<compile_context>
chip_gen: v6e
topology: v6e:2x2x1
jax: 0.10.0
libtpu: 0.0.40
codegen_flags: <defaults>
</compile_context>

<pallas_src>
import functools

import numpy as np
import jax
import jax.numpy as jnp
from jax import lax
from jax.experimental import pallas as pl
from jax.experimental.pallas import tpu as pltpu


def _peak_detector_kernel(x_ref, out_ref, *, height, distance, prominence,
                          n_slots):
    x = x_ref[...].astype(jnp.float32)                      # (TB, N)
    tb, n = x.shape
    lane = lax.broadcasted_iota(jnp.int32, (1, n), 1)       # batch-invariant

    # ---- per-row min-max normalization (matches the torch code) -------------
    row_min = jnp.min(x, axis=-1, keepdims=True)
    row_max = jnp.max(x, axis=-1, keepdims=True)
    xn = (x - row_min) / (row_max - row_min + 1e-5)         # (TB, N) in [0, 1)

    # ---- strict local maxima (interior samples) + height filter -------------
    # TODO(synk): scipy's flat-plateau (equal-neighbour) midpoint handling is
    # not reproduced; strict maxima only (identical for continuous inputs).
    left_nb = jnp.roll(xn, 1, axis=1)                       # xn[i-1] (cyclic)
    right_nb = jnp.roll(xn, -1, axis=1)                     # xn[i+1] (cyclic)
    interior = (lane >= 1) & (lane <= n - 2)                # wrap-around masked off
    cand = (xn > left_nb) & (xn > right_nb) & interior & (xn >= height)

    # ---- distance filter: greedy highest-first non-max suppression ----------
    # Equivalent to scipy's _select_by_peak_distance (highest remaining first,
    # ties -> lowest index).  xn >= 0 after normalization, so -1 is a safe
    # "not a candidate" sentinel and `best_val >= 0` detects remaining work.
    neg = jnp.float32(-1.0)
    active0 = jnp.where(cand, xn, neg)
    kept0 = jnp.zeros((tb, n), dtype=jnp.bool_)
    max_picks = (n - 1) // distance + 1                     # static upper bound

    def body(_, carry):
        active, kept = carry
        best_val = jnp.max(active, axis=-1, keepdims=True)            # (TB, 1)
        has = best_val >= 0.0
        best_idx = jnp.min(jnp.where((active == best_val) & has, lane, n),
                           axis=-1, keepdims=True)                     # (TB, 1)
        pick = (lane == best_idx) & has
        kept = kept | pick
        diff = lane - best_idx
        suppress = has & (jnp.maximum(diff, -diff) < distance)
        active = jnp.where(suppress, neg, active)
        return active, kept

    _, kept_mask = lax.fori_loop(0, max_picks, body, (active0, kept0),
                                 unroll=True)

    # ---- compact kept peaks into <= n_slots slots per row -------------------
    # Inclusive prefix count of kept peaks via lower-triangular matmul (MXU).
    jj2 = lax.broadcasted_iota(jnp.int32, (n, n), 0)
    ii2 = lax.broadcasted_iota(jnp.int32, (n, n), 1)
    lower_tri = (jj2 <= ii2).astype(jnp.float32)            # (N, N)
    kept_f = kept_mask.astype(jnp.float32)
    incl_cnt = jnp.dot(kept_f, lower_tri,
                       preferred_element_type=jnp.float32)  # (TB, N)
    rank = incl_cnt.astype(jnp.int32) - 1                   # 0-based slot at kept pos

    slot = lax.broadcasted_iota(jnp.int32, (1, n_slots, n), 1)
    onehot = (rank[:, None, :] == slot) & kept_mask[:, None, :]   # (TB, S, N)

    lane_f = lane.astype(jnp.float32)
    idx_p = jnp.sum(jnp.where(onehot, lane_f[:, None, :], 0.0),
                    axis=-1).astype(jnp.int32)               # (TB, S) peak index
    val_p = jnp.sum(jnp.where(onehot, xn[:, None, :], 0.0), axis=-1)  # (TB, S)
    valid = idx_p > 0            # kept peaks are interior => index >= 1

    # ---- prominence (wlen=None) on the compacted (TB, S, N) slabs -----------
    jj3 = lax.broadcasted_iota(jnp.int32, (1, 1, n), 2)      # sample index j
    ip = idx_p[:, :, None]                                   # (TB, S, 1)
    vp = val_p[:, :, None]                                   # (TB, S, 1)
    xj = xn[:, None, :]                                      # (TB, 1, N)
    greater = xj > vp                                        # (TB, S, N)

    # nearest strictly-greater sample left / right of each kept peak
    left_bound = jnp.max(jnp.where(greater & (jj3 < ip), jj3, -1), axis=-1)
    right_bound = jnp.min(jnp.where(greater & (jj3 > ip), jj3, n), axis=-1)

    big = jnp.float32(1e9)
    left_mask = (jj3 > left_bound[:, :, None]) & (jj3 <= ip)
    right_mask = (jj3 >= ip) & (jj3 < right_bound[:, :, None])
    left_min = jnp.min(jnp.where(left_mask, xj, big), axis=-1)    # (TB, S)
    right_min = jnp.min(jnp.where(right_mask, xj, big), axis=-1)  # (TB, S)
    prom = val_p - jnp.maximum(left_min, right_min)               # (TB, S)

    prom_ok = valid & (prom >= prominence)                        # (TB, S)

    # ---- scatter back to the lane-dense (TB, N) output ----------------------
    final = jnp.max(jnp.where(onehot & prom_ok[:, :, None], 1.0, 0.0), axis=1)
    out_ref[...] = final.astype(out_ref.dtype)


def _default_vmem_limit():
    # Generation-aware: ~3/4 of physical VMEM, capped at 64 MiB.
    # (v5e/v6e: 128 MiB -> 64 MiB request; v7x: 64 MiB -> 48 MiB request.)
    try:
        cap = pltpu.get_tpu_info().vmem_capacity_bytes
    except Exception:
        cap = 128 * 1024 * 1024
    return int(min(cap * 3 // 4, 64 * 1024 * 1024))


def peak_detector_forward(x, *, height_factor=0.1, min_distance=10,
                          prominence_factor=0.05, tb=8, vmem_limit_bytes=None):
    """Pallas equivalent of PeakDetector.forward.  x: (B, N) float."""
    B, N = x.shape
    assert N % 128 == 0, "spectrum length must be a multiple of 128 (lane-dense)"
    min_sublane = 8 if jnp.dtype(x.dtype).itemsize == 4 else 16
    assert B % tb == 0 and tb % min_sublane == 0, "bad batch tile for this dtype"

    distance = max(1, int(np.ceil(min_distance)))
    max_picks = (N - 1) // distance + 1
    n_slots = ((max_picks + 7) // 8) * 8          # round slots up to a sublane multiple

    if vmem_limit_bytes is None:
        vmem_limit_bytes = _default_vmem_limit()

    kernel = functools.partial(
        _peak_detector_kernel,
        height=float(height_factor),
        distance=distance,
        prominence=float(prominence_factor),
        n_slots=n_slots,
    )
    return pl.pallas_call(
        kernel,
        out_shape=jax.ShapeDtypeStruct((B, N), x.dtype),
        grid_spec=pltpu.PrefetchScalarGridSpec(
            num_scalar_prefetch=0,
            grid=(B // tb,),
            in_specs=[pl.BlockSpec((tb, N), lambda i: (i, 0))],
            out_specs=pl.BlockSpec((tb, N), lambda i: (i, 0)),
        ),
        compiler_params=pltpu.CompilerParams(
            dimension_semantics=("parallel",),
            vmem_limit_bytes=vmem_limit_bytes,
        ),
    )(x)


def peak_detector_ref(x, height_factor=0.1, min_distance=10, prominence_factor=0.05):
    """Independent Python reference mirroring scipy.find_peaks' height ->
    distance -> prominence pipeline (strict local maxima, lowest-index ties)."""
    xn = np.asarray((x - jnp.min(x, axis=-1, keepdims=True)) /
                    (jnp.max(x, axis=-1, keepdims=True)
                     - jnp.min(x, axis=-1, keepdims=True) + 1e-5))
    B, N = xn.shape
    dist = max(1, int(np.ceil(min_distance)))
    peaks = np.zeros((B, N), dtype=np.float32)
    for b in range(B):
        row = xn[b]
        cand = [i for i in range(1, N - 1)
                if row[i - 1] < row[i] and row[i] > row[i + 1]
                and row[i] >= height_factor]
        remaining = list(cand)
        kept = []
        while remaining:
            best = max(remaining, key=lambda i: (row[i], -i))  # highest, ties->lowest idx
            kept.append(best)
            remaining = [c for c in remaining if abs(c - best) >= dist]
        for p in kept:
            left_min = row[p]
            i = p - 1
            while i >= 0 and row[i] <= row[p]:
                left_min = min(left_min, row[i])
                i -= 1
            right_min = row[p]
            i = p + 1
            while i < N and row[i] <= row[p]:
                right_min = min(right_min, row[i])
                i += 1
            if row[p] - max(left_min, right_min) >= prominence_factor:
                peaks[b, p] = 1.0
    return peaks


if __name__ == "__main__":
    B, N = 32, 256   # grid = (4,) -> at least 2 blocks per v7x TensorCore
    key = jax.random.PRNGKey(0)
    k1, k2 = jax.random.split(key)
    # synthetic "spectra": smooth baseline + noise
    t = jnp.linspace(0.0, 1.0, N)
    base = jnp.sin(2.0 * jnp.pi * 3.0 * t)[None, :] * jax.random.uniform(k1, (B, 1))
    x = (base + 0.5 * jax.random.normal(k2, (B, N))).astype(jnp.float32)

    out = peak_detector_forward(x, height_factor=0.1, min_distance=10,
                                prominence_factor=0.05, tb=8)
    out = jax.block_until_ready(out)

    ref = peak_detector_ref(x, 0.1, 10, 0.05)
    assert out.shape == (B, N)
    assert np.array_equal(np.asarray(out, dtype=np.float32), ref)

    print("KERNEL_OK")
</pallas_src>

<mosaic_0001>
module attributes {stable_mosaic.version = 11 : i64} {
  func.func @_peak_detector_kernel(%arg0: i32, %arg1: memref<8x256xf32, #tpu.memory_space<vmem>>, %arg2: memref<8x256xf32, #tpu.memory_space<vmem>>) attributes {dimension_semantics = [#tpu.dimension_semantics<parallel>], iteration_bounds = array<i64: 4>, scalar_prefetch = 0 : i64, scratch_operands = 0 : i64, tpu.core_type = #tpu.core_type<tc>, window_params = [{transform_indices = @transform_0, window_bounds = array<i64: 8, 256>}, {transform_indices = @transform_1, window_bounds = array<i64: 8, 256>}]} {
    %c0 = arith.constant 0 : index
    %c0_0 = arith.constant 0 : index
    %0 = vector.load %arg1[%c0, %c0_0] : memref<8x256xf32, #tpu.memory_space<vmem>>, vector<8x256xf32>
    %1 = tpu.iota {dimensions = array<i32: 1>} : vector<1x256xi32>
    %cst = arith.constant dense<0x7F800000> : vector<8xf32>
    %2 = vector.multi_reduction <minimumf>, %0, %cst [1] : vector<8x256xf32> to vector<8xf32>
    %3 = vector.shape_cast %2 : vector<8xf32> to vector<8x1xf32>
    %cst_1 = arith.constant dense<0xFF800000> : vector<8xf32>
    %4 = vector.multi_reduction <maximumf>, %0, %cst_1 [1] : vector<8x256xf32> to vector<8xf32>
    %5 = vector.shape_cast %4 : vector<8xf32> to vector<8x1xf32>
    %6 = vector.broadcast %3 : vector<8x1xf32> to vector<8x256xf32>
    %7 = arith.subf %0, %6 : vector<8x256xf32>
    %8 = arith.subf %5, %3 : vector<8x1xf32>
    %cst_2 = arith.constant 9.99999974E-6 : f32
    %9 = vector.broadcast %cst_2 : f32 to vector<8x1xf32>
    %10 = arith.addf %8, %9 : vector<8x1xf32>
    %11 = vector.broadcast %10 : vector<8x1xf32> to vector<8x256xf32>
    %12 = arith.divf %7, %11 : vector<8x256xf32>
    %13 = vector.extract_strided_slice %12 {offsets = [0, 255], sizes = [8, 1], strides = [1, 1]} : vector<8x256xf32> to vector<8x1xf32>
    %14 = vector.extract_strided_slice %12 {offsets = [0, 0], sizes = [8, 255], strides = [1, 1]} : vector<8x256xf32> to vector<8x255xf32>
    %15 = tpu.concatenate %13, %14 in 1 : vector<8x1xf32>, vector<8x255xf32> -> vector<8x256xf32>
    %16 = vector.extract_strided_slice %12 {offsets = [0, 1], sizes = [8, 255], strides = [1, 1]} : vector<8x256xf32> to vector<8x255xf32>
    %17 = vector.extract_strided_slice %12 {offsets = [0, 0], sizes = [8, 1], strides = [1, 1]} : vector<8x256xf32> to vector<8x1xf32>
    %18 = tpu.concatenate %16, %17 in 1 : vector<8x255xf32>, vector<8x1xf32> -> vector<8x256xf32>
    %c1_i32 = arith.constant 1 : i32
    %19 = vector.broadcast %c1_i32 : i32 to vector<1x256xi32>
    %20 = arith.cmpi sge, %1, %19 : vector<1x256xi32>
    %c254_i32 = arith.constant 254 : i32
    %21 = vector.broadcast %c254_i32 : i32 to vector<1x256xi32>
    %22 = arith.cmpi sle, %1, %21 : vector<1x256xi32>
    %23 = arith.andi %20, %22 : vector<1x256xi1>
    %24 = arith.cmpf ogt, %12, %15 : vector<8x256xf32>
    %25 = arith.cmpf ogt, %12, %18 : vector<8x256xf32>
    %26 = arith.andi %24, %25 : vector<8x256xi1>
    %27 = vector.broadcast %23 : vector<1x256xi1> to vector<8x256xi1>
    %28 = arith.andi %26, %27 : vector<8x256xi1>
    %cst_3 = arith.constant 1.000000e-01 : f32
    %29 = vector.broadcast %cst_3 : f32 to vector<8x256xf32>
    %30 = arith.cmpf oge, %12, %29 : vector<8x256xf32>
    %31 = arith.andi %28, %30 : vector<8x256xi1>
    %cst_4 = arith.constant -1.000000e+00 : f32
    %32 = vector.broadcast %cst_4 : f32 to vector<8x256xf32>
    %33 = arith.select %31, %12, %32 : vector<8x256xi1>, vector<8x256xf32>
    %false = arith.constant false
    %34 = vector.broadcast %false : i1 to vector<8x256xi1>
    %cst_5 = arith.constant -1.000000e+00 : f32
    %c0_i32 = arith.constant 0 : i32
    %cst_6 = arith.constant dense<0xFF800000> : vector<8xf32>
    %35 = vector.multi_reduction <maximumf>, %33, %cst_6 [1] : vector<8x256xf32> to vector<8xf32>
    %36 = vector.shape_cast %35 : vector<8xf32> to vector<8x1xf32>
    %cst_7 = arith.constant 0.000000e+00 : f32
    %37 = vector.broadcast %cst_7 : f32 to vector<8x1xf32>
    %38 = arith.cmpf oge, %36, %37 : vector<8x1xf32>
    %39 = vector.broadcast %36 : vector<8x1xf32> to vector<8x256xf32>
    %40 = arith.cmpf oeq, %33, %39 : vector<8x256xf32>
    %41 = vector.broadcast %38 : vector<8x1xi1> to vector<8x256xi1>
    %42 = arith.andi %40, %41 : vector<8x256xi1>
    %c256_i32 = arith.constant 256 : i32
    %43 = vector.shape_cast %1 : vector<1x256xi32> to vector<1x256xi32>
    %44 = vector.broadcast %43 : vector<1x256xi32> to vector<8x256xi32>
    %45 = vector.broadcast %c256_i32 : i32 to vector<8x256xi32>
    %46 = arith.select %42, %44, %45 : vector<8x256xi1>, vector<8x256xi32>
    %cst_8 = arith.constant dense<2147483647> : vector<8xi32>
    %47 = vector.multi_reduction <minsi>, %46, %cst_8 [1] : vector<8x256xi32> to vector<8xi32>
    %48 = vector.shape_cast %47 : vector<8xi32> to vector<8x1xi32>
    %49 = vector.broadcast %1 : vector<1x256xi32> to vector<8x256xi32>
    %50 = vector.broadcast %48 : vector<8x1xi32> to vector<8x256xi32>
    %51 = arith.cmpi eq, %49, %50 : vector<8x256xi32>
    %52 = vector.broadcast %38 : vector<8x1xi1> to vector<8x256xi1>
    %53 = arith.andi %51, %52 : vector<8x256xi1>
    %54 = arith.ori %34, %53 : vector<8x256xi1>
    %55 = vector.broadcast %1 : vector<1x256xi32> to vector<8x256xi32>
    %56 = vector.broadcast %48 : vector<8x1xi32> to vector<8x256xi32>
    %57 = arith.subi %55, %56 : vector<8x256xi32>
    %c0_i32_9 = arith.constant 0 : i32
    %58 = vector.broadcast %c0_i32_9 : i32 to vector<8x256xi32>
    %59 = arith.subi %58, %57 : vector<8x256xi32>
    %60 = arith.maxsi %57, %59 : vector<8x256xi32>
    %c10_i32 = arith.constant 10 : i32
    %61 = vector.broadcast %c10_i32 : i32 to vector<8x256xi32>
    %62 = arith.cmpi slt, %60, %61 : vector<8x256xi32>
    %63 = vector.broadcast %38 : vector<8x1xi1> to vector<8x256xi1>
    %64 = arith.andi %63, %62 : vector<8x256xi1>
    %65 = vector.broadcast %cst_5 : f32 to vector<8x256xf32>
    %66 = arith.select %64, %65, %33 : vector<8x256xi1>, vector<8x256xf32>
    %c1_i32_10 = arith.constant 1 : i32
    %cst_11 = arith.constant dense<0xFF800000> : vector<8xf32>
    %67 = vector.multi_reduction <maximumf>, %66, %cst_11 [1] : vector<8x256xf32> to vector<8xf32>
    %68 = vector.shape_cast %67 : vector<8xf32> to vector<8x1xf32>
    %cst_12 = arith.constant 0.000000e+00 : f32
    %69 = vector.broadcast %cst_12 : f32 to vector<8x1xf32>
    %70 = arith.cmpf oge, %68, %69 : vector<8x1xf32>
    %71 = vector.broadcast %68 : vector<8x1xf32> to vector<8x256xf32>
    %72 = arith.cmpf oeq, %66, %71 : vector<8x256xf32>
    %73 = vector.broadcast %70 : vector<8x1xi1> to vector<8x256xi1>
    %74 = arith.andi %72, %73 : vector<8x256xi1>
    %c256_i32_13 = arith.constant 256 : i32
    %75 = vector.shape_cast %1 : vector<1x256xi32> to vector<1x256xi32>
    %76 = vector.broadcast %75 : vector<1x256xi32> to vector<8x256xi32>
    %77 = vector.broadcast %c256_i32_13 : i32 to vector<8x256xi32>
    %78 = arith.select %74, %76, %77 : vector<8x256xi1>, vector<8x256xi32>
    %cst_14 = arith.constant dense<2147483647> : vector<8xi32>
    %79 = vector.multi_reduction <minsi>, %78, %cst_14 [1] : vector<8x256xi32> to vector<8xi32>
    %80 = vector.shape_cast %79 : vector<8xi32> to vector<8x1xi32>
    %81 = vector.broadcast %1 : vector<1x256xi32> to vector<8x256xi32>
    %82 = vector.broadcast %80 : vector<8x1xi32> to vector<8x256xi32>
    %83 = arith.cmpi eq, %81, %82 : vector<8x256xi32>
    %84 = vector.broadcast %70 : vector<8x1xi1> to vector<8x256xi1>
    %85 = arith.andi %83, %84 : vector<8x256xi1>
    %86 = arith.ori %54, %85 : vector<8x256xi1>
    %87 = vector.broadcast %1 : vector<1x256xi32> to vector<8x256xi32>
    %88 = vector.broadcast %80 : vector<8x1xi32> to vector<8x256xi32>
    %89 = arith.subi %87, %88 : vector<8x256xi32>
    %c0_i32_15 = arith.constant 0 : i32
    %90 = vector.broadcast %c0_i32_15 : i32 to vector<8x256xi32>
    %91 = arith.subi %90, %89 : vector<8x256xi32>
    %92 = arith.maxsi %89, %91 : vector<8x256xi32>
    %c10_i32_16 = arith.constant 10 : i32
    %93 = vector.broadcast %c10_i32_16 : i32 to vector<8x256xi32>
    %94 = arith.cmpi slt, %92, %93 : vector<8x256xi32>
    %95 = vector.broadcast %70 : vector<8x1xi1> to vector<8x256xi1>
    %96 = arith.andi %95, %94 : vector<8x256xi1>
    %97 = vector.broadcast %cst_5 : f32 to vector<8x256xf32>
    %98 = arith.select %96, %97, %66 : vector<8x256xi1>, vector<8x256xf32>
    %c2_i32 = arith.constant 2 : i32
    %cst_17 = arith.constant dense<0xFF800000> : vector<8xf32>
    %99 = vector.multi_reduction <maximumf>, %98, %cst_17 [1] : vector<8x256xf32> to vector<8xf32>
    %100 = vector.shape_cast %99 : vector<8xf32> to vector<8x1xf32>
    %cst_18 = arith.constant 0.000000e+00 : f32
    %101 = vector.broadcast %cst_18 : f32 to vector<8x1xf32>
    %102 = arith.cmpf oge, %100, %101 : vector<8x1xf32>
    %103 = vector.broadcast %100 : vector<8x1xf32> to vector<8x256xf32>
    %104 = arith.cmpf oeq, %98, %103 : vector<8x256xf32>
    %105 = vector.broadcast %102 : vector<8x1xi1> to vector<8x256xi1>
    %106 = arith.andi %104, %105 : vector<8x256xi1>
    %c256_i32_19 = arith.constant 256 : i32
    %107 = vector.shape_cast %1 : vector<1x256xi32> to vector<1x256xi32>
    %108 = vector.broadcast %107 : vector<1x256xi32> to vector<8x256xi32>
    %109 = vector.broadcast %c256_i32_19 : i32 to vector<8x256xi32>
    %110 = arith.select %106, %108, %109 : vector<8x256xi1>, vector<8x256xi32>
    %cst_20 = arith.constant dense<2147483647> : vector<8xi32>
    %111 = vector.multi_reduction <minsi>, %110, %cst_20 [1] : vector<8x256xi32> to vector<8xi32>
    %112 = vector.shape_cast %111 : vector<8xi32> to vector<8x1xi32>
    %113 = vector.broadcast %1 : vector<1x256xi32> to vector<8x256xi32>
    %114 = vector.broadcast %112 : vector<8x1xi32> to vector<8x256xi32>
    %115 = arith.cmpi eq, %113, %114 : vector<8x256xi32>
    %116 = vector.broadcast %102 : vector<8x1xi1> to vector<8x256xi1>
    %117 = arith.andi %115, %116 : vector<8x256xi1>
    %118 = arith.ori %86, %117 : vector<8x256xi1>
    %119 = vector.broadcast %1 : vector<1x256xi32> to vector<8x256xi32>
    %120 = vector.broadcast %112 : vector<8x1xi32> to vector<8x256xi32>
    %121 = arith.subi %119, %120 : vector<8x256xi32>
    %c0_i32_21 = arith.constant 0 : i32
    %122 = vector.broadcast %c0_i32_21 : i32 to vector<8x256xi32>
    %123 = arith.subi %122, %121 : vector<8x256xi32>
    %124 = arith.maxsi %121, %123 : vector<8x256xi32>
    %c10_i32_22 = arith.constant 10 : i32
    %125 = vector.broadcast %c10_i32_22 : i32 to vector<8x256xi32>
    %126 = arith.cmpi slt, %124, %125 : vector<8x256xi32>
    %127 = vector.broadcast %102 : vector<8x1xi1> to vector<8x256xi1>
    %128 = arith.andi %127, %126 : vector<8x256xi1>
    %129 = vector.broadcast %cst_5 : f32 to vector<8x256xf32>
    %130 = arith.select %128, %129, %98 : vector<8x256xi1>, vector<8x256xf32>
    %c3_i32 = arith.constant 3 : i32
    %cst_23 = arith.constant dense<0xFF800000> : vector<8xf32>
    %131 = vector.multi_reduction <maximumf>, %130, %cst_23 [1] : vector<8x256xf32> to vector<8xf32>
    %132 = vector.shape_cast %131 : vector<8xf32> to vector<8x1xf32>
    %cst_24 = arith.constant 0.000000e+00 : f32
    %133 = vector.broadcast %cst_24 : f32 to vector<8x1xf32>
    %134 = arith.cmpf oge, %132, %133 : vector<8x1xf32>
    %135 = vector.broadcast %132 : vector<8x1xf32> to vector<8x256xf32>
    %136 = arith.cmpf oeq, %130, %135 : vector<8x256xf32>
    %137 = vector.broadcast %134 : vector<8x1xi1> to vector<8x256xi1>
    %138 = arith.andi %136, %137 : vector<8x256xi1>
    %c256_i32_25 = arith.constant 256 : i32
    %139 = vector.shape_cast %1 : vector<1x256xi32> to vector<1x256xi32>
    %140 = vector.broadcast %139 : vector<1x256xi32> to vector<8x256xi32>
    %141 = vector.broadcast %c256_i32_25 : i32 to vector<8x256xi32>
    %142 = arith.select %138, %140, %141 : vector<8x256xi1>, vector<8x256xi32>
    %cst_26 = arith.constant dense<2147483647> : vector<8xi32>
    %143 = vector.multi_reduction <minsi>, %142, %cst_26 [1] : vector<8x256xi32> to vector<8xi32>
    %144 = vector.shape_cast %143 : vector<8xi32> to vector<8x1xi32>
    %145 = vector.broadcast %1 : vector<1x256xi32> to vector<8x256xi32>
    %146 = vector.broadcast %144 : vector<8x1xi32> to vector<8x256xi32>
    %147 = arith.cmpi eq, %145, %146 : vector<8x256xi32>
    %148 = vector.broadcast %134 : vector<8x1xi1> to vector<8x256xi1>
    %149 = arith.andi %147, %148 : vector<8x256xi1>
    %150 = arith.ori %118, %149 : vector<8x256xi1>
    %151 = vector.broadcast %1 : vector<1x256xi32> to vector<8x256xi32>
    %152 = vector.broadcast %144 : vector<8x1xi32> to vector<8x256xi32>
    %153 = arith.subi %151, %152 : vector<8x256xi32>
    %c0_i32_27 = arith.constant 0 : i32
    %154 = vector.broadcast %c0_i32_27 : i32 to vector<8x256xi32>
    %155 = arith.subi %154, %153 : vector<8x256xi32>
    %156 = arith.maxsi %153, %155 : vector<8x256xi32>
    %c10_i32_28 = arith.constant 10 : i32
    %157 = vector.broadcast %c10_i32_28 : i32 to vector<8x256xi32>
    %158 = arith.cmpi slt, %156, %157 : vector<8x256xi32>
    %159 = vector.broadcast %134 : vector<8x1xi1> to vector<8x256xi1>
    %160 = arith.andi %159, %158 : vector<8x256xi1>
    %161 = vector.broadcast %cst_5 : f32 to vector<8x256xf32>
    %162 = arith.select %160, %161, %130 : vector<8x256xi1>, vector<8x256xf32>
    %c4_i32 = arith.constant 4 : i32
    %cst_29 = arith.constant dense<0xFF800000> : vector<8xf32>
    %163 = vector.multi_reduction <maximumf>, %162, %cst_29 [1] : vector<8x256xf32> to vector<8xf32>
    %164 = vector.shape_cast %163 : vector<8xf32> to vector<8x1xf32>
    %cst_30 = arith.constant 0.000000e+00 : f32
    %165 = vector.broadcast %cst_30 : f32 to vector<8x1xf32>
    %166 = arith.cmpf oge, %164, %165 : vector<8x1xf32>
    %167 = vector.broadcast %164 : vector<8x1xf32> to vector<8x256xf32>
    %168 = arith.cmpf oeq, %162, %167 : vector<8x256xf32>
    %169 = vector.broadcast %166 : vector<8x1xi1> to vector<8x256xi1>
    %170 = arith.andi %168, %169 : vector<8x256xi1>
    %c256_i32_31 = arith.constant 256 : i32
    %171 = vector.shape_cast %1 : vector<1x256xi32> to vector<1x256xi32>
    %172 = vector.broadcast %171 : vector<1x256xi32> to vector<8x256xi32>
    %173 = vector.broadcast %c256_i32_31 : i32 to vector<8x256xi32>
    %174 = arith.select %170, %172, %173 : vector<8x256xi1>, vector<8x256xi32>
    %cst_32 = arith.constant dense<2147483647> : vector<8xi32>
    %175 = vector.multi_reduction <minsi>, %174, %cst_32 [1] : vector<8x256xi32> to vector<8xi32>
    %176 = vector.shape_cast %175 : vector<8xi32> to vector<8x1xi32>
    %177 = vector.broadcast %1 : vector<1x256xi32> to vector<8x256xi32>
    %178 = vector.broadcast %176 : vector<8x1xi32> to vector<8x256xi32>
    %179 = arith.cmpi eq, %177, %178 : vector<8x256xi32>
    %180 = vector.broadcast %166 : vector<8x1xi1> to vector<8x256xi1>
    %181 = arith.andi %179, %180 : vector<8x256xi1>
    %182 = arith.ori %150, %181 : vector<8x256xi1>
    %183 = vector.broadcast %1 : vector<1x256xi32> to vector<8x256xi32>
    %184 = vector.broadcast %176 : vector<8x1xi32> to vector<8x256xi32>
    %185 = arith.subi %183, %184 : vector<8x256xi32>
    %c0_i32_33 = arith.constant 0 : i32
    %186 = vector.broadcast %c0_i32_33 : i32 to vector<8x256xi32>
    %187 = arith.subi %186, %185 : vector<8x256xi32>
    %188 = arith.maxsi %185, %187 : vector<8x256xi32>
    %c10_i32_34 = arith.constant 10 : i32
    %189 = vector.broadcast %c10_i32_34 : i32 to vector<8x256xi32>
    %190 = arith.cmpi slt, %188, %189 : vector<8x256xi32>
    %191 = vector.broadcast %166 : vector<8x1xi1> to vector<8x256xi1>
    %192 = arith.andi %191, %190 : vector<8x256xi1>
    %193 = vector.broadcast %cst_5 : f32 to vector<8x256xf32>
    %194 = arith.select %192, %193, %162 : vector<8x256xi1>, vector<8x256xf32>
    %c5_i32 = arith.constant 5 : i32
    %cst_35 = arith.constant dense<0xFF800000> : vector<8xf32>
    %195 = vector.multi_reduction <maximumf>, %194, %cst_35 [1] : vector<8x256xf32> to vector<8xf32>
    %196 = vector.shape_cast %195 : vector<8xf32> to vector<8x1xf32>
    %cst_36 = arith.constant 0.000000e+00 : f32
    %197 = vector.broadcast %cst_36 : f32 to vector<8x1xf32>
    %198 = arith.cmpf oge, %196, %197 : vector<8x1xf32>
    %199 = vector.broadcast %196 : vector<8x1xf32> to vector<8x256xf32>
    %200 = arith.cmpf oeq, %194, %199 : vector<8x256xf32>
    %201 = vector.broadcast %198 : vector<8x1xi1> to vector<8x256xi1>
    %202 = arith.andi %200, %201 : vector<8x256xi1>
    %c256_i32_37 = arith.constant 256 : i32
    %203 = vector.shape_cast %1 : vector<1x256xi32> to vector<1x256xi32>
    %204 = vector.broadcast %203 : vector<1x256xi32> to vector<8x256xi32>
    %205 = vector.broadcast %c256_i32_37 : i32 to vector<8x256xi32>
    %206 = arith.select %202, %204, %205 : vector<8x256xi1>, vector<8x256xi32>
    %cst_38 = arith.constant dense<2147483647> : vector<8xi32>
    %207 = vector.multi_reduction <minsi>, %206, %cst_38 [1] : vector<8x256xi32> to vector<8xi32>
    %208 = vector.shape_cast %207 : vector<8xi32> to vector<8x1xi32>
    %209 = vector.broadcast %1 : vector<1x256xi32> to vector<8x256xi32>
    %210 = vector.broadcast %208 : vector<8x1xi32> to vector<8x256xi32>
    %211 = arith.cmpi eq, %209, %210 : vector<8x256xi32>
    %212 = vector.broadcast %198 : vector<8x1xi1> to vector<8x256xi1>
    %213 = arith.andi %211, %212 : vector<8x256xi1>
    %214 = arith.ori %182, %213 : vector<8x256xi1>
    %215 = vector.broadcast %1 : vector<1x256xi32> to vector<8x256xi32>
    %216 = vector.broadcast %208 : vector<8x1xi32> to vector<8x256xi32>
    %217 = arith.subi %215, %216 : vector<8x256xi32>
    %c0_i32_39 = arith.constant 0 : i32
    %218 = vector.broadcast %c0_i32_39 : i32 to vector<8x256xi32>
    %219 = arith.subi %218, %217 : vector<8x256xi32>
    %220 = arith.maxsi %217, %219 : vector<8x256xi32>
    %c10_i32_40 = arith.constant 10 : i32
    %221 = vector.broadcast %c10_i32_40 : i32 to vector<8x256xi32>
    %222 = arith.cmpi slt, %220, %221 : vector<8x256xi32>
    %223 = vector.broadcast %198 : vector<8x1xi1> to vector<8x256xi1>
    %224 = arith.andi %223, %222 : vector<8x256xi1>
    %225 = vector.broadcast %cst_5 : f32 to vector<8x256xf32>
    %226 = arith.select %224, %225, %194 : vector<8x256xi1>, vector<8x256xf32>
    %c6_i32 = arith.constant 6 : i32
    %cst_41 = arith.constant dense<0xFF800000> : vector<8xf32>
    %227 = vector.multi_reduction <maximumf>, %226, %cst_41 [1] : vector<8x256xf32> to vector<8xf32>
    %228 = vector.shape_cast %227 : vector<8xf32> to vector<8x1xf32>
    %cst_42 = arith.constant 0.000000e+00 : f32
    %229 = vector.broadcast %cst_42 : f32 to vector<8x1xf32>
    %230 = arith.cmpf oge, %228, %229 : vector<8x1xf32>
    %231 = vector.broadcast %228 : vector<8x1xf32> to vector<8x256xf32>
    %232 = arith.cmpf oeq, %226, %231 : vector<8x256xf32>
    %233 = vector.broadcast %230 : vector<8x1xi1> to vector<8x256xi1>
    %234 = arith.andi %232, %233 : vector<8x256xi1>
    %c256_i32_43 = arith.constant 256 : i32
    %235 = vector.shape_cast %1 : vector<1x256xi32> to vector<1x256xi32>
    %236 = vector.broadcast %235 : vector<1x256xi32> to vector<8x256xi32>
    %237 = vector.broadcast %c256_i32_43 : i32 to vector<8x256xi32>
    %238 = arith.select %234, %236, %237 : vector<8x256xi1>, vector<8x256xi32>
    %cst_44 = arith.constant dense<2147483647> : vector<8xi32>
    %239 = vector.multi_reduction <minsi>, %238, %cst_44 [1] : vector<8x256xi32> to vector<8xi32>
    %240 = vector.shape_cast %239 : vector<8xi32> to vector<8x1xi32>
    %241 = vector.broadcast %1 : vector<1x256xi32> to vector<8x256xi32>
    %242 = vector.broadcast %240 : vector<8x1xi32> to vector<8x256xi32>
    %243 = arith.cmpi eq, %241, %242 : vector<8x256xi32>
    %244 = vector.broadcast %230 : vector<8x1xi1> to vector<8x256xi1>
    %245 = arith.andi %243, %244 : vector<8x256xi1>
    %246 = arith.ori %214, %245 : vector<8x256xi1>
    %247 = vector.broadcast %1 : vector<1x256xi32> to vector<8x256xi32>
    %248 = vector.broadcast %240 : vector<8x1xi32> to vector<8x256xi32>
    %249 = arith.subi %247, %248 : vector<8x256xi32>
    %c0_i32_45 = arith.constant 0 : i32
    %250 = vector.broadcast %c0_i32_45 : i32 to vector<8x256xi32>
    %251 = arith.subi %250, %249 : vector<8x256xi32>
    %252 = arith.maxsi %249, %251 : vector<8x256xi32>
    %c10_i32_46 = arith.constant 10 : i32
    %253 = vector.broadcast %c10_i32_46 : i32 to vector<8x256xi32>
    %254 = arith.cmpi slt, %252, %253 : vector<8x256xi32>
    %255 = vector.broadcast %230 : vector<8x1xi1> to vector<8x256xi1>
    %256 = arith.andi %255, %254 : vector<8x256xi1>
    %257 = vector.broadcast %cst_5 : f32 to vector<8x256xf32>
    %258 = arith.select %256, %257, %226 : vector<8x256xi1>, vector<8x256xf32>
    %c7_i32 = arith.constant 7 : i32
    %cst_47 = arith.constant dense<0xFF800000> : vector<8xf32>
    %259 = vector.multi_reduction <maximumf>, %258, %cst_47 [1] : vector<8x256xf32> to vector<8xf32>
    %260 = vector.shape_cast %259 : vector<8xf32> to vector<8x1xf32>
    %cst_48 = arith.constant 0.000000e+00 : f32
    %261 = vector.broadcast %cst_48 : f32 to vector<8x1xf32>
    %262 = arith.cmpf oge, %260, %261 : vector<8x1xf32>
    %263 = vector.broadcast %260 : vector<8x1xf32> to vector<8x256xf32>
    %264 = arith.cmpf oeq, %258, %263 : vector<8x256xf32>
    %265 = vector.broadcast %262 : vector<8x1xi1> to vector<8x256xi1>
    %266 = arith.andi %264, %265 : vector<8x256xi1>
    %c256_i32_49 = arith.constant 256 : i32
    %267 = vector.shape_cast %1 : vector<1x256xi32> to vector<1x256xi32>
    %268 = vector.broadcast %267 : vector<1x256xi32> to vector<8x256xi32>
    %269 = vector.broadcast %c256_i32_49 : i32 to vector<8x256xi32>
    %270 = arith.select %266, %268, %269 : vector<8x256xi1>, vector<8x256xi32>
    %cst_50 = arith.constant dense<2147483647> : vector<8xi32>
    %271 = vector.multi_reduction <minsi>, %270, %cst_50 [1] : vector<8x256xi32> to vector<8xi32>
    %272 = vector.shape_cast %271 : vector<8xi32> to vector<8x1xi32>
    %273 = vector.broadcast %1 : vector<1x256xi32> to vector<8x256xi32>
    %274 = vector.broadcast %272 : vector<8x1xi32> to vector<8x256xi32>
    %275 = arith.cmpi eq, %273, %274 : vector<8x256xi32>
    %276 = vector.broadcast %262 : vector<8x1xi1> to vector<8x256xi1>
    %277 = arith.andi %275, %276 : vector<8x256xi1>
    %278 = arith.ori %246, %277 : vector<8x256xi1>
    %279 = vector.broadcast %1 : vector<1x256xi32> to vector<8x256xi32>
    %280 = vector.broadcast %272 : vector<8x1xi32> to vector<8x256xi32>
    %281 = arith.subi %279, %280 : vector<8x256xi32>
    %c0_i32_51 = arith.constant 0 : i32
    %282 = vector.broadcast %c0_i32_51 : i32 to vector<8x256xi32>
    %283 = arith.subi %282, %281 : vector<8x256xi32>
    %284 = arith.maxsi %281, %283 : vector<8x256xi32>
    %c10_i32_52 = arith.constant 10 : i32
    %285 = vector.broadcast %c10_i32_52 : i32 to vector<8x256xi32>
    %286 = arith.cmpi slt, %284, %285 : vector<8x256xi32>
    %287 = vector.broadcast %262 : vector<8x1xi1> to vector<8x256xi1>
    %288 = arith.andi %287, %286 : vector<8x256xi1>
    %289 = vector.broadcast %cst_5 : f32 to vector<8x256xf32>
    %290 = arith.select %288, %289, %258 : vector<8x256xi1>, vector<8x256xf32>
    %c8_i32 = arith.constant 8 : i32
    %cst_53 = arith.constant dense<0xFF800000> : vector<8xf32>
    %291 = vector.multi_reduction <maximumf>, %290, %cst_53 [1] : vector<8x256xf32> to vector<8xf32>
    %292 = vector.shape_cast %291 : vector<8xf32> to vector<8x1xf32>
    %cst_54 = arith.constant 0.000000e+00 : f32
    %293 = vector.broadcast %cst_54 : f32 to vector<8x1xf32>
    %294 = arith.cmpf oge, %292, %293 : vector<8x1xf32>
    %295 = vector.broadcast %292 : vector<8x1xf32> to vector<8x256xf32>
    %296 = arith.cmpf oeq, %290, %295 : vector<8x256xf32>
    %297 = vector.broadcast %294 : vector<8x1xi1> to vector<8x256xi1>
    %298 = arith.andi %296, %297 : vector<8x256xi1>
    %c256_i32_55 = arith.constant 256 : i32
    %299 = vector.shape_cast %1 : vector<1x256xi32> to vector<1x256xi32>
    %300 = vector.broadcast %299 : vector<1x256xi32> to vector<8x256xi32>
    %301 = vector.broadcast %c256_i32_55 : i32 to vector<8x256xi32>
    %302 = arith.select %298, %300, %301 : vector<8x256xi1>, vector<8x256xi32>
    %cst_56 = arith.constant dense<2147483647> : vector<8xi32>
    %303 = vector.multi_reduction <minsi>, %302, %cst_56 [1] : vector<8x256xi32> to vector<8xi32>
    %304 = vector.shape_cast %303 : vector<8xi32> to vector<8x1xi32>
    %305 = vector.broadcast %1 : vector<1x256xi32> to vector<8x256xi32>
    %306 = vector.broadcast %304 : vector<8x1xi32> to vector<8x256xi32>
    %307 = arith.cmpi eq, %305, %306 : vector<8x256xi32>
    %308 = vector.broadcast %294 : vector<8x1xi1> to vector<8x256xi1>
    %309 = arith.andi %307, %308 : vector<8x256xi1>
    %310 = arith.ori %278, %309 : vector<8x256xi1>
    %311 = vector.broadcast %1 : vector<1x256xi32> to vector<8x256xi32>
    %312 = vector.broadcast %304 : vector<8x1xi32> to vector<8x256xi32>
    %313 = arith.subi %311, %312 : vector<8x256xi32>
    %c0_i32_57 = arith.constant 0 : i32
    %314 = vector.broadcast %c0_i32_57 : i32 to vector<8x256xi32>
    %315 = arith.subi %314, %313 : vector<8x256xi32>
    %316 = arith.maxsi %313, %315 : vector<8x256xi32>
    %c10_i32_58 = arith.constant 10 : i32
    %317 = vector.broadcast %c10_i32_58 : i32 to vector<8x256xi32>
    %318 = arith.cmpi slt, %316, %317 : vector<8x256xi32>
    %319 = vector.broadcast %294 : vector<8x1xi1> to vector<8x256xi1>
    %320 = arith.andi %319, %318 : vector<8x256xi1>
    %321 = vector.broadcast %cst_5 : f32 to vector<8x256xf32>
    %322 = arith.select %320, %321, %290 : vector<8x256xi1>, vector<8x256xf32>
    %c9_i32 = arith.constant 9 : i32
    %cst_59 = arith.constant dense<0xFF800000> : vector<8xf32>
    %323 = vector.multi_reduction <maximumf>, %322, %cst_59 [1] : vector<8x256xf32> to vector<8xf32>
    %324 = vector.shape_cast %323 : vector<8xf32> to vector<8x1xf32>
    %cst_60 = arith.constant 0.000000e+00 : f32
    %325 = vector.broadcast %cst_60 : f32 to vector<8x1xf32>
    %326 = arith.cmpf oge, %324, %325 : vector<8x1xf32>
    %327 = vector.broadcast %324 : vector<8x1xf32> to vector<8x256xf32>
    %328 = arith.cmpf oeq, %322, %327 : vector<8x256xf32>
    %329 = vector.broadcast %326 : vector<8x1xi1> to vector<8x256xi1>
    %330 = arith.andi %328, %329 : vector<8x256xi1>
    %c256_i32_61 = arith.constant 256 : i32
    %331 = vector.shape_cast %1 : vector<1x256xi32> to vector<1x256xi32>
    %332 = vector.broadcast %331 : vector<1x256xi32> to vector<8x256xi32>
    %333 = vector.broadcast %c256_i32_61 : i32 to vector<8x256xi32>
    %334 = arith.select %330, %332, %333 : vector<8x256xi1>, vector<8x256xi32>
    %cst_62 = arith.constant dense<2147483647> : vector<8xi32>
    %335 = vector.multi_reduction <minsi>, %334, %cst_62 [1] : vector<8x256xi32> to vector<8xi32>
    %336 = vector.shape_cast %335 : vector<8xi32> to vector<8x1xi32>
    %337 = vector.broadcast %1 : vector<1x256xi32> to vector<8x256xi32>
    %338 = vector.broadcast %336 : vector<8x1xi32> to vector<8x256xi32>
    %339 = arith.cmpi eq, %337, %338 : vector<8x256xi32>
    %340 = vector.broadcast %326 : vector<8x1xi1> to vector<8x256xi1>
    %341 = arith.andi %339, %340 : vector<8x256xi1>
    %342 = arith.ori %310, %341 : vector<8x256xi1>
    %343 = vector.broadcast %1 : vector<1x256xi32> to vector<8x256xi32>
    %344 = vector.broadcast %336 : vector<8x1xi32> to vector<8x256xi32>
    %345 = arith.subi %343, %344 : vector<8x256xi32>
    %c0_i32_63 = arith.constant 0 : i32
    %346 = vector.broadcast %c0_i32_63 : i32 to vector<8x256xi32>
    %347 = arith.subi %346, %345 : vector<8x256xi32>
    %348 = arith.maxsi %345, %347 : vector<8x256xi32>
    %c10_i32_64 = arith.constant 10 : i32
    %349 = vector.broadcast %c10_i32_64 : i32 to vector<8x256xi32>
    %350 = arith.cmpi slt, %348, %349 : vector<8x256xi32>
    %351 = vector.broadcast %326 : vector<8x1xi1> to vector<8x256xi1>
    %352 = arith.andi %351, %350 : vector<8x256xi1>
    %353 = vector.broadcast %cst_5 : f32 to vector<8x256xf32>
    %354 = arith.select %352, %353, %322 : vector<8x256xi1>, vector<8x256xf32>
    %c10_i32_65 = arith.constant 10 : i32
    %cst_66 = arith.constant dense<0xFF800000> : vector<8xf32>
    %355 = vector.multi_reduction <maximumf>, %354, %cst_66 [1] : vector<8x256xf32> to vector<8xf32>
    %356 = vector.shape_cast %355 : vector<8xf32> to vector<8x1xf32>
    %cst_67 = arith.constant 0.000000e+00 : f32
    %357 = vector.broadcast %cst_67 : f32 to vector<8x1xf32>
    %358 = arith.cmpf oge, %356, %357 : vector<8x1xf32>
    %359 = vector.broadcast %356 : vector<8x1xf32> to vector<8x256xf32>
    %360 = arith.cmpf oeq, %354, %359 : vector<8x256xf32>
    %361 = vector.broadcast %358 : vector<8x1xi1> to vector<8x256xi1>
    %362 = arith.andi %360, %361 : vector<8x256xi1>
    %c256_i32_68 = arith.constant 256 : i32
    %363 = vector.shape_cast %1 : vector<1x256xi32> to vector<1x256xi32>
    %364 = vector.broadcast %363 : vector<1x256xi32> to vector<8x256xi32>
    %365 = vector.broadcast %c256_i32_68 : i32 to vector<8x256xi32>
    %366 = arith.select %362, %364, %365 : vector<8x256xi1>, vector<8x256xi32>
    %cst_69 = arith.constant dense<2147483647> : vector<8xi32>
    %367 = vector.multi_reduction <minsi>, %366, %cst_69 [1] : vector<8x256xi32> to vector<8xi32>
    %368 = vector.shape_cast %367 : vector<8xi32> to vector<8x1xi32>
    %369 = vector.broadcast %1 : vector<1x256xi32> to vector<8x256xi32>
    %370 = vector.broadcast %368 : vector<8x1xi32> to vector<8x256xi32>
    %371 = arith.cmpi eq, %369, %370 : vector<8x256xi32>
    %372 = vector.broadcast %358 : vector<8x1xi1> to vector<8x256xi1>
    %373 = arith.andi %371, %372 : vector<8x256xi1>
    %374 = arith.ori %342, %373 : vector<8x256xi1>
    %375 = vector.broadcast %1 : vector<1x256xi32> to vector<8x256xi32>
    %376 = vector.broadcast %368 : vector<8x1xi32> to vector<8x256xi32>
    %377 = arith.subi %375, %376 : vector<8x256xi32>
    %c0_i32_70 = arith.constant 0 : i32
    %378 = vector.broadcast %c0_i32_70 : i32 to vector<8x256xi32>
    %379 = arith.subi %378, %377 : vector<8x256xi32>
    %380 = arith.maxsi %377, %379 : vector<8x256xi32>
    %c10_i32_71 = arith.constant 10 : i32
    %381 = vector.broadcast %c10_i32_71 : i32 to vector<8x256xi32>
    %382 = arith.cmpi slt, %380, %381 : vector<8x256xi32>
    %383 = vector.broadcast %358 : vector<8x1xi1> to vector<8x256xi1>
    %384 = arith.andi %383, %382 : vector<8x256xi1>
    %385 = vector.broadcast %cst_5 : f32 to vector<8x256xf32>
    %386 = arith.select %384, %385, %354 : vector<8x256xi1>, vector<8x256xf32>
    %c11_i32 = arith.constant 11 : i32
    %cst_72 = arith.constant dense<0xFF800000> : vector<8xf32>
    %387 = vector.multi_reduction <maximumf>, %386, %cst_72 [1] : vector<8x256xf32> to vector<8xf32>
    %388 = vector.shape_cast %387 : vector<8xf32> to vector<8x1xf32>
    %cst_73 = arith.constant 0.000000e+00 : f32
    %389 = vector.broadcast %cst_73 : f32 to vector<8x1xf32>
    %390 = arith.cmpf oge, %388, %389 : vector<8x1xf32>
    %391 = vector.broadcast %388 : vector<8x1xf32> to vector<8x256xf32>
    %392 = arith.cmpf oeq, %386, %391 : vector<8x256xf32>
    %393 = vector.broadcast %390 : vector<8x1xi1> to vector<8x256xi1>
    %394 = arith.andi %392, %393 : vector<8x256xi1>
    %c256_i32_74 = arith.constant 256 : i32
    %395 = vector.shape_cast %1 : vector<1x256xi32> to vector<1x256xi32>
    %396 = vector.broadcast %395 : vector<1x256xi32> to vector<8x256xi32>
    %397 = vector.broadcast %c256_i32_74 : i32 to vector<8x256xi32>
    %398 = arith.select %394, %396, %397 : vector<8x256xi1>, vector<8x256xi32>
    %cst_75 = arith.constant dense<2147483647> : vector<8xi32>
    %399 = vector.multi_reduction <minsi>, %398, %cst_75 [1] : vector<8x256xi32> to vector<8xi32>
    %400 = vector.shape_cast %399 : vector<8xi32> to vector<8x1xi32>
    %401 = vector.broadcast %1 : vector<1x256xi32> to vector<8x256xi32>
    %402 = vector.broadcast %400 : vector<8x1xi32> to vector<8x256xi32>
    %403 = arith.cmpi eq, %401, %402 : vector<8x256xi32>
    %404 = vector.broadcast %390 : vector<8x1xi1> to vector<8x256xi1>
    %405 = arith.andi %403, %404 : vector<8x256xi1>
    %406 = arith.ori %374, %405 : vector<8x256xi1>
    %407 = vector.broadcast %1 : vector<1x256xi32> to vector<8x256xi32>
    %408 = vector.broadcast %400 : vector<8x1xi32> to vector<8x256xi32>
    %409 = arith.subi %407, %408 : vector<8x256xi32>
    %c0_i32_76 = arith.constant 0 : i32
    %410 = vector.broadcast %c0_i32_76 : i32 to vector<8x256xi32>
    %411 = arith.subi %410, %409 : vector<8x256xi32>
    %412 = arith.maxsi %409, %411 : vector<8x256xi32>
    %c10_i32_77 = arith.constant 10 : i32
    %413 = vector.broadcast %c10_i32_77 : i32 to vector<8x256xi32>
    %414 = arith.cmpi slt, %412, %413 : vector<8x256xi32>
    %415 = vector.broadcast %390 : vector<8x1xi1> to vector<8x256xi1>
    %416 = arith.andi %415, %414 : vector<8x256xi1>
    %417 = vector.broadcast %cst_5 : f32 to vector<8x256xf32>
    %418 = arith.select %416, %417, %386 : vector<8x256xi1>, vector<8x256xf32>
    %c12_i32 = arith.constant 12 : i32
    %cst_78 = arith.constant dense<0xFF800000> : vector<8xf32>
    %419 = vector.multi_reduction <maximumf>, %418, %cst_78 [1] : vector<8x256xf32> to vector<8xf32>
    %420 = vector.shape_cast %419 : vector<8xf32> to vector<8x1xf32>
    %cst_79 = arith.constant 0.000000e+00 : f32
    %421 = vector.broadcast %cst_79 : f32 to vector<8x1xf32>
    %422 = arith.cmpf oge, %420, %421 : vector<8x1xf32>
    %423 = vector.broadcast %420 : vector<8x1xf32> to vector<8x256xf32>
    %424 = arith.cmpf oeq, %418, %423 : vector<8x256xf32>
    %425 = vector.broadcast %422 : vector<8x1xi1> to vector<8x256xi1>
    %426 = arith.andi %424, %425 : vector<8x256xi1>
    %c256_i32_80 = arith.constant 256 : i32
    %427 = vector.shape_cast %1 : vector<1x256xi32> to vector<1x256xi32>
    %428 = vector.broadcast %427 : vector<1x256xi32> to vector<8x256xi32>
    %429 = vector.broadcast %c256_i32_80 : i32 to vector<8x256xi32>
    %430 = arith.select %426, %428, %429 : vector<8x256xi1>, vector<8x256xi32>
    %cst_81 = arith.constant dense<2147483647> : vector<8xi32>
    %431 = vector.multi_reduction <minsi>, %430, %cst_81 [1] : vector<8x256xi32> to vector<8xi32>
    %432 = vector.shape_cast %431 : vector<8xi32> to vector<8x1xi32>
    %433 = vector.broadcast %1 : vector<1x256xi32> to vector<8x256xi32>
    %434 = vector.broadcast %432 : vector<8x1xi32> to vector<8x256xi32>
    %435 = arith.cmpi eq, %433, %434 : vector<8x256xi32>
    %436 = vector.broadcast %422 : vector<8x1xi1> to vector<8x256xi1>
    %437 = arith.andi %435, %436 : vector<8x256xi1>
    %438 = arith.ori %406, %437 : vector<8x256xi1>
    %439 = vector.broadcast %1 : vector<1x256xi32> to vector<8x256xi32>
    %440 = vector.broadcast %432 : vector<8x1xi32> to vector<8x256xi32>
    %441 = arith.subi %439, %440 : vector<8x256xi32>
    %c0_i32_82 = arith.constant 0 : i32
    %442 = vector.broadcast %c0_i32_82 : i32 to vector<8x256xi32>
    %443 = arith.subi %442, %441 : vector<8x256xi32>
    %444 = arith.maxsi %441, %443 : vector<8x256xi32>
    %c10_i32_83 = arith.constant 10 : i32
    %445 = vector.broadcast %c10_i32_83 : i32 to vector<8x256xi32>
    %446 = arith.cmpi slt, %444, %445 : vector<8x256xi32>
    %447 = vector.broadcast %422 : vector<8x1xi1> to vector<8x256xi1>
    %448 = arith.andi %447, %446 : vector<8x256xi1>
    %449 = vector.broadcast %cst_5 : f32 to vector<8x256xf32>
    %450 = arith.select %448, %449, %418 : vector<8x256xi1>, vector<8x256xf32>
    %c13_i32 = arith.constant 13 : i32
    %cst_84 = arith.constant dense<0xFF800000> : vector<8xf32>
    %451 = vector.multi_reduction <maximumf>, %450, %cst_84 [1] : vector<8x256xf32> to vector<8xf32>
    %452 = vector.shape_cast %451 : vector<8xf32> to vector<8x1xf32>
    %cst_85 = arith.constant 0.000000e+00 : f32
    %453 = vector.broadcast %cst_85 : f32 to vector<8x1xf32>
    %454 = arith.cmpf oge, %452, %453 : vector<8x1xf32>
    %455 = vector.broadcast %452 : vector<8x1xf32> to vector<8x256xf32>
    %456 = arith.cmpf oeq, %450, %455 : vector<8x256xf32>
    %457 = vector.broadcast %454 : vector<8x1xi1> to vector<8x256xi1>
    %458 = arith.andi %456, %457 : vector<8x256xi1>
    %c256_i32_86 = arith.constant 256 : i32
    %459 = vector.shape_cast %1 : vector<1x256xi32> to vector<1x256xi32>
    %460 = vector.broadcast %459 : vector<1x256xi32> to vector<8x256xi32>
    %461 = vector.broadcast %c256_i32_86 : i32 to vector<8x256xi32>
    %462 = arith.select %458, %460, %461 : vector<8x256xi1>, vector<8x256xi32>
    %cst_87 = arith.constant dense<2147483647> : vector<8xi32>
    %463 = vector.multi_reduction <minsi>, %462, %cst_87 [1] : vector<8x256xi32> to vector<8xi32>
    %464 = vector.shape_cast %463 : vector<8xi32> to vector<8x1xi32>
    %465 = vector.broadcast %1 : vector<1x256xi32> to vector<8x256xi32>
    %466 = vector.broadcast %464 : vector<8x1xi32> to vector<8x256xi32>
    %467 = arith.cmpi eq, %465, %466 : vector<8x256xi32>
    %468 = vector.broadcast %454 : vector<8x1xi1> to vector<8x256xi1>
    %469 = arith.andi %467, %468 : vector<8x256xi1>
    %470 = arith.ori %438, %469 : vector<8x256xi1>
    %471 = vector.broadcast %1 : vector<1x256xi32> to vector<8x256xi32>
    %472 = vector.broadcast %464 : vector<8x1xi32> to vector<8x256xi32>
    %473 = arith.subi %471, %472 : vector<8x256xi32>
    %c0_i32_88 = arith.constant 0 : i32
    %474 = vector.broadcast %c0_i32_88 : i32 to vector<8x256xi32>
    %475 = arith.subi %474, %473 : vector<8x256xi32>
    %476 = arith.maxsi %473, %475 : vector<8x256xi32>
    %c10_i32_89 = arith.constant 10 : i32
    %477 = vector.broadcast %c10_i32_89 : i32 to vector<8x256xi32>
    %478 = arith.cmpi slt, %476, %477 : vector<8x256xi32>
    %479 = vector.broadcast %454 : vector<8x1xi1> to vector<8x256xi1>
    %480 = arith.andi %479, %478 : vector<8x256xi1>
    %481 = vector.broadcast %cst_5 : f32 to vector<8x256xf32>
    %482 = arith.select %480, %481, %450 : vector<8x256xi1>, vector<8x256xf32>
    %c14_i32 = arith.constant 14 : i32
    %cst_90 = arith.constant dense<0xFF800000> : vector<8xf32>
    %483 = vector.multi_reduction <maximumf>, %482, %cst_90 [1] : vector<8x256xf32> to vector<8xf32>
    %484 = vector.shape_cast %483 : vector<8xf32> to vector<8x1xf32>
    %cst_91 = arith.constant 0.000000e+00 : f32
    %485 = vector.broadcast %cst_91 : f32 to vector<8x1xf32>
    %486 = arith.cmpf oge, %484, %485 : vector<8x1xf32>
    %487 = vector.broadcast %484 : vector<8x1xf32> to vector<8x256xf32>
    %488 = arith.cmpf oeq, %482, %487 : vector<8x256xf32>
    %489 = vector.broadcast %486 : vector<8x1xi1> to vector<8x256xi1>
    %490 = arith.andi %488, %489 : vector<8x256xi1>
    %c256_i32_92 = arith.constant 256 : i32
    %491 = vector.shape_cast %1 : vector<1x256xi32> to vector<1x256xi32>
    %492 = vector.broadcast %491 : vector<1x256xi32> to vector<8x256xi32>
    %493 = vector.broadcast %c256_i32_92 : i32 to vector<8x256xi32>
    %494 = arith.select %490, %492, %493 : vector<8x256xi1>, vector<8x256xi32>
    %cst_93 = arith.constant dense<2147483647> : vector<8xi32>
    %495 = vector.multi_reduction <minsi>, %494, %cst_93 [1] : vector<8x256xi32> to vector<8xi32>
    %496 = vector.shape_cast %495 : vector<8xi32> to vector<8x1xi32>
    %497 = vector.broadcast %1 : vector<1x256xi32> to vector<8x256xi32>
    %498 = vector.broadcast %496 : vector<8x1xi32> to vector<8x256xi32>
    %499 = arith.cmpi eq, %497, %498 : vector<8x256xi32>
    %500 = vector.broadcast %486 : vector<8x1xi1> to vector<8x256xi1>
    %501 = arith.andi %499, %500 : vector<8x256xi1>
    %502 = arith.ori %470, %501 : vector<8x256xi1>
    %503 = vector.broadcast %1 : vector<1x256xi32> to vector<8x256xi32>
    %504 = vector.broadcast %496 : vector<8x1xi32> to vector<8x256xi32>
    %505 = arith.subi %503, %504 : vector<8x256xi32>
    %c0_i32_94 = arith.constant 0 : i32
    %506 = vector.broadcast %c0_i32_94 : i32 to vector<8x256xi32>
    %507 = arith.subi %506, %505 : vector<8x256xi32>
    %508 = arith.maxsi %505, %507 : vector<8x256xi32>
    %c10_i32_95 = arith.constant 10 : i32
    %509 = vector.broadcast %c10_i32_95 : i32 to vector<8x256xi32>
    %510 = arith.cmpi slt, %508, %509 : vector<8x256xi32>
    %511 = vector.broadcast %486 : vector<8x1xi1> to vector<8x256xi1>
    %512 = arith.andi %511, %510 : vector<8x256xi1>
    %513 = vector.broadcast %cst_5 : f32 to vector<8x256xf32>
    %514 = arith.select %512, %513, %482 : vector<8x256xi1>, vector<8x256xf32>
    %c15_i32 = arith.constant 15 : i32
    %cst_96 = arith.constant dense<0xFF800000> : vector<8xf32>
    %515 = vector.multi_reduction <maximumf>, %514, %cst_96 [1] : vector<8x256xf32> to vector<8xf32>
    %516 = vector.shape_cast %515 : vector<8xf32> to vector<8x1xf32>
    %cst_97 = arith.constant 0.000000e+00 : f32
    %517 = vector.broadcast %cst_97 : f32 to vector<8x1xf32>
    %518 = arith.cmpf oge, %516, %517 : vector<8x1xf32>
    %519 = vector.broadcast %516 : vector<8x1xf32> to vector<8x256xf32>
    %520 = arith.cmpf oeq, %514, %519 : vector<8x256xf32>
    %521 = vector.broadcast %518 : vector<8x1xi1> to vector<8x256xi1>
    %522 = arith.andi %520, %521 : vector<8x256xi1>
    %c256_i32_98 = arith.constant 256 : i32
    %523 = vector.shape_cast %1 : vector<1x256xi32> to vector<1x256xi32>
    %524 = vector.broadcast %523 : vector<1x256xi32> to vector<8x256xi32>
    %525 = vector.broadcast %c256_i32_98 : i32 to vector<8x256xi32>
    %526 = arith.select %522, %524, %525 : vector<8x256xi1>, vector<8x256xi32>
    %cst_99 = arith.constant dense<2147483647> : vector<8xi32>
    %527 = vector.multi_reduction <minsi>, %526, %cst_99 [1] : vector<8x256xi32> to vector<8xi32>
    %528 = vector.shape_cast %527 : vector<8xi32> to vector<8x1xi32>
    %529 = vector.broadcast %1 : vector<1x256xi32> to vector<8x256xi32>
    %530 = vector.broadcast %528 : vector<8x1xi32> to vector<8x256xi32>
    %531 = arith.cmpi eq, %529, %530 : vector<8x256xi32>
    %532 = vector.broadcast %518 : vector<8x1xi1> to vector<8x256xi1>
    %533 = arith.andi %531, %532 : vector<8x256xi1>
    %534 = arith.ori %502, %533 : vector<8x256xi1>
    %535 = vector.broadcast %1 : vector<1x256xi32> to vector<8x256xi32>
    %536 = vector.broadcast %528 : vector<8x1xi32> to vector<8x256xi32>
    %537 = arith.subi %535, %536 : vector<8x256xi32>
    %c0_i32_100 = arith.constant 0 : i32
    %538 = vector.broadcast %c0_i32_100 : i32 to vector<8x256xi32>
    %539 = arith.subi %538, %537 : vector<8x256xi32>
    %540 = arith.maxsi %537, %539 : vector<8x256xi32>
    %c10_i32_101 = arith.constant 10 : i32
    %541 = vector.broadcast %c10_i32_101 : i32 to vector<8x256xi32>
    %542 = arith.cmpi slt, %540, %541 : vector<8x256xi32>
    %543 = vector.broadcast %518 : vector<8x1xi1> to vector<8x256xi1>
    %544 = arith.andi %543, %542 : vector<8x256xi1>
    %545 = vector.broadcast %cst_5 : f32 to vector<8x256xf32>
    %546 = arith.select %544, %545, %514 : vector<8x256xi1>, vector<8x256xf32>
    %c16_i32 = arith.constant 16 : i32
    %cst_102 = arith.constant dense<0xFF800000> : vector<8xf32>
    %547 = vector.multi_reduction <maximumf>, %546, %cst_102 [1] : vector<8x256xf32> to vector<8xf32>
    %548 = vector.shape_cast %547 : vector<8xf32> to vector<8x1xf32>
    %cst_103 = arith.constant 0.000000e+00 : f32
    %549 = vector.broadcast %cst_103 : f32 to vector<8x1xf32>
    %550 = arith.cmpf oge, %548, %549 : vector<8x1xf32>
    %551 = vector.broadcast %548 : vector<8x1xf32> to vector<8x256xf32>
    %552 = arith.cmpf oeq, %546, %551 : vector<8x256xf32>
    %553 = vector.broadcast %550 : vector<8x1xi1> to vector<8x256xi1>
    %554 = arith.andi %552, %553 : vector<8x256xi1>
    %c256_i32_104 = arith.constant 256 : i32
    %555 = vector.shape_cast %1 : vector<1x256xi32> to vector<1x256xi32>
    %556 = vector.broadcast %555 : vector<1x256xi32> to vector<8x256xi32>
    %557 = vector.broadcast %c256_i32_104 : i32 to vector<8x256xi32>
    %558 = arith.select %554, %556, %557 : vector<8x256xi1>, vector<8x256xi32>
    %cst_105 = arith.constant dense<2147483647> : vector<8xi32>
    %559 = vector.multi_reduction <minsi>, %558, %cst_105 [1] : vector<8x256xi32> to vector<8xi32>
    %560 = vector.shape_cast %559 : vector<8xi32> to vector<8x1xi32>
    %561 = vector.broadcast %1 : vector<1x256xi32> to vector<8x256xi32>
    %562 = vector.broadcast %560 : vector<8x1xi32> to vector<8x256xi32>
    %563 = arith.cmpi eq, %561, %562 : vector<8x256xi32>
    %564 = vector.broadcast %550 : vector<8x1xi1> to vector<8x256xi1>
    %565 = arith.andi %563, %564 : vector<8x256xi1>
    %566 = arith.ori %534, %565 : vector<8x256xi1>
    %567 = vector.broadcast %1 : vector<1x256xi32> to vector<8x256xi32>
    %568 = vector.broadcast %560 : vector<8x1xi32> to vector<8x256xi32>
    %569 = arith.subi %567, %568 : vector<8x256xi32>
    %c0_i32_106 = arith.constant 0 : i32
    %570 = vector.broadcast %c0_i32_106 : i32 to vector<8x256xi32>
    %571 = arith.subi %570, %569 : vector<8x256xi32>
    %572 = arith.maxsi %569, %571 : vector<8x256xi32>
    %c10_i32_107 = arith.constant 10 : i32
    %573 = vector.broadcast %c10_i32_107 : i32 to vector<8x256xi32>
    %574 = arith.cmpi slt, %572, %573 : vector<8x256xi32>
    %575 = vector.broadcast %550 : vector<8x1xi1> to vector<8x256xi1>
    %576 = arith.andi %575, %574 : vector<8x256xi1>
    %577 = vector.broadcast %cst_5 : f32 to vector<8x256xf32>
    %578 = arith.select %576, %577, %546 : vector<8x256xi1>, vector<8x256xf32>
    %c17_i32 = arith.constant 17 : i32
    %cst_108 = arith.constant dense<0xFF800000> : vector<8xf32>
    %579 = vector.multi_reduction <maximumf>, %578, %cst_108 [1] : vector<8x256xf32> to vector<8xf32>
    %580 = vector.shape_cast %579 : vector<8xf32> to vector<8x1xf32>
    %cst_109 = arith.constant 0.000000e+00 : f32
    %581 = vector.broadcast %cst_109 : f32 to vector<8x1xf32>
    %582 = arith.cmpf oge, %580, %581 : vector<8x1xf32>
    %583 = vector.broadcast %580 : vector<8x1xf32> to vector<8x256xf32>
    %584 = arith.cmpf oeq, %578, %583 : vector<8x256xf32>
    %585 = vector.broadcast %582 : vector<8x1xi1> to vector<8x256xi1>
    %586 = arith.andi %584, %585 : vector<8x256xi1>
    %c256_i32_110 = arith.constant 256 : i32
    %587 = vector.shape_cast %1 : vector<1x256xi32> to vector<1x256xi32>
    %588 = vector.broadcast %587 : vector<1x256xi32> to vector<8x256xi32>
    %589 = vector.broadcast %c256_i32_110 : i32 to vector<8x256xi32>
    %590 = arith.select %586, %588, %589 : vector<8x256xi1>, vector<8x256xi32>
    %cst_111 = arith.constant dense<2147483647> : vector<8xi32>
    %591 = vector.multi_reduction <minsi>, %590, %cst_111 [1] : vector<8x256xi32> to vector<8xi32>
    %592 = vector.shape_cast %591 : vector<8xi32> to vector<8x1xi32>
    %593 = vector.broadcast %1 : vector<1x256xi32> to vector<8x256xi32>
    %594 = vector.broadcast %592 : vector<8x1xi32> to vector<8x256xi32>
    %595 = arith.cmpi eq, %593, %594 : vector<8x256xi32>
    %596 = vector.broadcast %582 : vector<8x1xi1> to vector<8x256xi1>
    %597 = arith.andi %595, %596 : vector<8x256xi1>
    %598 = arith.ori %566, %597 : vector<8x256xi1>
    %599 = vector.broadcast %1 : vector<1x256xi32> to vector<8x256xi32>
    %600 = vector.broadcast %592 : vector<8x1xi32> to vector<8x256xi32>
    %601 = arith.subi %599, %600 : vector<8x256xi32>
    %c0_i32_112 = arith.constant 0 : i32
    %602 = vector.broadcast %c0_i32_112 : i32 to vector<8x256xi32>
    %603 = arith.subi %602, %601 : vector<8x256xi32>
    %604 = arith.maxsi %601, %603 : vector<8x256xi32>
    %c10_i32_113 = arith.constant 10 : i32
    %605 = vector.broadcast %c10_i32_113 : i32 to vector<8x256xi32>
    %606 = arith.cmpi slt, %604, %605 : vector<8x256xi32>
    %607 = vector.broadcast %582 : vector<8x1xi1> to vector<8x256xi1>
    %608 = arith.andi %607, %606 : vector<8x256xi1>
    %609 = vector.broadcast %cst_5 : f32 to vector<8x256xf32>
    %610 = arith.select %608, %609, %578 : vector<8x256xi1>, vector<8x256xf32>
    %c18_i32 = arith.constant 18 : i32
    %cst_114 = arith.constant dense<0xFF800000> : vector<8xf32>
    %611 = vector.multi_reduction <maximumf>, %610, %cst_114 [1] : vector<8x256xf32> to vector<8xf32>
    %612 = vector.shape_cast %611 : vector<8xf32> to vector<8x1xf32>
    %cst_115 = arith.constant 0.000000e+00 : f32
    %613 = vector.broadcast %cst_115 : f32 to vector<8x1xf32>
    %614 = arith.cmpf oge, %612, %613 : vector<8x1xf32>
    %615 = vector.broadcast %612 : vector<8x1xf32> to vector<8x256xf32>
    %616 = arith.cmpf oeq, %610, %615 : vector<8x256xf32>
    %617 = vector.broadcast %614 : vector<8x1xi1> to vector<8x256xi1>
    %618 = arith.andi %616, %617 : vector<8x256xi1>
    %c256_i32_116 = arith.constant 256 : i32
    %619 = vector.shape_cast %1 : vector<1x256xi32> to vector<1x256xi32>
    %620 = vector.broadcast %619 : vector<1x256xi32> to vector<8x256xi32>
    %621 = vector.broadcast %c256_i32_116 : i32 to vector<8x256xi32>
    %622 = arith.select %618, %620, %621 : vector<8x256xi1>, vector<8x256xi32>
    %cst_117 = arith.constant dense<2147483647> : vector<8xi32>
    %623 = vector.multi_reduction <minsi>, %622, %cst_117 [1] : vector<8x256xi32> to vector<8xi32>
    %624 = vector.shape_cast %623 : vector<8xi32> to vector<8x1xi32>
    %625 = vector.broadcast %1 : vector<1x256xi32> to vector<8x256xi32>
    %626 = vector.broadcast %624 : vector<8x1xi32> to vector<8x256xi32>
    %627 = arith.cmpi eq, %625, %626 : vector<8x256xi32>
    %628 = vector.broadcast %614 : vector<8x1xi1> to vector<8x256xi1>
    %629 = arith.andi %627, %628 : vector<8x256xi1>
    %630 = arith.ori %598, %629 : vector<8x256xi1>
    %631 = vector.broadcast %1 : vector<1x256xi32> to vector<8x256xi32>
    %632 = vector.broadcast %624 : vector<8x1xi32> to vector<8x256xi32>
    %633 = arith.subi %631, %632 : vector<8x256xi32>
    %c0_i32_118 = arith.constant 0 : i32
    %634 = vector.broadcast %c0_i32_118 : i32 to vector<8x256xi32>
    %635 = arith.subi %634, %633 : vector<8x256xi32>
    %636 = arith.maxsi %633, %635 : vector<8x256xi32>
    %c10_i32_119 = arith.constant 10 : i32
    %637 = vector.broadcast %c10_i32_119 : i32 to vector<8x256xi32>
    %638 = arith.cmpi slt, %636, %637 : vector<8x256xi32>
    %639 = vector.broadcast %614 : vector<8x1xi1> to vector<8x256xi1>
    %640 = arith.andi %639, %638 : vector<8x256xi1>
    %641 = vector.broadcast %cst_5 : f32 to vector<8x256xf32>
    %642 = arith.select %640, %641, %610 : vector<8x256xi1>, vector<8x256xf32>
    %c19_i32 = arith.constant 19 : i32
    %cst_120 = arith.constant dense<0xFF800000> : vector<8xf32>
    %643 = vector.multi_reduction <maximumf>, %642, %cst_120 [1] : vector<8x256xf32> to vector<8xf32>
    %644 = vector.shape_cast %643 : vector<8xf32> to vector<8x1xf32>
    %cst_121 = arith.constant 0.000000e+00 : f32
    %645 = vector.broadcast %cst_121 : f32 to vector<8x1xf32>
    %646 = arith.cmpf oge, %644, %645 : vector<8x1xf32>
    %647 = vector.broadcast %644 : vector<8x1xf32> to vector<8x256xf32>
    %648 = arith.cmpf oeq, %642, %647 : vector<8x256xf32>
    %649 = vector.broadcast %646 : vector<8x1xi1> to vector<8x256xi1>
    %650 = arith.andi %648, %649 : vector<8x256xi1>
    %c256_i32_122 = arith.constant 256 : i32
    %651 = vector.shape_cast %1 : vector<1x256xi32> to vector<1x256xi32>
    %652 = vector.broadcast %651 : vector<1x256xi32> to vector<8x256xi32>
    %653 = vector.broadcast %c256_i32_122 : i32 to vector<8x256xi32>
    %654 = arith.select %650, %652, %653 : vector<8x256xi1>, vector<8x256xi32>
    %cst_123 = arith.constant dense<2147483647> : vector<8xi32>
    %655 = vector.multi_reduction <minsi>, %654, %cst_123 [1] : vector<8x256xi32> to vector<8xi32>
    %656 = vector.shape_cast %655 : vector<8xi32> to vector<8x1xi32>
    %657 = vector.broadcast %1 : vector<1x256xi32> to vector<8x256xi32>
    %658 = vector.broadcast %656 : vector<8x1xi32> to vector<8x256xi32>
    %659 = arith.cmpi eq, %657, %658 : vector<8x256xi32>
    %660 = vector.broadcast %646 : vector<8x1xi1> to vector<8x256xi1>
    %661 = arith.andi %659, %660 : vector<8x256xi1>
    %662 = arith.ori %630, %661 : vector<8x256xi1>
    %663 = vector.broadcast %1 : vector<1x256xi32> to vector<8x256xi32>
    %664 = vector.broadcast %656 : vector<8x1xi32> to vector<8x256xi32>
    %665 = arith.subi %663, %664 : vector<8x256xi32>
    %c0_i32_124 = arith.constant 0 : i32
    %666 = vector.broadcast %c0_i32_124 : i32 to vector<8x256xi32>
    %667 = arith.subi %666, %665 : vector<8x256xi32>
    %668 = arith.maxsi %665, %667 : vector<8x256xi32>
    %c10_i32_125 = arith.constant 10 : i32
    %669 = vector.broadcast %c10_i32_125 : i32 to vector<8x256xi32>
    %670 = arith.cmpi slt, %668, %669 : vector<8x256xi32>
    %671 = vector.broadcast %646 : vector<8x1xi1> to vector<8x256xi1>
    %672 = arith.andi %671, %670 : vector<8x256xi1>
    %673 = vector.broadcast %cst_5 : f32 to vector<8x256xf32>
    %674 = arith.select %672, %673, %642 : vector<8x256xi1>, vector<8x256xf32>
    %c20_i32 = arith.constant 20 : i32
    %cst_126 = arith.constant dense<0xFF800000> : vector<8xf32>
    %675 = vector.multi_reduction <maximumf>, %674, %cst_126 [1] : vector<8x256xf32> to vector<8xf32>
    %676 = vector.shape_cast %675 : vector<8xf32> to vector<8x1xf32>
    %cst_127 = arith.constant 0.000000e+00 : f32
    %677 = vector.broadcast %cst_127 : f32 to vector<8x1xf32>
    %678 = arith.cmpf oge, %676, %677 : vector<8x1xf32>
    %679 = vector.broadcast %676 : vector<8x1xf32> to vector<8x256xf32>
    %680 = arith.cmpf oeq, %674, %679 : vector<8x256xf32>
    %681 = vector.broadcast %678 : vector<8x1xi1> to vector<8x256xi1>
    %682 = arith.andi %680, %681 : vector<8x256xi1>
    %c256_i32_128 = arith.constant 256 : i32
    %683 = vector.shape_cast %1 : vector<1x256xi32> to vector<1x256xi32>
    %684 = vector.broadcast %683 : vector<1x256xi32> to vector<8x256xi32>
    %685 = vector.broadcast %c256_i32_128 : i32 to vector<8x256xi32>
    %686 = arith.select %682, %684, %685 : vector<8x256xi1>, vector<8x256xi32>
    %cst_129 = arith.constant dense<2147483647> : vector<8xi32>
    %687 = vector.multi_reduction <minsi>, %686, %cst_129 [1] : vector<8x256xi32> to vector<8xi32>
    %688 = vector.shape_cast %687 : vector<8xi32> to vector<8x1xi32>
    %689 = vector.broadcast %1 : vector<1x256xi32> to vector<8x256xi32>
    %690 = vector.broadcast %688 : vector<8x1xi32> to vector<8x256xi32>
    %691 = arith.cmpi eq, %689, %690 : vector<8x256xi32>
    %692 = vector.broadcast %678 : vector<8x1xi1> to vector<8x256xi1>
    %693 = arith.andi %691, %692 : vector<8x256xi1>
    %694 = arith.ori %662, %693 : vector<8x256xi1>
    %695 = vector.broadcast %1 : vector<1x256xi32> to vector<8x256xi32>
    %696 = vector.broadcast %688 : vector<8x1xi32> to vector<8x256xi32>
    %697 = arith.subi %695, %696 : vector<8x256xi32>
    %c0_i32_130 = arith.constant 0 : i32
    %698 = vector.broadcast %c0_i32_130 : i32 to vector<8x256xi32>
    %699 = arith.subi %698, %697 : vector<8x256xi32>
    %700 = arith.maxsi %697, %699 : vector<8x256xi32>
    %c10_i32_131 = arith.constant 10 : i32
    %701 = vector.broadcast %c10_i32_131 : i32 to vector<8x256xi32>
    %702 = arith.cmpi slt, %700, %701 : vector<8x256xi32>
    %703 = vector.broadcast %678 : vector<8x1xi1> to vector<8x256xi1>
    %704 = arith.andi %703, %702 : vector<8x256xi1>
    %705 = vector.broadcast %cst_5 : f32 to vector<8x256xf32>
    %706 = arith.select %704, %705, %674 : vector<8x256xi1>, vector<8x256xf32>
    %c21_i32 = arith.constant 21 : i32
    %cst_132 = arith.constant dense<0xFF800000> : vector<8xf32>
    %707 = vector.multi_reduction <maximumf>, %706, %cst_132 [1] : vector<8x256xf32> to vector<8xf32>
    %708 = vector.shape_cast %707 : vector<8xf32> to vector<8x1xf32>
    %cst_133 = arith.constant 0.000000e+00 : f32
    %709 = vector.broadcast %cst_133 : f32 to vector<8x1xf32>
    %710 = arith.cmpf oge, %708, %709 : vector<8x1xf32>
    %711 = vector.broadcast %708 : vector<8x1xf32> to vector<8x256xf32>
    %712 = arith.cmpf oeq, %706, %711 : vector<8x256xf32>
    %713 = vector.broadcast %710 : vector<8x1xi1> to vector<8x256xi1>
    %714 = arith.andi %712, %713 : vector<8x256xi1>
    %c256_i32_134 = arith.constant 256 : i32
    %715 = vector.shape_cast %1 : vector<1x256xi32> to vector<1x256xi32>
    %716 = vector.broadcast %715 : vector<1x256xi32> to vector<8x256xi32>
    %717 = vector.broadcast %c256_i32_134 : i32 to vector<8x256xi32>
    %718 = arith.select %714, %716, %717 : vector<8x256xi1>, vector<8x256xi32>
    %cst_135 = arith.constant dense<2147483647> : vector<8xi32>
    %719 = vector.multi_reduction <minsi>, %718, %cst_135 [1] : vector<8x256xi32> to vector<8xi32>
    %720 = vector.shape_cast %719 : vector<8xi32> to vector<8x1xi32>
    %721 = vector.broadcast %1 : vector<1x256xi32> to vector<8x256xi32>
    %722 = vector.broadcast %720 : vector<8x1xi32> to vector<8x256xi32>
    %723 = arith.cmpi eq, %721, %722 : vector<8x256xi32>
    %724 = vector.broadcast %710 : vector<8x1xi1> to vector<8x256xi1>
    %725 = arith.andi %723, %724 : vector<8x256xi1>
    %726 = arith.ori %694, %725 : vector<8x256xi1>
    %727 = vector.broadcast %1 : vector<1x256xi32> to vector<8x256xi32>
    %728 = vector.broadcast %720 : vector<8x1xi32> to vector<8x256xi32>
    %729 = arith.subi %727, %728 : vector<8x256xi32>
    %c0_i32_136 = arith.constant 0 : i32
    %730 = vector.broadcast %c0_i32_136 : i32 to vector<8x256xi32>
    %731 = arith.subi %730, %729 : vector<8x256xi32>
    %732 = arith.maxsi %729, %731 : vector<8x256xi32>
    %c10_i32_137 = arith.constant 10 : i32
    %733 = vector.broadcast %c10_i32_137 : i32 to vector<8x256xi32>
    %734 = arith.cmpi slt, %732, %733 : vector<8x256xi32>
    %735 = vector.broadcast %710 : vector<8x1xi1> to vector<8x256xi1>
    %736 = arith.andi %735, %734 : vector<8x256xi1>
    %737 = vector.broadcast %cst_5 : f32 to vector<8x256xf32>
    %738 = arith.select %736, %737, %706 : vector<8x256xi1>, vector<8x256xf32>
    %c22_i32 = arith.constant 22 : i32
    %cst_138 = arith.constant dense<0xFF800000> : vector<8xf32>
    %739 = vector.multi_reduction <maximumf>, %738, %cst_138 [1] : vector<8x256xf32> to vector<8xf32>
    %740 = vector.shape_cast %739 : vector<8xf32> to vector<8x1xf32>
    %cst_139 = arith.constant 0.000000e+00 : f32
    %741 = vector.broadcast %cst_139 : f32 to vector<8x1xf32>
    %742 = arith.cmpf oge, %740, %741 : vector<8x1xf32>
    %743 = vector.broadcast %740 : vector<8x1xf32> to vector<8x256xf32>
    %744 = arith.cmpf oeq, %738, %743 : vector<8x256xf32>
    %745 = vector.broadcast %742 : vector<8x1xi1> to vector<8x256xi1>
    %746 = arith.andi %744, %745 : vector<8x256xi1>
    %c256_i32_140 = arith.constant 256 : i32
    %747 = vector.shape_cast %1 : vector<1x256xi32> to vector<1x256xi32>
    %748 = vector.broadcast %747 : vector<1x256xi32> to vector<8x256xi32>
    %749 = vector.broadcast %c256_i32_140 : i32 to vector<8x256xi32>
    %750 = arith.select %746, %748, %749 : vector<8x256xi1>, vector<8x256xi32>
    %cst_141 = arith.constant dense<2147483647> : vector<8xi32>
    %751 = vector.multi_reduction <minsi>, %750, %cst_141 [1] : vector<8x256xi32> to vector<8xi32>
    %752 = vector.shape_cast %751 : vector<8xi32> to vector<8x1xi32>
    %753 = vector.broadcast %1 : vector<1x256xi32> to vector<8x256xi32>
    %754 = vector.broadcast %752 : vector<8x1xi32> to vector<8x256xi32>
    %755 = arith.cmpi eq, %753, %754 : vector<8x256xi32>
    %756 = vector.broadcast %742 : vector<8x1xi1> to vector<8x256xi1>
    %757 = arith.andi %755, %756 : vector<8x256xi1>
    %758 = arith.ori %726, %757 : vector<8x256xi1>
    %759 = vector.broadcast %1 : vector<1x256xi32> to vector<8x256xi32>
    %760 = vector.broadcast %752 : vector<8x1xi32> to vector<8x256xi32>
    %761 = arith.subi %759, %760 : vector<8x256xi32>
    %c0_i32_142 = arith.constant 0 : i32
    %762 = vector.broadcast %c0_i32_142 : i32 to vector<8x256xi32>
    %763 = arith.subi %762, %761 : vector<8x256xi32>
    %764 = arith.maxsi %761, %763 : vector<8x256xi32>
    %c10_i32_143 = arith.constant 10 : i32
    %765 = vector.broadcast %c10_i32_143 : i32 to vector<8x256xi32>
    %766 = arith.cmpi slt, %764, %765 : vector<8x256xi32>
    %767 = vector.broadcast %742 : vector<8x1xi1> to vector<8x256xi1>
    %768 = arith.andi %767, %766 : vector<8x256xi1>
    %769 = vector.broadcast %cst_5 : f32 to vector<8x256xf32>
    %770 = arith.select %768, %769, %738 : vector<8x256xi1>, vector<8x256xf32>
    %c23_i32 = arith.constant 23 : i32
    %cst_144 = arith.constant dense<0xFF800000> : vector<8xf32>
    %771 = vector.multi_reduction <maximumf>, %770, %cst_144 [1] : vector<8x256xf32> to vector<8xf32>
    %772 = vector.shape_cast %771 : vector<8xf32> to vector<8x1xf32>
    %cst_145 = arith.constant 0.000000e+00 : f32
    %773 = vector.broadcast %cst_145 : f32 to vector<8x1xf32>
    %774 = arith.cmpf oge, %772, %773 : vector<8x1xf32>
    %775 = vector.broadcast %772 : vector<8x1xf32> to vector<8x256xf32>
    %776 = arith.cmpf oeq, %770, %775 : vector<8x256xf32>
    %777 = vector.broadcast %774 : vector<8x1xi1> to vector<8x256xi1>
    %778 = arith.andi %776, %777 : vector<8x256xi1>
    %c256_i32_146 = arith.constant 256 : i32
    %779 = vector.shape_cast %1 : vector<1x256xi32> to vector<1x256xi32>
    %780 = vector.broadcast %779 : vector<1x256xi32> to vector<8x256xi32>
    %781 = vector.broadcast %c256_i32_146 : i32 to vector<8x256xi32>
    %782 = arith.select %778, %780, %781 : vector<8x256xi1>, vector<8x256xi32>
    %cst_147 = arith.constant dense<2147483647> : vector<8xi32>
    %783 = vector.multi_reduction <minsi>, %782, %cst_147 [1] : vector<8x256xi32> to vector<8xi32>
    %784 = vector.shape_cast %783 : vector<8xi32> to vector<8x1xi32>
    %785 = vector.broadcast %1 : vector<1x256xi32> to vector<8x256xi32>
    %786 = vector.broadcast %784 : vector<8x1xi32> to vector<8x256xi32>
    %787 = arith.cmpi eq, %785, %786 : vector<8x256xi32>
    %788 = vector.broadcast %774 : vector<8x1xi1> to vector<8x256xi1>
    %789 = arith.andi %787, %788 : vector<8x256xi1>
    %790 = arith.ori %758, %789 : vector<8x256xi1>
    %791 = vector.broadcast %1 : vector<1x256xi32> to vector<8x256xi32>
    %792 = vector.broadcast %784 : vector<8x1xi32> to vector<8x256xi32>
    %793 = arith.subi %791, %792 : vector<8x256xi32>
    %c0_i32_148 = arith.constant 0 : i32
    %794 = vector.broadcast %c0_i32_148 : i32 to vector<8x256xi32>
    %795 = arith.subi %794, %793 : vector<8x256xi32>
    %796 = arith.maxsi %793, %795 : vector<8x256xi32>
    %c10_i32_149 = arith.constant 10 : i32
    %797 = vector.broadcast %c10_i32_149 : i32 to vector<8x256xi32>
    %798 = arith.cmpi slt, %796, %797 : vector<8x256xi32>
    %799 = vector.broadcast %774 : vector<8x1xi1> to vector<8x256xi1>
    %800 = arith.andi %799, %798 : vector<8x256xi1>
    %801 = vector.broadcast %cst_5 : f32 to vector<8x256xf32>
    %802 = arith.select %800, %801, %770 : vector<8x256xi1>, vector<8x256xf32>
    %c24_i32 = arith.constant 24 : i32
    %cst_150 = arith.constant dense<0xFF800000> : vector<8xf32>
    %803 = vector.multi_reduction <maximumf>, %802, %cst_150 [1] : vector<8x256xf32> to vector<8xf32>
    %804 = vector.shape_cast %803 : vector<8xf32> to vector<8x1xf32>
    %cst_151 = arith.constant 0.000000e+00 : f32
    %805 = vector.broadcast %cst_151 : f32 to vector<8x1xf32>
    %806 = arith.cmpf oge, %804, %805 : vector<8x1xf32>
    %807 = vector.broadcast %804 : vector<8x1xf32> to vector<8x256xf32>
    %808 = arith.cmpf oeq, %802, %807 : vector<8x256xf32>
    %809 = vector.broadcast %806 : vector<8x1xi1> to vector<8x256xi1>
    %810 = arith.andi %808, %809 : vector<8x256xi1>
    %c256_i32_152 = arith.constant 256 : i32
    %811 = vector.shape_cast %1 : vector<1x256xi32> to vector<1x256xi32>
    %812 = vector.broadcast %811 : vector<1x256xi32> to vector<8x256xi32>
    %813 = vector.broadcast %c256_i32_152 : i32 to vector<8x256xi32>
    %814 = arith.select %810, %812, %813 : vector<8x256xi1>, vector<8x256xi32>
    %cst_153 = arith.constant dense<2147483647> : vector<8xi32>
    %815 = vector.multi_reduction <minsi>, %814, %cst_153 [1] : vector<8x256xi32> to vector<8xi32>
    %816 = vector.shape_cast %815 : vector<8xi32> to vector<8x1xi32>
    %817 = vector.broadcast %1 : vector<1x256xi32> to vector<8x256xi32>
    %818 = vector.broadcast %816 : vector<8x1xi32> to vector<8x256xi32>
    %819 = arith.cmpi eq, %817, %818 : vector<8x256xi32>
    %820 = vector.broadcast %806 : vector<8x1xi1> to vector<8x256xi1>
    %821 = arith.andi %819, %820 : vector<8x256xi1>
    %822 = arith.ori %790, %821 : vector<8x256xi1>
    %823 = vector.broadcast %1 : vector<1x256xi32> to vector<8x256xi32>
    %824 = vector.broadcast %816 : vector<8x1xi32> to vector<8x256xi32>
    %825 = arith.subi %823, %824 : vector<8x256xi32>
    %c0_i32_154 = arith.constant 0 : i32
    %826 = vector.broadcast %c0_i32_154 : i32 to vector<8x256xi32>
    %827 = arith.subi %826, %825 : vector<8x256xi32>
    %828 = arith.maxsi %825, %827 : vector<8x256xi32>
    %c10_i32_155 = arith.constant 10 : i32
    %829 = vector.broadcast %c10_i32_155 : i32 to vector<8x256xi32>
    %830 = arith.cmpi slt, %828, %829 : vector<8x256xi32>
    %831 = vector.broadcast %806 : vector<8x1xi1> to vector<8x256xi1>
    %832 = arith.andi %831, %830 : vector<8x256xi1>
    %833 = vector.broadcast %cst_5 : f32 to vector<8x256xf32>
    %834 = arith.select %832, %833, %802 : vector<8x256xi1>, vector<8x256xf32>
    %c25_i32 = arith.constant 25 : i32
    %cst_156 = arith.constant dense<0xFF800000> : vector<8xf32>
    %835 = vector.multi_reduction <maximumf>, %834, %cst_156 [1] : vector<8x256xf32> to vector<8xf32>
    %836 = vector.shape_cast %835 : vector<8xf32> to vector<8x1xf32>
    %cst_157 = arith.constant 0.000000e+00 : f32
    %837 = vector.broadcast %cst_157 : f32 to vector<8x1xf32>
    %838 = arith.cmpf oge, %836, %837 : vector<8x1xf32>
    %839 = vector.broadcast %836 : vector<8x1xf32> to vector<8x256xf32>
    %840 = arith.cmpf oeq, %834, %839 : vector<8x256xf32>
    %841 = vector.broadcast %838 : vector<8x1xi1> to vector<8x256xi1>
    %842 = arith.andi %840, %841 : vector<8x256xi1>
    %c256_i32_158 = arith.constant 256 : i32
    %843 = vector.shape_cast %1 : vector<1x256xi32> to vector<1x256xi32>
    %844 = vector.broadcast %843 : vector<1x256xi32> to vector<8x256xi32>
    %845 = vector.broadcast %c256_i32_158 : i32 to vector<8x256xi32>
    %846 = arith.select %842, %844, %845 : vector<8x256xi1>, vector<8x256xi32>
    %cst_159 = arith.constant dense<2147483647> : vector<8xi32>
    %847 = vector.multi_reduction <minsi>, %846, %cst_159 [1] : vector<8x256xi32> to vector<8xi32>
    %848 = vector.shape_cast %847 : vector<8xi32> to vector<8x1xi32>
    %849 = vector.broadcast %1 : vector<1x256xi32> to vector<8x256xi32>
    %850 = vector.broadcast %848 : vector<8x1xi32> to vector<8x256xi32>
    %851 = arith.cmpi eq, %849, %850 : vector<8x256xi32>
    %852 = vector.broadcast %838 : vector<8x1xi1> to vector<8x256xi1>
    %853 = arith.andi %851, %852 : vector<8x256xi1>
    %854 = arith.ori %822, %853 : vector<8x256xi1>
    %855 = vector.broadcast %1 : vector<1x256xi32> to vector<8x256xi32>
    %856 = vector.broadcast %848 : vector<8x1xi32> to vector<8x256xi32>
    %857 = arith.subi %855, %856 : vector<8x256xi32>
    %c0_i32_160 = arith.constant 0 : i32
    %858 = vector.broadcast %c0_i32_160 : i32 to vector<8x256xi32>
    %859 = arith.subi %858, %857 : vector<8x256xi32>
    %860 = arith.maxsi %857, %859 : vector<8x256xi32>
    %c10_i32_161 = arith.constant 10 : i32
    %861 = vector.broadcast %c10_i32_161 : i32 to vector<8x256xi32>
    %862 = arith.cmpi slt, %860, %861 : vector<8x256xi32>
    %863 = vector.broadcast %838 : vector<8x1xi1> to vector<8x256xi1>
    %864 = arith.andi %863, %862 : vector<8x256xi1>
    %865 = vector.broadcast %cst_5 : f32 to vector<8x256xf32>
    %866 = arith.select %864, %865, %834 : vector<8x256xi1>, vector<8x256xf32>
    %867 = tpu.iota {dimensions = array<i32: 0>} : vector<256x256xi32>
    %868 = tpu.iota {dimensions = array<i32: 1>} : vector<256x256xi32>
    %869 = arith.cmpi sle, %867, %868 : vector<256x256xi32>
    %870 = arith.extui %869 : vector<256x256xi1> to vector<256x256xi32>
    %871 = arith.sitofp %870 : vector<256x256xi32> to vector<256x256xf32>
    %872 = arith.extui %854 : vector<8x256xi1> to vector<8x256xi32>
    %873 = arith.sitofp %872 : vector<8x256xi32> to vector<8x256xf32>
    %cst_162 = arith.constant dense<0.000000e+00> : vector<8x256xf32>
    %874 = tpu.matmul %873, %871, %cst_162 {dimension_numbers = #tpu.dot_dimension_numbers<[1], [0], [0], [1], [0, 0, 1, 1], [], []>} : vector<8x256xf32>, vector<256x256xf32>, vector<8x256xf32> -> vector<8x256xf32>
    %875 = arith.fptosi %874 : vector<8x256xf32> to vector<8x256xi32>
    %c1_i32_163 = arith.constant 1 : i32
    %876 = vector.broadcast %c1_i32_163 : i32 to vector<8x256xi32>
    %877 = arith.subi %875, %876 : vector<8x256xi32>
    %878 = tpu.iota {dimensions = array<i32: 1>} : vector<1x32x256xi32>
    %879 = vector.shape_cast %877 : vector<8x256xi32> to vector<8x1x256xi32>
    %880 = vector.broadcast %879 : vector<8x1x256xi32> to vector<8x32x256xi32>
    %881 = vector.broadcast %878 : vector<1x32x256xi32> to vector<8x32x256xi32>
    %882 = arith.cmpi eq, %880, %881 : vector<8x32x256xi32>
    %883 = vector.shape_cast %854 : vector<8x256xi1> to vector<8x1x256xi1>
    %884 = vector.broadcast %883 : vector<8x1x256xi1> to vector<8x32x256xi1>
    %885 = arith.andi %882, %884 : vector<8x32x256xi1>
    %886 = arith.sitofp %1 : vector<1x256xi32> to vector<1x256xf32>
    %887 = vector.shape_cast %886 : vector<1x256xf32> to vector<1x1x256xf32>
    %cst_164 = arith.constant 0.000000e+00 : f32
    %888 = vector.shape_cast %887 : vector<1x1x256xf32> to vector<1x1x256xf32>
    %889 = vector.broadcast %888 : vector<1x1x256xf32> to vector<8x32x256xf32>
    %890 = vector.broadcast %cst_164 : f32 to vector<8x32x256xf32>
    %891 = arith.select %885, %889, %890 : vector<8x32x256xi1>, vector<8x32x256xf32>
    %cst_165 = arith.constant dense<0.000000e+00> : vector<8x32xf32>
    %892 = vector.multi_reduction <add>, %891, %cst_165 [2] : vector<8x32x256xf32> to vector<8x32xf32>
    %893 = arith.fptosi %892 : vector<8x32xf32> to vector<8x32xi32>
    %894 = vector.shape_cast %12 : vector<8x256xf32> to vector<8x1x256xf32>
    %cst_166 = arith.constant 0.000000e+00 : f32
    %895 = vector.shape_cast %894 : vector<8x1x256xf32> to vector<8x1x256xf32>
    %896 = vector.broadcast %895 : vector<8x1x256xf32> to vector<8x32x256xf32>
    %897 = vector.broadcast %cst_166 : f32 to vector<8x32x256xf32>
    %898 = arith.select %885, %896, %897 : vector<8x32x256xi1>, vector<8x32x256xf32>
    %cst_167 = arith.constant dense<0.000000e+00> : vector<8x32xf32>
    %899 = vector.multi_reduction <add>, %898, %cst_167 [2] : vector<8x32x256xf32> to vector<8x32xf32>
    %c0_i32_168 = arith.constant 0 : i32
    %900 = vector.broadcast %c0_i32_168 : i32 to vector<8x32xi32>
    %901 = arith.cmpi sgt, %893, %900 : vector<8x32xi32>
    %902 = tpu.iota {dimensions = array<i32: 2>} : vector<1x1x256xi32>
    %903 = vector.shape_cast %893 : vector<8x32xi32> to vector<8x32x1xi32>
    %904 = vector.shape_cast %899 : vector<8x32xf32> to vector<8x32x1xf32>
    %905 = vector.shape_cast %12 : vector<8x256xf32> to vector<8x1x256xf32>
    %906 = vector.broadcast %905 : vector<8x1x256xf32> to vector<8x32x256xf32>
    %907 = vector.broadcast %904 : vector<8x32x1xf32> to vector<8x32x256xf32>
    %908 = arith.cmpf ogt, %906, %907 : vector<8x32x256xf32>
    %909 = vector.broadcast %902 : vector<1x1x256xi32> to vector<8x32x256xi32>
    %910 = vector.broadcast %903 : vector<8x32x1xi32> to vector<8x32x256xi32>
    %911 = arith.cmpi slt, %909, %910 : vector<8x32x256xi32>
    %912 = arith.andi %908, %911 : vector<8x32x256xi1>
    %c-1_i32 = arith.constant -1 : i32
    %913 = vector.shape_cast %902 : vector<1x1x256xi32> to vector<1x1x256xi32>
    %914 = vector.broadcast %913 : vector<1x1x256xi32> to vector<8x32x256xi32>
    %915 = vector.broadcast %c-1_i32 : i32 to vector<8x32x256xi32>
    %916 = arith.select %912, %914, %915 : vector<8x32x256xi1>, vector<8x32x256xi32>
    %cst_169 = arith.constant dense<-2147483648> : vector<8x32xi32>
    %917 = vector.multi_reduction <maxsi>, %916, %cst_169 [2] : vector<8x32x256xi32> to vector<8x32xi32>
    %918 = vector.broadcast %902 : vector<1x1x256xi32> to vector<8x32x256xi32>
    %919 = vector.broadcast %903 : vector<8x32x1xi32> to vector<8x32x256xi32>
    %920 = arith.cmpi sgt, %918, %919 : vector<8x32x256xi32>
    %921 = arith.andi %908, %920 : vector<8x32x256xi1>
    %c256_i32_170 = arith.constant 256 : i32
    %922 = vector.shape_cast %902 : vector<1x1x256xi32> to vector<1x1x256xi32>
    %923 = vector.broadcast %922 : vector<1x1x256xi32> to vector<8x32x256xi32>
    %924 = vector.broadcast %c256_i32_170 : i32 to vector<8x32x256xi32>
    %925 = arith.select %921, %923, %924 : vector<8x32x256xi1>, vector<8x32x256xi32>
    %cst_171 = arith.constant dense<2147483647> : vector<8x32xi32>
    %926 = vector.multi_reduction <minsi>, %925, %cst_171 [2] : vector<8x32x256xi32> to vector<8x32xi32>
    %927 = vector.shape_cast %917 : vector<8x32xi32> to vector<8x32x1xi32>
    %928 = vector.broadcast %902 : vector<1x1x256xi32> to vector<8x32x256xi32>
    %929 = vector.broadcast %927 : vector<8x32x1xi32> to vector<8x32x256xi32>
    %930 = arith.cmpi sgt, %928, %929 : vector<8x32x256xi32>
    %931 = vector.broadcast %902 : vector<1x1x256xi32> to vector<8x32x256xi32>
    %932 = vector.broadcast %903 : vector<8x32x1xi32> to vector<8x32x256xi32>
    %933 = arith.cmpi sle, %931, %932 : vector<8x32x256xi32>
    %934 = arith.andi %930, %933 : vector<8x32x256xi1>
    %935 = vector.broadcast %902 : vector<1x1x256xi32> to vector<8x32x256xi32>
    %936 = vector.broadcast %903 : vector<8x32x1xi32> to vector<8x32x256xi32>
    %937 = arith.cmpi sge, %935, %936 : vector<8x32x256xi32>
    %938 = vector.shape_cast %926 : vector<8x32xi32> to vector<8x32x1xi32>
    %939 = vector.broadcast %902 : vector<1x1x256xi32> to vector<8x32x256xi32>
    %940 = vector.broadcast %938 : vector<8x32x1xi32> to vector<8x32x256xi32>
    %941 = arith.cmpi slt, %939, %940 : vector<8x32x256xi32>
    %942 = arith.andi %937, %941 : vector<8x32x256xi1>
    %cst_172 = arith.constant 1.000000e+09 : f32
    %943 = vector.shape_cast %905 : vector<8x1x256xf32> to vector<8x1x256xf32>
    %944 = vector.broadcast %943 : vector<8x1x256xf32> to vector<8x32x256xf32>
    %945 = vector.broadcast %cst_172 : f32 to vector<8x32x256xf32>
    %946 = arith.select %934, %944, %945 : vector<8x32x256xi1>, vector<8x32x256xf32>
    %cst_173 = arith.constant dense<0x7F800000> : vector<8x32xf32>
    %947 = vector.multi_reduction <minimumf>, %946, %cst_173 [2] : vector<8x32x256xf32> to vector<8x32xf32>
    %cst_174 = arith.constant 1.000000e+09 : f32
    %948 = vector.shape_cast %905 : vector<8x1x256xf32> to vector<8x1x256xf32>
    %949 = vector.broadcast %948 : vector<8x1x256xf32> to vector<8x32x256xf32>
    %950 = vector.broadcast %cst_174 : f32 to vector<8x32x256xf32>
    %951 = arith.select %942, %949, %950 : vector<8x32x256xi1>, vector<8x32x256xf32>
    %cst_175 = arith.constant dense<0x7F800000> : vector<8x32xf32>
    %952 = vector.multi_reduction <minimumf>, %951, %cst_175 [2] : vector<8x32x256xf32> to vector<8x32xf32>
    %953 = arith.maximumf %947, %952 : vector<8x32xf32>
    %954 = arith.subf %899, %953 : vector<8x32xf32>
    %cst_176 = arith.constant 5.000000e-02 : f32
    %955 = vector.broadcast %cst_176 : f32 to vector<8x32xf32>
    %956 = arith.cmpf oge, %954, %955 : vector<8x32xf32>
    %957 = arith.andi %901, %956 : vector<8x32xi1>
    %958 = vector.shape_cast %957 : vector<8x32xi1> to vector<8x32x1xi1>
    %959 = vector.broadcast %958 : vector<8x32x1xi1> to vector<8x32x256xi1>
    %960 = arith.andi %885, %959 : vector<8x32x256xi1>
    %cst_177 = arith.constant 1.000000e+00 : f32
    %cst_178 = arith.constant 0.000000e+00 : f32
    %961 = vector.broadcast %cst_177 : f32 to vector<8x32x256xf32>
    %962 = vector.broadcast %cst_178 : f32 to vector<8x32x256xf32>
    %963 = arith.select %960, %961, %962 : vector<8x32x256xi1>, vector<8x32x256xf32>
    %cst_179 = arith.constant dense<0xFF800000> : vector<8x256xf32>
    %964 = vector.multi_reduction <maximumf>, %963, %cst_179 [1] : vector<8x32x256xf32> to vector<8x256xf32>
    %c0_180 = arith.constant 0 : index
    %c0_181 = arith.constant 0 : index
    %965 = vector.load %arg2[%c0_180, %c0_181] : memref<8x256xf32, #tpu.memory_space<vmem>>, vector<8x256xf32>
    tpu.vector_store %arg2[%c0_180, %c0_181], %964 {strides = array<i32>} : memref<8x256xf32, #tpu.memory_space<vmem>>, vector<8x256xf32>,
    return
  }
  func.func @transform_0(%arg0: i32) -> (i32, i32) {
    %c0_i32 = arith.constant 0 : i32
    %c0_i32_0 = arith.constant 0 : i32
    return %arg0, %c0_i32 : i32, i32
  }
  func.func @transform_1(%arg0: i32) -> (i32, i32) {
    %c0_i32 = arith.constant 0 : i32
    %c0_i32_0 = arith.constant 0 : i32
    return %arg0, %c0_i32 : i32, i32
  }
}

</mosaic_0001>

<llo_original>
// kernel: tpu_custom_call.1
$region0: #{tpu_custom_call.1}
  #allocation0 [shape = 'u32[]', space=smem, size = 0x4, offset = 0x4, fixed_abs, tag = 'smem constant byte address 0x4 - core index']
  #allocation1 [shape = 'u32[144,128]{1,0:T(1,128)}', space=vmem, size = 0x12000, scoped, tag = 'internal scratch']
  %s0 = inlined_call_operand.hbm [shape: f32[32,256], index: 0, kind: input, shape index: {}]
  %s1 = inlined_call_operand.hbm [shape: f32[32,256], index: 1, kind: output, shape index: {}]
  %s2 = sld [smem:[#allocation0]]
  $region41: #{tpu_custom_call.1} parent=0
    _
  %s4 = ssub.s32 1, %s2
  %s5 = scalar_select 0, %s4, %s2
  $region1: #{tpu_custom_call.1} parent=0
    #allocation2 [shape = 'u8[16384]{0}', space=vmem, size = 0x4000, scoped, tag = 'input window, operand 0']
    #allocation3 [shape = 's32[2]{0}', space=sflag, size = 0x8, scoped, tag = 'scoped memory for tpu_custom_call.1']
    #allocation4 [shape = 's32[2]{0}', space=sflag, size = 0x8, scoped, tag = 'scoped memory for tpu_custom_call.1']
    #allocation5 [shape = 'u8[16384]{0}', space=vmem, size = 0x4000, scoped, tag = 'output window, operand 0']
    %6 = vsyncpa [#allocation3], 0
    %s7 = scalar_lea.sflag [#allocation3], 1
    %8 = vsyncpa %s7, 0
    %9 = vsyncpa [#allocation4], 0
    %s10 = scalar_lea.sflag [#allocation4], 1
    %11 = vsyncpa %s10, 0
    loop: start=0, step=1, limit=6
    $region2: #{tpu_custom_call.1} parent=1 // loop_pre_header
      _
    $region3: #{tpu_custom_call.1} parent=1 // loop_header
      %s13 = sphi 0, %s17
      %p14 = scmp.ge.s32.totalorder %s13, 6
      %s23 = sphi 0, %s25
      %s26 = sphi 0, %s23
      %s27 = sphi 0, %s26
      %s43 = sphi 0, %s27
      %s49 = sphi 0, %s51
      %s52 = sphi 0, %s49
      %s53 = sphi 0, %s52
      %s69 = sphi 0, %s53
    $region4: #{tpu_custom_call.1} parent=1 // loop_header_branch
      %16 = sbr.rel (%p14) target = $region8
    $region5: #{tpu_custom_call.1} parent=1 // loop_body
      %s18 = ssub.s32 %s13, 1
      %s19 = ssub.s32 %s13, 2
      %s20 = sadd.s32 %s13, 1
      %s21 = ssub.s32 %s13, %s20
      %p22 = scmp.eq.s32.totalorder %s21, 0
      %s24 = sadd.s32 %s23, 1
      %s25 = scalar_select %p22, %s23, %s24
      %p28 = pneg %p22
      %p29 = scmp.eq.s32.totalorder %s13, 3
      %p30 = por %p28, %p29
      %p31 = scmp.ne.s32.totalorder %s23, %s26
      %p32 = scmp.eq.s32.totalorder %s13, 0
      %p33 = por %p31, %p32
      %p34 = scmp.ne.s32.totalorder %s23, %s26
      %p35 = scmp.eq.s32.totalorder %s18, 3
      %p36 = por %p34, %p35
      %p37 = scmp.ne.s32.totalorder %s26, %s27
      %p38 = scmp.eq.s32.totalorder %s18, 0
      %p39 = por %p37, %p38
      %p40 = scmp.ne.s32.totalorder %s26, %s27
      %p41 = scmp.eq.s32.totalorder %s19, 3
      %p42 = por %p40, %p41
      %p44 = scmp.ne.s32.totalorder %s27, %s43
      %p45 = scmp.eq.s32.totalorder %s19, 0
      %p46 = por %p44, %p45
      %s47 = ssub.s32 %s13, %s20
      %p48 = scmp.eq.s32.totalorder %s47, 0
      %s50 = sadd.s32 %s49, 1
      %s51 = scalar_select %p48, %s49, %s50
      %p54 = pneg %p48
      %p55 = scmp.eq.s32.totalorder %s13, 3
      %p56 = por %p54, %p55
      %p57 = scmp.ne.s32.totalorder %s49, %s52
      %p58 = scmp.eq.s32.totalorder %s13, 0
      %p59 = por %p57, %p58
      %p60 = scmp.ne.s32.totalorder %s49, %s52
      %p61 = scmp.eq.s32.totalorder %s18, 3
      %p62 = por %p60, %p61
      %p63 = scmp.ne.s32.totalorder %s52, %s53
      %p64 = scmp.eq.s32.totalorder %s18, 0
      %p65 = por %p63, %p64
      %p66 = scmp.ne.s32.totalorder %s52, %s53
      %p67 = scmp.eq.s32.totalorder %s19, 3
      %p68 = por %p66, %p67
      %p70 = scmp.ne.s32.totalorder %s53, %s69
      %p71 = scmp.eq.s32.totalorder %s19, 0
      %p72 = por %p70, %p71
      %p73 = scmp.le.s32.totalorder 1, %s13
      %p74 = scmp.lt.s32.totalorder %s13, 5
      %p75 = pnand %p73, %p74
      %p76 = pneg %p75
      // Predicated region
      $region9: #{tpu_custom_call.1} parent=5 // pred_check
        _
      $region10: #{tpu_custom_call.1} parent=5 // pred_check_branch
        %78 = sbr.rel (%p75) target = $region12
      $region11: #{tpu_custom_call.1} parent=5 // pred_region
        %s79 = ssub.s32 %s13, 1
      $region12: #{tpu_custom_call.1} parent=5 // pred_fallthru
        _
      %p80 = scmp.lt.s32.totalorder %s13, 4
      // Predicated region
      $region13: #{tpu_custom_call.1} parent=5 // pred_check
        %p81 = pneg %p80
      $region14: #{tpu_custom_call.1} parent=5 // pred_check_branch
        %83 = sbr.rel (%p81) target = $region16
      $region15: #{tpu_custom_call.1} parent=5 // pred_region
        // Predicated region
        $region17: #{tpu_custom_call.1} parent=15 // pred_check
          %p84 = pneg %p33
        $region18: #{tpu_custom_call.1} parent=15 // pred_check_branch
          %86 = sbr.rel (%p84) target = $region20
        $region19: #{tpu_custom_call.1} parent=15 // pred_region
          %s87 = sand.u32 %s23, 1
          %s88 = scalar_lea.sflag [#allocation3], %s87
          %s89 = sand.u32 %s23, 1
          %s90 = smul.addr %s89, 16
          %s91 = scalar_lea.vmem [#allocation2], %s90
          %s93 = ssub.s32 256, 256
          %94 = vsyncadd %s88, %s93
          %s95 = smul.addr %s13, 2
          %s96 = smul.addr %s95, 128
          %s97 = scalar_lea.hbm %s0, %s96
          %s99 = sshll.u32 %s91, 4
          %s100 = int_to_ptr.vmem [resolvable:$true] %s99
          %102 = dma.hbm_to_vmem [thread:$0]  %s97, 256, %s100, %s88
        $region20: #{tpu_custom_call.1} parent=15 // pred_fallthru
          _
      $region16: #{tpu_custom_call.1} parent=5 // pred_fallthru
        _
      %p103 = scmp.le.s32.totalorder 1, %s13
      %p104 = scmp.lt.s32.totalorder %s13, 5
      %p105 = pnand %p103, %p104
      %p106 = pneg %p105
      // Predicated region
      $region21: #{tpu_custom_call.1} parent=5 // pred_check
        _
      $region22: #{tpu_custom_call.1} parent=5 // pred_check_branch
        %108 = sbr.rel (%p105) target = $region24
      $region23: #{tpu_custom_call.1} parent=5 // pred_region
        %s109 = ssub.s32 %s13, 1
        %s110 = sand.u32 %s26, 1
        %s111 = scalar_lea.sflag [#allocation3], %s110
        %s112 = sand.u32 %s26, 1
        %s113 = smul.addr %s112, 16
        %s114 = scalar_lea.vmem [#allocation2], %s113
        // Predicated region
        $region25: #{tpu_custom_call.1} parent=23 // pred_check
          %p115 = pneg %p39
        $region26: #{tpu_custom_call.1} parent=23 // pred_check_branch
          %117 = sbr.rel (%p115) target = $region28
        $region27: #{tpu_custom_call.1} parent=23 // pred_region
          %118 = dma.done %s111, 256
        $region28: #{tpu_custom_call.1} parent=23 // pred_fallthru
          _
        %s119 = sand.u32 %s26, 1
        %s120 = scalar_lea.sflag [#allocation3], %s119
        %s121 = sand.u32 %s26, 1
        %s122 = smul.addr %s121, 16
        %s123 = scalar_lea.vmem [#allocation2], %s122
        %p124 = pneg %p39
        %p125 = pneg %p36
        %p126 = pneg %p65
        %p127 = pneg %p62
        %s128 = sand.u32 %s52, 1
        %s129 = scalar_lea.sflag [#allocation4], %s128
        %s130 = sand.u32 %s52, 1
        %s131 = smul.addr %s130, 16
        %s132 = scalar_lea.vmem [#allocation5], %s131
        %v133 = vld [vmem:[%s114] sm:$0xff]
        %v134 = vld [vmem:[%s114 + $0x8] sm:$0xff]
        %v135 = vlaneseq
        %v136 = vand.u32 %v135, 127
        %v137 = vadd.s32 %v136, 128
        %v138 = vmin.f32 %v133, %v134
        %139 = vmin.xlane.f32.xlu0 %v138
        %v140 = vpop.xlane.xlu0 %139
        %v141 = vmax.f32 %v133, %v134
        %142 = vmax.xlane.f32.xlu0 %v141
        %v143 = vpop.xlane.xlu0 %142
        %v144 = vsub.f32 %v133, %v140
        %v145 = vsub.f32 %v134, %v140
        %v146 = vsub.f32 %v143, %v140
        %v147 = vadd.f32 %v146, 1e-05
        %v148 = vrcp.pop %v147
        %v149 = vmul.f32 %v144, %v148
        %v150 = vmul.f32 %v145, %v148
        %152 = vrot.lane.b32.xlu0 %v150, 1
        %v153 = vpop.permute.xlu0 %152
        %156 = vrot.lane.b32.xlu0 %v149, 1
        %v157 = vpop.permute.xlu0 %156
        %vm158 = vcmask 7168
        %v159 = vsel %vm158, %v157, %v153
        %v162 = vsel %vm158, %v153, %v157
        %163 = vrot.lane.b32.xlu0 %v149, 127
        %v164 = vpop.permute.xlu0 %163
        %165 = vrot.lane.b32.xlu0 %v150, 127
        %v166 = vpop.permute.xlu0 %165
        %vm167 = vcmask 1039360
        %v168 = vsel %vm167, %v164, %v166
        %v172 = vsel %vm167, %v166, %v164
        %vm173 = vcmp.ge.s32.totalorder %v136, 1
        %vm174 = vcmp.ge.s32.totalorder %v137, 1
        %vm175 = vcmp.le.s32.totalorder %v136, 254
        %vm176 = vcmp.le.s32.totalorder %v137, 254
        %vm177 = vmand %vm173, %vm175
        %vm178 = vmand %vm174, %vm176
        %vm179 = vcmp.gt.f32.partialorder %v149, %v162
        %vm180 = vcmp.gt.f32.partialorder %v150, %v159
        %vm181 = vcmp.gt.f32.partialorder %v149, %v168
        %vm182 = vcmp.gt.f32.partialorder %v150, %v172
        %vm183 = vmand %vm179, %vm181
        %vm184 = vmand %vm180, %vm182
        %v185 = vsel %vm177, 1, 0
        %v186 = vsel %vm178, 1, 0
        %vm187 = vcmp.eq.s32.totalorder %v185, 1
        %vm188 = vcmp.eq.s32.totalorder %v186, 1
        %vm189 = vmand %vm183, %vm187
        %vm190 = vmand %vm184, %vm188
        %vm191 = vcmp.ge.f32.partialorder %v149, 0.1
        %vm192 = vcmp.ge.f32.partialorder %v150, 0.1
        %vm193 = vmand %vm189, %vm191
        %vm194 = vmand %vm190, %vm192
        %v195 = vsel %vm193, %v149, -1.0
        %v196 = vsel %vm194, %v150, -1.0
        %v197 = vmax.f32 %v195, %v196
        %198 = vmax.xlane.f32.xlu0 %v197
        %v199 = vpop.xlane.xlu0 %198
        %vm200 = vcmp.ge.f32.partialorder %v199, 0.0
        %vm201 = vcmp.eq.f32.partialorder %v195, %v199
        %vm202 = vcmp.eq.f32.partialorder %v196, %v199
        %v203 = vsel %vm200, 1, 0
        %vm204 = vcmp.eq.s32.totalorder %v203, 1
        %vm205 = vmand %vm201, %vm204
        %vm206 = vmand %vm202, %vm204
        %v207 = vsel %vm205, %v136, 256
        %v208 = vsel %vm206, %v137, 256
        %vm209 = vcmp.lt.s32.totalorder %v207, %v208
        %v210 = vsel %vm209, %v207, %v208
        %v211 = vand.u32 %v210, 65535
        %v212 = vshra.s32 %v210, 16
        %v213 = vcvt.s32.f32 %v211
        %v214 = vcvt.s32.f32 %v212
        %215 = vmin.xlane.f32.xlu0 %v214
        %v216 = vpop.xlane.xlu0 %215
        %vm217 = vcmp.eq.f32.partialorder %v214, %v216
        %v218 = vsel %vm217, %v213, inf
        %219 = vmin.xlane.f32.xlu0 %v218
        %v220 = vpop.xlane.xlu0 %219
        %v221 = vcvt.f32.s32 %v220
        %v222 = vcvt.f32.s32 %v216
        %v223 = vshll.u32 %v222, 16
        %v224 = vadd.s32 %v223, %v221
        %vm225 = vcmp.eq.s32.totalorder %v136, %v224
        %vm226 = vcmp.eq.s32.totalorder %v137, %v224
        %vm227 = vmand %vm225, %vm204
        %vm228 = vmand %vm226, %vm204
        %v229 = vsub.s32 %v136, %v224
        %v230 = vsub.s32 %v137, %v224
        %v231 = vsub.s32 0, %v229
        %v232 = vsub.s32 0, %v230
        %vm233 = vcmp.gt.s32.totalorder %v229, %v231
        %v234 = vsel %vm233, %v229, %v231
        %vm235 = vcmp.gt.s32.totalorder %v230, %v232
        %v236 = vsel %vm235, %v230, %v232
        %vm237 = vcmp.lt.s32.totalorder %v234, 10
        %vm238 = vcmp.lt.s32.totalorder %v236, 10
        %vm239 = vmand %vm204, %vm237
        %vm240 = vmand %vm204, %vm238
        %v241 = vsel %vm239, -1.0, %v195
        %v242 = vsel %vm240, -1.0, %v196
        %v243 = vmax.f32 %v241, %v242
        %244 = vmax.xlane.f32.xlu0 %v243
        %v245 = vpop.xlane.xlu0 %244
        %vm246 = vcmp.ge.f32.partialorder %v245, 0.0
        %vm247 = vcmp.eq.f32.partialorder %v241, %v245
        %vm248 = vcmp.eq.f32.partialorder %v242, %v245
        %v249 = vsel %vm246, 1, 0
        %vm250 = vcmp.eq.s32.totalorder %v249, 1
        %vm251 = vmand %vm247, %vm250
        %vm252 = vmand %vm248, %vm250
        %v253 = vsel %vm251, %v136, 256
        %v254 = vsel %vm252, %v137, 256
        %vm255 = vcmp.lt.s32.totalorder %v253, %v254
        %v256 = vsel %vm255, %v253, %v254
        %v257 = vand.u32 %v256, 65535
        %v258 = vshra.s32 %v256, 16
        %v259 = vcvt.s32.f32 %v257
        %v260 = vcvt.s32.f32 %v258
        %261 = vmin.xlane.f32.xlu0 %v260
        %v262 = vpop.xlane.xlu0 %261
        %vm263 = vcmp.eq.f32.partialorder %v260, %v262
        %v264 = vsel %vm263, %v259, inf
        %265 = vmin.xlane.f32.xlu0 %v264
        %v266 = vpop.xlane.xlu0 %265
        %v267 = vcvt.f32.s32 %v266
        %v268 = vcvt.f32.s32 %v262
        %v269 = vshll.u32 %v268, 16
        %v270 = vadd.s32 %v269, %v267
        %vm271 = vcmp.eq.s32.totalorder %v136, %v270
        %vm272 = vcmp.eq.s32.totalorder %v137, %v270
        %vm273 = vmand %vm271, %vm250
        %vm274 = vmand %vm272, %vm250
        %vm275 = vmor %vm227, %vm273
        %vm276 = vmor %vm228, %vm274
        %v277 = vsub.s32 %v136, %v270
        %v278 = vsub.s32 %v137, %v270
        %v279 = vsub.s32 0, %v277
        %v280 = vsub.s32 0, %v278
        %vm281 = vcmp.gt.s32.totalorder %v277, %v279
        %v282 = vsel %vm281, %v277, %v279
        %vm283 = vcmp.gt.s32.totalorder %v278, %v280
        %v284 = vsel %vm283, %v278, %v280
        %vm285 = vcmp.lt.s32.totalorder %v282, 10
        %vm286 = vcmp.lt.s32.totalorder %v284, 10
        %vm287 = vmand %vm250, %vm285
        %vm288 = vmand %vm250, %vm286
        %v289 = vsel %vm287, -1.0, %v241
        %v290 = vsel %vm288, -1.0, %v242
        %v291 = vmax.f32 %v289, %v290
        %292 = vmax.xlane.f32.xlu0 %v291
        %v293 = vpop.xlane.xlu0 %292
        %vm294 = vcmp.ge.f32.partialorder %v293, 0.0
        %vm295 = vcmp.eq.f32.partialorder %v289, %v293
        %vm296 = vcmp.eq.f32.partialorder %v290, %v293
        %v297 = vsel %vm294, 1, 0
        %vm298 = vcmp.eq.s32.totalorder %v297, 1
        %vm299 = vmand %vm295, %vm298
        %vm300 = vmand %vm296, %vm298
        %v301 = vsel %vm299, %v136, 256
        %v302 = vsel %vm300, %v137, 256
        %vm303 = vcmp.lt.s32.totalorder %v301, %v302
        %v304 = vsel %vm303, %v301, %v302
        %v305 = vand.u32 %v304, 65535
        %v306 = vshra.s32 %v304, 16
        %v307 = vcvt.s32.f32 %v305
        %v308 = vcvt.s32.f32 %v306
        %309 = vmin.xlane.f32.xlu0 %v308
        %v310 = vpop.xlane.xlu0 %309
        %vm311 = vcmp.eq.f32.partialorder %v308, %v310
        %v312 = vsel %vm311, %v307, inf
        %313 = vmin.xlane.f32.xlu0 %v312
        %v314 = vpop.xlane.xlu0 %313
        %v315 = vcvt.f32.s32 %v314
        %v316 = vcvt.f32.s32 %v310
        %v317 = vshll.u32 %v316, 16
        %v318 = vadd.s32 %v317, %v315
        %vm319 = vcmp.eq.s32.totalorder %v136, %v318
        %vm320 = vcmp.eq.s32.totalorder %v137, %v318
        %vm321 = vmand %vm319, %vm298
        %vm322 = vmand %vm320, %vm298
        %vm323 = vmor %vm275, %vm321
        %vm324 = vmor %vm276, %vm322
        %v325 = vsub.s32 %v136, %v318
        %v326 = vsub.s32 %v137, %v318
        %v327 = vsub.s32 0, %v325
        %v328 = vsub.s32 0, %v326
        %vm329 = vcmp.gt.s32.totalorder %v325, %v327
        %v330 = vsel %vm329, %v325, %v327
        %vm331 = vcmp.gt.s32.totalorder %v326, %v328
        %v332 = vsel %vm331, %v326, %v328
        %vm333 = vcmp.lt.s32.totalorder %v330, 10
        %vm334 = vcmp.lt.s32.totalorder %v332, 10
        %vm335 = vmand %vm298, %vm333
        %vm336 = vmand %vm298, %vm334
        %v337 = vsel %vm335, -1.0, %v289
        %v338 = vsel %vm336, -1.0, %v290
        %v339 = vmax.f32 %v337, %v338
        %340 = vmax.xlane.f32.xlu0 %v339
        %v341 = vpop.xlane.xlu0 %340
        %vm342 = vcmp.ge.f32.partialorder %v341, 0.0
        %vm343 = vcmp.eq.f32.partialorder %v337, %v341
        %vm344 = vcmp.eq.f32.partialorder %v338, %v341
        %v345 = vsel %vm342, 1, 0
        %vm346 = vcmp.eq.s32.totalorder %v345, 1
        %vm347 = vmand %vm343, %vm346
        %vm348 = vmand %vm344, %vm346
        %v349 = vsel %vm347, %v136, 256
        %v350 = vsel %vm348, %v137, 256
        %vm351 = vcmp.lt.s32.totalorder %v349, %v350
        %v352 = vsel %vm351, %v349, %v350
        %v353 = vand.u32 %v352, 65535
        %v354 = vshra.s32 %v352, 16
        %v355 = vcvt.s32.f32 %v353
        %v356 = vcvt.s32.f32 %v354
        %357 = vmin.xlane.f32.xlu0 %v356
        %v358 = vpop.xlane.xlu0 %357
        %vm359 = vcmp.eq.f32.partialorder %v356, %v358
        %v360 = vsel %vm359, %v355, inf
        %361 = vmin.xlane.f32.xlu0 %v360
        %v362 = vpop.xlane.xlu0 %361
        %v363 = vcvt.f32.s32 %v362
        %v364 = vcvt.f32.s32 %v358
        %v365 = vshll.u32 %v364, 16
        %v366 = vadd.s32 %v365, %v363
        %vm367 = vcmp.eq.s32.totalorder %v136, %v366
        %vm368 = vcmp.eq.s32.totalorder %v137, %v366
        %vm369 = vmand %vm367, %vm346
        %vm370 = vmand %vm368, %vm346
        %vm371 = vmor %vm323, %vm369
        %vm372 = vmor %vm324, %vm370
        %v373 = vsub.s32 %v136, %v366
        %v374 = vsub.s32 %v137, %v366
        %v375 = vsub.s32 0, %v373
        %v376 = vsub.s32 0, %v374
        %vm377 = vcmp.gt.s32.totalorder %v373, %v375
        %v378 = vsel %vm377, %v373, %v375
        %vm379 = vcmp.gt.s32.totalorder %v374, %v376
        %v380 = vsel %vm379, %v374, %v376
        %vm381 = vcmp.lt.s32.totalorder %v378, 10
        %vm382 = vcmp.lt.s32.totalorder %v380, 10
        %vm383 = vmand %vm346, %vm381
        %vm384 = vmand %vm346, %vm382
        %v385 = vsel %vm383, -1.0, %v337
        %v386 = vsel %vm384, -1.0, %v338
        %v387 = vmax.f32 %v385, %v386
        %388 = vmax.xlane.f32.xlu0 %v387
        %v389 = vpop.xlane.xlu0 %388
        %vm390 = vcmp.ge.f32.partialorder %v389, 0.0
        %vm391 = vcmp.eq.f32.partialorder %v385, %v389
        %vm392 = vcmp.eq.f32.partialorder %v386, %v389
        %v393 = vsel %vm390, 1, 0
        %vm394 = vcmp.eq.s32.totalorder %v393, 1
        %vm395 = vmand %vm391, %vm394
        %vm396 = vmand %vm392, %vm394
        %v397 = vsel %vm395, %v136, 256
        %v398 = vsel %vm396, %v137, 256
        %vm399 = vcmp.lt.s32.totalorder %v397, %v398
        %v400 = vsel %vm399, %v397, %v398
        %v401 = vand.u32 %v400, 65535
        %v402 = vshra.s32 %v400, 16
        %v403 = vcvt.s32.f32 %v401
        %v404 = vcvt.s32.f32 %v402
        %405 = vmin.xlane.f32.xlu0 %v404
        %v406 = vpop.xlane.xlu0 %405
        %vm407 = vcmp.eq.f32.partialorder %v404, %v406
        %v408 = vsel %vm407, %v403, inf
        %409 = vmin.xlane.f32.xlu0 %v408
        %v410 = vpop.xlane.xlu0 %409
        %v411 = vcvt.f32.s32 %v410
        %v412 = vcvt.f32.s32 %v406
        %v413 = vshll.u32 %v412, 16
        %v414 = vadd.s32 %v413, %v411
        %vm415 = vcmp.eq.s32.totalorder %v136, %v414
        %vm416 = vcmp.eq.s32.totalorder %v137, %v414
        %vm417 = vmand %vm415, %vm394
        %vm418 = vmand %vm416, %vm394
        %vm419 = vmor %vm371, %vm417
        %vm420 = vmor %vm372, %vm418
        %v421 = vsub.s32 %v136, %v414
        %v422 = vsub.s32 %v137, %v414
        %v423 = vsub.s32 0, %v421
        %v424 = vsub.s32 0, %v422
        %vm425 = vcmp.gt.s32.totalorder %v421, %v423
        %v426 = vsel %vm425, %v421, %v423
        %vm427 = vcmp.gt.s32.totalorder %v422, %v424
        %v428 = vsel %vm427, %v422, %v424
        %vm429 = vcmp.lt.s32.totalorder %v426, 10
        %vm430 = vcmp.lt.s32.totalorder %v428, 10
        %vm431 = vmand %vm394, %vm429
        %vm432 = vmand %vm394, %vm430
        %v433 = vsel %vm431, -1.0, %v385
        %v434 = vsel %vm432, -1.0, %v386
        %v435 = vmax.f32 %v433, %v434
        %436 = vmax.xlane.f32.xlu0 %v435
        %v437 = vpop.xlane.xlu0 %436
        %vm438 = vcmp.ge.f32.partialorder %v437, 0.0
        %vm439 = vcmp.eq.f32.partialorder %v433, %v437
        %vm440 = vcmp.eq.f32.partialorder %v434, %v437
        %v441 = vsel %vm438, 1, 0
        %vm442 = vcmp.eq.s32.totalorder %v441, 1
        %vm443 = vmand %vm439, %vm442
        %vm444 = vmand %vm440, %vm442
        %v445 = vsel %vm443, %v136, 256
        %v446 = vsel %vm444, %v137, 256
        %vm447 = vcmp.lt.s32.totalorder %v445, %v446
        %v448 = vsel %vm447, %v445, %v446
        %v449 = vand.u32 %v448, 65535
        %v450 = vshra.s32 %v448, 16
        %v451 = vcvt.s32.f32 %v449
        %v452 = vcvt.s32.f32 %v450
        %453 = vmin.xlane.f32.xlu0 %v452
        %v454 = vpop.xlane.xlu0 %453
        %vm455 = vcmp.eq.f32.partialorder %v452, %v454
        %v456 = vsel %vm455, %v451, inf
        %457 = vmin.xlane.f32.xlu0 %v456
        %v458 = vpop.xlane.xlu0 %457
        %v459 = vcvt.f32.s32 %v458
        %v460 = vcvt.f32.s32 %v454
        %v461 = vshll.u32 %v460, 16
        %v462 = vadd.s32 %v461, %v459
        %vm463 = vcmp.eq.s32.totalorder %v136, %v462
        %vm464 = vcmp.eq.s32.totalorder %v137, %v462
        %vm465 = vmand %vm463, %vm442
        %vm466 = vmand %vm464, %vm442
        %vm467 = vmor %vm419, %vm465
        %vm468 = vmor %vm420, %vm466
        %v469 = vsub.s32 %v136, %v462
        %v470 = vsub.s32 %v137, %v462
        %v471 = vsub.s32 0, %v469
        %v472 = vsub.s32 0, %v470
        %vm473 = vcmp.gt.s32.totalorder %v469, %v471
        %v474 = vsel %vm473, %v469, %v471
        %vm475 = vcmp.gt.s32.totalorder %v470, %v472
        %v476 = vsel %vm475, %v470, %v472
        %vm477 = vcmp.lt.s32.totalorder %v474, 10
        %vm478 = vcmp.lt.s32.totalorder %v476, 10
        %vm479 = vmand %vm442, %vm477
        %vm480 = vmand %vm442, %vm478
        %v481 = vsel %vm479, -1.0, %v433
        %v482 = vsel %vm480, -1.0, %v434
        %v483 = vmax.f32 %v481, %v482
        %484 = vmax.xlane.f32.xlu0 %v483
        %v485 = vpop.xlane.xlu0 %484
        %vm486 = vcmp.ge.f32.partialorder %v485, 0.0
        %vm487 = vcmp.eq.f32.partialorder %v481, %v485
        %vm488 = vcmp.eq.f32.partialorder %v482, %v485
        %v489 = vsel %vm486, 1, 0
        %vm490 = vcmp.eq.s32.totalorder %v489, 1
        %vm491 = vmand %vm487, %vm490
        %vm492 = vmand %vm488, %vm490
        %v493 = vsel %vm491, %v136, 256
        %v494 = vsel %vm492, %v137, 256
        %vm495 = vcmp.lt.s32.totalorder %v493, %v494
        %v496 = vsel %vm495, %v493, %v494
        %v497 = vand.u32 %v496, 65535
        %v498 = vshra.s32 %v496, 16
        %v499 = vcvt.s32.f32 %v497
        %v500 = vcvt.s32.f32 %v498
        %501 = vmin.xlane.f32.xlu0 %v500
        %v502 = vpop.xlane.xlu0 %501
        %vm503 = vcmp.eq.f32.partialorder %v500, %v502
        %v504 = vsel %vm503, %v499, inf
        %505 = vmin.xlane.f32.xlu0 %v504
        %v506 = vpop.xlane.xlu0 %505
        %v507 = vcvt.f32.s32 %v506
        %v508 = vcvt.f32.s32 %v502
        %v509 = vshll.u32 %v508, 16
        %v510 = vadd.s32 %v509, %v507
        %vm511 = vcmp.eq.s32.totalorder %v136, %v510
        %vm512 = vcmp.eq.s32.totalorder %v137, %v510
        %vm513 = vmand %vm511, %vm490
        %vm514 = vmand %vm512, %vm490
        %vm515 = vmor %vm467, %vm513
        %vm516 = vmor %vm468, %vm514
        %v517 = vsub.s32 %v136, %v510
        %v518 = vsub.s32 %v137, %v510
        %v519 = vsub.s32 0, %v517
        %v520 = vsub.s32 0, %v518
        %vm521 = vcmp.gt.s32.totalorder %v517, %v519
        %v522 = vsel %vm521, %v517, %v519
        %vm523 = vcmp.gt.s32.totalorder %v518, %v520
        %v524 = vsel %vm523, %v518, %v520
        %vm525 = vcmp.lt.s32.totalorder %v522, 10
        %vm526 = vcmp.lt.s32.totalorder %v524, 10
        %vm527 = vmand %vm490, %vm525
        %vm528 = vmand %vm490, %vm526
        %v529 = vsel %vm527, -1.0, %v481
        %v530 = vsel %vm528, -1.0, %v482
        %v531 = vmax.f32 %v529, %v530
        %532 = vmax.xlane.f32.xlu0 %v531
        %v533 = vpop.xlane.xlu0 %532
        %vm534 = vcmp.ge.f32.partialorder %v533, 0.0
        %vm535 = vcmp.eq.f32.partialorder %v529, %v533
        %vm536 = vcmp.eq.f32.partialorder %v530, %v533
        %v537 = vsel %vm534, 1, 0
        %vm538 = vcmp.eq.s32.totalorder %v537, 1
        %vm539 = vmand %vm535, %vm538
        %vm540 = vmand %vm536, %vm538
        %v541 = vsel %vm539, %v136, 256
        %v542 = vsel %vm540, %v137, 256
        %vm543 = vcmp.lt.s32.totalorder %v541, %v542
        %v544 = vsel %vm543, %v541, %v542
        %v545 = vand.u32 %v544, 65535
        %v546 = vshra.s32 %v544, 16
        %v547 = vcvt.s32.f32 %v545
        %v548 = vcvt.s32.f32 %v546
        %549 = vmin.xlane.f32.xlu0 %v548
        %v550 = vpop.xlane.xlu0 %549
        %vm551 = vcmp.eq.f32.partialorder %v548, %v550
        %v552 = vsel %vm551, %v547, inf
        %553 = vmin.xlane.f32.xlu0 %v552
        %v554 = vpop.xlane.xlu0 %553
        %v555 = vcvt.f32.s32 %v554
        %v556 = vcvt.f32.s32 %v550
        %v557 = vshll.u32 %v556, 16
        %v558 = vadd.s32 %v557, %v555
        %vm559 = vcmp.eq.s32.totalorder %v136, %v558
        %vm560 = vcmp.eq.s32.totalorder %v137, %v558
        %vm561 = vmand %vm559, %vm538
        %vm562 = vmand %vm560, %vm538
        %vm563 = vmor %vm515, %vm561
        %vm564 = vmor %vm516, %vm562
        %v565 = vsub.s32 %v136, %v558
        %v566 = vsub.s32 %v137, %v558
        %v567 = vsub.s32 0, %v565
        %v568 = vsub.s32 0, %v566
        %vm569 = vcmp.gt.s32.totalorder %v565, %v567
        %v570 = vsel %vm569, %v565, %v567
        %vm571 = vcmp.gt.s32.totalorder %v566, %v568
        %v572 = vsel %vm571, %v566, %v568
        %vm573 = vcmp.lt.s32.totalorder %v570, 10
        %vm574 = vcmp.lt.s32.totalorder %v572, 10
        %vm575 = vmand %vm538, %vm573
        %vm576 = vmand %vm538, %vm574
        %v577 = vsel %vm575, -1.0, %v529
        %v578 = vsel %vm576, -1.0, %v530
        %v579 = vmax.f32 %v577, %v578
        %580 = vmax.xlane.f32.xlu0 %v579
        %v581 = vpop.xlane.xlu0 %580
        %vm582 = vcmp.ge.f32.partialorder %v581, 0.0
        %vm583 = vcmp.eq.f32.partialorder %v577, %v581
        %vm584 = vcmp.eq.f32.partialorder %v578, %v581
        %v585 = vsel %vm582, 1, 0
        %vm586 = vcmp.eq.s32.totalorder %v585, 1
        %vm587 = vmand %vm583, %vm586
        %vm588 = vmand %vm584, %vm586
        %v589 = vsel %vm587, %v136, 256
        %v590 = vsel %vm588, %v137, 256
        %vm591 = vcmp.lt.s32.totalorder %v589, %v590
        %v592 = vsel %vm591, %v589, %v590
        %v593 = vand.u32 %v592, 65535
        %v594 = vshra.s32 %v592, 16
        %v595 = vcvt.s32.f32 %v593
        %v596 = vcvt.s32.f32 %v594
        %597 = vmin.xlane.f32.xlu0 %v596
        %v598 = vpop.xlane.xlu0 %597
        %vm599 = vcmp.eq.f32.partialorder %v596, %v598
        %v600 = vsel %vm599, %v595, inf
        %601 = vmin.xlane.f32.xlu0 %v600
        %v602 = vpop.xlane.xlu0 %601
        %v603 = vcvt.f32.s32 %v602
        %v604 = vcvt.f32.s32 %v598
        %v605 = vshll.u32 %v604, 16
        %v606 = vadd.s32 %v605, %v603
        %vm607 = vcmp.eq.s32.totalorder %v136, %v606
        %vm608 = vcmp.eq.s32.totalorder %v137, %v606
        %vm609 = vmand %vm607, %vm586
        %vm610 = vmand %vm608, %vm586
        %vm611 = vmor %vm563, %vm609
        %vm612 = vmor %vm564, %vm610
        %v613 = vsub.s32 %v136, %v606
        %v614 = vsub.s32 %v137, %v606
        %v615 = vsub.s32 0, %v613
        %v616 = vsub.s32 0, %v614
        %vm617 = vcmp.gt.s32.totalorder %v613, %v615
        %v618 = vsel %vm617, %v613, %v615
        %vm619 = vcmp.gt.s32.totalorder %v614, %v616
        %v620 = vsel %vm619, %v614, %v616
        %vm621 = vcmp.lt.s32.totalorder %v618, 10
        %vm622 = vcmp.lt.s32.totalorder %v620, 10
        %vm623 = vmand %vm586, %vm621
        %vm624 = vmand %vm586, %vm622
        %v625 = vsel %vm623, -1.0, %v577
        %v626 = vsel %vm624, -1.0, %v578
        %v627 = vmax.f32 %v625, %v626
        %628 = vmax.xlane.f32.xlu0 %v627
        %v629 = vpop.xlane.xlu0 %628
        %vm630 = vcmp.ge.f32.partialorder %v629, 0.0
        %vm631 = vcmp.eq.f32.partialorder %v625, %v629
        %vm632 = vcmp.eq.f32.partialorder %v626, %v629
        %v633 = vsel %vm630, 1, 0
        %vm634 = vcmp.eq.s32.totalorder %v633, 1
        %vm635 = vmand %vm631, %vm634
        %vm636 = vmand %vm632, %vm634
        %v637 = vsel %vm635, %v136, 256
        %v638 = vsel %vm636, %v137, 256
        %vm639 = vcmp.lt.s32.totalorder %v637, %v638
        %v640 = vsel %vm639, %v637, %v638
        %v641 = vand.u32 %v640, 65535
        %v642 = vshra.s32 %v640, 16
        %v643 = vcvt.s32.f32 %v641
        %v644 = vcvt.s32.f32 %v642
        %645 = vmin.xlane.f32.xlu0 %v644
        %v646 = vpop.xlane.xlu0 %645
        %vm647 = vcmp.eq.f32.partialorder %v644, %v646
        %v648 = vsel %vm647, %v643, inf
        %649 = vmin.xlane.f32.xlu0 %v648
        %v650 = vpop.xlane.xlu0 %649
        %v651 = vcvt.f32.s32 %v650
        %v652 = vcvt.f32.s32 %v646
        %v653 = vshll.u32 %v652, 16
        %v654 = vadd.s32 %v653, %v651
        %vm655 = vcmp.eq.s32.totalorder %v136, %v654
        %vm656 = vcmp.eq.s32.totalorder %v137, %v654
        %vm657 = vmand %vm655, %vm634
        %vm658 = vmand %vm656, %vm634
        %vm659 = vmor %vm611, %vm657
        %vm660 = vmor %vm612, %vm658
        %v661 = vsub.s32 %v136, %v654
        %v662 = vsub.s32 %v137, %v654
        %v663 = vsub.s32 0, %v661
        %v664 = vsub.s32 0, %v662
        %vm665 = vcmp.gt.s32.totalorder %v661, %v663
        %v666 = vsel %vm665, %v661, %v663
        %vm667 = vcmp.gt.s32.totalorder %v662, %v664
        %v668 = vsel %vm667, %v662, %v664
        %vm669 = vcmp.lt.s32.totalorder %v666, 10
        %vm670 = vcmp.lt.s32.totalorder %v668, 10
        %vm671 = vmand %vm634, %vm669
        %vm672 = vmand %vm634, %vm670
        %v673 = vsel %vm671, -1.0, %v625
        %v674 = vsel %vm672, -1.0, %v626
        %v675 = vmax.f32 %v673, %v674
        %676 = vmax.xlane.f32.xlu0 %v675
        %v677 = vpop.xlane.xlu0 %676
        %vm678 = vcmp.ge.f32.partialorder %v677, 0.0
        %vm679 = vcmp.eq.f32.partialorder %v673, %v677
        %vm680 = vcmp.eq.f32.partialorder %v674, %v677
        %v681 = vsel %vm678, 1, 0
        %vm682 = vcmp.eq.s32.totalorder %v681, 1
        %vm683 = vmand %vm679, %vm682
        %vm684 = vmand %vm680, %vm682
        %v685 = vsel %vm683, %v136, 256
        %v686 = vsel %vm684, %v137, 256
        %vm687 = vcmp.lt.s32.totalorder %v685, %v686
        %v688 = vsel %vm687, %v685, %v686
        %v689 = vand.u32 %v688, 65535
        %v690 = vshra.s32 %v688, 16
        %v691 = vcvt.s32.f32 %v689
        %v692 = vcvt.s32.f32 %v690
        %693 = vmin.xlane.f32.xlu0 %v692
        %v694 = vpop.xlane.xlu0 %693
        %vm695 = vcmp.eq.f32.partialorder %v692, %v694
        %v696 = vsel %vm695, %v691, inf
        %697 = vmin.xlane.f32.xlu0 %v696
        %v698 = vpop.xlane.xlu0 %697
        %v699 = vcvt.f32.s32 %v698
        %v700 = vcvt.f32.s32 %v694
        %v701 = vshll.u32 %v700, 16
        %v702 = vadd.s32 %v701, %v699
        %vm703 = vcmp.eq.s32.totalorder %v136, %v702
        %vm704 = vcmp.eq.s32.totalorder %v137, %v702
        %vm705 = vmand %vm703, %vm682
        %vm706 = vmand %vm704, %vm682
        %vm707 = vmor %vm659, %vm705
        %vm708 = vmor %vm660, %vm706
        %v709 = vsub.s32 %v136, %v702
        %v710 = vsub.s32 %v137, %v702
        %v711 = vsub.s32 0, %v709
        %v712 = vsub.s32 0, %v710
        %vm713 = vcmp.gt.s32.totalorder %v709, %v711
        %v714 = vsel %vm713, %v709, %v711
        %vm715 = vcmp.gt.s32.totalorder %v710, %v712
        %v716 = vsel %vm715, %v710, %v712
        %vm717 = vcmp.lt.s32.totalorder %v714, 10
        %vm718 = vcmp.lt.s32.totalorder %v716, 10
        %vm719 = vmand %vm682, %vm717
        %vm720 = vmand %vm682, %vm718
        %v721 = vsel %vm719, -1.0, %v673
        %v722 = vsel %vm720, -1.0, %v674
        %v723 = vmax.f32 %v721, %v722
        %724 = vmax.xlane.f32.xlu0 %v723
        %v725 = vpop.xlane.xlu0 %724
        %vm726 = vcmp.ge.f32.partialorder %v725, 0.0
        %vm727 = vcmp.eq.f32.partialorder %v721, %v725
        %vm728 = vcmp.eq.f32.partialorder %v722, %v725
        %v729 = vsel %vm726, 1, 0
        %vm730 = vcmp.eq.s32.totalorder %v729, 1
        %vm731 = vmand %vm727, %vm730
        %vm732 = vmand %vm728, %vm730
        %v733 = vsel %vm731, %v136, 256
        %v734 = vsel %vm732, %v137, 256
        %vm735 = vcmp.lt.s32.totalorder %v733, %v734
        %v736 = vsel %vm735, %v733, %v734
        %v737 = vand.u32 %v736, 65535
        %v738 = vshra.s32 %v736, 16
        %v739 = vcvt.s32.f32 %v737
        %v740 = vcvt.s32.f32 %v738
        %741 = vmin.xlane.f32.xlu0 %v740
        %v742 = vpop.xlane.xlu0 %741
        %vm743 = vcmp.eq.f32.partialorder %v740, %v742
        %v744 = vsel %vm743, %v739, inf
        %745 = vmin.xlane.f32.xlu0 %v744
        %v746 = vpop.xlane.xlu0 %745
        %v747 = vcvt.f32.s32 %v746
        %v748 = vcvt.f32.s32 %v742
        %v749 = vshll.u32 %v748, 16
        %v750 = vadd.s32 %v749, %v747
        %vm751 = vcmp.eq.s32.totalorder %v136, %v750
        %vm752 = vcmp.eq.s32.totalorder %v137, %v750
        %vm753 = vmand %vm751, %vm730
        %vm754 = vmand %vm752, %vm730
        %vm755 = vmor %vm707, %vm753
        %vm756 = vmor %vm708, %vm754
        %v757 = vsub.s32 %v136, %v750
        %v758 = vsub.s32 %v137, %v750
        %v759 = vsub.s32 0, %v757
        %v760 = vsub.s32 0, %v758
        %vm761 = vcmp.gt.s32.totalorder %v757, %v759
        %v762 = vsel %vm761, %v757, %v759
        %vm763 = vcmp.gt.s32.totalorder %v758, %v760
        %v764 = vsel %vm763, %v758, %v760
        %vm765 = vcmp.lt.s32.totalorder %v762, 10
        %vm766 = vcmp.lt.s32.totalorder %v764, 10
        %vm767 = vmand %vm730, %vm765
        %vm768 = vmand %vm730, %vm766
        %v769 = vsel %vm767, -1.0, %v721
        %v770 = vsel %vm768, -1.0, %v722
        %v771 = vmax.f32 %v769, %v770
        %772 = vmax.xlane.f32.xlu0 %v771
        %v773 = vpop.xlane.xlu0 %772
        %vm774 = vcmp.ge.f32.partialorder %v773, 0.0
        %vm775 = vcmp.eq.f32.partialorder %v769, %v773
        %vm776 = vcmp.eq.f32.partialorder %v770, %v773
        %v777 = vsel %vm774, 1, 0
        %vm778 = vcmp.eq.s32.totalorder %v777, 1
        %vm779 = vmand %vm775, %vm778
        %vm780 = vmand %vm776, %vm778
        %v781 = vsel %vm779, %v136, 256
        %v782 = vsel %vm780, %v137, 256
        %vm783 = vcmp.lt.s32.totalorder %v781, %v782
        %v784 = vsel %vm783, %v781, %v782
        %v785 = vand.u32 %v784, 65535
        %v786 = vshra.s32 %v784, 16
        %v787 = vcvt.s32.f32 %v785
        %v788 = vcvt.s32.f32 %v786
        %789 = vmin.xlane.f32.xlu0 %v788
        %v790 = vpop.xlane.xlu0 %789
        %vm791 = vcmp.eq.f32.partialorder %v788, %v790
        %v792 = vsel %vm791, %v787, inf
        %793 = vmin.xlane.f32.xlu0 %v792
        %v794 = vpop.xlane.xlu0 %793
        %v795 = vcvt.f32.s32 %v794
        %v796 = vcvt.f32.s32 %v790
        %v797 = vshll.u32 %v796, 16
        %v798 = vadd.s32 %v797, %v795
        %vm799 = vcmp.eq.s32.totalorder %v136, %v798
        %vm800 = vcmp.eq.s32.totalorder %v137, %v798
        %vm801 = vmand %vm799, %vm778
        %vm802 = vmand %vm800, %vm778
        %vm803 = vmor %vm755, %vm801
        %vm804 = vmor %vm756, %vm802
        %v805 = vsub.s32 %v136, %v798
        %v806 = vsub.s32 %v137, %v798
        %v807 = vsub.s32 0, %v805
        %v808 = vsub.s32 0, %v806
        %vm809 = vcmp.gt.s32.totalorder %v805, %v807
        %v810 = vsel %vm809, %v805, %v807
        %vm811 = vcmp.gt.s32.totalorder %v806, %v808
        %v812 = vsel %vm811, %v806, %v808
        %vm813 = vcmp.lt.s32.totalorder %v810, 10
        %vm814 = vcmp.lt.s32.totalorder %v812, 10
        %vm815 = vmand %vm778, %vm813
        %vm816 = vmand %vm778, %vm814
        %v817 = vsel %vm815, -1.0, %v769
        %v818 = vsel %vm816, -1.0, %v770
        %v819 = vmax.f32 %v817, %v818
        %820 = vmax.xlane.f32.xlu0 %v819
        %v821 = vpop.xlane.xlu0 %820
        %vm822 = vcmp.ge.f32.partialorder %v821, 0.0
        %vm823 = vcmp.eq.f32.partialorder %v817, %v821
        %vm824 = vcmp.eq.f32.partialorder %v818, %v821
        %v825 = vsel %vm822, 1, 0
        %vm826 = vcmp.eq.s32.totalorder %v825, 1
        %vm827 = vmand %vm823, %vm826
        %vm828 = vmand %vm824, %vm826
        %v829 = vsel %vm827, %v136, 256
        %v830 = vsel %vm828, %v137, 256
        %vm831 = vcmp.lt.s32.totalorder %v829, %v830
        %v832 = vsel %vm831, %v829, %v830
        %v833 = vand.u32 %v832, 65535
        %v834 = vshra.s32 %v832, 16
        %v835 = vcvt.s32.f32 %v833
        %v836 = vcvt.s32.f32 %v834
        %837 = vmin.xlane.f32.xlu0 %v836
        %v838 = vpop.xlane.xlu0 %837
        %vm839 = vcmp.eq.f32.partialorder %v836, %v838
        %v840 = vsel %vm839, %v835, inf
        %841 = vmin.xlane.f32.xlu0 %v840
        %v842 = vpop.xlane.xlu0 %841
        %v843 = vcvt.f32.s32 %v842
        %v844 = vcvt.f32.s32 %v838
        %v845 = vshll.u32 %v844, 16
        %v846 = vadd.s32 %v845, %v843
        %vm847 = vcmp.eq.s32.totalorder %v136, %v846
        %vm848 = vcmp.eq.s32.totalorder %v137, %v846
        %vm849 = vmand %vm847, %vm826
        %vm850 = vmand %vm848, %vm826
        %vm851 = vmor %vm803, %vm849
        %vm852 = vmor %vm804, %vm850
        %v853 = vsub.s32 %v136, %v846
        %v854 = vsub.s32 %v137, %v846
        %v855 = vsub.s32 0, %v853
        %v856 = vsub.s32 0, %v854
        %vm857 = vcmp.gt.s32.totalorder %v853, %v855
        %v858 = vsel %vm857, %v853, %v855
        %vm859 = vcmp.gt.s32.totalorder %v854, %v856
        %v860 = vsel %vm859, %v854, %v856
        %vm861 = vcmp.lt.s32.totalorder %v858, 10
        %vm862 = vcmp.lt.s32.totalorder %v860, 10
        %vm863 = vmand %vm826, %vm861
        %vm864 = vmand %vm826, %vm862
        %v865 = vsel %vm863, -1.0, %v817
        %v866 = vsel %vm864, -1.0, %v818
        %v867 = vmax.f32 %v865, %v866
        %868 = vmax.xlane.f32.xlu0 %v867
        %v869 = vpop.xlane.xlu0 %868
        %vm870 = vcmp.ge.f32.partialorder %v869, 0.0
        %vm871 = vcmp.eq.f32.partialorder %v865, %v869
        %vm872 = vcmp.eq.f32.partialorder %v866, %v869
        %v873 = vsel %vm870, 1, 0
        %vm874 = vcmp.eq.s32.totalorder %v873, 1
        %vm875 = vmand %vm871, %vm874
        %vm876 = vmand %vm872, %vm874
        %v877 = vsel %vm875, %v136, 256
        %v878 = vsel %vm876, %v137, 256
        %vm879 = vcmp.lt.s32.totalorder %v877, %v878
        %v880 = vsel %vm879, %v877, %v878
        %v881 = vand.u32 %v880, 65535
        %v882 = vshra.s32 %v880, 16
        %v883 = vcvt.s32.f32 %v881
        %v884 = vcvt.s32.f32 %v882
        %885 = vmin.xlane.f32.xlu0 %v884
        %v886 = vpop.xlane.xlu0 %885
        %vm887 = vcmp.eq.f32.partialorder %v884, %v886
        %v888 = vsel %vm887, %v883, inf
        %889 = vmin.xlane.f32.xlu0 %v888
        %v890 = vpop.xlane.xlu0 %889
        %v891 = vcvt.f32.s32 %v890
        %v892 = vcvt.f32.s32 %v886
        %v893 = vshll.u32 %v892, 16
        %v894 = vadd.s32 %v893, %v891
        %vm895 = vcmp.eq.s32.totalorder %v136, %v894
        %vm896 = vcmp.eq.s32.totalorder %v137, %v894
        %vm897 = vmand %vm895, %vm874
        %vm898 = vmand %vm896, %vm874
        %vm899 = vmor %vm851, %vm897
        %vm900 = vmor %vm852, %vm898
        %v901 = vsub.s32 %v136, %v894
        %v902 = vsub.s32 %v137, %v894
        %v903 = vsub.s32 0, %v901
        %v904 = vsub.s32 0, %v902
        %vm905 = vcmp.gt.s32.totalorder %v901, %v903
        %v906 = vsel %vm905, %v901, %v903
        %vm907 = vcmp.gt.s32.totalorder %v902, %v904
        %v908 = vsel %vm907, %v902, %v904
        %vm909 = vcmp.lt.s32.totalorder %v906, 10
        %vm910 = vcmp.lt.s32.totalorder %v908, 10
        %vm911 = vmand %vm874, %vm909
        %vm912 = vmand %vm874, %vm910
        %v913 = vsel %vm911, -1.0, %v865
        %v914 = vsel %vm912, -1.0, %v866
        %v915 = vmax.f32 %v913, %v914
        %916 = vmax.xlane.f32.xlu0 %v915
        %v917 = vpop.xlane.xlu0 %916
        %vm918 = vcmp.ge.f32.partialorder %v917, 0.0
        %vm919 = vcmp.eq.f32.partialorder %v913, %v917
        %vm920 = vcmp.eq.f32.partialorder %v914, %v917
        %v921 = vsel %vm918, 1, 0
        %vm922 = vcmp.eq.s32.totalorder %v921, 1
        %vm923 = vmand %vm919, %vm922
        %vm924 = vmand %vm920, %vm922
        %v925 = vsel %vm923, %v136, 256
        %v926 = vsel %vm924, %v137, 256
        %vm927 = vcmp.lt.s32.totalorder %v925, %v926
        %v928 = vsel %vm927, %v925, %v926
        %v929 = vand.u32 %v928, 65535
        %v930 = vshra.s32 %v928, 16
        %v931 = vcvt.s32.f32 %v929
        %v932 = vcvt.s32.f32 %v930
        %933 = vmin.xlane.f32.xlu0 %v932
        %v934 = vpop.xlane.xlu0 %933
        %vm935 = vcmp.eq.f32.partialorder %v932, %v934
        %v936 = vsel %vm935, %v931, inf
        %937 = vmin.xlane.f32.xlu0 %v936
        %v938 = vpop.xlane.xlu0 %937
        %v939 = vcvt.f32.s32 %v938
        %v940 = vcvt.f32.s32 %v934
        %v941 = vshll.u32 %v940, 16
        %v942 = vadd.s32 %v941, %v939
        %vm943 = vcmp.eq.s32.totalorder %v136, %v942
        %vm944 = vcmp.eq.s32.totalorder %v137, %v942
        %vm945 = vmand %vm943, %vm922
        %vm946 = vmand %vm944, %vm922
        %vm947 = vmor %vm899, %vm945
        %vm948 = vmor %vm900, %vm946
        %v949 = vsub.s32 %v136, %v942
        %v950 = vsub.s32 %v137, %v942
        %v951 = vsub.s32 0, %v949
        %v952 = vsub.s32 0, %v950
        %vm953 = vcmp.gt.s32.totalorder %v949, %v951
        %v954 = vsel %vm953, %v949, %v951
        %vm955 = vcmp.gt.s32.totalorder %v950, %v952
        %v956 = vsel %vm955, %v950, %v952
        %vm957 = vcmp.lt.s32.totalorder %v954, 10
        %vm958 = vcmp.lt.s32.totalorder %v956, 10
        %vm959 = vmand %vm922, %vm957
        %vm960 = vmand %vm922, %vm958
        %v961 = vsel %vm959, -1.0, %v913
        %v962 = vsel %vm960, -1.0, %v914
        %v963 = vmax.f32 %v961, %v962
        %964 = vmax.xlane.f32.xlu0 %v963
        %v965 = vpop.xlane.xlu0 %964
        %vm966 = vcmp.ge.f32.partialorder %v965, 0.0
        %vm967 = vcmp.eq.f32.partialorder %v961, %v965
        %vm968 = vcmp.eq.f32.partialorder %v962, %v965
        %v969 = vsel %vm966, 1, 0
        %vm970 = vcmp.eq.s32.totalorder %v969, 1
        %vm971 = vmand %vm967, %vm970
        %vm972 = vmand %vm968, %vm970
        %v973 = vsel %vm971, %v136, 256
        %v974 = vsel %vm972, %v137, 256
        %vm975 = vcmp.lt.s32.totalorder %v973, %v974
        %v976 = vsel %vm975, %v973, %v974
        %v977 = vand.u32 %v976, 65535
        %v978 = vshra.s32 %v976, 16
        %v979 = vcvt.s32.f32 %v977
        %v980 = vcvt.s32.f32 %v978
        %981 = vmin.xlane.f32.xlu0 %v980
        %v982 = vpop.xlane.xlu0 %981
        %vm983 = vcmp.eq.f32.partialorder %v980, %v982
        %v984 = vsel %vm983, %v979, inf
        %985 = vmin.xlane.f32.xlu0 %v984
        %v986 = vpop.xlane.xlu0 %985
        %v987 = vcvt.f32.s32 %v986
        %v988 = vcvt.f32.s32 %v982
        %v989 = vshll.u32 %v988, 16
        %v990 = vadd.s32 %v989, %v987
        %vm991 = vcmp.eq.s32.totalorder %v136, %v990
        %vm992 = vcmp.eq.s32.totalorder %v137, %v990
        %vm993 = vmand %vm991, %vm970
        %vm994 = vmand %vm992, %vm970
        %vm995 = vmor %vm947, %vm993
        %vm996 = vmor %vm948, %vm994
        %v997 = vsub.s32 %v136, %v990
        %v998 = vsub.s32 %v137, %v990
        %v999 = vsub.s32 0, %v997
        %v1000 = vsub.s32 0, %v998
        %vm1001 = vcmp.gt.s32.totalorder %v997, %v999
        %v1002 = vsel %vm1001, %v997, %v999
        %vm1003 = vcmp.gt.s32.totalorder %v998, %v1000
        %v1004 = vsel %vm1003, %v998, %v1000
        %vm1005 = vcmp.lt.s32.totalorder %v1002, 10
        %vm1006 = vcmp.lt.s32.totalorder %v1004, 10
        %vm1007 = vmand %vm970, %vm1005
        %vm1008 = vmand %vm970, %vm1006
        %v1009 = vsel %vm1007, -1.0, %v961
        %v1010 = vsel %vm1008, -1.0, %v962
        %v1011 = vmax.f32 %v1009, %v1010
        %1012 = vmax.xlane.f32.xlu0 %v1011
        %v1013 = vpop.xlane.xlu0 %1012
        %vm1014 = vcmp.ge.f32.partialorder %v1013, 0.0
        %vm1015 = vcmp.eq.f32.partialorder %v1009, %v1013
        %vm1016 = vcmp.eq.f32.partialorder %v1010, %v1013
        %v1017 = vsel %vm1014, 1, 0
        %vm1018 = vcmp.eq.s32.totalorder %v1017, 1
        %vm1019 = vmand %vm1015, %vm1018
        %vm1020 = vmand %vm1016, %vm1018
        %v1021 = vsel %vm1019, %v136, 256
        %v1022 = vsel %vm1020, %v137, 256
        %vm1023 = vcmp.lt.s32.totalorder %v1021, %v1022
        %v1024 = vsel %vm1023, %v1021, %v1022
        %v1025 = vand.u32 %v1024, 65535
        %v1026 = vshra.s32 %v1024, 16
        %v1027 = vcvt.s32.f32 %v1025
        %v1028 = vcvt.s32.f32 %v1026
        %1029 = vmin.xlane.f32.xlu0 %v1028
        %v1030 = vpop.xlane.xlu0 %1029
        %vm1031 = vcmp.eq.f32.partialorder %v1028, %v1030
        %v1032 = vsel %vm1031, %v1027, inf
        %1033 = vmin.xlane.f32.xlu0 %v1032
        %v1034 = vpop.xlane.xlu0 %1033
        %v1035 = vcvt.f32.s32 %v1034
        %v1036 = vcvt.f32.s32 %v1030
        %v1037 = vshll.u32 %v1036, 16
        %v1038 = vadd.s32 %v1037, %v1035
        %vm1039 = vcmp.eq.s32.totalorder %v136, %v1038
        %vm1040 = vcmp.eq.s32.totalorder %v137, %v1038
        %vm1041 = vmand %vm1039, %vm1018
        %vm1042 = vmand %vm1040, %vm1018
        %vm1043 = vmor %vm995, %vm1041
        %vm1044 = vmor %vm996, %vm1042
        %v1045 = vsub.s32 %v136, %v1038
        %v1046 = vsub.s32 %v137, %v1038
        %v1047 = vsub.s32 0, %v1045
        %v1048 = vsub.s32 0, %v1046
        %vm1049 = vcmp.gt.s32.totalorder %v1045, %v1047
        %v1050 = vsel %vm1049, %v1045, %v1047
        %vm1051 = vcmp.gt.s32.totalorder %v1046, %v1048
        %v1052 = vsel %vm1051, %v1046, %v1048
        %vm1053 = vcmp.lt.s32.totalorder %v1050, 10
        %vm1054 = vcmp.lt.s32.totalorder %v1052, 10
        %vm1055 = vmand %vm1018, %vm1053
        %vm1056 = vmand %vm1018, %vm1054
        %v1057 = vsel %vm1055, -1.0, %v1009
        %v1058 = vsel %vm1056, -1.0, %v1010
        %v1059 = vmax.f32 %v1057, %v1058
        %1060 = vmax.xlane.f32.xlu0 %v1059
        %v1061 = vpop.xlane.xlu0 %1060
        %vm1062 = vcmp.ge.f32.partialorder %v1061, 0.0
        %vm1063 = vcmp.eq.f32.partialorder %v1057, %v1061
        %vm1064 = vcmp.eq.f32.partialorder %v1058, %v1061
        %v1065 = vsel %vm1062, 1, 0
        %vm1066 = vcmp.eq.s32.totalorder %v1065, 1
        %vm1067 = vmand %vm1063, %vm1066
        %vm1068 = vmand %vm1064, %vm1066
        %v1069 = vsel %vm1067, %v136, 256
        %v1070 = vsel %vm1068, %v137, 256
        %vm1071 = vcmp.lt.s32.totalorder %v1069, %v1070
        %v1072 = vsel %vm1071, %v1069, %v1070
        %v1073 = vand.u32 %v1072, 65535
        %v1074 = vshra.s32 %v1072, 16
        %v1075 = vcvt.s32.f32 %v1073
        %v1076 = vcvt.s32.f32 %v1074
        %1077 = vmin.xlane.f32.xlu0 %v1076
        %v1078 = vpop.xlane.xlu0 %1077
        %vm1079 = vcmp.eq.f32.partialorder %v1076, %v1078
        %v1080 = vsel %vm1079, %v1075, inf
        %1081 = vmin.xlane.f32.xlu0 %v1080
        %v1082 = vpop.xlane.xlu0 %1081
        %v1083 = vcvt.f32.s32 %v1082
        %v1084 = vcvt.f32.s32 %v1078
        %v1085 = vshll.u32 %v1084, 16
        %v1086 = vadd.s32 %v1085, %v1083
        %vm1087 = vcmp.eq.s32.totalorder %v136, %v1086
        %vm1088 = vcmp.eq.s32.totalorder %v137, %v1086
        %vm1089 = vmand %vm1087, %vm1066
        %vm1090 = vmand %vm1088, %vm1066
        %vm1091 = vmor %vm1043, %vm1089
        %vm1092 = vmor %vm1044, %vm1090
        %v1093 = vsub.s32 %v136, %v1086
        %v1094 = vsub.s32 %v137, %v1086
        %v1095 = vsub.s32 0, %v1093
        %v1096 = vsub.s32 0, %v1094
        %vm1097 = vcmp.gt.s32.totalorder %v1093, %v1095
        %v1098 = vsel %vm1097, %v1093, %v1095
        %vm1099 = vcmp.gt.s32.totalorder %v1094, %v1096
        %v1100 = vsel %vm1099, %v1094, %v1096
        %vm1101 = vcmp.lt.s32.totalorder %v1098, 10
        %vm1102 = vcmp.lt.s32.totalorder %v1100, 10
        %vm1103 = vmand %vm1066, %vm1101
        %vm1104 = vmand %vm1066, %vm1102
        %v1105 = vsel %vm1103, -1.0, %v1057
        %v1106 = vsel %vm1104, -1.0, %v1058
        %v1107 = vmax.f32 %v1105, %v1106
        %1108 = vmax.xlane.f32.xlu0 %v1107
        %v1109 = vpop.xlane.xlu0 %1108
        %vm1110 = vcmp.ge.f32.partialorder %v1109, 0.0
        %vm1111 = vcmp.eq.f32.partialorder %v1105, %v1109
        %vm1112 = vcmp.eq.f32.partialorder %v1106, %v1109
        %v1113 = vsel %vm1110, 1, 0
        %vm1114 = vcmp.eq.s32.totalorder %v1113, 1
        %vm1115 = vmand %vm1111, %vm1114
        %vm1116 = vmand %vm1112, %vm1114
        %v1117 = vsel %vm1115, %v136, 256
        %v1118 = vsel %vm1116, %v137, 256
        %vm1119 = vcmp.lt.s32.totalorder %v1117, %v1118
        %v1120 = vsel %vm1119, %v1117, %v1118
        %v1121 = vand.u32 %v1120, 65535
        %v1122 = vshra.s32 %v1120, 16
        %v1123 = vcvt.s32.f32 %v1121
        %v1124 = vcvt.s32.f32 %v1122
        %1125 = vmin.xlane.f32.xlu0 %v1124
        %v1126 = vpop.xlane.xlu0 %1125
        %vm1127 = vcmp.eq.f32.partialorder %v1124, %v1126
        %v1128 = vsel %vm1127, %v1123, inf
        %1129 = vmin.xlane.f32.xlu0 %v1128
        %v1130 = vpop.xlane.xlu0 %1129
        %v1131 = vcvt.f32.s32 %v1130
        %v1132 = vcvt.f32.s32 %v1126
        %v1133 = vshll.u32 %v1132, 16
        %v1134 = vadd.s32 %v1133, %v1131
        %vm1135 = vcmp.eq.s32.totalorder %v136, %v1134
        %vm1136 = vcmp.eq.s32.totalorder %v137, %v1134
        %vm1137 = vmand %vm1135, %vm1114
        %vm1138 = vmand %vm1136, %vm1114
        %vm1139 = vmor %vm1091, %vm1137
        %vm1140 = vmor %vm1092, %vm1138
        %v1141 = vsub.s32 %v136, %v1134
        %v1142 = vsub.s32 %v137, %v1134
        %v1143 = vsub.s32 0, %v1141
        %v1144 = vsub.s32 0, %v1142
        %vm1145 = vcmp.gt.s32.totalorder %v1141, %v1143
        %v1146 = vsel %vm1145, %v1141, %v1143
        %vm1147 = vcmp.gt.s32.totalorder %v1142, %v1144
        %v1148 = vsel %vm1147, %v1142, %v1144
        %vm1149 = vcmp.lt.s32.totalorder %v1146, 10
        %vm1150 = vcmp.lt.s32.totalorder %v1148, 10
        %vm1151 = vmand %vm1114, %vm1149
        %vm1152 = vmand %vm1114, %vm1150
        %v1153 = vsel %vm1151, -1.0, %v1105
        %v1154 = vsel %vm1152, -1.0, %v1106
        %v1155 = vmax.f32 %v1153, %v1154
        %1156 = vmax.xlane.f32.xlu0 %v1155
        %v1157 = vpop.xlane.xlu0 %1156
        %vm1158 = vcmp.ge.f32.partialorder %v1157, 0.0
        %vm1159 = vcmp.eq.f32.partialorder %v1153, %v1157
        %vm1160 = vcmp.eq.f32.partialorder %v1154, %v1157
        %v1161 = vsel %vm1158, 1, 0
        %vm1162 = vcmp.eq.s32.totalorder %v1161, 1
        %vm1163 = vmand %vm1159, %vm1162
        %vm1164 = vmand %vm1160, %vm1162
        %v1165 = vsel %vm1163, %v136, 256
        %v1166 = vsel %vm1164, %v137, 256
        %vm1167 = vcmp.lt.s32.totalorder %v1165, %v1166
        %v1168 = vsel %vm1167, %v1165, %v1166
        %v1169 = vand.u32 %v1168, 65535
        %v1170 = vshra.s32 %v1168, 16
        %v1171 = vcvt.s32.f32 %v1169
        %v1172 = vcvt.s32.f32 %v1170
        %1173 = vmin.xlane.f32.xlu0 %v1172
        %v1174 = vpop.xlane.xlu0 %1173
        %vm1175 = vcmp.eq.f32.partialorder %v1172, %v1174
        %v1176 = vsel %vm1175, %v1171, inf
        %1177 = vmin.xlane.f32.xlu0 %v1176
        %v1178 = vpop.xlane.xlu0 %1177
        %v1179 = vcvt.f32.s32 %v1178
        %v1180 = vcvt.f32.s32 %v1174
        %v1181 = vshll.u32 %v1180, 16
        %v1182 = vadd.s32 %v1181, %v1179
        %vm1183 = vcmp.eq.s32.totalorder %v136, %v1182
        %vm1184 = vcmp.eq.s32.totalorder %v137, %v1182
        %vm1185 = vmand %vm1183, %vm1162
        %vm1186 = vmand %vm1184, %vm1162
        %vm1187 = vmor %vm1139, %vm1185
        %vm1188 = vmor %vm1140, %vm1186
        %v1189 = vsub.s32 %v136, %v1182
        %v1190 = vsub.s32 %v137, %v1182
        %v1191 = vsub.s32 0, %v1189
        %v1192 = vsub.s32 0, %v1190
        %vm1193 = vcmp.gt.s32.totalorder %v1189, %v1191
        %v1194 = vsel %vm1193, %v1189, %v1191
        %vm1195 = vcmp.gt.s32.totalorder %v1190, %v1192
        %v1196 = vsel %vm1195, %v1190, %v1192
        %vm1197 = vcmp.lt.s32.totalorder %v1194, 10
        %vm1198 = vcmp.lt.s32.totalorder %v1196, 10
        %vm1199 = vmand %vm1162, %vm1197
        %vm1200 = vmand %vm1162, %vm1198
        %v1201 = vsel %vm1199, -1.0, %v1153
        %v1202 = vsel %vm1200, -1.0, %v1154
        %v1203 = vmax.f32 %v1201, %v1202
        %1204 = vmax.xlane.f32.xlu0 %v1203
        %v1205 = vpop.xlane.xlu0 %1204
        %vm1206 = vcmp.ge.f32.partialorder %v1205, 0.0
        %vm1207 = vcmp.eq.f32.partialorder %v1201, %v1205
        %vm1208 = vcmp.eq.f32.partialorder %v1202, %v1205
        %v1209 = vsel %vm1206, 1, 0
        %vm1210 = vcmp.eq.s32.totalorder %v1209, 1
        %vm1211 = vmand %vm1207, %vm1210
        %vm1212 = vmand %vm1208, %vm1210
        %v1213 = vsel %vm1211, %v136, 256
        %v1214 = vsel %vm1212, %v137, 256
        %vm1215 = vcmp.lt.s32.totalorder %v1213, %v1214
        %v1216 = vsel %vm1215, %v1213, %v1214
        %v1217 = vand.u32 %v1216, 65535
        %v1218 = vshra.s32 %v1216, 16
        %v1219 = vcvt.s32.f32 %v1217
        %v1220 = vcvt.s32.f32 %v1218
        %1221 = vmin.xlane.f32.xlu0 %v1220
        %v1222 = vpop.xlane.xlu0 %1221
        %vm1223 = vcmp.eq.f32.partialorder %v1220, %v1222
        %v1224 = vsel %vm1223, %v1219, inf
        %1225 = vmin.xlane.f32.xlu0 %v1224
        %v1226 = vpop.xlane.xlu0 %1225
        %v1227 = vcvt.f32.s32 %v1226
        %v1228 = vcvt.f32.s32 %v1222
        %v1229 = vshll.u32 %v1228, 16
        %v1230 = vadd.s32 %v1229, %v1227
        %vm1231 = vcmp.eq.s32.totalorder %v136, %v1230
        %vm1232 = vcmp.eq.s32.totalorder %v137, %v1230
        %vm1233 = vmand %vm1231, %vm1210
        %vm1234 = vmand %vm1232, %vm1210
        %vm1235 = vmor %vm1187, %vm1233
        %vm1236 = vmor %vm1188, %vm1234
        %v1237 = vsub.s32 %v136, %v1230
        %v1238 = vsub.s32 %v137, %v1230
        %v1239 = vsub.s32 0, %v1237
        %v1240 = vsub.s32 0, %v1238
        %vm1241 = vcmp.gt.s32.totalorder %v1237, %v1239
        %v1242 = vsel %vm1241, %v1237, %v1239
        %vm1243 = vcmp.gt.s32.totalorder %v1238, %v1240
        %v1244 = vsel %vm1243, %v1238, %v1240
        %vm1245 = vcmp.lt.s32.totalorder %v1242, 10
        %vm1246 = vcmp.lt.s32.totalorder %v1244, 10
        %vm1247 = vmand %vm1210, %vm1245
        %vm1248 = vmand %vm1210, %vm1246
        %v1249 = vsel %vm1247, -1.0, %v1201
        %v1250 = vsel %vm1248, -1.0, %v1202
        %v1251 = vmax.f32 %v1249, %v1250
        %1252 = vmax.xlane.f32.xlu0 %v1251
        %v1253 = vpop.xlane.xlu0 %1252
        %vm1254 = vcmp.ge.f32.partialorder %v1253, 0.0
        %vm1255 = vcmp.eq.f32.partialorder %v1249, %v1253
        %vm1256 = vcmp.eq.f32.partialorder %v1250, %v1253
        %v1257 = vsel %vm1254, 1, 0
        %vm1258 = vcmp.eq.s32.totalorder %v1257, 1
        %vm1259 = vmand %vm1255, %vm1258
        %vm1260 = vmand %vm1256, %vm1258
        %v1261 = vsel %vm1259, %v136, 256
        %v1262 = vsel %vm1260, %v137, 256
        %vm1263 = vcmp.lt.s32.totalorder %v1261, %v1262
        %v1264 = vsel %vm1263, %v1261, %v1262
        %v1265 = vand.u32 %v1264, 65535
        %v1266 = vshra.s32 %v1264, 16
        %v1267 = vcvt.s32.f32 %v1265
        %v1268 = vcvt.s32.f32 %v1266
        %1269 = vmin.xlane.f32.xlu0 %v1268
        %v1270 = vpop.xlane.xlu0 %1269
        %vm1271 = vcmp.eq.f32.partialorder %v1268, %v1270
        %v1272 = vsel %vm1271, %v1267, inf
        %1273 = vmin.xlane.f32.xlu0 %v1272
        %v1274 = vpop.xlane.xlu0 %1273
        %v1275 = vcvt.f32.s32 %v1274
        %v1276 = vcvt.f32.s32 %v1270
        %v1277 = vshll.u32 %v1276, 16
        %v1278 = vadd.s32 %v1277, %v1275
        %vm1279 = vcmp.eq.s32.totalorder %v136, %v1278
        %vm1280 = vcmp.eq.s32.totalorder %v137, %v1278
        %vm1281 = vmand %vm1279, %vm1258
        %vm1282 = vmand %vm1280, %vm1258
        %vm1283 = vmor %vm1235, %vm1281
        %vm1284 = vmor %vm1236, %vm1282
        %v1285 = vsub.s32 %v136, %v1278
        %v1286 = vsub.s32 %v137, %v1278
        %v1287 = vsub.s32 0, %v1285
        %v1288 = vsub.s32 0, %v1286
        %vm1289 = vcmp.gt.s32.totalorder %v1285, %v1287
        %v1290 = vsel %vm1289, %v1285, %v1287
        %vm1291 = vcmp.gt.s32.totalorder %v1286, %v1288
        %v1292 = vsel %vm1291, %v1286, %v1288
        %vm1293 = vcmp.lt.s32.totalorder %v1290, 10
        %vm1294 = vcmp.lt.s32.totalorder %v1292, 10
        %vm1295 = vmand %vm1258, %vm1293
        %vm1296 = vmand %vm1258, %vm1294
        %v1297 = vsel %vm1295, -1.0, %v1249
        %v1298 = vsel %vm1296, -1.0, %v1250
        %v1299 = vmax.f32 %v1297, %v1298
        %1300 = vmax.xlane.f32.xlu0 %v1299
        %v1301 = vpop.xlane.xlu0 %1300
        %vm1302 = vcmp.ge.f32.partialorder %v1301, 0.0
        %vm1303 = vcmp.eq.f32.partialorder %v1297, %v1301
        %vm1304 = vcmp.eq.f32.partialorder %v1298, %v1301
        %v1305 = vsel %vm1302, 1, 0
        %vm1306 = vcmp.eq.s32.totalorder %v1305, 1
        %vm1307 = vmand %vm1303, %vm1306
        %vm1308 = vmand %vm1304, %vm1306
        %v1309 = vsel %vm1307, %v136, 256
        %v1310 = vsel %vm1308, %v137, 256
        %vm1311 = vcmp.lt.s32.totalorder %v1309, %v1310
        %v1312 = vsel %vm1311, %v1309, %v1310
        %v1313 = vand.u32 %v1312, 65535
        %v1314 = vshra.s32 %v1312, 16
        %v1315 = vcvt.s32.f32 %v1313
        %v1316 = vcvt.s32.f32 %v1314
        %1317 = vmin.xlane.f32.xlu0 %v1316
        %v1318 = vpop.xlane.xlu0 %1317
        %vm1319 = vcmp.eq.f32.partialorder %v1316, %v1318
        %v1320 = vsel %vm1319, %v1315, inf
        %1321 = vmin.xlane.f32.xlu0 %v1320
        %v1322 = vpop.xlane.xlu0 %1321
        %v1323 = vcvt.f32.s32 %v1322
        %v1324 = vcvt.f32.s32 %v1318
        %v1325 = vshll.u32 %v1324, 16
        %v1326 = vadd.s32 %v1325, %v1323
        %vm1327 = vcmp.eq.s32.totalorder %v136, %v1326
        %vm1328 = vcmp.eq.s32.totalorder %v137, %v1326
        %vm1329 = vmand %vm1327, %vm1306
        %vm1330 = vmand %vm1328, %vm1306
        %vm1331 = vmor %vm1283, %vm1329
        %vm1332 = vmor %vm1284, %vm1330
        %v1333 = vsub.s32 %v136, %v1326
        %v1334 = vsub.s32 %v137, %v1326
        %v1335 = vsub.s32 0, %v1333
        %v1336 = vsub.s32 0, %v1334
        %vm1337 = vcmp.gt.s32.totalorder %v1333, %v1335
        %v1338 = vsel %vm1337, %v1333, %v1335
        %vm1339 = vcmp.gt.s32.totalorder %v1334, %v1336
        %v1340 = vsel %vm1339, %v1334, %v1336
        %vm1341 = vcmp.lt.s32.totalorder %v1338, 10
        %vm1342 = vcmp.lt.s32.totalorder %v1340, 10
        %vm1343 = vmand %vm1306, %vm1341
        %vm1344 = vmand %vm1306, %vm1342
        %v1345 = vsel %vm1343, -1.0, %v1297
        %v1346 = vsel %vm1344, -1.0, %v1298
        %v1347 = vmax.f32 %v1345, %v1346
        %1348 = vmax.xlane.f32.xlu0 %v1347
        %v1349 = vpop.xlane.xlu0 %1348
        %vm1350 = vcmp.ge.f32.partialorder %v1349, 0.0
        %vm1351 = vcmp.eq.f32.partialorder %v1345, %v1349
        %vm1352 = vcmp.eq.f32.partialorder %v1346, %v1349
        %v1353 = vsel %vm1350, 1, 0
        %vm1354 = vcmp.eq.s32.totalorder %v1353, 1
        %vm1355 = vmand %vm1351, %vm1354
        %vm1356 = vmand %vm1352, %vm1354
        %v1357 = vsel %vm1355, %v136, 256
        %v1358 = vsel %vm1356, %v137, 256
        %vm1359 = vcmp.lt.s32.totalorder %v1357, %v1358
        %v1360 = vsel %vm1359, %v1357, %v1358
        %v1361 = vand.u32 %v1360, 65535
        %v1362 = vshra.s32 %v1360, 16
        %v1363 = vcvt.s32.f32 %v1361
        %v1364 = vcvt.s32.f32 %v1362
        %1365 = vmin.xlane.f32.xlu0 %v1364
        %v1366 = vpop.xlane.xlu0 %1365
        %vm1367 = vcmp.eq.f32.partialorder %v1364, %v1366
        %v1368 = vsel %vm1367, %v1363, inf
        %1369 = vmin.xlane.f32.xlu0 %v1368
        %v1370 = vpop.xlane.xlu0 %1369
        %v1371 = vcvt.f32.s32 %v1370
        %v1372 = vcvt.f32.s32 %v1366
        %v1373 = vshll.u32 %v1372, 16
        %v1374 = vadd.s32 %v1373, %v1371
        %vm1375 = vcmp.eq.s32.totalorder %v136, %v1374
        %vm1376 = vcmp.eq.s32.totalorder %v137, %v1374
        %vm1377 = vmand %vm1375, %vm1354
        %vm1378 = vmand %vm1376, %vm1354
        %vm1379 = vmor %vm1331, %vm1377
        %vm1380 = vmor %vm1332, %vm1378
        %v1381 = vsub.s32 %v136, %v1374
        %v1382 = vsub.s32 %v137, %v1374
        %v1383 = vsub.s32 0, %v1381
        %v1384 = vsub.s32 0, %v1382
        %vm1385 = vcmp.gt.s32.totalorder %v1381, %v1383
        %v1386 = vsel %vm1385, %v1381, %v1383
        %vm1387 = vcmp.gt.s32.totalorder %v1382, %v1384
        %v1388 = vsel %vm1387, %v1382, %v1384
        %vm1389 = vcmp.lt.s32.totalorder %v1386, 10
        %vm1390 = vcmp.lt.s32.totalorder %v1388, 10
        %vm1391 = vmand %vm1354, %vm1389
        %vm1392 = vmand %vm1354, %vm1390
        %v1393 = vsel %vm1391, -1.0, %v1345
        %v1394 = vsel %vm1392, -1.0, %v1346
        %v1395 = vmax.f32 %v1393, %v1394
        %1396 = vmax.xlane.f32.xlu0 %v1395
        %v1397 = vpop.xlane.xlu0 %1396
        %vm1398 = vcmp.ge.f32.partialorder %v1397, 0.0
        %vm1399 = vcmp.eq.f32.partialorder %v1393, %v1397
        %vm1400 = vcmp.eq.f32.partialorder %v1394, %v1397
        %v1401 = vsel %vm1398, 1, 0
        %vm1402 = vcmp.eq.s32.totalorder %v1401, 1
        %vm1403 = vmand %vm1399, %vm1402
        %vm1404 = vmand %vm1400, %vm1402
        %v1405 = vsel %vm1403, %v136, 256
        %v1406 = vsel %vm1404, %v137, 256
        %vm1407 = vcmp.lt.s32.totalorder %v1405, %v1406
        %v1408 = vsel %vm1407, %v1405, %v1406
        %v1409 = vand.u32 %v1408, 65535
        %v1410 = vshra.s32 %v1408, 16
        %v1411 = vcvt.s32.f32 %v1409
        %v1412 = vcvt.s32.f32 %v1410
        %1413 = vmin.xlane.f32.xlu0 %v1412
        %v1414 = vpop.xlane.xlu0 %1413
        %vm1415 = vcmp.eq.f32.partialorder %v1412, %v1414
        %v1416 = vsel %vm1415, %v1411, inf
        %1417 = vmin.xlane.f32.xlu0 %v1416
        %v1418 = vpop.xlane.xlu0 %1417
        %v1419 = vcvt.f32.s32 %v1418
        %v1420 = vcvt.f32.s32 %v1414
        %v1421 = vshll.u32 %v1420, 16
        %v1422 = vadd.s32 %v1421, %v1419
        %vm1423 = vcmp.eq.s32.totalorder %v136, %v1422
        %vm1424 = vcmp.eq.s32.totalorder %v137, %v1422
        %vm1425 = vmand %vm1423, %vm1402
        %vm1426 = vmand %vm1424, %vm1402
        %vm1427 = vmor %vm1379, %vm1425
        %vm1428 = vmor %vm1380, %vm1426
        %v1429 = vlaneseq
        %v1430 = vshrl.u32 %v1429, 7
        %v1431 = vadd.s32 %v1430, 8
        %v1432 = vadd.s32 %v1430, 16
        %v1433 = vadd.s32 %v1430, 24
        %v1434 = vadd.s32 %v1430, 32
        %v1435 = vadd.s32 %v1430, 40
        %v1436 = vadd.s32 %v1430, 48
        %v1437 = vadd.s32 %v1430, 56
        %v1438 = vadd.s32 %v1430, 64
        %v1439 = vadd.s32 %v1430, 72
        %v1440 = vadd.s32 %v1430, 80
        %v1441 = vadd.s32 %v1430, 88
        %v1442 = vadd.s32 %v1430, 96
        %v1443 = vadd.s32 %v1430, 104
        %v1444 = vadd.s32 %v1430, 112
        %v1445 = vadd.s32 %v1430, 120
        %v1446 = vadd.s32 %v1430, 128
        %v1447 = vadd.s32 %v1430, 136
        %v1448 = vadd.s32 %v1430, 144
        %v1449 = vadd.s32 %v1430, 152
        %v1450 = vadd.s32 %v1430, 160
        %v1451 = vadd.s32 %v1430, 168
        %v1452 = vadd.s32 %v1430, 176
        %v1453 = vadd.s32 %v1430, 184
        %v1454 = vadd.s32 %v1430, 192
        %v1455 = vadd.s32 %v1430, 200
        %v1456 = vadd.s32 %v1430, 208
        %v1457 = vadd.s32 %v1430, 216
        %v1458 = vadd.s32 %v1430, 224
        %v1459 = vadd.s32 %v1430, 232
        %v1460 = vadd.s32 %v1430, 240
        %v1461 = vadd.s32 %v1430, 248
        %vm1462 = vcmp.le.s32.totalorder %v1430, %v136
        %vm1463 = vcmp.le.s32.totalorder %v1430, %v137
        %vm1464 = vcmp.le.s32.totalorder %v1431, %v136
        %vm1465 = vcmp.le.s32.totalorder %v1431, %v137
        %vm1466 = vcmp.le.s32.totalorder %v1432, %v136
        %vm1467 = vcmp.le.s32.totalorder %v1432, %v137
        %vm1468 = vcmp.le.s32.totalorder %v1433, %v136
        %vm1469 = vcmp.le.s32.totalorder %v1433, %v137
        %vm1470 = vcmp.le.s32.totalorder %v1434, %v136
        %vm1471 = vcmp.le.s32.totalorder %v1434, %v137
        %vm1472 = vcmp.le.s32.totalorder %v1435, %v136
        %vm1473 = vcmp.le.s32.totalorder %v1435, %v137
        %vm1474 = vcmp.le.s32.totalorder %v1436, %v136
        %vm1475 = vcmp.le.s32.totalorder %v1436, %v137
        %vm1476 = vcmp.le.s32.totalorder %v1437, %v136
        %vm1477 = vcmp.le.s32.totalorder %v1437, %v137
        %vm1478 = vcmp.le.s32.totalorder %v1438, %v136
        %vm1479 = vcmp.le.s32.totalorder %v1438, %v137
        %vm1480 = vcmp.le.s32.totalorder %v1439, %v136
        %vm1481 = vcmp.le.s32.totalorder %v1439, %v137
        %vm1482 = vcmp.le.s32.totalorder %v1440, %v136
        %vm1483 = vcmp.le.s32.totalorder %v1440, %v137
        %vm1484 = vcmp.le.s32.totalorder %v1441, %v136
        %vm1485 = vcmp.le.s32.totalorder %v1441, %v137
        %vm1486 = vcmp.le.s32.totalorder %v1442, %v136
        %vm1487 = vcmp.le.s32.totalorder %v1442, %v137
        %vm1488 = vcmp.le.s32.totalorder %v1443, %v136
        %vm1489 = vcmp.le.s32.totalorder %v1443, %v137
        %vm1490 = vcmp.le.s32.totalorder %v1444, %v136
        %vm1491 = vcmp.le.s32.totalorder %v1444, %v137
        %vm1492 = vcmp.le.s32.totalorder %v1445, %v136
        %vm1493 = vcmp.le.s32.totalorder %v1445, %v137
        %vm1494 = vcmp.le.s32.totalorder %v1446, %v136
        %vm1495 = vcmp.le.s32.totalorder %v1446, %v137
        %vm1496 = vcmp.le.s32.totalorder %v1447, %v136
        %vm1497 = vcmp.le.s32.totalorder %v1447, %v137
        %vm1498 = vcmp.le.s32.totalorder %v1448, %v136
        %vm1499 = vcmp.le.s32.totalorder %v1448, %v137
        %vm1500 = vcmp.le.s32.totalorder %v1449, %v136
        %vm1501 = vcmp.le.s32.totalorder %v1449, %v137
        %vm1502 = vcmp.le.s32.totalorder %v1450, %v136
        %vm1503 = vcmp.le.s32.totalorder %v1450, %v137
        %vm1504 = vcmp.le.s32.totalorder %v1451, %v136
        %vm1505 = vcmp.le.s32.totalorder %v1451, %v137
        %vm1506 = vcmp.le.s32.totalorder %v1452, %v136
        %vm1507 = vcmp.le.s32.totalorder %v1452, %v137
        %vm1508 = vcmp.le.s32.totalorder %v1453, %v136
        %vm1509 = vcmp.le.s32.totalorder %v1453, %v137
        %vm1510 = vcmp.le.s32.totalorder %v1454, %v136
        %vm1511 = vcmp.le.s32.totalorder %v1454, %v137
        %vm1512 = vcmp.le.s32.totalorder %v1455, %v136
        %vm1513 = vcmp.le.s32.totalorder %v1455, %v137
        %vm1514 = vcmp.le.s32.totalorder %v1456, %v136
        %vm1515 = vcmp.le.s32.totalorder %v1456, %v137
        %vm1516 = vcmp.le.s32.totalorder %v1457, %v136
        %vm1517 = vcmp.le.s32.totalorder %v1457, %v137
        %vm1518 = vcmp.le.s32.totalorder %v1458, %v136
        %vm1519 = vcmp.le.s32.totalorder %v1458, %v137
        %vm1520 = vcmp.le.s32.totalorder %v1459, %v136
        %vm1521 = vcmp.le.s32.totalorder %v1459, %v137
        %vm1522 = vcmp.le.s32.totalorder %v1460, %v136
        %vm1523 = vcmp.le.s32.totalorder %v1460, %v137
        %vm1524 = vcmp.le.s32.totalorder %v1461, %v136
        %vm1525 = vcmp.le.s32.totalorder %v1461, %v137
        %v1526 = vsel %vm1462, 1, 0
        %v1527 = vsel %vm1463, 1, 0
        %v1528 = vsel %vm1464, 1, 0
        %v1529 = vsel %vm1465, 1, 0
        %v1530 = vsel %vm1466, 1, 0
        %v1531 = vsel %vm1467, 1, 0
        %v1532 = vsel %vm1468, 1, 0
        %v1533 = vsel %vm1469, 1, 0
        %v1534 = vsel %vm1470, 1, 0
        %v1535 = vsel %vm1471, 1, 0
        %v1536 = vsel %vm1472, 1, 0
        %v1537 = vsel %vm1473, 1, 0
        %v1538 = vsel %vm1474, 1, 0
        %v1539 = vsel %vm1475, 1, 0
        %v1540 = vsel %vm1476, 1, 0
        %v1541 = vsel %vm1477, 1, 0
        %v1542 = vsel %vm1478, 1, 0
        %v1543 = vsel %vm1479, 1, 0
        %v1544 = vsel %vm1480, 1, 0
        %v1545 = vsel %vm1481, 1, 0
        %v1546 = vsel %vm1482, 1, 0
        %v1547 = vsel %vm1483, 1, 0
        %v1548 = vsel %vm1484, 1, 0
        %v1549 = vsel %vm1485, 1, 0
        %v1550 = vsel %vm1486, 1, 0
        %v1551 = vsel %vm1487, 1, 0
        %v1552 = vsel %vm1488, 1, 0
        %v1553 = vsel %vm1489, 1, 0
        %v1554 = vsel %vm1490, 1, 0
        %v1555 = vsel %vm1491, 1, 0
        %v1556 = vsel %vm1492, 1, 0
        %v1557 = vsel %vm1493, 1, 0
        %v1558 = vsel %vm1494, 1, 0
        %v1559 = vsel %vm1495, 1, 0
        %v1560 = vsel %vm1496, 1, 0
        %v1561 = vsel %vm1497, 1, 0
        %v1562 = vsel %vm1498, 1, 0
        %v1563 = vsel %vm1499, 1, 0
        %v1564 = vsel %vm1500, 1, 0
        %v1565 = vsel %vm1501, 1, 0
        %v1566 = vsel %vm1502, 1, 0
        %v1567 = vsel %vm1503, 1, 0
        %v1568 = vsel %vm1504, 1, 0
        %v1569 = vsel %vm1505, 1, 0
        %v1570 = vsel %vm1506, 1, 0
        %v1571 = vsel %vm1507, 1, 0
        %v1572 = vsel %vm1508, 1, 0
        %v1573 = vsel %vm1509, 1, 0
        %v1574 = vsel %vm1510, 1, 0
        %v1575 = vsel %vm1511, 1, 0
        %v1576 = vsel %vm1512, 1, 0
        %v1577 = vsel %vm1513, 1, 0
        %v1578 = vsel %vm1514, 1, 0
        %v1579 = vsel %vm1515, 1, 0
        %v1580 = vsel %vm1516, 1, 0
        %v1581 = vsel %vm1517, 1, 0
        %v1582 = vsel %vm1518, 1, 0
        %v1583 = vsel %vm1519, 1, 0
        %v1584 = vsel %vm1520, 1, 0
        %v1585 = vsel %vm1521, 1, 0
        %v1586 = vsel %vm1522, 1, 0
        %v1587 = vsel %vm1523, 1, 0
        %v1588 = vsel %vm1524, 1, 0
        %v1589 = vsel %vm1525, 1, 0
        %v1590 = vcvt.s32.f32 %v1526
        %v1591 = vcvt.s32.f32 %v1527
        %v1592 = vcvt.s32.f32 %v1528
        %v1593 = vcvt.s32.f32 %v1529
        %v1594 = vcvt.s32.f32 %v1530
        %v1595 = vcvt.s32.f32 %v1531
        %v1596 = vcvt.s32.f32 %v1532
        %v1597 = vcvt.s32.f32 %v1533
        %v1598 = vcvt.s32.f32 %v1534
        %v1599 = vcvt.s32.f32 %v1535
        %v1600 = vcvt.s32.f32 %v1536
        %v1601 = vcvt.s32.f32 %v1537
        %v1602 = vcvt.s32.f32 %v1538
        %v1603 = vcvt.s32.f32 %v1539
        %v1604 = vcvt.s32.f32 %v1540
        %v1605 = vcvt.s32.f32 %v1541
        %v1606 = vcvt.s32.f32 %v1542
        %v1607 = vcvt.s32.f32 %v1543
        %v1608 = vcvt.s32.f32 %v1544
        %v1609 = vcvt.s32.f32 %v1545
        %v1610 = vcvt.s32.f32 %v1546
        %v1611 = vcvt.s32.f32 %v1547
        %v1612 = vcvt.s32.f32 %v1548
        %v1613 = vcvt.s32.f32 %v1549
        %v1614 = vcvt.s32.f32 %v1550
        %v1615 = vcvt.s32.f32 %v1551
        %v1616 = vcvt.s32.f32 %v1552
        %v1617 = vcvt.s32.f32 %v1553
        %v1618 = vcvt.s32.f32 %v1554
        %v1619 = vcvt.s32.f32 %v1555
        %v1620 = vcvt.s32.f32 %v1556
        %v1621 = vcvt.s32.f32 %v1557
        %v1622 = vcvt.s32.f32 %v1558
        %v1623 = vcvt.s32.f32 %v1559
        %v1624 = vcvt.s32.f32 %v1560
        %v1625 = vcvt.s32.f32 %v1561
        %v1626 = vcvt.s32.f32 %v1562
        %v1627 = vcvt.s32.f32 %v1563
        %v1628 = vcvt.s32.f32 %v1564
        %v1629 = vcvt.s32.f32 %v1565
        %v1630 = vcvt.s32.f32 %v1566
        %v1631 = vcvt.s32.f32 %v1567
        %v1632 = vcvt.s32.f32 %v1568
        %v1633 = vcvt.s32.f32 %v1569
        %v1634 = vcvt.s32.f32 %v1570
        %v1635 = vcvt.s32.f32 %v1571
        %v1636 = vcvt.s32.f32 %v1572
        %v1637 = vcvt.s32.f32 %v1573
        %v1638 = vcvt.s32.f32 %v1574
        %v1639 = vcvt.s32.f32 %v1575
        %v1640 = vcvt.s32.f32 %v1576
        %v1641 = vcvt.s32.f32 %v1577
        %v1642 = vcvt.s32.f32 %v1578
        %v1643 = vcvt.s32.f32 %v1579
        %v1644 = vcvt.s32.f32 %v1580
        %v1645 = vcvt.s32.f32 %v1581
        %v1646 = vcvt.s32.f32 %v1582
        %v1647 = vcvt.s32.f32 %v1583
        %v1648 = vcvt.s32.f32 %v1584
        %v1649 = vcvt.s32.f32 %v1585
        %v1650 = vcvt.s32.f32 %v1586
        %v1651 = vcvt.s32.f32 %v1587
        %v1652 = vcvt.s32.f32 %v1588
        %v1653 = vcvt.s32.f32 %v1589
        %v1654 = vsel %vm1427, 1, 0
        %v1655 = vsel %vm1428, 1, 0
        %v1656 = vcvt.s32.f32 %v1654
        %v1657 = vcvt.s32.f32 %v1655
        %1658 = vmatprep.subr.mxu0 %v1621
        %1659 = vmatpush1.msra.mxu0 %v1620
        %1660 = vmatprep.subr.mxu0 %v1619
        %1661 = vmatpush1.msra.mxu0 %v1618
        %1662 = vmatprep.subr.mxu0 %v1617
        %1663 = vmatpush1.msra.mxu0 %v1616
        %1664 = vmatprep.subr.mxu0 %v1615
        %1665 = vmatpush1.msra.mxu0 %v1614
        %1666 = vmatprep.subr.mxu0 %v1613
        %1667 = vmatpush1.msra.mxu0 %v1612
        %1668 = vmatprep.subr.mxu0 %v1611
        %1669 = vmatpush1.msra.mxu0 %v1610
        %1670 = vmatprep.subr.mxu0 %v1609
        %1671 = vmatpush1.msra.mxu0 %v1608
        %1672 = vmatprep.subr.mxu0 %v1607
        %1673 = vmatpush1.msra.mxu0 %v1606
        %1674 = vmatprep.subr.mxu0 %v1605
        %1675 = vmatpush1.msra.mxu0 %v1604
        %1676 = vmatprep.subr.mxu0 %v1603
        %1677 = vmatpush1.msra.mxu0 %v1602
        %1678 = vmatprep.subr.mxu0 %v1601
        %1679 = vmatpush1.msra.mxu0 %v1600
        %1680 = vmatprep.subr.mxu0 %v1599
        %1681 = vmatpush1.msra.mxu0 %v1598
        %1682 = vmatprep.subr.mxu0 %v1597
        %1683 = vmatpush1.msra.mxu0 %v1596
        %1684 = vmatprep.subr.mxu0 %v1595
        %1685 = vmatpush1.msra.mxu0 %v1594
        %1686 = vmatprep.subr.mxu0 %v1593
        %1687 = vmatpush1.msra.mxu0 %v1592
        %1688 = vmatprep.subr.mxu0 %v1591
        %1689 = vmatpush1.msra.mxu0 %v1590
        %1690 = vmatprep.subr.mxu0 %v1653
        %1691 = vmatpush2.msra.mxu0 %v1652
        %1692 = vmatprep.subr.mxu0 %v1651
        %1693 = vmatpush2.msra.mxu0 %v1650
        %1694 = vmatprep.subr.mxu0 %v1649
        %1695 = vmatpush2.msra.mxu0 %v1648
        %1696 = vmatprep.subr.mxu0 %v1647
        %1697 = vmatpush2.msra.mxu0 %v1646
        %1698 = vmatprep.subr.mxu0 %v1645
        %1699 = vmatpush2.msra.mxu0 %v1644
        %1700 = vmatprep.subr.mxu0 %v1643
        %1701 = vmatpush2.msra.mxu0 %v1642
        %1702 = vmatprep.subr.mxu0 %v1641
        %1703 = vmatpush2.msra.mxu0 %v1640
        %1704 = vmatprep.subr.mxu0 %v1639
        %1705 = vmatpush2.msra.mxu0 %v1638
        %1706 = vmatprep.subr.mxu0 %v1637
        %1707 = vmatpush2.msra.mxu0 %v1636
        %1708 = vmatprep.subr.mxu0 %v1635
        %1709 = vmatpush2.msra.mxu0 %v1634
        %1710 = vmatprep.subr.mxu0 %v1633
        %1711 = vmatpush2.msra.mxu0 %v1632
        %1712 = vmatprep.subr.mxu0 %v1631
        %1713 = vmatpush2.msra.mxu0 %v1630
        %1714 = vmatprep.subr.mxu0 %v1629
        %1715 = vmatpush2.msra.mxu0 %v1628
        %1716 = vmatprep.subr.mxu0 %v1627
        %1717 = vmatpush2.msra.mxu0 %v1626
        %1718 = vmatprep.subr.mxu0 %v1625
        %1719 = vmatpush2.msra.mxu0 %v1624
        %1720 = vmatprep.subr.mxu0 %v1623
        %1721 = vmatpush2.msra.mxu0 %v1622
        %1722 = vmatprep.mubr.f32.mxu0 %v1657
        %1723 = vmatmul.mubr.f32.gmra.mxu0 %v1656
        %v1724 = vpop.f32.mrf.mxu0
        %v1725 = vadd.f32 0.0, %v1724
        %v1726 = vpop.f32.mrf.mxu0
        %v1727 = vadd.f32 0.0, %v1726
        %1728 = vdwg.mxu0
        %v1729 = vcvt.f32.s32.to.zero.pseudo %v1725
        %v1730 = vcvt.f32.s32.to.zero.pseudo %v1727
        %v1731 = vsub.s32 %v1729, 1
        %v1732 = vsub.s32 %v1730, 1
        %v1733 = vcombine.low %v1731, %v1732
        %v1734 = vcombine.high %v1731, %v1732
        %v1736 = vunpack.c.l.s4 1966171168
        %v1737 = vunpack.c.0.s8 %v1736
        %v1738 = vlaneseq
        %v1739 = vshrl.u32 %v1738, 7
        %v1740 = vsub.s32 %v1737, %v1739
        %v1741 = vrot.slane %v1733, %v1740
        %v1743 = vunpack.c.l.s4 1966171168
        %v1744 = vunpack.c.0.s8 %v1743
        %v1745 = vlaneseq
        %v1746 = vshrl.u32 %v1745, 7
        %v1747 = vsub.s32 %v1744, %v1746
        %v1748 = vrot.slane %v1734, %v1747
        %v1749 = vcombine.high %v1741, %v1741
        %v1750 = vcombine.high %v1748, %v1748
        %v1752 = vunpack.c.l.s4 1966171168
        %v1753 = vunpack.c.0.s8 %v1752
        %v1754 = vlaneseq
        %v1755 = vshrl.u32 %v1754, 7
        %v1756 = vsub.s32 %v1753, %v1755
        %v1757 = vrot.slane %v1741, %v1756
        %v1759 = vunpack.c.l.s4 1966171168
        %v1760 = vunpack.c.0.s8 %v1759
        %v1761 = vlaneseq
        %v1762 = vshrl.u32 %v1761, 7
        %v1763 = vsub.s32 %v1760, %v1762
        %v1764 = vrot.slane %v1748, %v1763
        %v1766 = vunpack.c.l.s4 1966171168
        %v1767 = vunpack.c.0.s8 %v1766
        %v1768 = vlaneseq
        %v1769 = vshrl.u32 %v1768, 7
        %v1770 = vsub.s32 %v1767, %v1769
        %v1771 = vrot.slane %v1749, %v1770
        %v1773 = vunpack.c.l.s4 1966171168
        %v1774 = vunpack.c.0.s8 %v1773
        %v1775 = vlaneseq
        %v1776 = vshrl.u32 %v1775, 7
        %v1777 = vsub.s32 %v1774, %v1776
        %v1778 = vrot.slane %v1750, %v1777
        %v1779 = vcombine.high %v1757, %v1757
        %v1780 = vcombine.high %v1764, %v1764
        %v1781 = vcombine.high %v1771, %v1771
        %v1782 = vcombine.high %v1778, %v1778
        %v1783 = vlaneseq
        %v1784 = vshrl.u32 %v1783, 7
        %v1785 = vsub.s32 0, %v1784
        %v1786 = vrot.slane %v1757, %v1785
        %v1787 = vlaneseq
        %v1788 = vshrl.u32 %v1787, 7
        %v1789 = vsub.s32 1, %v1788
        %v1790 = vrot.slane %v1757, %v1789
        %v1791 = vlaneseq
        %v1792 = vshrl.u32 %v1791, 7
        %v1793 = vsub.s32 0, %v1792
        %v1794 = vrot.slane %v1771, %v1793
        %v1795 = vlaneseq
        %v1796 = vshrl.u32 %v1795, 7
        %v1797 = vsub.s32 1, %v1796
        %v1798 = vrot.slane %v1771, %v1797
        %v1799 = vlaneseq
        %v1800 = vshrl.u32 %v1799, 7
        %v1801 = vsub.s32 0, %v1800
        %v1802 = vrot.slane %v1779, %v1801
        %v1803 = vlaneseq
        %v1804 = vshrl.u32 %v1803, 7
        %v1805 = vsub.s32 1, %v1804
        %v1806 = vrot.slane %v1779, %v1805
        %v1807 = vlaneseq
        %v1808 = vshrl.u32 %v1807, 7
        %v1809 = vsub.s32 0, %v1808
        %v1810 = vrot.slane %v1781, %v1809
        %v1811 = vlaneseq
        %v1812 = vshrl.u32 %v1811, 7
        %v1813 = vsub.s32 1, %v1812
        %v1814 = vrot.slane %v1781, %v1813
        %v1815 = vlaneseq
        %v1816 = vshrl.u32 %v1815, 7
        %v1817 = vsub.s32 0, %v1816
        %v1818 = vrot.slane %v1764, %v1817
        %v1819 = vlaneseq
        %v1820 = vshrl.u32 %v1819, 7
        %v1821 = vsub.s32 1, %v1820
        %v1822 = vrot.slane %v1764, %v1821
        %v1823 = vlaneseq
        %v1824 = vshrl.u32 %v1823, 7
        %v1825 = vsub.s32 0, %v1824
        %v1826 = vrot.slane %v1778, %v1825
        %v1827 = vlaneseq
        %v1828 = vshrl.u32 %v1827, 7
        %v1829 = vsub.s32 1, %v1828
        %v1830 = vrot.slane %v1778, %v1829
        %v1831 = vlaneseq
        %v1832 = vshrl.u32 %v1831, 7
        %v1833 = vsub.s32 0, %v1832
        %v1834 = vrot.slane %v1780, %v1833
        %v1835 = vlaneseq
        %v1836 = vshrl.u32 %v1835, 7
        %v1837 = vsub.s32 1, %v1836
        %v1838 = vrot.slane %v1780, %v1837
        %v1839 = vlaneseq
        %v1840 = vshrl.u32 %v1839, 7
        %v1841 = vsub.s32 0, %v1840
        %v1842 = vrot.slane %v1782, %v1841
        %v1843 = vlaneseq
        %v1844 = vshrl.u32 %v1843, 7
        %v1845 = vsub.s32 1, %v1844
        %v1846 = vrot.slane %v1782, %v1845
        %vm1847 = vcmp.eq.s32.totalorder %v1786, %v1430
        %vm1848 = vcmp.eq.s32.totalorder %v1790, %v1430
        %vm1849 = vcmp.eq.s32.totalorder %v1786, %v1431
        %vm1850 = vcmp.eq.s32.totalorder %v1790, %v1431
        %vm1851 = vcmp.eq.s32.totalorder %v1786, %v1432
        %vm1852 = vcmp.eq.s32.totalorder %v1790, %v1432
        %vm1853 = vcmp.eq.s32.totalorder %v1786, %v1433
        %vm1854 = vcmp.eq.s32.totalorder %v1790, %v1433
        %vm1855 = vcmp.eq.s32.totalorder %v1794, %v1430
        %vm1856 = vcmp.eq.s32.totalorder %v1798, %v1430
        %vm1857 = vcmp.eq.s32.totalorder %v1794, %v1431
        %vm1858 = vcmp.eq.s32.totalorder %v1798, %v1431
        %vm1859 = vcmp.eq.s32.totalorder %v1794, %v1432
        %vm1860 = vcmp.eq.s32.totalorder %v1798, %v1432
        %vm1861 = vcmp.eq.s32.totalorder %v1794, %v1433
        %vm1862 = vcmp.eq.s32.totalorder %v1798, %v1433
        %vm1863 = vcmp.eq.s32.totalorder %v1802, %v1430
        %vm1864 = vcmp.eq.s32.totalorder %v1806, %v1430
        %vm1865 = vcmp.eq.s32.totalorder %v1802, %v1431
        %vm1866 = vcmp.eq.s32.totalorder %v1806, %v1431
        %vm1867 = vcmp.eq.s32.totalorder %v1802, %v1432
        %vm1868 = vcmp.eq.s32.totalorder %v1806, %v1432
        %vm1869 = vcmp.eq.s32.totalorder %v1802, %v1433
        %vm1870 = vcmp.eq.s32.totalorder %v1806, %v1433
        %vm1871 = vcmp.eq.s32.totalorder %v1810, %v1430
        %vm1872 = vcmp.eq.s32.totalorder %v1814, %v1430
        %vm1873 = vcmp.eq.s32.totalorder %v1810, %v1431
        %vm1874 = vcmp.eq.s32.totalorder %v1814, %v1431
        %vm1875 = vcmp.eq.s32.totalorder %v1810, %v1432
        %vm1876 = vcmp.eq.s32.totalorder %v1814, %v1432
        %vm1877 = vcmp.eq.s32.totalorder %v1810, %v1433
        %vm1878 = vcmp.eq.s32.totalorder %v1814, %v1433
        %vm1879 = vcmp.eq.s32.totalorder %v1818, %v1430
        %vm1880 = vcmp.eq.s32.totalorder %v1822, %v1430
        %vm1881 = vcmp.eq.s32.totalorder %v1818, %v1431
        %vm1882 = vcmp.eq.s32.totalorder %v1822, %v1431
        %vm1883 = vcmp.eq.s32.totalorder %v1818, %v1432
        %vm1884 = vcmp.eq.s32.totalorder %v1822, %v1432
        %vm1885 = vcmp.eq.s32.totalorder %v1818, %v1433
        %vm1886 = vcmp.eq.s32.totalorder %v1822, %v1433
        %vm1887 = vcmp.eq.s32.totalorder %v1826, %v1430
        %vm1888 = vcmp.eq.s32.totalorder %v1830, %v1430
        %vm1889 = vcmp.eq.s32.totalorder %v1826, %v1431
        %vm1890 = vcmp.eq.s32.totalorder %v1830, %v1431
        %vm1891 = vcmp.eq.s32.totalorder %v1826, %v1432
        %vm1892 = vcmp.eq.s32.totalorder %v1830, %v1432
        %vm1893 = vcmp.eq.s32.totalorder %v1826, %v1433
        %vm1894 = vcmp.eq.s32.totalorder %v1830, %v1433
        %vm1895 = vcmp.eq.s32.totalorder %v1834, %v1430
        %vm1896 = vcmp.eq.s32.totalorder %v1838, %v1430
        %vm1897 = vcmp.eq.s32.totalorder %v1834, %v1431
        %vm1898 = vcmp.eq.s32.totalorder %v1838, %v1431
        %vm1899 = vcmp.eq.s32.totalorder %v1834, %v1432
        %vm1900 = vcmp.eq.s32.totalorder %v1838, %v1432
        %vm1901 = vcmp.eq.s32.totalorder %v1834, %v1433
        %vm1902 = vcmp.eq.s32.totalorder %v1838, %v1433
        %vm1903 = vcmp.eq.s32.totalorder %v1842, %v1430
        %vm1904 = vcmp.eq.s32.totalorder %v1846, %v1430
        %vm1905 = vcmp.eq.s32.totalorder %v1842, %v1431
        %vm1906 = vcmp.eq.s32.totalorder %v1846, %v1431
        %vm1907 = vcmp.eq.s32.totalorder %v1842, %v1432
        %vm1908 = vcmp.eq.s32.totalorder %v1846, %v1432
        %vm1909 = vcmp.eq.s32.totalorder %v1842, %v1433
        %vm1910 = vcmp.eq.s32.totalorder %v1846, %v1433
        %v1911 = vcombine.low %v1654, %v1655
        %v1912 = vcombine.high %v1654, %v1655
        %v1914 = vunpack.c.l.s4 1966171168
        %v1915 = vunpack.c.0.s8 %v1914
        %v1916 = vlaneseq
        %v1917 = vshrl.u32 %v1916, 7
        %v1918 = vsub.s32 %v1915, %v1917
        %v1919 = vrot.slane %v1911, %v1918
        %v1921 = vunpack.c.l.s4 1966171168
        %v1922 = vunpack.c.0.s8 %v1921
        %v1923 = vlaneseq
        %v1924 = vshrl.u32 %v1923, 7
        %v1925 = vsub.s32 %v1922, %v1924
        %v1926 = vrot.slane %v1912, %v1925
        %v1927 = vcombine.high %v1919, %v1919
        %v1928 = vcombine.high %v1926, %v1926
        %v1930 = vunpack.c.l.s4 1966171168
        %v1931 = vunpack.c.0.s8 %v1930
        %v1932 = vlaneseq
        %v1933 = vshrl.u32 %v1932, 7
        %v1934 = vsub.s32 %v1931, %v1933
        %v1935 = vrot.slane %v1919, %v1934
        %v1937 = vunpack.c.l.s4 1966171168
        %v1938 = vunpack.c.0.s8 %v1937
        %v1939 = vlaneseq
        %v1940 = vshrl.u32 %v1939, 7
        %v1941 = vsub.s32 %v1938, %v1940
        %v1942 = vrot.slane %v1926, %v1941
        %v1944 = vunpack.c.l.s4 1966171168
        %v1945 = vunpack.c.0.s8 %v1944
        %v1946 = vlaneseq
        %v1947 = vshrl.u32 %v1946, 7
        %v1948 = vsub.s32 %v1945, %v1947
        %v1949 = vrot.slane %v1927, %v1948
        %v1951 = vunpack.c.l.s4 1966171168
        %v1952 = vunpack.c.0.s8 %v1951
        %v1953 = vlaneseq
        %v1954 = vshrl.u32 %v1953, 7
        %v1955 = vsub.s32 %v1952, %v1954
        %v1956 = vrot.slane %v1928, %v1955
        %v1957 = vcombine.high %v1935, %v1935
        %v1958 = vcombine.high %v1942, %v1942
        %v1959 = vcombine.high %v1949, %v1949
        %v1960 = vcombine.high %v1956, %v1956
        %vm1961 = vcmp.ne.s32.totalorder %v1935, 0
        %vm1962 = vcmp.ne.s32.totalorder %v1949, 0
        %vm1963 = vcmp.ne.s32.totalorder %v1957, 0
        %vm1964 = vcmp.ne.s32.totalorder %v1959, 0
        %vm1965 = vcmp.ne.s32.totalorder %v1942, 0
        %vm1966 = vcmp.ne.s32.totalorder %v1956, 0
        %vm1967 = vcmp.ne.s32.totalorder %v1958, 0
        %vm1968 = vcmp.ne.s32.totalorder %v1960, 0
        %v1969 = vsel %vm1961, 1, 0
        %v1970 = vsel %vm1962, 1, 0
        %v1971 = vsel %vm1963, 1, 0
        %v1972 = vsel %vm1964, 1, 0
        %v1973 = vsel %vm1965, 1, 0
        %v1974 = vsel %vm1966, 1, 0
        %v1975 = vsel %vm1967, 1, 0
        %v1976 = vsel %vm1968, 1, 0
        %v1977 = vlaneseq
        %v1978 = vshrl.u32 %v1977, 7
        %v1979 = vsub.s32 0, %v1978
        %v1980 = vrot.slane %v1969, %v1979
        %v1981 = vlaneseq
        %v1982 = vshrl.u32 %v1981, 7
        %v1983 = vsub.s32 1, %v1982
        %v1984 = vrot.slane %v1969, %v1983
        %v1985 = vlaneseq
        %v1986 = vshrl.u32 %v1985, 7
        %v1987 = vsub.s32 0, %v1986
        %v1988 = vrot.slane %v1970, %v1987
        %v1989 = vlaneseq
        %v1990 = vshrl.u32 %v1989, 7
        %v1991 = vsub.s32 1, %v1990
        %v1992 = vrot.slane %v1970, %v1991
        %v1993 = vlaneseq
        %v1994 = vshrl.u32 %v1993, 7
        %v1995 = vsub.s32 0, %v1994
        %v1996 = vrot.slane %v1971, %v1995
        %v1997 = vlaneseq
        %v1998 = vshrl.u32 %v1997, 7
        %v1999 = vsub.s32 1, %v1998
        %v2000 = vrot.slane %v1971, %v1999
        %v2001 = vlaneseq
        %v2002 = vshrl.u32 %v2001, 7
        %v2003 = vsub.s32 0, %v2002
        %v2004 = vrot.slane %v1972, %v2003
        %v2005 = vlaneseq
        %v2006 = vshrl.u32 %v2005, 7
        %v2007 = vsub.s32 1, %v2006
        %v2008 = vrot.slane %v1972, %v2007
        %v2009 = vlaneseq
        %v2010 = vshrl.u32 %v2009, 7
        %v2011 = vsub.s32 0, %v2010
        %v2012 = vrot.slane %v1973, %v2011
        %v2013 = vlaneseq
        %v2014 = vshrl.u32 %v2013, 7
        %v2015 = vsub.s32 1, %v2014
        %v2016 = vrot.slane %v1973, %v2015
        %v2017 = vlaneseq
        %v2018 = vshrl.u32 %v2017, 7
        %v2019 = vsub.s32 0, %v2018
        %v2020 = vrot.slane %v1974, %v2019
        %v2021 = vlaneseq
        %v2022 = vshrl.u32 %v2021, 7
        %v2023 = vsub.s32 1, %v2022
        %v2024 = vrot.slane %v1974, %v2023
        %v2025 = vlaneseq
        %v2026 = vshrl.u32 %v2025, 7
        %v2027 = vsub.s32 0, %v2026
        %v2028 = vrot.slane %v1975, %v2027
        %v2029 = vlaneseq
        %v2030 = vshrl.u32 %v2029, 7
        %v2031 = vsub.s32 1, %v2030
        %v2032 = vrot.slane %v1975, %v2031
        %v2033 = vlaneseq
        %v2034 = vshrl.u32 %v2033, 7
        %v2035 = vsub.s32 0, %v2034
        %v2036 = vrot.slane %v1976, %v2035
        %v2037 = vlaneseq
        %v2038 = vshrl.u32 %v2037, 7
        %v2039 = vsub.s32 1, %v2038
        %v2040 = vrot.slane %v1976, %v2039
        %vm2041 = vcmp.eq.s32.totalorder %v1980, 1
        %vm2042 = vcmp.eq.s32.totalorder %v1984, 1
        %vm2043 = vcmp.eq.s32.totalorder %v1988, 1
        %vm2044 = vcmp.eq.s32.totalorder %v1992, 1
        %vm2045 = vcmp.eq.s32.totalorder %v1996, 1
        %vm2046 = vcmp.eq.s32.totalorder %v2000, 1
        %vm2047 = vcmp.eq.s32.totalorder %v2004, 1
        %vm2048 = vcmp.eq.s32.totalorder %v2008, 1
        %vm2049 = vcmp.eq.s32.totalorder %v2012, 1
        %vm2050 = vcmp.eq.s32.totalorder %v2016, 1
        %vm2051 = vcmp.eq.s32.totalorder %v2020, 1
        %vm2052 = vcmp.eq.s32.totalorder %v2024, 1
        %vm2053 = vcmp.eq.s32.totalorder %v2028, 1
        %vm2054 = vcmp.eq.s32.totalorder %v2032, 1
        %vm2055 = vcmp.eq.s32.totalorder %v2036, 1
        %vm2056 = vcmp.eq.s32.totalorder %v2040, 1
        %vm2057 = vmand %vm1847, %vm2041
        %vm2058 = vmand %vm1848, %vm2042
        %vm2059 = vmand %vm1849, %vm2041
        %vm2060 = vmand %vm1850, %vm2042
        %vm2061 = vmand %vm1851, %vm2041
        %vm2062 = vmand %vm1852, %vm2042
        %vm2063 = vmand %vm1853, %vm2041
        %vm2064 = vmand %vm1854, %vm2042
        %vm2065 = vmand %vm1855, %vm2043
        %vm2066 = vmand %vm1856, %vm2044
        %vm2067 = vmand %vm1857, %vm2043
        %vm2068 = vmand %vm1858, %vm2044
        %vm2069 = vmand %vm1859, %vm2043
        %vm2070 = vmand %vm1860, %vm2044
        %vm2071 = vmand %vm1861, %vm2043
        %vm2072 = vmand %vm1862, %vm2044
        %vm2073 = vmand %vm1863, %vm2045
        %vm2074 = vmand %vm1864, %vm2046
        %vm2075 = vmand %vm1865, %vm2045
        %vm2076 = vmand %vm1866, %vm2046
        %vm2077 = vmand %vm1867, %vm2045
        %vm2078 = vmand %vm1868, %vm2046
        %vm2079 = vmand %vm1869, %vm2045
        %vm2080 = vmand %vm1870, %vm2046
        %vm2081 = vmand %vm1871, %vm2047
        %vm2082 = vmand %vm1872, %vm2048
        %vm2083 = vmand %vm1873, %vm2047
        %vm2084 = vmand %vm1874, %vm2048
        %vm2085 = vmand %vm1875, %vm2047
        %vm2086 = vmand %vm1876, %vm2048
        %vm2087 = vmand %vm1877, %vm2047
        %vm2088 = vmand %vm1878, %vm2048
        %vm2089 = vmand %vm1879, %vm2049
        %vm2090 = vmand %vm1880, %vm2050
        %vm2091 = vmand %vm1881, %vm2049
        %vm2092 = vmand %vm1882, %vm2050
        %vm2093 = vmand %vm1883, %vm2049
        %vm2094 = vmand %vm1884, %vm2050
        %vm2095 = vmand %vm1885, %vm2049
        %vm2096 = vmand %vm1886, %vm2050
        %vm2097 = vmand %vm1887, %vm2051
        %vm2098 = vmand %vm1888, %vm2052
        %vm2099 = vmand %vm1889, %vm2051
        %vm2100 = vmand %vm1890, %vm2052
        %vm2101 = vmand %vm1891, %vm2051
        %vm2102 = vmand %vm1892, %vm2052
        %vm2103 = vmand %vm1893, %vm2051
        %vm2104 = vmand %vm1894, %vm2052
        %vm2105 = vmand %vm1895, %vm2053
        %vm2106 = vmand %vm1896, %vm2054
        %vm2107 = vmand %vm1897, %vm2053
        %vm2108 = vmand %vm1898, %vm2054
        %vm2109 = vmand %vm1899, %vm2053
        %vm2110 = vmand %vm1900, %vm2054
        %vm2111 = vmand %vm1901, %vm2053
        %vm2112 = vmand %vm1902, %vm2054
        %vm2113 = vmand %vm1903, %vm2055
        %vm2114 = vmand %vm1904, %vm2056
        %vm2115 = vmand %vm1905, %vm2055
        %vm2116 = vmand %vm1906, %vm2056
        %vm2117 = vmand %vm1907, %vm2055
        %vm2118 = vmand %vm1908, %vm2056
        %vm2119 = vmand %vm1909, %vm2055
        %vm2120 = vmand %vm1910, %vm2056
        %v2121 = vcvt.s32.f32 %v136
        %v2122 = vcvt.s32.f32 %v137
        %v2123 = vsel %vm2057, %v2121, 0.0
        %v2124 = vsel %vm2058, %v2122, 0.0
        %v2125 = vsel %vm2059, %v2121, 0.0
        %v2126 = vsel %vm2060, %v2122, 0.0
        %v2127 = vsel %vm2061, %v2121, 0.0
        %v2128 = vsel %vm2062, %v2122, 0.0
        %v2129 = vsel %vm2063, %v2121, 0.0
        %v2130 = vsel %vm2064, %v2122, 0.0
        %v2131 = vsel %vm2065, %v2121, 0.0
        %v2132 = vsel %vm2066, %v2122, 0.0
        %v2133 = vsel %vm2067, %v2121, 0.0
        %v2134 = vsel %vm2068, %v2122, 0.0
        %v2135 = vsel %vm2069, %v2121, 0.0
        %v2136 = vsel %vm2070, %v2122, 0.0
        %v2137 = vsel %vm2071, %v2121, 0.0
        %v2138 = vsel %vm2072, %v2122, 0.0
        %v2139 = vsel %vm2073, %v2121, 0.0
        %v2140 = vsel %vm2074, %v2122, 0.0
        %v2141 = vsel %vm2075, %v2121, 0.0
        %v2142 = vsel %vm2076, %v2122, 0.0
        %v2143 = vsel %vm2077, %v2121, 0.0
        %v2144 = vsel %vm2078, %v2122, 0.0
        %v2145 = vsel %vm2079, %v2121, 0.0
        %v2146 = vsel %vm2080, %v2122, 0.0
        %v2147 = vsel %vm2081, %v2121, 0.0
        %v2148 = vsel %vm2082, %v2122, 0.0
        %v2149 = vsel %vm2083, %v2121, 0.0
        %v2150 = vsel %vm2084, %v2122, 0.0
        %v2151 = vsel %vm2085, %v2121, 0.0
        %v2152 = vsel %vm2086, %v2122, 0.0
        %v2153 = vsel %vm2087, %v2121, 0.0
        %v2154 = vsel %vm2088, %v2122, 0.0
        %v2155 = vsel %vm2089, %v2121, 0.0
        %v2156 = vsel %vm2090, %v2122, 0.0
        %v2157 = vsel %vm2091, %v2121, 0.0
        %v2158 = vsel %vm2092, %v2122, 0.0
        %v2159 = vsel %vm2093, %v2121, 0.0
        %v2160 = vsel %vm2094, %v2122, 0.0
        %v2161 = vsel %vm2095, %v2121, 0.0
        %v2162 = vsel %vm2096, %v2122, 0.0
        %v2163 = vsel %vm2097, %v2121, 0.0
        %v2164 = vsel %vm2098, %v2122, 0.0
        %v2165 = vsel %vm2099, %v2121, 0.0
        %v2166 = vsel %vm2100, %v2122, 0.0
        %v2167 = vsel %vm2101, %v2121, 0.0
        %v2168 = vsel %vm2102, %v2122, 0.0
        %v2169 = vsel %vm2103, %v2121, 0.0
        %v2170 = vsel %vm2104, %v2122, 0.0
        %v2171 = vsel %vm2105, %v2121, 0.0
        %v2172 = vsel %vm2106, %v2122, 0.0
        %v2173 = vsel %vm2107, %v2121, 0.0
        %v2174 = vsel %vm2108, %v2122, 0.0
        %v2175 = vsel %vm2109, %v2121, 0.0
        %v2176 = vsel %vm2110, %v2122, 0.0
        %v2177 = vsel %vm2111, %v2121, 0.0
        %v2178 = vsel %vm2112, %v2122, 0.0
        %v2179 = vsel %vm2113, %v2121, 0.0
        %v2180 = vsel %vm2114, %v2122, 0.0
        %v2181 = vsel %vm2115, %v2121, 0.0
        %v2182 = vsel %vm2116, %v2122, 0.0
        %v2183 = vsel %vm2117, %v2121, 0.0
        %v2184 = vsel %vm2118, %v2122, 0.0
        %v2185 = vsel %vm2119, %v2121, 0.0
        %v2186 = vsel %vm2120, %v2122, 0.0
        %v2187 = vadd.f32 %v2123, %v2124
        %2188 = vadd.xlane.f32.xlu0 %v2187
        %v2189 = vpop.xlane.xlu0 %2188
        %v2190 = vadd.f32 %v2125, %v2126
        %2191 = vadd.xlane.f32.xlu0 %v2190
        %v2192 = vpop.xlane.xlu0 %2191
        %v2193 = vadd.f32 %v2127, %v2128
        %2194 = vadd.xlane.f32.xlu0 %v2193
        %v2195 = vpop.xlane.xlu0 %2194
        %v2196 = vadd.f32 %v2129, %v2130
        %2197 = vadd.xlane.f32.xlu0 %v2196
        %v2198 = vpop.xlane.xlu0 %2197
        %v2199 = vadd.f32 %v2131, %v2132
        %2200 = vadd.xlane.f32.xlu0 %v2199
        %v2201 = vpop.xlane.xlu0 %2200
        %v2202 = vadd.f32 %v2133, %v2134
        %2203 = vadd.xlane.f32.xlu0 %v2202
        %v2204 = vpop.xlane.xlu0 %2203
        %v2205 = vadd.f32 %v2135, %v2136
        %2206 = vadd.xlane.f32.xlu0 %v2205
        %v2207 = vpop.xlane.xlu0 %2206
        %v2208 = vadd.f32 %v2137, %v2138
        %2209 = vadd.xlane.f32.xlu0 %v2208
        %v2210 = vpop.xlane.xlu0 %2209
        %v2211 = vadd.f32 %v2139, %v2140
        %2212 = vadd.xlane.f32.xlu0 %v2211
        %v2213 = vpop.xlane.xlu0 %2212
        %v2214 = vadd.f32 %v2141, %v2142
        %2215 = vadd.xlane.f32.xlu0 %v2214
        %v2216 = vpop.xlane.xlu0 %2215
        %v2217 = vadd.f32 %v2143, %v2144
        %2218 = vadd.xlane.f32.xlu0 %v2217
        %v2219 = vpop.xlane.xlu0 %2218
        %v2220 = vadd.f32 %v2145, %v2146
        %2221 = vadd.xlane.f32.xlu0 %v2220
        %v2222 = vpop.xlane.xlu0 %2221
        %v2223 = vadd.f32 %v2147, %v2148
        %2224 = vadd.xlane.f32.xlu0 %v2223
        %v2225 = vpop.xlane.xlu0 %2224
        %v2226 = vadd.f32 %v2149, %v2150
        %2227 = vadd.xlane.f32.xlu0 %v2226
        %v2228 = vpop.xlane.xlu0 %2227
        %v2229 = vadd.f32 %v2151, %v2152
        %2230 = vadd.xlane.f32.xlu0 %v2229
        %v2231 = vpop.xlane.xlu0 %2230
        %v2232 = vadd.f32 %v2153, %v2154
        %2233 = vadd.xlane.f32.xlu0 %v2232
        %v2234 = vpop.xlane.xlu0 %2233
        %v2235 = vadd.f32 %v2155, %v2156
        %2236 = vadd.xlane.f32.xlu0 %v2235
        %v2237 = vpop.xlane.xlu0 %2236
        %v2238 = vadd.f32 %v2157, %v2158
        %2239 = vadd.xlane.f32.xlu0 %v2238
        %v2240 = vpop.xlane.xlu0 %2239
        %v2241 = vadd.f32 %v2159, %v2160
        %2242 = vadd.xlane.f32.xlu0 %v2241
        %v2243 = vpop.xlane.xlu0 %2242
        %v2244 = vadd.f32 %v2161, %v2162
        %2245 = vadd.xlane.f32.xlu0 %v2244
        %v2246 = vpop.xlane.xlu0 %2245
        %v2247 = vadd.f32 %v2163, %v2164
        %2248 = vadd.xlane.f32.xlu0 %v2247
        %v2249 = vpop.xlane.xlu0 %2248
        %v2250 = vadd.f32 %v2165, %v2166
        %2251 = vadd.xlane.f32.xlu0 %v2250
        %v2252 = vpop.xlane.xlu0 %2251
        %v2253 = vadd.f32 %v2167, %v2168
        %2254 = vadd.xlane.f32.xlu0 %v2253
        %v2255 = vpop.xlane.xlu0 %2254
        %v2256 = vadd.f32 %v2169, %v2170
        %2257 = vadd.xlane.f32.xlu0 %v2256
        %v2258 = vpop.xlane.xlu0 %2257
        %v2259 = vadd.f32 %v2171, %v2172
        %2260 = vadd.xlane.f32.xlu0 %v2259
        %v2261 = vpop.xlane.xlu0 %2260
        %v2262 = vadd.f32 %v2173, %v2174
        %2263 = vadd.xlane.f32.xlu0 %v2262
        %v2264 = vpop.xlane.xlu0 %2263
        %v2265 = vadd.f32 %v2175, %v2176
        %2266 = vadd.xlane.f32.xlu0 %v2265
        %v2267 = vpop.xlane.xlu0 %2266
        %v2268 = vadd.f32 %v2177, %v2178
        %2269 = vadd.xlane.f32.xlu0 %v2268
        %v2270 = vpop.xlane.xlu0 %2269
        %v2271 = vadd.f32 %v2179, %v2180
        %2272 = vadd.xlane.f32.xlu0 %v2271
        %v2273 = vpop.xlane.xlu0 %2272
        %v2274 = vadd.f32 %v2181, %v2182
        %2275 = vadd.xlane.f32.xlu0 %v2274
        %v2276 = vpop.xlane.xlu0 %2275
        %v2277 = vadd.f32 %v2183, %v2184
        %2278 = vadd.xlane.f32.xlu0 %v2277
        %v2279 = vpop.xlane.xlu0 %2278
        %v2280 = vadd.f32 %v2185, %v2186
        %2281 = vadd.xlane.f32.xlu0 %v2280
        %v2282 = vpop.xlane.xlu0 %2281
        %v2283 = vcvt.f32.s32.to.zero.pseudo %v2189
        %v2284 = vcvt.f32.s32.to.zero.pseudo %v2192
        %v2285 = vcvt.f32.s32.to.zero.pseudo %v2195
        %v2286 = vcvt.f32.s32.to.zero.pseudo %v2198
        %v2287 = vcvt.f32.s32.to.zero.pseudo %v2201
        %v2288 = vcvt.f32.s32.to.zero.pseudo %v2204
        %v2289 = vcvt.f32.s32.to.zero.pseudo %v2207
        %v2290 = vcvt.f32.s32.to.zero.pseudo %v2210
        %v2291 = vcvt.f32.s32.to.zero.pseudo %v2213
        %v2292 = vcvt.f32.s32.to.zero.pseudo %v2216
        %v2293 = vcvt.f32.s32.to.zero.pseudo %v2219
        %v2294 = vcvt.f32.s32.to.zero.pseudo %v2222
        %v2295 = vcvt.f32.s32.to.zero.pseudo %v2225
        %v2296 = vcvt.f32.s32.to.zero.pseudo %v2228
        %v2297 = vcvt.f32.s32.to.zero.pseudo %v2231
        %v2298 = vcvt.f32.s32.to.zero.pseudo %v2234
        %v2299 = vcvt.f32.s32.to.zero.pseudo %v2237
        %v2300 = vcvt.f32.s32.to.zero.pseudo %v2240
        %v2301 = vcvt.f32.s32.to.zero.pseudo %v2243
        %v2302 = vcvt.f32.s32.to.zero.pseudo %v2246
        %v2303 = vcvt.f32.s32.to.zero.pseudo %v2249
        %v2304 = vcvt.f32.s32.to.zero.pseudo %v2252
        %v2305 = vcvt.f32.s32.to.zero.pseudo %v2255
        %v2306 = vcvt.f32.s32.to.zero.pseudo %v2258
        %v2307 = vcvt.f32.s32.to.zero.pseudo %v2261
        %v2308 = vcvt.f32.s32.to.zero.pseudo %v2264
        %v2309 = vcvt.f32.s32.to.zero.pseudo %v2267
        %v2310 = vcvt.f32.s32.to.zero.pseudo %v2270
        %v2311 = vcvt.f32.s32.to.zero.pseudo %v2273
        %v2312 = vcvt.f32.s32.to.zero.pseudo %v2276
        %v2313 = vcvt.f32.s32.to.zero.pseudo %v2279
        %v2314 = vcvt.f32.s32.to.zero.pseudo %v2282
        %v2315 = vcombine.low %v149, %v150
        %v2316 = vcombine.high %v149, %v150
        %v2318 = vunpack.c.l.s4 1966171168
        %v2319 = vunpack.c.0.s8 %v2318
        %v2320 = vlaneseq
        %v2321 = vshrl.u32 %v2320, 7
        %v2322 = vsub.s32 %v2319, %v2321
        %v2323 = vrot.slane %v2315, %v2322
        %v2325 = vunpack.c.l.s4 1966171168
        %v2326 = vunpack.c.0.s8 %v2325
        %v2327 = vlaneseq
        %v2328 = vshrl.u32 %v2327, 7
        %v2329 = vsub.s32 %v2326, %v2328
        %v2330 = vrot.slane %v2316, %v2329
        %v2331 = vcombine.high %v2323, %v2323
        %v2332 = vcombine.high %v2330, %v2330
        %v2334 = vunpack.c.l.s4 1966171168
        %v2335 = vunpack.c.0.s8 %v2334
        %v2336 = vlaneseq
        %v2337 = vshrl.u32 %v2336, 7
        %v2338 = vsub.s32 %v2335, %v2337
        %v2339 = vrot.slane %v2323, %v2338
        %v2341 = vunpack.c.l.s4 1966171168
        %v2342 = vunpack.c.0.s8 %v2341
        %v2343 = vlaneseq
        %v2344 = vshrl.u32 %v2343, 7
        %v2345 = vsub.s32 %v2342, %v2344
        %v2346 = vrot.slane %v2330, %v2345
        %v2348 = vunpack.c.l.s4 1966171168
        %v2349 = vunpack.c.0.s8 %v2348
        %v2350 = vlaneseq
        %v2351 = vshrl.u32 %v2350, 7
        %v2352 = vsub.s32 %v2349, %v2351
        %v2353 = vrot.slane %v2331, %v2352
        %v2355 = vunpack.c.l.s4 1966171168
        %v2356 = vunpack.c.0.s8 %v2355
        %v2357 = vlaneseq
        %v2358 = vshrl.u32 %v2357, 7
        %v2359 = vsub.s32 %v2356, %v2358
        %v2360 = vrot.slane %v2332, %v2359
        %v2361 = vcombine.high %v2339, %v2339
        %v2362 = vcombine.high %v2346, %v2346
        %v2363 = vcombine.high %v2353, %v2353
        %v2364 = vcombine.high %v2360, %v2360
        %v2365 = vlaneseq
        %v2366 = vshrl.u32 %v2365, 7
        %v2367 = vsub.s32 0, %v2366
        %v2368 = vrot.slane %v2339, %v2367
        %v2369 = vlaneseq
        %v2370 = vshrl.u32 %v2369, 7
        %v2371 = vsub.s32 1, %v2370
        %v2372 = vrot.slane %v2339, %v2371
        %v2373 = vlaneseq
        %v2374 = vshrl.u32 %v2373, 7
        %v2375 = vsub.s32 0, %v2374
        %v2376 = vrot.slane %v2353, %v2375
        %v2377 = vlaneseq
        %v2378 = vshrl.u32 %v2377, 7
        %v2379 = vsub.s32 1, %v2378
        %v2380 = vrot.slane %v2353, %v2379
        %v2381 = vlaneseq
        %v2382 = vshrl.u32 %v2381, 7
        %v2383 = vsub.s32 0, %v2382
        %v2384 = vrot.slane %v2361, %v2383
        %v2385 = vlaneseq
        %v2386 = vshrl.u32 %v2385, 7
        %v2387 = vsub.s32 1, %v2386
        %v2388 = vrot.slane %v2361, %v2387
        %v2389 = vlaneseq
        %v2390 = vshrl.u32 %v2389, 7
        %v2391 = vsub.s32 0, %v2390
        %v2392 = vrot.slane %v2363, %v2391
        %v2393 = vlaneseq
        %v2394 = vshrl.u32 %v2393, 7
        %v2395 = vsub.s32 1, %v2394
        %v2396 = vrot.slane %v2363, %v2395
        %v2397 = vlaneseq
        %v2398 = vshrl.u32 %v2397, 7
        %v2399 = vsub.s32 0, %v2398
        %v2400 = vrot.slane %v2346, %v2399
        %v2401 = vlaneseq
        %v2402 = vshrl.u32 %v2401, 7
        %v2403 = vsub.s32 1, %v2402
        %v2404 = vrot.slane %v2346, %v2403
        %v2405 = vlaneseq
        %v2406 = vshrl.u32 %v2405, 7
        %v2407 = vsub.s32 0, %v2406
        %v2408 = vrot.slane %v2360, %v2407
        %v2409 = vlaneseq
        %v2410 = vshrl.u32 %v2409, 7
        %v2411 = vsub.s32 1, %v2410
        %v2412 = vrot.slane %v2360, %v2411
        %v2413 = vlaneseq
        %v2414 = vshrl.u32 %v2413, 7
        %v2415 = vsub.s32 0, %v2414
        %v2416 = vrot.slane %v2362, %v2415
        %v2417 = vlaneseq
        %v2418 = vshrl.u32 %v2417, 7
        %v2419 = vsub.s32 1, %v2418
        %v2420 = vrot.slane %v2362, %v2419
        %v2421 = vlaneseq
        %v2422 = vshrl.u32 %v2421, 7
        %v2423 = vsub.s32 0, %v2422
        %v2424 = vrot.slane %v2364, %v2423
        %v2425 = vlaneseq
        %v2426 = vshrl.u32 %v2425, 7
        %v2427 = vsub.s32 1, %v2426
        %v2428 = vrot.slane %v2364, %v2427
        %v2445 = vsel %vm2057, %v2368, 0.0
        %v2446 = vsel %vm2058, %v2372, 0.0
        %v2447 = vsel %vm2059, %v2368, 0.0
        %v2448 = vsel %vm2060, %v2372, 0.0
        %v2449 = vsel %vm2061, %v2368, 0.0
        %v2450 = vsel %vm2062, %v2372, 0.0
        %v2451 = vsel %vm2063, %v2368, 0.0
        %v2452 = vsel %vm2064, %v2372, 0.0
        %v2453 = vsel %vm2065, %v2376, 0.0
        %v2454 = vsel %vm2066, %v2380, 0.0
        %v2455 = vsel %vm2067, %v2376, 0.0
        %v2456 = vsel %vm2068, %v2380, 0.0
        %v2457 = vsel %vm2069, %v2376, 0.0
        %v2458 = vsel %vm2070, %v2380, 0.0
        %v2459 = vsel %vm2071, %v2376, 0.0
        %v2460 = vsel %vm2072, %v2380, 0.0
        %v2461 = vsel %vm2073, %v2384, 0.0
        %v2462 = vsel %vm2074, %v2388, 0.0
        %v2463 = vsel %vm2075, %v2384, 0.0
        %v2464 = vsel %vm2076, %v2388, 0.0
        %v2465 = vsel %vm2077, %v2384, 0.0
        %v2466 = vsel %vm2078, %v2388, 0.0
        %v2467 = vsel %vm2079, %v2384, 0.0
        %v2468 = vsel %vm2080, %v2388, 0.0
        %v2469 = vsel %vm2081, %v2392, 0.0
        %v2470 = vsel %vm2082, %v2396, 0.0
        %v2471 = vsel %vm2083, %v2392, 0.0
        %v2472 = vsel %vm2084, %v2396, 0.0
        %v2473 = vsel %vm2085, %v2392, 0.0
        %v2474 = vsel %vm2086, %v2396, 0.0
        %v2475 = vsel %vm2087, %v2392, 0.0
        %v2476 = vsel %vm2088, %v2396, 0.0
        %v2477 = vsel %vm2089, %v2400, 0.0
        %v2478 = vsel %vm2090, %v2404, 0.0
        %v2479 = vsel %vm2091, %v2400, 0.0
        %v2480 = vsel %vm2092, %v2404, 0.0
        %v2481 = vsel %vm2093, %v2400, 0.0
        %v2482 = vsel %vm2094, %v2404, 0.0
        %v2483 = vsel %vm2095, %v2400, 0.0
        %v2484 = vsel %vm2096, %v2404, 0.0
        %v2485 = vsel %vm2097, %v2408, 0.0
        %v2486 = vsel %vm2098, %v2412, 0.0
        %v2487 = vsel %vm2099, %v2408, 0.0
        %v2488 = vsel %vm2100, %v2412, 0.0
        %v2489 = vsel %vm2101, %v2408, 0.0
        %v2490 = vsel %vm2102, %v2412, 0.0
        %v2491 = vsel %vm2103, %v2408, 0.0
        %v2492 = vsel %vm2104, %v2412, 0.0
        %v2493 = vsel %vm2105, %v2416, 0.0
        %v2494 = vsel %vm2106, %v2420, 0.0
        %v2495 = vsel %vm2107, %v2416, 0.0
        %v2496 = vsel %vm2108, %v2420, 0.0
        %v2497 = vsel %vm2109, %v2416, 0.0
        %v2498 = vsel %vm2110, %v2420, 0.0
        %v2499 = vsel %vm2111, %v2416, 0.0
        %v2500 = vsel %vm2112, %v2420, 0.0
        %v2501 = vsel %vm2113, %v2424, 0.0
        %v2502 = vsel %vm2114, %v2428, 0.0
        %v2503 = vsel %vm2115, %v2424, 0.0
        %v2504 = vsel %vm2116, %v2428, 0.0
        %v2505 = vsel %vm2117, %v2424, 0.0
        %v2506 = vsel %vm2118, %v2428, 0.0
        %v2507 = vsel %vm2119, %v2424, 0.0
        %v2508 = vsel %vm2120, %v2428, 0.0
        %v2509 = vadd.f32 %v2445, %v2446
        %2510 = vadd.xlane.f32.xlu0 %v2509
        %v2511 = vpop.xlane.xlu0 %2510
        %v2512 = vadd.f32 %v2447, %v2448
        %2513 = vadd.xlane.f32.xlu0 %v2512
        %v2514 = vpop.xlane.xlu0 %2513
        %v2515 = vadd.f32 %v2449, %v2450
        %2516 = vadd.xlane.f32.xlu0 %v2515
        %v2517 = vpop.xlane.xlu0 %2516
        %v2518 = vadd.f32 %v2451, %v2452
        %2519 = vadd.xlane.f32.xlu0 %v2518
        %v2520 = vpop.xlane.xlu0 %2519
        %v2521 = vadd.f32 %v2453, %v2454
        %2522 = vadd.xlane.f32.xlu0 %v2521
        %v2523 = vpop.xlane.xlu0 %2522
        %v2524 = vadd.f32 %v2455, %v2456
        %2525 = vadd.xlane.f32.xlu0 %v2524
        %v2526 = vpop.xlane.xlu0 %2525
        %v2527 = vadd.f32 %v2457, %v2458
        %2528 = vadd.xlane.f32.xlu0 %v2527
        %v2529 = vpop.xlane.xlu0 %2528
        %v2530 = vadd.f32 %v2459, %v2460
        %2531 = vadd.xlane.f32.xlu0 %v2530
        %v2532 = vpop.xlane.xlu0 %2531
        %v2533 = vadd.f32 %v2461, %v2462
        %2534 = vadd.xlane.f32.xlu0 %v2533
        %v2535 = vpop.xlane.xlu0 %2534
        %v2536 = vadd.f32 %v2463, %v2464
        %2537 = vadd.xlane.f32.xlu0 %v2536
        %v2538 = vpop.xlane.xlu0 %2537
        %v2539 = vadd.f32 %v2465, %v2466
        %2540 = vadd.xlane.f32.xlu0 %v2539
        %v2541 = vpop.xlane.xlu0 %2540
        %v2542 = vadd.f32 %v2467, %v2468
        %2543 = vadd.xlane.f32.xlu0 %v2542
        %v2544 = vpop.xlane.xlu0 %2543
        %v2545 = vadd.f32 %v2469, %v2470
        %2546 = vadd.xlane.f32.xlu0 %v2545
        %v2547 = vpop.xlane.xlu0 %2546
        %v2548 = vadd.f32 %v2471, %v2472
        %2549 = vadd.xlane.f32.xlu0 %v2548
        %v2550 = vpop.xlane.xlu0 %2549
        %v2551 = vadd.f32 %v2473, %v2474
        %2552 = vadd.xlane.f32.xlu0 %v2551
        %v2553 = vpop.xlane.xlu0 %2552
        %v2554 = vadd.f32 %v2475, %v2476
        %2555 = vadd.xlane.f32.xlu0 %v2554
        %v2556 = vpop.xlane.xlu0 %2555
        %v2557 = vadd.f32 %v2477, %v2478
        %2558 = vadd.xlane.f32.xlu0 %v2557
        %v2559 = vpop.xlane.xlu0 %2558
        %v2560 = vadd.f32 %v2479, %v2480
        %2561 = vadd.xlane.f32.xlu0 %v2560
        %v2562 = vpop.xlane.xlu0 %2561
        %v2563 = vadd.f32 %v2481, %v2482
        %2564 = vadd.xlane.f32.xlu0 %v2563
        %v2565 = vpop.xlane.xlu0 %2564
        %v2566 = vadd.f32 %v2483, %v2484
        %2567 = vadd.xlane.f32.xlu0 %v2566
        %v2568 = vpop.xlane.xlu0 %2567
        %v2569 = vadd.f32 %v2485, %v2486
        %2570 = vadd.xlane.f32.xlu0 %v2569
        %v2571 = vpop.xlane.xlu0 %2570
        %v2572 = vadd.f32 %v2487, %v2488
        %2573 = vadd.xlane.f32.xlu0 %v2572
        %v2574 = vpop.xlane.xlu0 %2573
        %v2575 = vadd.f32 %v2489, %v2490
        %2576 = vadd.xlane.f32.xlu0 %v2575
        %v2577 = vpop.xlane.xlu0 %2576
        %v2578 = vadd.f32 %v2491, %v2492
        %2579 = vadd.xlane.f32.xlu0 %v2578
        %v2580 = vpop.xlane.xlu0 %2579
        %v2581 = vadd.f32 %v2493, %v2494
        %2582 = vadd.xlane.f32.xlu0 %v2581
        %v2583 = vpop.xlane.xlu0 %2582
        %v2584 = vadd.f32 %v2495, %v2496
        %2585 = vadd.xlane.f32.xlu0 %v2584
        %v2586 = vpop.xlane.xlu0 %2585
        %v2587 = vadd.f32 %v2497, %v2498
        %2588 = vadd.xlane.f32.xlu0 %v2587
        %v2589 = vpop.xlane.xlu0 %2588
        %v2590 = vadd.f32 %v2499, %v2500
        %2591 = vadd.xlane.f32.xlu0 %v2590
        %v2592 = vpop.xlane.xlu0 %2591
        %v2593 = vadd.f32 %v2501, %v2502
        %2594 = vadd.xlane.f32.xlu0 %v2593
        %v2595 = vpop.xlane.xlu0 %2594
        %v2596 = vadd.f32 %v2503, %v2504
        %2597 = vadd.xlane.f32.xlu0 %v2596
        %v2598 = vpop.xlane.xlu0 %2597
        %v2599 = vadd.f32 %v2505, %v2506
        %2600 = vadd.xlane.f32.xlu0 %v2599
        %v2601 = vpop.xlane.xlu0 %2600
        %v2602 = vadd.f32 %v2507, %v2508
        %2603 = vadd.xlane.f32.xlu0 %v2602
        %v2604 = vpop.xlane.xlu0 %2603
        %vm2605 = vcmp.gt.s32.totalorder %v2283, 0
        %vm2606 = vcmp.gt.s32.totalorder %v2284, 0
        %vm2607 = vcmp.gt.s32.totalorder %v2285, 0
        %vm2608 = vcmp.gt.s32.totalorder %v2286, 0
        %vm2609 = vcmp.gt.s32.totalorder %v2287, 0
        %vm2610 = vcmp.gt.s32.totalorder %v2288, 0
        %vm2611 = vcmp.gt.s32.totalorder %v2289, 0
        %vm2612 = vcmp.gt.s32.totalorder %v2290, 0
        %vm2613 = vcmp.gt.s32.totalorder %v2291, 0
        %vm2614 = vcmp.gt.s32.totalorder %v2292, 0
        %vm2615 = vcmp.gt.s32.totalorder %v2293, 0
        %vm2616 = vcmp.gt.s32.totalorder %v2294, 0
        %vm2617 = vcmp.gt.s32.totalorder %v2295, 0
        %vm2618 = vcmp.gt.s32.totalorder %v2296, 0
        %vm2619 = vcmp.gt.s32.totalorder %v2297, 0
        %vm2620 = vcmp.gt.s32.totalorder %v2298, 0
        %vm2621 = vcmp.gt.s32.totalorder %v2299, 0
        %vm2622 = vcmp.gt.s32.totalorder %v2300, 0
        %vm2623 = vcmp.gt.s32.totalorder %v2301, 0
        %vm2624 = vcmp.gt.s32.totalorder %v2302, 0
        %vm2625 = vcmp.gt.s32.totalorder %v2303, 0
        %vm2626 = vcmp.gt.s32.totalorder %v2304, 0
        %vm2627 = vcmp.gt.s32.totalorder %v2305, 0
        %vm2628 = vcmp.gt.s32.totalorder %v2306, 0
        %vm2629 = vcmp.gt.s32.totalorder %v2307, 0
        %vm2630 = vcmp.gt.s32.totalorder %v2308, 0
        %vm2631 = vcmp.gt.s32.totalorder %v2309, 0
        %vm2632 = vcmp.gt.s32.totalorder %v2310, 0
        %vm2633 = vcmp.gt.s32.totalorder %v2311, 0
        %vm2634 = vcmp.gt.s32.totalorder %v2312, 0
        %vm2635 = vcmp.gt.s32.totalorder %v2313, 0
        %vm2636 = vcmp.gt.s32.totalorder %v2314, 0
        %vm2637 = vcmp.gt.f32.partialorder %v2368, %v2511
        %vm2638 = vcmp.gt.f32.partialorder %v2372, %v2511
        %vm2639 = vcmp.gt.f32.partialorder %v2368, %v2514
        %vm2640 = vcmp.gt.f32.partialorder %v2372, %v2514
        %vm2641 = vcmp.gt.f32.partialorder %v2368, %v2517
        %vm2642 = vcmp.gt.f32.partialorder %v2372, %v2517
        %vm2643 = vcmp.gt.f32.partialorder %v2368, %v2520
        %vm2644 = vcmp.gt.f32.partialorder %v2372, %v2520
        %vm2645 = vcmp.gt.f32.partialorder %v2376, %v2523
        %vm2646 = vcmp.gt.f32.partialorder %v2380, %v2523
        %vm2647 = vcmp.gt.f32.partialorder %v2376, %v2526
        %vm2648 = vcmp.gt.f32.partialorder %v2380, %v2526
        %vm2649 = vcmp.gt.f32.partialorder %v2376, %v2529
        %vm2650 = vcmp.gt.f32.partialorder %v2380, %v2529
        %vm2651 = vcmp.gt.f32.partialorder %v2376, %v2532
        %vm2652 = vcmp.gt.f32.partialorder %v2380, %v2532
        %vm2653 = vcmp.gt.f32.partialorder %v2384, %v2535
        %vm2654 = vcmp.gt.f32.partialorder %v2388, %v2535
        %vm2655 = vcmp.gt.f32.partialorder %v2384, %v2538
        %vm2656 = vcmp.gt.f32.partialorder %v2388, %v2538
        %vm2657 = vcmp.gt.f32.partialorder %v2384, %v2541
        %vm2658 = vcmp.gt.f32.partialorder %v2388, %v2541
        %vm2659 = vcmp.gt.f32.partialorder %v2384, %v2544
        %vm2660 = vcmp.gt.f32.partialorder %v2388, %v2544
        %vm2661 = vcmp.gt.f32.partialorder %v2392, %v2547
        %vm2662 = vcmp.gt.f32.partialorder %v2396, %v2547
        %vm2663 = vcmp.gt.f32.partialorder %v2392, %v2550
        %vm2664 = vcmp.gt.f32.partialorder %v2396, %v2550
        %vm2665 = vcmp.gt.f32.partialorder %v2392, %v2553
        %vm2666 = vcmp.gt.f32.partialorder %v2396, %v2553
        %vm2667 = vcmp.gt.f32.partialorder %v2392, %v2556
        %vm2668 = vcmp.gt.f32.partialorder %v2396, %v2556
        %vm2669 = vcmp.gt.f32.partialorder %v2400, %v2559
        %vm2670 = vcmp.gt.f32.partialorder %v2404, %v2559
        %vm2671 = vcmp.gt.f32.partialorder %v2400, %v2562
        %vm2672 = vcmp.gt.f32.partialorder %v2404, %v2562
        %vm2673 = vcmp.gt.f32.partialorder %v2400, %v2565
        %vm2674 = vcmp.gt.f32.partialorder %v2404, %v2565
        %vm2675 = vcmp.gt.f32.partialorder %v2400, %v2568
        %vm2676 = vcmp.gt.f32.partialorder %v2404, %v2568
        %vm2677 = vcmp.gt.f32.partialorder %v2408, %v2571
        %vm2678 = vcmp.gt.f32.partialorder %v2412, %v2571
        %vm2679 = vcmp.gt.f32.partialorder %v2408, %v2574
        %vm2680 = vcmp.gt.f32.partialorder %v2412, %v2574
        %vm2681 = vcmp.gt.f32.partialorder %v2408, %v2577
        %vm2682 = vcmp.gt.f32.partialorder %v2412, %v2577
        %vm2683 = vcmp.gt.f32.partialorder %v2408, %v2580
        %vm2684 = vcmp.gt.f32.partialorder %v2412, %v2580
        %vm2685 = vcmp.gt.f32.partialorder %v2416, %v2583
        %vm2686 = vcmp.gt.f32.partialorder %v2420, %v2583
        %vm2687 = vcmp.gt.f32.partialorder %v2416, %v2586
        %vm2688 = vcmp.gt.f32.partialorder %v2420, %v2586
        %vm2689 = vcmp.gt.f32.partialorder %v2416, %v2589
        %vm2690 = vcmp.gt.f32.partialorder %v2420, %v2589
        %vm2691 = vcmp.gt.f32.partialorder %v2416, %v2592
        %vm2692 = vcmp.gt.f32.partialorder %v2420, %v2592
        %vm2693 = vcmp.gt.f32.partialorder %v2424, %v2595
        %vm2694 = vcmp.gt.f32.partialorder %v2428, %v2595
        %vm2695 = vcmp.gt.f32.partialorder %v2424, %v2598
        %vm2696 = vcmp.gt.f32.partialorder %v2428, %v2598
        %vm2697 = vcmp.gt.f32.partialorder %v2424, %v2601
        %vm2698 = vcmp.gt.f32.partialorder %v2428, %v2601
        %vm2699 = vcmp.gt.f32.partialorder %v2424, %v2604
        %vm2700 = vcmp.gt.f32.partialorder %v2428, %v2604
        %vm2701 = vcmp.lt.s32.totalorder %v136, %v2283
        %vm2702 = vcmp.lt.s32.totalorder %v137, %v2283
        %vm2703 = vcmp.lt.s32.totalorder %v136, %v2284
        %vm2704 = vcmp.lt.s32.totalorder %v137, %v2284
        %vm2705 = vcmp.lt.s32.totalorder %v136, %v2285
        %vm2706 = vcmp.lt.s32.totalorder %v137, %v2285
        %vm2707 = vcmp.lt.s32.totalorder %v136, %v2286
        %vm2708 = vcmp.lt.s32.totalorder %v137, %v2286
        %vm2709 = vcmp.lt.s32.totalorder %v136, %v2287
        %vm2710 = vcmp.lt.s32.totalorder %v137, %v2287
        %vm2711 = vcmp.lt.s32.totalorder %v136, %v2288
        %vm2712 = vcmp.lt.s32.totalorder %v137, %v2288
        %vm2713 = vcmp.lt.s32.totalorder %v136, %v2289
        %vm2714 = vcmp.lt.s32.totalorder %v137, %v2289
        %vm2715 = vcmp.lt.s32.totalorder %v136, %v2290
        %vm2716 = vcmp.lt.s32.totalorder %v137, %v2290
        %vm2717 = vcmp.lt.s32.totalorder %v136, %v2291
        %vm2718 = vcmp.lt.s32.totalorder %v137, %v2291
        %vm2719 = vcmp.lt.s32.totalorder %v136, %v2292
        %vm2720 = vcmp.lt.s32.totalorder %v137, %v2292
        %vm2721 = vcmp.lt.s32.totalorder %v136, %v2293
        %vm2722 = vcmp.lt.s32.totalorder %v137, %v2293
        %vm2723 = vcmp.lt.s32.totalorder %v136, %v2294
        %vm2724 = vcmp.lt.s32.totalorder %v137, %v2294
        %vm2725 = vcmp.lt.s32.totalorder %v136, %v2295
        %vm2726 = vcmp.lt.s32.totalorder %v137, %v2295
        %vm2727 = vcmp.lt.s32.totalorder %v136, %v2296
        %vm2728 = vcmp.lt.s32.totalorder %v137, %v2296
        %vm2729 = vcmp.lt.s32.totalorder %v136, %v2297
        %vm2730 = vcmp.lt.s32.totalorder %v137, %v2297
        %vm2731 = vcmp.lt.s32.totalorder %v136, %v2298
        %vm2732 = vcmp.lt.s32.totalorder %v137, %v2298
        %vm2733 = vcmp.lt.s32.totalorder %v136, %v2299
        %vm2734 = vcmp.lt.s32.totalorder %v137, %v2299
        %vm2735 = vcmp.lt.s32.totalorder %v136, %v2300
        %vm2736 = vcmp.lt.s32.totalorder %v137, %v2300
        %vm2737 = vcmp.lt.s32.totalorder %v136, %v2301
        %vm2738 = vcmp.lt.s32.totalorder %v137, %v2301
        %vm2739 = vcmp.lt.s32.totalorder %v136, %v2302
        %vm2740 = vcmp.lt.s32.totalorder %v137, %v2302
        %vm2741 = vcmp.lt.s32.totalorder %v136, %v2303
        %vm2742 = vcmp.lt.s32.totalorder %v137, %v2303
        %vm2743 = vcmp.lt.s32.totalorder %v136, %v2304
        %vm2744 = vcmp.lt.s32.totalorder %v137, %v2304
        %vm2745 = vcmp.lt.s32.totalorder %v136, %v2305
        %vm2746 = vcmp.lt.s32.totalorder %v137, %v2305
        %vm2747 = vcmp.lt.s32.totalorder %v136, %v2306
        %vm2748 = vcmp.lt.s32.totalorder %v137, %v2306
        %vm2749 = vcmp.lt.s32.totalorder %v136, %v2307
        %vm2750 = vcmp.lt.s32.totalorder %v137, %v2307
        %vm2751 = vcmp.lt.s32.totalorder %v136, %v2308
        %vm2752 = vcmp.lt.s32.totalorder %v137, %v2308
        %vm2753 = vcmp.lt.s32.totalorder %v136, %v2309
        %vm2754 = vcmp.lt.s32.totalorder %v137, %v2309
        %vm2755 = vcmp.lt.s32.totalorder %v136, %v2310
        %vm2756 = vcmp.lt.s32.totalorder %v137, %v2310
        %vm2757 = vcmp.lt.s32.totalorder %v136, %v2311
        %vm2758 = vcmp.lt.s32.totalorder %v137, %v2311
        %vm2759 = vcmp.lt.s32.totalorder %v136, %v2312
        %vm2760 = vcmp.lt.s32.totalorder %v137, %v2312
        %vm2761 = vcmp.lt.s32.totalorder %v136, %v2313
        %vm2762 = vcmp.lt.s32.totalorder %v137, %v2313
        %vm2763 = vcmp.lt.s32.totalorder %v136, %v2314
        %vm2764 = vcmp.lt.s32.totalorder %v137, %v2314
        %vm2765 = vmand %vm2637, %vm2701
        %vm2766 = vmand %vm2638, %vm2702
        %vm2767 = vmand %vm2639, %vm2703
        %vm2768 = vmand %vm2640, %vm2704
        %vm2769 = vmand %vm2641, %vm2705
        %vm2770 = vmand %vm2642, %vm2706
        %vm2771 = vmand %vm2643, %vm2707
        %vm2772 = vmand %vm2644, %vm2708
        %vm2773 = vmand %vm2645, %vm2709
        %vm2774 = vmand %vm2646, %vm2710
        %vm2775 = vmand %vm2647, %vm2711
        %vm2776 = vmand %vm2648, %vm2712
        %vm2777 = vmand %vm2649, %vm2713
        %vm2778 = vmand %vm2650, %vm2714
        %vm2779 = vmand %vm2651, %vm2715
        %vm2780 = vmand %vm2652, %vm2716
        %vm2781 = vmand %vm2653, %vm2717
        %vm2782 = vmand %vm2654, %vm2718
        %vm2783 = vmand %vm2655, %vm2719
        %vm2784 = vmand %vm2656, %vm2720
        %vm2785 = vmand %vm2657, %vm2721
        %vm2786 = vmand %vm2658, %vm2722
        %vm2787 = vmand %vm2659, %vm2723
        %vm2788 = vmand %vm2660, %vm2724
        %vm2789 = vmand %vm2661, %vm2725
        %vm2790 = vmand %vm2662, %vm2726
        %vm2791 = vmand %vm2663, %vm2727
        %vm2792 = vmand %vm2664, %vm2728
        %vm2793 = vmand %vm2665, %vm2729
        %vm2794 = vmand %vm2666, %vm2730
        %vm2795 = vmand %vm2667, %vm2731
        %vm2796 = vmand %vm2668, %vm2732
        %vm2797 = vmand %vm2669, %vm2733
        %vm2798 = vmand %vm2670, %vm2734
        %vm2799 = vmand %vm2671, %vm2735
        %vm2800 = vmand %vm2672, %vm2736
        %vm2801 = vmand %vm2673, %vm2737
        %vm2802 = vmand %vm2674, %vm2738
        %vm2803 = vmand %vm2675, %vm2739
        %vm2804 = vmand %vm2676, %vm2740
        %vm2805 = vmand %vm2677, %vm2741
        %vm2806 = vmand %vm2678, %vm2742
        %vm2807 = vmand %vm2679, %vm2743
        %vm2808 = vmand %vm2680, %vm2744
        %vm2809 = vmand %vm2681, %vm2745
        %vm2810 = vmand %vm2682, %vm2746
        %vm2811 = vmand %vm2683, %vm2747
        %vm2812 = vmand %vm2684, %vm2748
        %vm2813 = vmand %vm2685, %vm2749
        %vm2814 = vmand %vm2686, %vm2750
        %vm2815 = vmand %vm2687, %vm2751
        %vm2816 = vmand %vm2688, %vm2752
        %vm2817 = vmand %vm2689, %vm2753
        %vm2818 = vmand %vm2690, %vm2754
        %vm2819 = vmand %vm2691, %vm2755
        %vm2820 = vmand %vm2692, %vm2756
        %vm2821 = vmand %vm2693, %vm2757
        %vm2822 = vmand %vm2694, %vm2758
        %vm2823 = vmand %vm2695, %vm2759
        %vm2824 = vmand %vm2696, %vm2760
        %vm2825 = vmand %vm2697, %vm2761
        %vm2826 = vmand %vm2698, %vm2762
        %vm2827 = vmand %vm2699, %vm2763
        %vm2828 = vmand %vm2700, %vm2764
        %v2829 = vsel %vm2765, %v136, 4294967295
        %v2830 = vsel %vm2766, %v137, 4294967295
        %v2831 = vsel %vm2767, %v136, 4294967295
        %v2832 = vsel %vm2768, %v137, 4294967295
        %v2833 = vsel %vm2769, %v136, 4294967295
        %v2834 = vsel %vm2770, %v137, 4294967295
        %v2835 = vsel %vm2771, %v136, 4294967295
        %v2836 = vsel %vm2772, %v137, 4294967295
        %v2837 = vsel %vm2773, %v136, 4294967295
        %v2838 = vsel %vm2774, %v137, 4294967295
        %v2839 = vsel %vm2775, %v136, 4294967295
        %v2840 = vsel %vm2776, %v137, 4294967295
        %v2841 = vsel %vm2777, %v136, 4294967295
        %v2842 = vsel %vm2778, %v137, 4294967295
        %v2843 = vsel %vm2779, %v136, 4294967295
        %v2844 = vsel %vm2780, %v137, 4294967295
        %v2845 = vsel %vm2781, %v136, 4294967295
        %v2846 = vsel %vm2782, %v137, 4294967295
        %v2847 = vsel %vm2783, %v136, 4294967295
        %v2848 = vsel %vm2784, %v137, 4294967295
        %v2849 = vsel %vm2785, %v136, 4294967295
        %v2850 = vsel %vm2786, %v137, 4294967295
        %v2851 = vsel %vm2787, %v136, 4294967295
        %v2852 = vsel %vm2788, %v137, 4294967295
        %v2853 = vsel %vm2789, %v136, 4294967295
        %v2854 = vsel %vm2790, %v137, 4294967295
        %v2855 = vsel %vm2791, %v136, 4294967295
        %v2856 = vsel %vm2792, %v137, 4294967295
        %v2857 = vsel %vm2793, %v136, 4294967295
        %v2858 = vsel %vm2794, %v137, 4294967295
        %v2859 = vsel %vm2795, %v136, 4294967295
        %v2860 = vsel %vm2796, %v137, 4294967295
        %v2861 = vsel %vm2797, %v136, 4294967295
        %v2862 = vsel %vm2798, %v137, 4294967295
        %v2863 = vsel %vm2799, %v136, 4294967295
        %v2864 = vsel %vm2800, %v137, 4294967295
        %v2865 = vsel %vm2801, %v136, 4294967295
        %v2866 = vsel %vm2802, %v137, 4294967295
        %v2867 = vsel %vm2803, %v136, 4294967295
        %v2868 = vsel %vm2804, %v137, 4294967295
        %v2869 = vsel %vm2805, %v136, 4294967295
        %v2870 = vsel %vm2806, %v137, 4294967295
        %v2871 = vsel %vm2807, %v136, 4294967295
        %v2872 = vsel %vm2808, %v137, 4294967295
        %v2873 = vsel %vm2809, %v136, 4294967295
        %v2874 = vsel %vm2810, %v137, 4294967295
        %v2875 = vsel %vm2811, %v136, 4294967295
        %v2876 = vsel %vm2812, %v137, 4294967295
        %v2877 = vsel %vm2813, %v136, 4294967295
        %v2878 = vsel %vm2814, %v137, 4294967295
        %v2879 = vsel %vm2815, %v136, 4294967295
        %v2880 = vsel %vm2816, %v137, 4294967295
        %v2881 = vsel %vm2817, %v136, 4294967295
        %v2882 = vsel %vm2818, %v137, 4294967295
        %v2883 = vsel %vm2819, %v136, 4294967295
        %v2884 = vsel %vm2820, %v137, 4294967295
        %v2885 = vsel %vm2821, %v136, 4294967295
        %v2886 = vsel %vm2822, %v137, 4294967295
        %v2887 = vsel %vm2823, %v136, 4294967295
        %v2888 = vsel %vm2824, %v137, 4294967295
        %v2889 = vsel %vm2825, %v136, 4294967295
        %v2890 = vsel %vm2826, %v137, 4294967295
        %v2891 = vsel %vm2827, %v136, 4294967295
        %v2892 = vsel %vm2828, %v137, 4294967295
        %vm2893 = vcmp.gt.s32.totalorder %v2829, %v2830
        %v2894 = vsel %vm2893, %v2829, %v2830
        %v2895 = vand.u32 %v2894, 65535
        %v2896 = vshra.s32 %v2894, 16
        %v2897 = vcvt.s32.f32 %v2895
        %v2898 = vcvt.s32.f32 %v2896
        %2899 = vmax.xlane.f32.xlu0 %v2898
        %v2900 = vpop.xlane.xlu0 %2899
        %vm2901 = vcmp.eq.f32.partialorder %v2898, %v2900
        %v2902 = vsel %vm2901, %v2897, -inf
        %2903 = vmax.xlane.f32.xlu0 %v2902
        %v2904 = vpop.xlane.xlu0 %2903
        %v2905 = vcvt.f32.s32 %v2904
        %v2906 = vcvt.f32.s32 %v2900
        %v2907 = vshll.u32 %v2906, 16
        %v2908 = vadd.s32 %v2907, %v2905
        %vm2909 = vcmp.gt.s32.totalorder %v2831, %v2832
        %v2910 = vsel %vm2909, %v2831, %v2832
        %v2911 = vand.u32 %v2910, 65535
        %v2912 = vshra.s32 %v2910, 16
        %v2913 = vcvt.s32.f32 %v2911
        %v2914 = vcvt.s32.f32 %v2912
        %2915 = vmax.xlane.f32.xlu0 %v2914
        %v2916 = vpop.xlane.xlu0 %2915
        %vm2917 = vcmp.eq.f32.partialorder %v2914, %v2916
        %v2918 = vsel %vm2917, %v2913, -inf
        %2919 = vmax.xlane.f32.xlu0 %v2918
        %v2920 = vpop.xlane.xlu0 %2919
        %v2921 = vcvt.f32.s32 %v2920
        %v2922 = vcvt.f32.s32 %v2916
        %v2923 = vshll.u32 %v2922, 16
        %v2924 = vadd.s32 %v2923, %v2921
        %vm2925 = vcmp.gt.s32.totalorder %v2833, %v2834
        %v2926 = vsel %vm2925, %v2833, %v2834
        %v2927 = vand.u32 %v2926, 65535
        %v2928 = vshra.s32 %v2926, 16
        %v2929 = vcvt.s32.f32 %v2927
        %v2930 = vcvt.s32.f32 %v2928
        %2931 = vmax.xlane.f32.xlu0 %v2930
        %v2932 = vpop.xlane.xlu0 %2931
        %vm2933 = vcmp.eq.f32.partialorder %v2930, %v2932
        %v2934 = vsel %vm2933, %v2929, -inf
        %2935 = vmax.xlane.f32.xlu0 %v2934
        %v2936 = vpop.xlane.xlu0 %2935
        %v2937 = vcvt.f32.s32 %v2936
        %v2938 = vcvt.f32.s32 %v2932
        %v2939 = vshll.u32 %v2938, 16
        %v2940 = vadd.s32 %v2939, %v2937
        %vm2941 = vcmp.gt.s32.totalorder %v2835, %v2836
        %v2942 = vsel %vm2941, %v2835, %v2836
        %v2943 = vand.u32 %v2942, 65535
        %v2944 = vshra.s32 %v2942, 16
        %v2945 = vcvt.s32.f32 %v2943
        %v2946 = vcvt.s32.f32 %v2944
        %2947 = vmax.xlane.f32.xlu0 %v2946
        %v2948 = vpop.xlane.xlu0 %2947
        %vm2949 = vcmp.eq.f32.partialorder %v2946, %v2948
        %v2950 = vsel %vm2949, %v2945, -inf
        %2951 = vmax.xlane.f32.xlu0 %v2950
        %v2952 = vpop.xlane.xlu0 %2951
        %v2953 = vcvt.f32.s32 %v2952
        %v2954 = vcvt.f32.s32 %v2948
        %v2955 = vshll.u32 %v2954, 16
        %v2956 = vadd.s32 %v2955, %v2953
        %vm2957 = vcmp.gt.s32.totalorder %v2837, %v2838
        %v2958 = vsel %vm2957, %v2837, %v2838
        %v2959 = vand.u32 %v2958, 65535
        %v2960 = vshra.s32 %v2958, 16
        %v2961 = vcvt.s32.f32 %v2959
        %v2962 = vcvt.s32.f32 %v2960
        %2963 = vmax.xlane.f32.xlu0 %v2962
        %v2964 = vpop.xlane.xlu0 %2963
        %vm2965 = vcmp.eq.f32.partialorder %v2962, %v2964
        %v2966 = vsel %vm2965, %v2961, -inf
        %2967 = vmax.xlane.f32.xlu0 %v2966
        %v2968 = vpop.xlane.xlu0 %2967
        %v2969 = vcvt.f32.s32 %v2968
        %v2970 = vcvt.f32.s32 %v2964
        %v2971 = vshll.u32 %v2970, 16
        %v2972 = vadd.s32 %v2971, %v2969
        %vm2973 = vcmp.gt.s32.totalorder %v2839, %v2840
        %v2974 = vsel %vm2973, %v2839, %v2840
        %v2975 = vand.u32 %v2974, 65535
        %v2976 = vshra.s32 %v2974, 16
        %v2977 = vcvt.s32.f32 %v2975
        %v2978 = vcvt.s32.f32 %v2976
        %2979 = vmax.xlane.f32.xlu0 %v2978
        %v2980 = vpop.xlane.xlu0 %2979
        %vm2981 = vcmp.eq.f32.partialorder %v2978, %v2980
        %v2982 = vsel %vm2981, %v2977, -inf
        %2983 = vmax.xlane.f32.xlu0 %v2982
        %v2984 = vpop.xlane.xlu0 %2983
        %v2985 = vcvt.f32.s32 %v2984
        %v2986 = vcvt.f32.s32 %v2980
        %v2987 = vshll.u32 %v2986, 16
        %v2988 = vadd.s32 %v2987, %v2985
        %vm2989 = vcmp.gt.s32.totalorder %v2841, %v2842
        %v2990 = vsel %vm2989, %v2841, %v2842
        %v2991 = vand.u32 %v2990, 65535
        %v2992 = vshra.s32 %v2990, 16
        %v2993 = vcvt.s32.f32 %v2991
        %v2994 = vcvt.s32.f32 %v2992
        %2995 = vmax.xlane.f32.xlu0 %v2994
        %v2996 = vpop.xlane.xlu0 %2995
        %vm2997 = vcmp.eq.f32.partialorder %v2994, %v2996
        %v2998 = vsel %vm2997, %v2993, -inf
        %2999 = vmax.xlane.f32.xlu0 %v2998
        %v3000 = vpop.xlane.xlu0 %2999
        %v3001 = vcvt.f32.s32 %v3000
        %v3002 = vcvt.f32.s32 %v2996
        %v3003 = vshll.u32 %v3002, 16
        %v3004 = vadd.s32 %v3003, %v3001
        %vm3005 = vcmp.gt.s32.totalorder %v2843, %v2844
        %v3006 = vsel %vm3005, %v2843, %v2844
        %v3007 = vand.u32 %v3006, 65535
        %v3008 = vshra.s32 %v3006, 16
        %v3009 = vcvt.s32.f32 %v3007
        %v3010 = vcvt.s32.f32 %v3008
        %3011 = vmax.xlane.f32.xlu0 %v3010
        %v3012 = vpop.xlane.xlu0 %3011
        %vm3013 = vcmp.eq.f32.partialorder %v3010, %v3012
        %v3014 = vsel %vm3013, %v3009, -inf
        %3015 = vmax.xlane.f32.xlu0 %v3014
        %v3016 = vpop.xlane.xlu0 %3015
        %v3017 = vcvt.f32.s32 %v3016
        %v3018 = vcvt.f32.s32 %v3012
        %v3019 = vshll.u32 %v3018, 16
        %v3020 = vadd.s32 %v3019, %v3017
        %vm3021 = vcmp.gt.s32.totalorder %v2845, %v2846
        %v3022 = vsel %vm3021, %v2845, %v2846
        %v3023 = vand.u32 %v3022, 65535
        %v3024 = vshra.s32 %v3022, 16
        %v3025 = vcvt.s32.f32 %v3023
        %v3026 = vcvt.s32.f32 %v3024
        %3027 = vmax.xlane.f32.xlu0 %v3026
        %v3028 = vpop.xlane.xlu0 %3027
        %vm3029 = vcmp.eq.f32.partialorder %v3026, %v3028
        %v3030 = vsel %vm3029, %v3025, -inf
        %3031 = vmax.xlane.f32.xlu0 %v3030
        %v3032 = vpop.xlane.xlu0 %3031
        %v3033 = vcvt.f32.s32 %v3032
        %v3034 = vcvt.f32.s32 %v3028
        %v3035 = vshll.u32 %v3034, 16
        %v3036 = vadd.s32 %v3035, %v3033
        %vm3037 = vcmp.gt.s32.totalorder %v2847, %v2848
        %v3038 = vsel %vm3037, %v2847, %v2848
        %v3039 = vand.u32 %v3038, 65535
        %v3040 = vshra.s32 %v3038, 16
        %v3041 = vcvt.s32.f32 %v3039
        %v3042 = vcvt.s32.f32 %v3040
        %3043 = vmax.xlane.f32.xlu0 %v3042
        %v3044 = vpop.xlane.xlu0 %3043
        %vm3045 = vcmp.eq.f32.partialorder %v3042, %v3044
        %v3046 = vsel %vm3045, %v3041, -inf
        %3047 = vmax.xlane.f32.xlu0 %v3046
        %v3048 = vpop.xlane.xlu0 %3047
        %v3049 = vcvt.f32.s32 %v3048
        %v3050 = vcvt.f32.s32 %v3044
        %v3051 = vshll.u32 %v3050, 16
        %v3052 = vadd.s32 %v3051, %v3049
        %vm3053 = vcmp.gt.s32.totalorder %v2849, %v2850
        %v3054 = vsel %vm3053, %v2849, %v2850
        %v3055 = vand.u32 %v3054, 65535
        %v3056 = vshra.s32 %v3054, 16
        %v3057 = vcvt.s32.f32 %v3055
        %v3058 = vcvt.s32.f32 %v3056
        %3059 = vmax.xlane.f32.xlu0 %v3058
        %v3060 = vpop.xlane.xlu0 %3059
        %vm3061 = vcmp.eq.f32.partialorder %v3058, %v3060
        %v3062 = vsel %vm3061, %v3057, -inf
        %3063 = vmax.xlane.f32.xlu0 %v3062
        %v3064 = vpop.xlane.xlu0 %3063
        %v3065 = vcvt.f32.s32 %v3064
        %v3066 = vcvt.f32.s32 %v3060
        %v3067 = vshll.u32 %v3066, 16
        %v3068 = vadd.s32 %v3067, %v3065
        %vm3069 = vcmp.gt.s32.totalorder %v2851, %v2852
        %v3070 = vsel %vm3069, %v2851, %v2852
        %v3071 = vand.u32 %v3070, 65535
        %v3072 = vshra.s32 %v3070, 16
        %v3073 = vcvt.s32.f32 %v3071
        %v3074 = vcvt.s32.f32 %v3072
        %3075 = vmax.xlane.f32.xlu0 %v3074
        %v3076 = vpop.xlane.xlu0 %3075
        %vm3077 = vcmp.eq.f32.partialorder %v3074, %v3076
        %v3078 = vsel %vm3077, %v3073, -inf
        %3079 = vmax.xlane.f32.xlu0 %v3078
        %v3080 = vpop.xlane.xlu0 %3079
        %v3081 = vcvt.f32.s32 %v3080
        %v3082 = vcvt.f32.s32 %v3076
        %v3083 = vshll.u32 %v3082, 16
        %v3084 = vadd.s32 %v3083, %v3081
        %vm3085 = vcmp.gt.s32.totalorder %v2853, %v2854
        %v3086 = vsel %vm3085, %v2853, %v2854
        %v3087 = vand.u32 %v3086, 65535
        %v3088 = vshra.s32 %v3086, 16
        %v3089 = vcvt.s32.f32 %v3087
        %v3090 = vcvt.s32.f32 %v3088
        %3091 = vmax.xlane.f32.xlu0 %v3090
        %v3092 = vpop.xlane.xlu0 %3091
        %vm3093 = vcmp.eq.f32.partialorder %v3090, %v3092
        %v3094 = vsel %vm3093, %v3089, -inf
        %3095 = vmax.xlane.f32.xlu0 %v3094
        %v3096 = vpop.xlane.xlu0 %3095
        %v3097 = vcvt.f32.s32 %v3096
        %v3098 = vcvt.f32.s32 %v3092
        %v3099 = vshll.u32 %v3098, 16
        %v3100 = vadd.s32 %v3099, %v3097
        %vm3101 = vcmp.gt.s32.totalorder %v2855, %v2856
        %v3102 = vsel %vm3101, %v2855, %v2856
        %v3103 = vand.u32 %v3102, 65535
        %v3104 = vshra.s32 %v3102, 16
        %v3105 = vcvt.s32.f32 %v3103
        %v3106 = vcvt.s32.f32 %v3104
        %3107 = vmax.xlane.f32.xlu0 %v3106
        %v3108 = vpop.xlane.xlu0 %3107
        %vm3109 = vcmp.eq.f32.partialorder %v3106, %v3108
        %v3110 = vsel %vm3109, %v3105, -inf
        %3111 = vmax.xlane.f32.xlu0 %v3110
        %v3112 = vpop.xlane.xlu0 %3111
        %v3113 = vcvt.f32.s32 %v3112
        %v3114 = vcvt.f32.s32 %v3108
        %v3115 = vshll.u32 %v3114, 16
        %v3116 = vadd.s32 %v3115, %v3113
        %vm3117 = vcmp.gt.s32.totalorder %v2857, %v2858
        %v3118 = vsel %vm3117, %v2857, %v2858
        %v3119 = vand.u32 %v3118, 65535
        %v3120 = vshra.s32 %v3118, 16
        %v3121 = vcvt.s32.f32 %v3119
        %v3122 = vcvt.s32.f32 %v3120
        %3123 = vmax.xlane.f32.xlu0 %v3122
        %v3124 = vpop.xlane.xlu0 %3123
        %vm3125 = vcmp.eq.f32.partialorder %v3122, %v3124
        %v3126 = vsel %vm3125, %v3121, -inf
        %3127 = vmax.xlane.f32.xlu0 %v3126
        %v3128 = vpop.xlane.xlu0 %3127
        %v3129 = vcvt.f32.s32 %v3128
        %v3130 = vcvt.f32.s32 %v3124
        %v3131 = vshll.u32 %v3130, 16
        %v3132 = vadd.s32 %v3131, %v3129
        %vm3133 = vcmp.gt.s32.totalorder %v2859, %v2860
        %v3134 = vsel %vm3133, %v2859, %v2860
        %v3135 = vand.u32 %v3134, 65535
        %v3136 = vshra.s32 %v3134, 16
        %v3137 = vcvt.s32.f32 %v3135
        %v3138 = vcvt.s32.f32 %v3136
        %3139 = vmax.xlane.f32.xlu0 %v3138
        %v3140 = vpop.xlane.xlu0 %3139
        %vm3141 = vcmp.eq.f32.partialorder %v3138, %v3140
        %v3142 = vsel %vm3141, %v3137, -inf
        %3143 = vmax.xlane.f32.xlu0 %v3142
        %v3144 = vpop.xlane.xlu0 %3143
        %v3145 = vcvt.f32.s32 %v3144
        %v3146 = vcvt.f32.s32 %v3140
        %v3147 = vshll.u32 %v3146, 16
        %v3148 = vadd.s32 %v3147, %v3145
        %vm3149 = vcmp.gt.s32.totalorder %v2861, %v2862
        %v3150 = vsel %vm3149, %v2861, %v2862
        %v3151 = vand.u32 %v3150, 65535
        %v3152 = vshra.s32 %v3150, 16
        %v3153 = vcvt.s32.f32 %v3151
        %v3154 = vcvt.s32.f32 %v3152
        %3155 = vmax.xlane.f32.xlu0 %v3154
        %v3156 = vpop.xlane.xlu0 %3155
        %vm3157 = vcmp.eq.f32.partialorder %v3154, %v3156
        %v3158 = vsel %vm3157, %v3153, -inf
        %3159 = vmax.xlane.f32.xlu0 %v3158
        %v3160 = vpop.xlane.xlu0 %3159
        %v3161 = vcvt.f32.s32 %v3160
        %v3162 = vcvt.f32.s32 %v3156
        %v3163 = vshll.u32 %v3162, 16
        %v3164 = vadd.s32 %v3163, %v3161
        %vm3165 = vcmp.gt.s32.totalorder %v2863, %v2864
        %v3166 = vsel %vm3165, %v2863, %v2864
        %v3167 = vand.u32 %v3166, 65535
        %v3168 = vshra.s32 %v3166, 16
        %v3169 = vcvt.s32.f32 %v3167
        %v3170 = vcvt.s32.f32 %v3168
        %3171 = vmax.xlane.f32.xlu0 %v3170
        %v3172 = vpop.xlane.xlu0 %3171
        %vm3173 = vcmp.eq.f32.partialorder %v3170, %v3172
        %v3174 = vsel %vm3173, %v3169, -inf
        %3175 = vmax.xlane.f32.xlu0 %v3174
        %v3176 = vpop.xlane.xlu0 %3175
        %v3177 = vcvt.f32.s32 %v3176
        %v3178 = vcvt.f32.s32 %v3172
        %v3179 = vshll.u32 %v3178, 16
        %v3180 = vadd.s32 %v3179, %v3177
        %vm3181 = vcmp.gt.s32.totalorder %v2865, %v2866
        %v3182 = vsel %vm3181, %v2865, %v2866
        %v3183 = vand.u32 %v3182, 65535
        %v3184 = vshra.s32 %v3182, 16
        %v3185 = vcvt.s32.f32 %v3183
        %v3186 = vcvt.s32.f32 %v3184
        %3187 = vmax.xlane.f32.xlu0 %v3186
        %v3188 = vpop.xlane.xlu0 %3187
        %vm3189 = vcmp.eq.f32.partialorder %v3186, %v3188
        %v3190 = vsel %vm3189, %v3185, -inf
        %3191 = vmax.xlane.f32.xlu0 %v3190
        %v3192 = vpop.xlane.xlu0 %3191
        %v3193 = vcvt.f32.s32 %v3192
        %v3194 = vcvt.f32.s32 %v3188
        %v3195 = vshll.u32 %v3194, 16
        %v3196 = vadd.s32 %v3195, %v3193
        %vm3197 = vcmp.gt.s32.totalorder %v2867, %v2868
        %v3198 = vsel %vm3197, %v2867, %v2868
        %v3199 = vand.u32 %v3198, 65535
        %v3200 = vshra.s32 %v3198, 16
        %v3201 = vcvt.s32.f32 %v3199
        %v3202 = vcvt.s32.f32 %v3200
        %3203 = vmax.xlane.f32.xlu0 %v3202
        %v3204 = vpop.xlane.xlu0 %3203
        %vm3205 = vcmp.eq.f32.partialorder %v3202, %v3204
        %v3206 = vsel %vm3205, %v3201, -inf
        %3207 = vmax.xlane.f32.xlu0 %v3206
        %v3208 = vpop.xlane.xlu0 %3207
        %v3209 = vcvt.f32.s32 %v3208
        %v3210 = vcvt.f32.s32 %v3204
        %v3211 = vshll.u32 %v3210, 16
        %v3212 = vadd.s32 %v3211, %v3209
        %vm3213 = vcmp.gt.s32.totalorder %v2869, %v2870
        %v3214 = vsel %vm3213, %v2869, %v2870
        %v3215 = vand.u32 %v3214, 65535
        %v3216 = vshra.s32 %v3214, 16
        %v3217 = vcvt.s32.f32 %v3215
        %v3218 = vcvt.s32.f32 %v3216
        %3219 = vmax.xlane.f32.xlu0 %v3218
        %v3220 = vpop.xlane.xlu0 %3219
        %vm3221 = vcmp.eq.f32.partialorder %v3218, %v3220
        %v3222 = vsel %vm3221, %v3217, -inf
        %3223 = vmax.xlane.f32.xlu0 %v3222
        %v3224 = vpop.xlane.xlu0 %3223
        %v3225 = vcvt.f32.s32 %v3224
        %v3226 = vcvt.f32.s32 %v3220
        %v3227 = vshll.u32 %v3226, 16
        %v3228 = vadd.s32 %v3227, %v3225
        %vm3229 = vcmp.gt.s32.totalorder %v2871, %v2872
        %v3230 = vsel %vm3229, %v2871, %v2872
        %v3231 = vand.u32 %v3230, 65535
        %v3232 = vshra.s32 %v3230, 16
        %v3233 = vcvt.s32.f32 %v3231
        %v3234 = vcvt.s32.f32 %v3232
        %3235 = vmax.xlane.f32.xlu0 %v3234
        %v3236 = vpop.xlane.xlu0 %3235
        %vm3237 = vcmp.eq.f32.partialorder %v3234, %v3236
        %v3238 = vsel %vm3237, %v3233, -inf
        %3239 = vmax.xlane.f32.xlu0 %v3238
        %v3240 = vpop.xlane.xlu0 %3239
        %v3241 = vcvt.f32.s32 %v3240
        %v3242 = vcvt.f32.s32 %v3236
        %v3243 = vshll.u32 %v3242, 16
        %v3244 = vadd.s32 %v3243, %v3241
        %vm3245 = vcmp.gt.s32.totalorder %v2873, %v2874
        %v3246 = vsel %vm3245, %v2873, %v2874
        %v3247 = vand.u32 %v3246, 65535
        %v3248 = vshra.s32 %v3246, 16
        %v3249 = vcvt.s32.f32 %v3247
        %v3250 = vcvt.s32.f32 %v3248
        %3251 = vmax.xlane.f32.xlu0 %v3250
        %v3252 = vpop.xlane.xlu0 %3251
        %vm3253 = vcmp.eq.f32.partialorder %v3250, %v3252
        %v3254 = vsel %vm3253, %v3249, -inf
        %3255 = vmax.xlane.f32.xlu0 %v3254
        %v3256 = vpop.xlane.xlu0 %3255
        %v3257 = vcvt.f32.s32 %v3256
        %v3258 = vcvt.f32.s32 %v3252
        %v3259 = vshll.u32 %v3258, 16
        %v3260 = vadd.s32 %v3259, %v3257
        %vm3261 = vcmp.gt.s32.totalorder %v2875, %v2876
        %v3262 = vsel %vm3261, %v2875, %v2876
        %v3263 = vand.u32 %v3262, 65535
        %v3264 = vshra.s32 %v3262, 16
        %v3265 = vcvt.s32.f32 %v3263
        %v3266 = vcvt.s32.f32 %v3264
        %3267 = vmax.xlane.f32.xlu0 %v3266
        %v3268 = vpop.xlane.xlu0 %3267
        %vm3269 = vcmp.eq.f32.partialorder %v3266, %v3268
        %v3270 = vsel %vm3269, %v3265, -inf
        %3271 = vmax.xlane.f32.xlu0 %v3270
        %v3272 = vpop.xlane.xlu0 %3271
        %v3273 = vcvt.f32.s32 %v3272
        %v3274 = vcvt.f32.s32 %v3268
        %v3275 = vshll.u32 %v3274, 16
        %v3276 = vadd.s32 %v3275, %v3273
        %vm3277 = vcmp.gt.s32.totalorder %v2877, %v2878
        %v3278 = vsel %vm3277, %v2877, %v2878
        %v3279 = vand.u32 %v3278, 65535
        %v3280 = vshra.s32 %v3278, 16
        %v3281 = vcvt.s32.f32 %v3279
        %v3282 = vcvt.s32.f32 %v3280
        %3283 = vmax.xlane.f32.xlu0 %v3282
        %v3284 = vpop.xlane.xlu0 %3283
        %vm3285 = vcmp.eq.f32.partialorder %v3282, %v3284
        %v3286 = vsel %vm3285, %v3281, -inf
        %3287 = vmax.xlane.f32.xlu0 %v3286
        %v3288 = vpop.xlane.xlu0 %3287
        %v3289 = vcvt.f32.s32 %v3288
        %v3290 = vcvt.f32.s32 %v3284
        %v3291 = vshll.u32 %v3290, 16
        %v3292 = vadd.s32 %v3291, %v3289
        %vm3293 = vcmp.gt.s32.totalorder %v2879, %v2880
        %v3294 = vsel %vm3293, %v2879, %v2880
        %v3295 = vand.u32 %v3294, 65535
        %v3296 = vshra.s32 %v3294, 16
        %v3297 = vcvt.s32.f32 %v3295
        %v3298 = vcvt.s32.f32 %v3296
        %3299 = vmax.xlane.f32.xlu0 %v3298
        %v3300 = vpop.xlane.xlu0 %3299
        %vm3301 = vcmp.eq.f32.partialorder %v3298, %v3300
        %v3302 = vsel %vm3301, %v3297, -inf
        %3303 = vmax.xlane.f32.xlu0 %v3302
        %v3304 = vpop.xlane.xlu0 %3303
        %v3305 = vcvt.f32.s32 %v3304
        %v3306 = vcvt.f32.s32 %v3300
        %v3307 = vshll.u32 %v3306, 16
        %v3308 = vadd.s32 %v3307, %v3305
        %vm3309 = vcmp.gt.s32.totalorder %v2881, %v2882
        %v3310 = vsel %vm3309, %v2881, %v2882
        %v3311 = vand.u32 %v3310, 65535
        %v3312 = vshra.s32 %v3310, 16
        %v3313 = vcvt.s32.f32 %v3311
        %v3314 = vcvt.s32.f32 %v3312
        %3315 = vmax.xlane.f32.xlu0 %v3314
        %v3316 = vpop.xlane.xlu0 %3315
        %vm3317 = vcmp.eq.f32.partialorder %v3314, %v3316
        %v3318 = vsel %vm3317, %v3313, -inf
        %3319 = vmax.xlane.f32.xlu0 %v3318
        %v3320 = vpop.xlane.xlu0 %3319
        %v3321 = vcvt.f32.s32 %v3320
        %v3322 = vcvt.f32.s32 %v3316
        %v3323 = vshll.u32 %v3322, 16
        %v3324 = vadd.s32 %v3323, %v3321
        %vm3325 = vcmp.gt.s32.totalorder %v2883, %v2884
        %v3326 = vsel %vm3325, %v2883, %v2884
        %v3327 = vand.u32 %v3326, 65535
        %v3328 = vshra.s32 %v3326, 16
        %v3329 = vcvt.s32.f32 %v3327
        %v3330 = vcvt.s32.f32 %v3328
        %3331 = vmax.xlane.f32.xlu0 %v3330
        %v3332 = vpop.xlane.xlu0 %3331
        %vm3333 = vcmp.eq.f32.partialorder %v3330, %v3332
        %v3334 = vsel %vm3333, %v3329, -inf
        %3335 = vmax.xlane.f32.xlu0 %v3334
        %v3336 = vpop.xlane.xlu0 %3335
        %v3337 = vcvt.f32.s32 %v3336
        %v3338 = vcvt.f32.s32 %v3332
        %v3339 = vshll.u32 %v3338, 16
        %v3340 = vadd.s32 %v3339, %v3337
        %vm3341 = vcmp.gt.s32.totalorder %v2885, %v2886
        %v3342 = vsel %vm3341, %v2885, %v2886
        %v3343 = vand.u32 %v3342, 65535
        %v3344 = vshra.s32 %v3342, 16
        %v3345 = vcvt.s32.f32 %v3343
        %v3346 = vcvt.s32.f32 %v3344
        %3347 = vmax.xlane.f32.xlu0 %v3346
        %v3348 = vpop.xlane.xlu0 %3347
        %vm3349 = vcmp.eq.f32.partialorder %v3346, %v3348
        %v3350 = vsel %vm3349, %v3345, -inf
        %3351 = vmax.xlane.f32.xlu0 %v3350
        %v3352 = vpop.xlane.xlu0 %3351
        %v3353 = vcvt.f32.s32 %v3352
        %v3354 = vcvt.f32.s32 %v3348
        %v3355 = vshll.u32 %v3354, 16
        %v3356 = vadd.s32 %v3355, %v3353
        %vm3357 = vcmp.gt.s32.totalorder %v2887, %v2888
        %v3358 = vsel %vm3357, %v2887, %v2888
        %v3359 = vand.u32 %v3358, 65535
        %v3360 = vshra.s32 %v3358, 16
        %v3361 = vcvt.s32.f32 %v3359
        %v3362 = vcvt.s32.f32 %v3360
        %3363 = vmax.xlane.f32.xlu0 %v3362
        %v3364 = vpop.xlane.xlu0 %3363
        %vm3365 = vcmp.eq.f32.partialorder %v3362, %v3364
        %v3366 = vsel %vm3365, %v3361, -inf
        %3367 = vmax.xlane.f32.xlu0 %v3366
        %v3368 = vpop.xlane.xlu0 %3367
        %v3369 = vcvt.f32.s32 %v3368
        %v3370 = vcvt.f32.s32 %v3364
        %v3371 = vshll.u32 %v3370, 16
        %v3372 = vadd.s32 %v3371, %v3369
        %vm3373 = vcmp.gt.s32.totalorder %v2889, %v2890
        %v3374 = vsel %vm3373, %v2889, %v2890
        %v3375 = vand.u32 %v3374, 65535
        %v3376 = vshra.s32 %v3374, 16
        %v3377 = vcvt.s32.f32 %v3375
        %v3378 = vcvt.s32.f32 %v3376
        %3379 = vmax.xlane.f32.xlu0 %v3378
        %v3380 = vpop.xlane.xlu0 %3379
        %vm3381 = vcmp.eq.f32.partialorder %v3378, %v3380
        %v3382 = vsel %vm3381, %v3377, -inf
        %3383 = vmax.xlane.f32.xlu0 %v3382
        %v3384 = vpop.xlane.xlu0 %3383
        %v3385 = vcvt.f32.s32 %v3384
        %v3386 = vcvt.f32.s32 %v3380
        %v3387 = vshll.u32 %v3386, 16
        %v3388 = vadd.s32 %v3387, %v3385
        %vm3389 = vcmp.gt.s32.totalorder %v2891, %v2892
        %v3390 = vsel %vm3389, %v2891, %v2892
        %v3391 = vand.u32 %v3390, 65535
        %v3392 = vshra.s32 %v3390, 16
        %v3393 = vcvt.s32.f32 %v3391
        %v3394 = vcvt.s32.f32 %v3392
        %3395 = vmax.xlane.f32.xlu0 %v3394
        %v3396 = vpop.xlane.xlu0 %3395
        %vm3397 = vcmp.eq.f32.partialorder %v3394, %v3396
        %v3398 = vsel %vm3397, %v3393, -inf
        %3399 = vmax.xlane.f32.xlu0 %v3398
        %v3400 = vpop.xlane.xlu0 %3399
        %v3401 = vcvt.f32.s32 %v3400
        %v3402 = vcvt.f32.s32 %v3396
        %v3403 = vshll.u32 %v3402, 16
        %v3404 = vadd.s32 %v3403, %v3401
        %vm3405 = vcmp.gt.s32.totalorder %v136, %v2283
        %vm3406 = vcmp.gt.s32.totalorder %v137, %v2283
        %vm3407 = vcmp.gt.s32.totalorder %v136, %v2284
        %vm3408 = vcmp.gt.s32.totalorder %v137, %v2284
        %vm3409 = vcmp.gt.s32.totalorder %v136, %v2285
        %vm3410 = vcmp.gt.s32.totalorder %v137, %v2285
        %vm3411 = vcmp.gt.s32.totalorder %v136, %v2286
        %vm3412 = vcmp.gt.s32.totalorder %v137, %v2286
        %vm3413 = vcmp.gt.s32.totalorder %v136, %v2287
        %vm3414 = vcmp.gt.s32.totalorder %v137, %v2287
        %vm3415 = vcmp.gt.s32.totalorder %v136, %v2288
        %vm3416 = vcmp.gt.s32.totalorder %v137, %v2288
        %vm3417 = vcmp.gt.s32.totalorder %v136, %v2289
        %vm3418 = vcmp.gt.s32.totalorder %v137, %v2289
        %vm3419 = vcmp.gt.s32.totalorder %v136, %v2290
        %vm3420 = vcmp.gt.s32.totalorder %v137, %v2290
        %vm3421 = vcmp.gt.s32.totalorder %v136, %v2291
        %vm3422 = vcmp.gt.s32.totalorder %v137, %v2291
        %vm3423 = vcmp.gt.s32.totalorder %v136, %v2292
        %vm3424 = vcmp.gt.s32.totalorder %v137, %v2292
        %vm3425 = vcmp.gt.s32.totalorder %v136, %v2293
        %vm3426 = vcmp.gt.s32.totalorder %v137, %v2293
        %vm3427 = vcmp.gt.s32.totalorder %v136, %v2294
        %vm3428 = vcmp.gt.s32.totalorder %v137, %v2294
        %vm3429 = vcmp.gt.s32.totalorder %v136, %v2295
        %vm3430 = vcmp.gt.s32.totalorder %v137, %v2295
        %vm3431 = vcmp.gt.s32.totalorder %v136, %v2296
        %vm3432 = vcmp.gt.s32.totalorder %v137, %v2296
        %vm3433 = vcmp.gt.s32.totalorder %v136, %v2297
        %vm3434 = vcmp.gt.s32.totalorder %v137, %v2297
        %vm3435 = vcmp.gt.s32.totalorder %v136, %v2298
        %vm3436 = vcmp.gt.s32.totalorder %v137, %v2298
        %vm3437 = vcmp.gt.s32.totalorder %v136, %v2299
        %vm3438 = vcmp.gt.s32.totalorder %v137, %v2299
        %vm3439 = vcmp.gt.s32.totalorder %v136, %v2300
        %vm3440 = vcmp.gt.s32.totalorder %v137, %v2300
        %vm3441 = vcmp.gt.s32.totalorder %v136, %v2301
        %vm3442 = vcmp.gt.s32.totalorder %v137, %v2301
        %vm3443 = vcmp.gt.s32.totalorder %v136, %v2302
        %vm3444 = vcmp.gt.s32.totalorder %v137, %v2302
        %vm3445 = vcmp.gt.s32.totalorder %v136, %v2303
        %vm3446 = vcmp.gt.s32.totalorder %v137, %v2303
        %vm3447 = vcmp.gt.s32.totalorder %v136, %v2304
        %vm3448 = vcmp.gt.s32.totalorder %v137, %v2304
        %vm3449 = vcmp.gt.s32.totalorder %v136, %v2305
        %vm3450 = vcmp.gt.s32.totalorder %v137, %v2305
        %vm3451 = vcmp.gt.s32.totalorder %v136, %v2306
        %vm3452 = vcmp.gt.s32.totalorder %v137, %v2306
        %vm3453 = vcmp.gt.s32.totalorder %v136, %v2307
        %vm3454 = vcmp.gt.s32.totalorder %v137, %v2307
        %vm3455 = vcmp.gt.s32.totalorder %v136, %v2308
        %vm3456 = vcmp.gt.s32.totalorder %v137, %v2308
        %vm3457 = vcmp.gt.s32.totalorder %v136, %v2309
        %vm3458 = vcmp.gt.s32.totalorder %v137, %v2309
        %vm3459 = vcmp.gt.s32.totalorder %v136, %v2310
        %vm3460 = vcmp.gt.s32.totalorder %v137, %v2310
        %vm3461 = vcmp.gt.s32.totalorder %v136, %v2311
        %vm3462 = vcmp.gt.s32.totalorder %v137, %v2311
        %vm3463 = vcmp.gt.s32.totalorder %v136, %v2312
        %vm3464 = vcmp.gt.s32.totalorder %v137, %v2312
        %vm3465 = vcmp.gt.s32.totalorder %v136, %v2313
        %vm3466 = vcmp.gt.s32.totalorder %v137, %v2313
        %vm3467 = vcmp.gt.s32.totalorder %v136, %v2314
        %vm3468 = vcmp.gt.s32.totalorder %v137, %v2314
        %vm3469 = vmand %vm2637, %vm3405
        %vm3470 = vmand %vm2638, %vm3406
        %vm3471 = vmand %vm2639, %vm3407
        %vm3472 = vmand %vm2640, %vm3408
        %vm3473 = vmand %vm2641, %vm3409
        %vm3474 = vmand %vm2642, %vm3410
        %vm3475 = vmand %vm2643, %vm3411
        %vm3476 = vmand %vm2644, %vm3412
        %vm3477 = vmand %vm2645, %vm3413
        %vm3478 = vmand %vm2646, %vm3414
        %vm3479 = vmand %vm2647, %vm3415
        %vm3480 = vmand %vm2648, %vm3416
        %vm3481 = vmand %vm2649, %vm3417
        %vm3482 = vmand %vm2650, %vm3418
        %vm3483 = vmand %vm2651, %vm3419
        %vm3484 = vmand %vm2652, %vm3420
        %vm3485 = vmand %vm2653, %vm3421
        %vm3486 = vmand %vm2654, %vm3422
        %vm3487 = vmand %vm2655, %vm3423
        %vm3488 = vmand %vm2656, %vm3424
        %vm3489 = vmand %vm2657, %vm3425
        %vm3490 = vmand %vm2658, %vm3426
        %vm3491 = vmand %vm2659, %vm3427
        %vm3492 = vmand %vm2660, %vm3428
        %vm3493 = vmand %vm2661, %vm3429
        %vm3494 = vmand %vm2662, %vm3430
        %vm3495 = vmand %vm2663, %vm3431
        %vm3496 = vmand %vm2664, %vm3432
        %vm3497 = vmand %vm2665, %vm3433
        %vm3498 = vmand %vm2666, %vm3434
        %vm3499 = vmand %vm2667, %vm3435
        %vm3500 = vmand %vm2668, %vm3436
        %vm3501 = vmand %vm2669, %vm3437
        %vm3502 = vmand %vm2670, %vm3438
        %vm3503 = vmand %vm2671, %vm3439
        %vm3504 = vmand %vm2672, %vm3440
        %vm3505 = vmand %vm2673, %vm3441
        %vm3506 = vmand %vm2674, %vm3442
        %vm3507 = vmand %vm2675, %vm3443
        %vm3508 = vmand %vm2676, %vm3444
        %vm3509 = vmand %vm2677, %vm3445
        %vm3510 = vmand %vm2678, %vm3446
        %vm3511 = vmand %vm2679, %vm3447
        %vm3512 = vmand %vm2680, %vm3448
        %vm3513 = vmand %vm2681, %vm3449
        %vm3514 = vmand %vm2682, %vm3450
        %vm3515 = vmand %vm2683, %vm3451
        %vm3516 = vmand %vm2684, %vm3452
        %vm3517 = vmand %vm2685, %vm3453
        %vm3518 = vmand %vm2686, %vm3454
        %vm3519 = vmand %vm2687, %vm3455
        %vm3520 = vmand %vm2688, %vm3456
        %vm3521 = vmand %vm2689, %vm3457
        %vm3522 = vmand %vm2690, %vm3458
        %vm3523 = vmand %vm2691, %vm3459
        %vm3524 = vmand %vm2692, %vm3460
        %vm3525 = vmand %vm2693, %vm3461
        %vm3526 = vmand %vm2694, %vm3462
        %vm3527 = vmand %vm2695, %vm3463
        %vm3528 = vmand %vm2696, %vm3464
        %vm3529 = vmand %vm2697, %vm3465
        %vm3530 = vmand %vm2698, %vm3466
        %vm3531 = vmand %vm2699, %vm3467
        %vm3532 = vmand %vm2700, %vm3468
        %v3533 = vsel %vm3469, %v136, 256
        %v3534 = vsel %vm3470, %v137, 256
        %v3535 = vsel %vm3471, %v136, 256
        %v3536 = vsel %vm3472, %v137, 256
        %v3537 = vsel %vm3473, %v136, 256
        %v3538 = vsel %vm3474, %v137, 256
        %v3539 = vsel %vm3475, %v136, 256
        %v3540 = vsel %vm3476, %v137, 256
        %v3541 = vsel %vm3477, %v136, 256
        %v3542 = vsel %vm3478, %v137, 256
        %v3543 = vsel %vm3479, %v136, 256
        %v3544 = vsel %vm3480, %v137, 256
        %v3545 = vsel %vm3481, %v136, 256
        %v3546 = vsel %vm3482, %v137, 256
        %v3547 = vsel %vm3483, %v136, 256
        %v3548 = vsel %vm3484, %v137, 256
        %v3549 = vsel %vm3485, %v136, 256
        %v3550 = vsel %vm3486, %v137, 256
        %v3551 = vsel %vm3487, %v136, 256
        %v3552 = vsel %vm3488, %v137, 256
        %v3553 = vsel %vm3489, %v136, 256
        %v3554 = vsel %vm3490, %v137, 256
        %v3555 = vsel %vm3491, %v136, 256
        %v3556 = vsel %vm3492, %v137, 256
        %v3557 = vsel %vm3493, %v136, 256
        %v3558 = vsel %vm3494, %v137, 256
        %v3559 = vsel %vm3495, %v136, 256
        %v3560 = vsel %vm3496, %v137, 256
        %v3561 = vsel %vm3497, %v136, 256
        %v3562 = vsel %vm3498, %v137, 256
        %v3563 = vsel %vm3499, %v136, 256
        %v3564 = vsel %vm3500, %v137, 256
        %v3565 = vsel %vm3501, %v136, 256
        %v3566 = vsel %vm3502, %v137, 256
        %v3567 = vsel %vm3503, %v136, 256
        %v3568 = vsel %vm3504, %v137, 256
        %v3569 = vsel %vm3505, %v136, 256
        %v3570 = vsel %vm3506, %v137, 256
        %v3571 = vsel %vm3507, %v136, 256
        %v3572 = vsel %vm3508, %v137, 256
        %v3573 = vsel %vm3509, %v136, 256
        %v3574 = vsel %vm3510, %v137, 256
        %v3575 = vsel %vm3511, %v136, 256
        %v3576 = vsel %vm3512, %v137, 256
        %v3577 = vsel %vm3513, %v136, 256
        %v3578 = vsel %vm3514, %v137, 256
        %v3579 = vsel %vm3515, %v136, 256
        %v3580 = vsel %vm3516, %v137, 256
        %v3581 = vsel %vm3517, %v136, 256
        %v3582 = vsel %vm3518, %v137, 256
        %v3583 = vsel %vm3519, %v136, 256
        %v3584 = vsel %vm3520, %v137, 256
        %v3585 = vsel %vm3521, %v136, 256
        %v3586 = vsel %vm3522, %v137, 256
        %v3587 = vsel %vm3523, %v136, 256
        %v3588 = vsel %vm3524, %v137, 256
        %v3589 = vsel %vm3525, %v136, 256
        %v3590 = vsel %vm3526, %v137, 256
        %v3591 = vsel %vm3527, %v136, 256
        %v3592 = vsel %vm3528, %v137, 256
        %v3593 = vsel %vm3529, %v136, 256
        %v3594 = vsel %vm3530, %v137, 256
        %v3595 = vsel %vm3531, %v136, 256
        %v3596 = vsel %vm3532, %v137, 256
        %vm3597 = vcmp.lt.s32.totalorder %v3533, %v3534
        %v3598 = vsel %vm3597, %v3533, %v3534
        %v3599 = vand.u32 %v3598, 65535
        %v3600 = vshra.s32 %v3598, 16
        %v3601 = vcvt.s32.f32 %v3599
        %v3602 = vcvt.s32.f32 %v3600
        %3603 = vmin.xlane.f32.xlu0 %v3602
        %v3604 = vpop.xlane.xlu0 %3603
        %vm3605 = vcmp.eq.f32.partialorder %v3602, %v3604
        %v3606 = vsel %vm3605, %v3601, inf
        %3607 = vmin.xlane.f32.xlu0 %v3606
        %v3608 = vpop.xlane.xlu0 %3607
        %v3609 = vcvt.f32.s32 %v3608
        %v3610 = vcvt.f32.s32 %v3604
        %v3611 = vshll.u32 %v3610, 16
        %v3612 = vadd.s32 %v3611, %v3609
        %vm3613 = vcmp.lt.s32.totalorder %v3535, %v3536
        %v3614 = vsel %vm3613, %v3535, %v3536
        %v3615 = vand.u32 %v3614, 65535
        %v3616 = vshra.s32 %v3614, 16
        %v3617 = vcvt.s32.f32 %v3615
        %v3618 = vcvt.s32.f32 %v3616
        %3619 = vmin.xlane.f32.xlu0 %v3618
        %v3620 = vpop.xlane.xlu0 %3619
        %vm3621 = vcmp.eq.f32.partialorder %v3618, %v3620
        %v3622 = vsel %vm3621, %v3617, inf
        %3623 = vmin.xlane.f32.xlu0 %v3622
        %v3624 = vpop.xlane.xlu0 %3623
        %v3625 = vcvt.f32.s32 %v3624
        %v3626 = vcvt.f32.s32 %v3620
        %v3627 = vshll.u32 %v3626, 16
        %v3628 = vadd.s32 %v3627, %v3625
        %vm3629 = vcmp.lt.s32.totalorder %v3537, %v3538
        %v3630 = vsel %vm3629, %v3537, %v3538
        %v3631 = vand.u32 %v3630, 65535
        %v3632 = vshra.s32 %v3630, 16
        %v3633 = vcvt.s32.f32 %v3631
        %v3634 = vcvt.s32.f32 %v3632
        %3635 = vmin.xlane.f32.xlu0 %v3634
        %v3636 = vpop.xlane.xlu0 %3635
        %vm3637 = vcmp.eq.f32.partialorder %v3634, %v3636
        %v3638 = vsel %vm3637, %v3633, inf
        %3639 = vmin.xlane.f32.xlu0 %v3638
        %v3640 = vpop.xlane.xlu0 %3639
        %v3641 = vcvt.f32.s32 %v3640
        %v3642 = vcvt.f32.s32 %v3636
        %v3643 = vshll.u32 %v3642, 16
        %v3644 = vadd.s32 %v3643, %v3641
        %vm3645 = vcmp.lt.s32.totalorder %v3539, %v3540
        %v3646 = vsel %vm3645, %v3539, %v3540
        %v3647 = vand.u32 %v3646, 65535
        %v3648 = vshra.s32 %v3646, 16
        %v3649 = vcvt.s32.f32 %v3647
        %v3650 = vcvt.s32.f32 %v3648
        %3651 = vmin.xlane.f32.xlu0 %v3650
        %v3652 = vpop.xlane.xlu0 %3651
        %vm3653 = vcmp.eq.f32.partialorder %v3650, %v3652
        %v3654 = vsel %vm3653, %v3649, inf
        %3655 = vmin.xlane.f32.xlu0 %v3654
        %v3656 = vpop.xlane.xlu0 %3655
        %v3657 = vcvt.f32.s32 %v3656
        %v3658 = vcvt.f32.s32 %v3652
        %v3659 = vshll.u32 %v3658, 16
        %v3660 = vadd.s32 %v3659, %v3657
        %vm3661 = vcmp.lt.s32.totalorder %v3541, %v3542
        %v3662 = vsel %vm3661, %v3541, %v3542
        %v3663 = vand.u32 %v3662, 65535
        %v3664 = vshra.s32 %v3662, 16
        %v3665 = vcvt.s32.f32 %v3663
        %v3666 = vcvt.s32.f32 %v3664
        %3667 = vmin.xlane.f32.xlu0 %v3666
        %v3668 = vpop.xlane.xlu0 %3667
        %vm3669 = vcmp.eq.f32.partialorder %v3666, %v3668
        %v3670 = vsel %vm3669, %v3665, inf
        %3671 = vmin.xlane.f32.xlu0 %v3670
        %v3672 = vpop.xlane.xlu0 %3671
        %v3673 = vcvt.f32.s32 %v3672
        %v3674 = vcvt.f32.s32 %v3668
        %v3675 = vshll.u32 %v3674, 16
        %v3676 = vadd.s32 %v3675, %v3673
        %vm3677 = vcmp.lt.s32.totalorder %v3543, %v3544
        %v3678 = vsel %vm3677, %v3543, %v3544
        %v3679 = vand.u32 %v3678, 65535
        %v3680 = vshra.s32 %v3678, 16
        %v3681 = vcvt.s32.f32 %v3679
        %v3682 = vcvt.s32.f32 %v3680
        %3683 = vmin.xlane.f32.xlu0 %v3682
        %v3684 = vpop.xlane.xlu0 %3683
        %vm3685 = vcmp.eq.f32.partialorder %v3682, %v3684
        %v3686 = vsel %vm3685, %v3681, inf
        %3687 = vmin.xlane.f32.xlu0 %v3686
        %v3688 = vpop.xlane.xlu0 %3687
        %v3689 = vcvt.f32.s32 %v3688
        %v3690 = vcvt.f32.s32 %v3684
        %v3691 = vshll.u32 %v3690, 16
        %v3692 = vadd.s32 %v3691, %v3689
        %vm3693 = vcmp.lt.s32.totalorder %v3545, %v3546
        %v3694 = vsel %vm3693, %v3545, %v3546
        %v3695 = vand.u32 %v3694, 65535
        %v3696 = vshra.s32 %v3694, 16
        %v3697 = vcvt.s32.f32 %v3695
        %v3698 = vcvt.s32.f32 %v3696
        %3699 = vmin.xlane.f32.xlu0 %v3698
        %v3700 = vpop.xlane.xlu0 %3699
        %vm3701 = vcmp.eq.f32.partialorder %v3698, %v3700
        %v3702 = vsel %vm3701, %v3697, inf
        %3703 = vmin.xlane.f32.xlu0 %v3702
        %v3704 = vpop.xlane.xlu0 %3703
        %v3705 = vcvt.f32.s32 %v3704
        %v3706 = vcvt.f32.s32 %v3700
        %v3707 = vshll.u32 %v3706, 16
        %v3708 = vadd.s32 %v3707, %v3705
        %vm3709 = vcmp.lt.s32.totalorder %v3547, %v3548
        %v3710 = vsel %vm3709, %v3547, %v3548
        %v3711 = vand.u32 %v3710, 65535
        %v3712 = vshra.s32 %v3710, 16
        %v3713 = vcvt.s32.f32 %v3711
        %v3714 = vcvt.s32.f32 %v3712
        %3715 = vmin.xlane.f32.xlu0 %v3714
        %v3716 = vpop.xlane.xlu0 %3715
        %vm3717 = vcmp.eq.f32.partialorder %v3714, %v3716
        %v3718 = vsel %vm3717, %v3713, inf
        %3719 = vmin.xlane.f32.xlu0 %v3718
        %v3720 = vpop.xlane.xlu0 %3719
        %v3721 = vcvt.f32.s32 %v3720
        %v3722 = vcvt.f32.s32 %v3716
        %v3723 = vshll.u32 %v3722, 16
        %v3724 = vadd.s32 %v3723, %v3721
        %vm3725 = vcmp.lt.s32.totalorder %v3549, %v3550
        %v3726 = vsel %vm3725, %v3549, %v3550
        %v3727 = vand.u32 %v3726, 65535
        %v3728 = vshra.s32 %v3726, 16
        %v3729 = vcvt.s32.f32 %v3727
        %v3730 = vcvt.s32.f32 %v3728
        %3731 = vmin.xlane.f32.xlu0 %v3730
        %v3732 = vpop.xlane.xlu0 %3731
        %vm3733 = vcmp.eq.f32.partialorder %v3730, %v3732
        %v3734 = vsel %vm3733, %v3729, inf
        %3735 = vmin.xlane.f32.xlu0 %v3734
        %v3736 = vpop.xlane.xlu0 %3735
        %v3737 = vcvt.f32.s32 %v3736
        %v3738 = vcvt.f32.s32 %v3732
        %v3739 = vshll.u32 %v3738, 16
        %v3740 = vadd.s32 %v3739, %v3737
        %vm3741 = vcmp.lt.s32.totalorder %v3551, %v3552
        %v3742 = vsel %vm3741, %v3551, %v3552
        %v3743 = vand.u32 %v3742, 65535
        %v3744 = vshra.s32 %v3742, 16
        %v3745 = vcvt.s32.f32 %v3743
        %v3746 = vcvt.s32.f32 %v3744
        %3747 = vmin.xlane.f32.xlu0 %v3746
        %v3748 = vpop.xlane.xlu0 %3747
        %vm3749 = vcmp.eq.f32.partialorder %v3746, %v3748
        %v3750 = vsel %vm3749, %v3745, inf
        %3751 = vmin.xlane.f32.xlu0 %v3750
        %v3752 = vpop.xlane.xlu0 %3751
        %v3753 = vcvt.f32.s32 %v3752
        %v3754 = vcvt.f32.s32 %v3748
        %v3755 = vshll.u32 %v3754, 16
        %v3756 = vadd.s32 %v3755, %v3753
        %vm3757 = vcmp.lt.s32.totalorder %v3553, %v3554
        %v3758 = vsel %vm3757, %v3553, %v3554
        %v3759 = vand.u32 %v3758, 65535
        %v3760 = vshra.s32 %v3758, 16
        %v3761 = vcvt.s32.f32 %v3759
        %v3762 = vcvt.s32.f32 %v3760
        %3763 = vmin.xlane.f32.xlu0 %v3762
        %v3764 = vpop.xlane.xlu0 %3763
        %vm3765 = vcmp.eq.f32.partialorder %v3762, %v3764
        %v3766 = vsel %vm3765, %v3761, inf
        %3767 = vmin.xlane.f32.xlu0 %v3766
        %v3768 = vpop.xlane.xlu0 %3767
        %v3769 = vcvt.f32.s32 %v3768
        %v3770 = vcvt.f32.s32 %v3764
        %v3771 = vshll.u32 %v3770, 16
        %v3772 = vadd.s32 %v3771, %v3769
        %vm3773 = vcmp.lt.s32.totalorder %v3555, %v3556
        %v3774 = vsel %vm3773, %v3555, %v3556
        %v3775 = vand.u32 %v3774, 65535
        %v3776 = vshra.s32 %v3774, 16
        %v3777 = vcvt.s32.f32 %v3775
        %v3778 = vcvt.s32.f32 %v3776
        %3779 = vmin.xlane.f32.xlu0 %v3778
        %v3780 = vpop.xlane.xlu0 %3779
        %vm3781 = vcmp.eq.f32.partialorder %v3778, %v3780
        %v3782 = vsel %vm3781, %v3777, inf
        %3783 = vmin.xlane.f32.xlu0 %v3782
        %v3784 = vpop.xlane.xlu0 %3783
        %v3785 = vcvt.f32.s32 %v3784
        %v3786 = vcvt.f32.s32 %v3780
        %v3787 = vshll.u32 %v3786, 16
        %v3788 = vadd.s32 %v3787, %v3785
        %vm3789 = vcmp.lt.s32.totalorder %v3557, %v3558
        %v3790 = vsel %vm3789, %v3557, %v3558
        %v3791 = vand.u32 %v3790, 65535
        %v3792 = vshra.s32 %v3790, 16
        %v3793 = vcvt.s32.f32 %v3791
        %v3794 = vcvt.s32.f32 %v3792
        %3795 = vmin.xlane.f32.xlu0 %v3794
        %v3796 = vpop.xlane.xlu0 %3795
        %vm3797 = vcmp.eq.f32.partialorder %v3794, %v3796
        %v3798 = vsel %vm3797, %v3793, inf
        %3799 = vmin.xlane.f32.xlu0 %v3798
        %v3800 = vpop.xlane.xlu0 %3799
        %v3801 = vcvt.f32.s32 %v3800
        %v3802 = vcvt.f32.s32 %v3796
        %v3803 = vshll.u32 %v3802, 16
        %v3804 = vadd.s32 %v3803, %v3801
        %vm3805 = vcmp.lt.s32.totalorder %v3559, %v3560
        %v3806 = vsel %vm3805, %v3559, %v3560
        %v3807 = vand.u32 %v3806, 65535
        %v3808 = vshra.s32 %v3806, 16
        %v3809 = vcvt.s32.f32 %v3807
        %v3810 = vcvt.s32.f32 %v3808
        %3811 = vmin.xlane.f32.xlu0 %v3810
        %v3812 = vpop.xlane.xlu0 %3811
        %vm3813 = vcmp.eq.f32.partialorder %v3810, %v3812
        %v3814 = vsel %vm3813, %v3809, inf
        %3815 = vmin.xlane.f32.xlu0 %v3814
        %v3816 = vpop.xlane.xlu0 %3815
        %v3817 = vcvt.f32.s32 %v3816
        %v3818 = vcvt.f32.s32 %v3812
        %v3819 = vshll.u32 %v3818, 16
        %v3820 = vadd.s32 %v3819, %v3817
        %vm3821 = vcmp.lt.s32.totalorder %v3561, %v3562
        %v3822 = vsel %vm3821, %v3561, %v3562
        %v3823 = vand.u32 %v3822, 65535
        %v3824 = vshra.s32 %v3822, 16
        %v3825 = vcvt.s32.f32 %v3823
        %v3826 = vcvt.s32.f32 %v3824
        %3827 = vmin.xlane.f32.xlu0 %v3826
        %v3828 = vpop.xlane.xlu0 %3827
        %vm3829 = vcmp.eq.f32.partialorder %v3826, %v3828
        %v3830 = vsel %vm3829, %v3825, inf
        %3831 = vmin.xlane.f32.xlu0 %v3830
        %v3832 = vpop.xlane.xlu0 %3831
        %v3833 = vcvt.f32.s32 %v3832
        %v3834 = vcvt.f32.s32 %v3828
        %v3835 = vshll.u32 %v3834, 16
        %v3836 = vadd.s32 %v3835, %v3833
        %vm3837 = vcmp.lt.s32.totalorder %v3563, %v3564
        %v3838 = vsel %vm3837, %v3563, %v3564
        %v3839 = vand.u32 %v3838, 65535
        %v3840 = vshra.s32 %v3838, 16
        %v3841 = vcvt.s32.f32 %v3839
        %v3842 = vcvt.s32.f32 %v3840
        %3843 = vmin.xlane.f32.xlu0 %v3842
        %v3844 = vpop.xlane.xlu0 %3843
        %vm3845 = vcmp.eq.f32.partialorder %v3842, %v3844
        %v3846 = vsel %vm3845, %v3841, inf
        %3847 = vmin.xlane.f32.xlu0 %v3846
        %v3848 = vpop.xlane.xlu0 %3847
        %v3849 = vcvt.f32.s32 %v3848
        %v3850 = vcvt.f32.s32 %v3844
        %v3851 = vshll.u32 %v3850, 16
        %v3852 = vadd.s32 %v3851, %v3849
        %vm3853 = vcmp.lt.s32.totalorder %v3565, %v3566
        %v3854 = vsel %vm3853, %v3565, %v3566
        %v3855 = vand.u32 %v3854, 65535
        %v3856 = vshra.s32 %v3854, 16
        %v3857 = vcvt.s32.f32 %v3855
        %v3858 = vcvt.s32.f32 %v3856
        %3859 = vmin.xlane.f32.xlu0 %v3858
        %v3860 = vpop.xlane.xlu0 %3859
        %vm3861 = vcmp.eq.f32.partialorder %v3858, %v3860
        %v3862 = vsel %vm3861, %v3857, inf
        %3863 = vmin.xlane.f32.xlu0 %v3862
        %v3864 = vpop.xlane.xlu0 %3863
        %v3865 = vcvt.f32.s32 %v3864
        %v3866 = vcvt.f32.s32 %v3860
        %v3867 = vshll.u32 %v3866, 16
        %v3868 = vadd.s32 %v3867, %v3865
        %vm3869 = vcmp.lt.s32.totalorder %v3567, %v3568
        %v3870 = vsel %vm3869, %v3567, %v3568
        %v3871 = vand.u32 %v3870, 65535
        %v3872 = vshra.s32 %v3870, 16
        %v3873 = vcvt.s32.f32 %v3871
        %v3874 = vcvt.s32.f32 %v3872
        %3875 = vmin.xlane.f32.xlu0 %v3874
        %v3876 = vpop.xlane.xlu0 %3875
        %vm3877 = vcmp.eq.f32.partialorder %v3874, %v3876
        %v3878 = vsel %vm3877, %v3873, inf
        %3879 = vmin.xlane.f32.xlu0 %v3878
        %v3880 = vpop.xlane.xlu0 %3879
        %v3881 = vcvt.f32.s32 %v3880
        %v3882 = vcvt.f32.s32 %v3876
        %v3883 = vshll.u32 %v3882, 16
        %v3884 = vadd.s32 %v3883, %v3881
        %vm3885 = vcmp.lt.s32.totalorder %v3569, %v3570
        %v3886 = vsel %vm3885, %v3569, %v3570
        %v3887 = vand.u32 %v3886, 65535
        %v3888 = vshra.s32 %v3886, 16
        %v3889 = vcvt.s32.f32 %v3887
        %v3890 = vcvt.s32.f32 %v3888
        %3891 = vmin.xlane.f32.xlu0 %v3890
        %v3892 = vpop.xlane.xlu0 %3891
        %vm3893 = vcmp.eq.f32.partialorder %v3890, %v3892
        %v3894 = vsel %vm3893, %v3889, inf
        %3895 = vmin.xlane.f32.xlu0 %v3894
        %v3896 = vpop.xlane.xlu0 %3895
        %v3897 = vcvt.f32.s32 %v3896
        %v3898 = vcvt.f32.s32 %v3892
        %v3899 = vshll.u32 %v3898, 16
        %v3900 = vadd.s32 %v3899, %v3897
        %vm3901 = vcmp.lt.s32.totalorder %v3571, %v3572
        %v3902 = vsel %vm3901, %v3571, %v3572
        %v3903 = vand.u32 %v3902, 65535
        %v3904 = vshra.s32 %v3902, 16
        %v3905 = vcvt.s32.f32 %v3903
        %v3906 = vcvt.s32.f32 %v3904
        %3907 = vmin.xlane.f32.xlu0 %v3906
        %v3908 = vpop.xlane.xlu0 %3907
        %vm3909 = vcmp.eq.f32.partialorder %v3906, %v3908
        %v3910 = vsel %vm3909, %v3905, inf
        %3911 = vmin.xlane.f32.xlu0 %v3910
        %v3912 = vpop.xlane.xlu0 %3911
        %v3913 = vcvt.f32.s32 %v3912
        %v3914 = vcvt.f32.s32 %v3908
        %v3915 = vshll.u32 %v3914, 16
        %v3916 = vadd.s32 %v3915, %v3913
        %vm3917 = vcmp.lt.s32.totalorder %v3573, %v3574
        %v3918 = vsel %vm3917, %v3573, %v3574
        %v3919 = vand.u32 %v3918, 65535
        %v3920 = vshra.s32 %v3918, 16
        %v3921 = vcvt.s32.f32 %v3919
        %v3922 = vcvt.s32.f32 %v3920
        %3923 = vmin.xlane.f32.xlu0 %v3922
        %v3924 = vpop.xlane.xlu0 %3923
        %vm3925 = vcmp.eq.f32.partialorder %v3922, %v3924
        %v3926 = vsel %vm3925, %v3921, inf
        %3927 = vmin.xlane.f32.xlu0 %v3926
        %v3928 = vpop.xlane.xlu0 %3927
        %v3929 = vcvt.f32.s32 %v3928
        %v3930 = vcvt.f32.s32 %v3924
        %v3931 = vshll.u32 %v3930, 16
        %v3932 = vadd.s32 %v3931, %v3929
        %vm3933 = vcmp.lt.s32.totalorder %v3575, %v3576
        %v3934 = vsel %vm3933, %v3575, %v3576
        %v3935 = vand.u32 %v3934, 65535
        %v3936 = vshra.s32 %v3934, 16
        %v3937 = vcvt.s32.f32 %v3935
        %v3938 = vcvt.s32.f32 %v3936
        %3939 = vmin.xlane.f32.xlu0 %v3938
        %v3940 = vpop.xlane.xlu0 %3939
        %vm3941 = vcmp.eq.f32.partialorder %v3938, %v3940
        %v3942 = vsel %vm3941, %v3937, inf
        %3943 = vmin.xlane.f32.xlu0 %v3942
        %v3944 = vpop.xlane.xlu0 %3943
        %v3945 = vcvt.f32.s32 %v3944
        %v3946 = vcvt.f32.s32 %v3940
        %v3947 = vshll.u32 %v3946, 16
        %v3948 = vadd.s32 %v3947, %v3945
        %vm3949 = vcmp.lt.s32.totalorder %v3577, %v3578
        %v3950 = vsel %vm3949, %v3577, %v3578
        %v3951 = vand.u32 %v3950, 65535
        %v3952 = vshra.s32 %v3950, 16
        %v3953 = vcvt.s32.f32 %v3951
        %v3954 = vcvt.s32.f32 %v3952
        %3955 = vmin.xlane.f32.xlu0 %v3954
        %v3956 = vpop.xlane.xlu0 %3955
        %vm3957 = vcmp.eq.f32.partialorder %v3954, %v3956
        %v3958 = vsel %vm3957, %v3953, inf
        %3959 = vmin.xlane.f32.xlu0 %v3958
        %v3960 = vpop.xlane.xlu0 %3959
        %v3961 = vcvt.f32.s32 %v3960
        %v3962 = vcvt.f32.s32 %v3956
        %v3963 = vshll.u32 %v3962, 16
        %v3964 = vadd.s32 %v3963, %v3961
        %vm3965 = vcmp.lt.s32.totalorder %v3579, %v3580
        %v3966 = vsel %vm3965, %v3579, %v3580
        %v3967 = vand.u32 %v3966, 65535
        %v3968 = vshra.s32 %v3966, 16
        %v3969 = vcvt.s32.f32 %v3967
        %v3970 = vcvt.s32.f32 %v3968
        %3971 = vmin.xlane.f32.xlu0 %v3970
        %v3972 = vpop.xlane.xlu0 %3971
        %vm3973 = vcmp.eq.f32.partialorder %v3970, %v3972
        %v3974 = vsel %vm3973, %v3969, inf
        %3975 = vmin.xlane.f32.xlu0 %v3974
        %v3976 = vpop.xlane.xlu0 %3975
        %v3977 = vcvt.f32.s32 %v3976
        %v3978 = vcvt.f32.s32 %v3972
        %v3979 = vshll.u32 %v3978, 16
        %v3980 = vadd.s32 %v3979, %v3977
        %vm3981 = vcmp.lt.s32.totalorder %v3581, %v3582
        %v3982 = vsel %vm3981, %v3581, %v3582
        %v3983 = vand.u32 %v3982, 65535
        %v3984 = vshra.s32 %v3982, 16
        %v3985 = vcvt.s32.f32 %v3983
        %v3986 = vcvt.s32.f32 %v3984
        %3987 = vmin.xlane.f32.xlu0 %v3986
        %v3988 = vpop.xlane.xlu0 %3987
        %vm3989 = vcmp.eq.f32.partialorder %v3986, %v3988
        %v3990 = vsel %vm3989, %v3985, inf
        %3991 = vmin.xlane.f32.xlu0 %v3990
        %v3992 = vpop.xlane.xlu0 %3991
        %v3993 = vcvt.f32.s32 %v3992
        %v3994 = vcvt.f32.s32 %v3988
        %v3995 = vshll.u32 %v3994, 16
        %v3996 = vadd.s32 %v3995, %v3993
        %vm3997 = vcmp.lt.s32.totalorder %v3583, %v3584
        %v3998 = vsel %vm3997, %v3583, %v3584
        %v3999 = vand.u32 %v3998, 65535
        %v4000 = vshra.s32 %v3998, 16
        %v4001 = vcvt.s32.f32 %v3999
        %v4002 = vcvt.s32.f32 %v4000
        %4003 = vmin.xlane.f32.xlu0 %v4002
        %v4004 = vpop.xlane.xlu0 %4003
        %vm4005 = vcmp.eq.f32.partialorder %v4002, %v4004
        %v4006 = vsel %vm4005, %v4001, inf
        %4007 = vmin.xlane.f32.xlu0 %v4006
        %v4008 = vpop.xlane.xlu0 %4007
        %v4009 = vcvt.f32.s32 %v4008
        %v4010 = vcvt.f32.s32 %v4004
        %v4011 = vshll.u32 %v4010, 16
        %v4012 = vadd.s32 %v4011, %v4009
        %vm4013 = vcmp.lt.s32.totalorder %v3585, %v3586
        %v4014 = vsel %vm4013, %v3585, %v3586
        %v4015 = vand.u32 %v4014, 65535
        %v4016 = vshra.s32 %v4014, 16
        %v4017 = vcvt.s32.f32 %v4015
        %v4018 = vcvt.s32.f32 %v4016
        %4019 = vmin.xlane.f32.xlu0 %v4018
        %v4020 = vpop.xlane.xlu0 %4019
        %vm4021 = vcmp.eq.f32.partialorder %v4018, %v4020
        %v4022 = vsel %vm4021, %v4017, inf
        %4023 = vmin.xlane.f32.xlu0 %v4022
        %v4024 = vpop.xlane.xlu0 %4023
        %v4025 = vcvt.f32.s32 %v4024
        %v4026 = vcvt.f32.s32 %v4020
        %v4027 = vshll.u32 %v4026, 16
        %v4028 = vadd.s32 %v4027, %v4025
        %vm4029 = vcmp.lt.s32.totalorder %v3587, %v3588
        %v4030 = vsel %vm4029, %v3587, %v3588
        %v4031 = vand.u32 %v4030, 65535
        %v4032 = vshra.s32 %v4030, 16
        %v4033 = vcvt.s32.f32 %v4031
        %v4034 = vcvt.s32.f32 %v4032
        %4035 = vmin.xlane.f32.xlu0 %v4034
        %v4036 = vpop.xlane.xlu0 %4035
        %vm4037 = vcmp.eq.f32.partialorder %v4034, %v4036
        %v4038 = vsel %vm4037, %v4033, inf
        %4039 = vmin.xlane.f32.xlu0 %v4038
        %v4040 = vpop.xlane.xlu0 %4039
        %v4041 = vcvt.f32.s32 %v4040
        %v4042 = vcvt.f32.s32 %v4036
        %v4043 = vshll.u32 %v4042, 16
        %v4044 = vadd.s32 %v4043, %v4041
        %vm4045 = vcmp.lt.s32.totalorder %v3589, %v3590
        %v4046 = vsel %vm4045, %v3589, %v3590
        %v4047 = vand.u32 %v4046, 65535
        %v4048 = vshra.s32 %v4046, 16
        %v4049 = vcvt.s32.f32 %v4047
        %v4050 = vcvt.s32.f32 %v4048
        %4051 = vmin.xlane.f32.xlu0 %v4050
        %v4052 = vpop.xlane.xlu0 %4051
        %vm4053 = vcmp.eq.f32.partialorder %v4050, %v4052
        %v4054 = vsel %vm4053, %v4049, inf
        %4055 = vmin.xlane.f32.xlu0 %v4054
        %v4056 = vpop.xlane.xlu0 %4055
        %v4057 = vcvt.f32.s32 %v4056
        %v4058 = vcvt.f32.s32 %v4052
        %v4059 = vshll.u32 %v4058, 16
        %v4060 = vadd.s32 %v4059, %v4057
        %vm4061 = vcmp.lt.s32.totalorder %v3591, %v3592
        %v4062 = vsel %vm4061, %v3591, %v3592
        %v4063 = vand.u32 %v4062, 65535
        %v4064 = vshra.s32 %v4062, 16
        %v4065 = vcvt.s32.f32 %v4063
        %v4066 = vcvt.s32.f32 %v4064
        %4067 = vmin.xlane.f32.xlu0 %v4066
        %v4068 = vpop.xlane.xlu0 %4067
        %vm4069 = vcmp.eq.f32.partialorder %v4066, %v4068
        %v4070 = vsel %vm4069, %v4065, inf
        %4071 = vmin.xlane.f32.xlu0 %v4070
        %v4072 = vpop.xlane.xlu0 %4071
        %v4073 = vcvt.f32.s32 %v4072
        %v4074 = vcvt.f32.s32 %v4068
        %v4075 = vshll.u32 %v4074, 16
        %v4076 = vadd.s32 %v4075, %v4073
        %vm4077 = vcmp.lt.s32.totalorder %v3593, %v3594
        %v4078 = vsel %vm4077, %v3593, %v3594
        %v4079 = vand.u32 %v4078, 65535
        %v4080 = vshra.s32 %v4078, 16
        %v4081 = vcvt.s32.f32 %v4079
        %v4082 = vcvt.s32.f32 %v4080
        %4083 = vmin.xlane.f32.xlu0 %v4082
        %v4084 = vpop.xlane.xlu0 %4083
        %vm4085 = vcmp.eq.f32.partialorder %v4082, %v4084
        %v4086 = vsel %vm4085, %v4081, inf
        %4087 = vmin.xlane.f32.xlu0 %v4086
        %v4088 = vpop.xlane.xlu0 %4087
        %v4089 = vcvt.f32.s32 %v4088
        %v4090 = vcvt.f32.s32 %v4084
        %v4091 = vshll.u32 %v4090, 16
        %v4092 = vadd.s32 %v4091, %v4089
        %vm4093 = vcmp.lt.s32.totalorder %v3595, %v3596
        %v4094 = vsel %vm4093, %v3595, %v3596
        %v4095 = vand.u32 %v4094, 65535
        %v4096 = vshra.s32 %v4094, 16
        %v4097 = vcvt.s32.f32 %v4095
        %v4098 = vcvt.s32.f32 %v4096
        %4099 = vmin.xlane.f32.xlu0 %v4098
        %v4100 = vpop.xlane.xlu0 %4099
        %vm4101 = vcmp.eq.f32.partialorder %v4098, %v4100
        %v4102 = vsel %vm4101, %v4097, inf
        %4103 = vmin.xlane.f32.xlu0 %v4102
        %v4104 = vpop.xlane.xlu0 %4103
        %v4105 = vcvt.f32.s32 %v4104
        %v4106 = vcvt.f32.s32 %v4100
        %v4107 = vshll.u32 %v4106, 16
        %v4108 = vadd.s32 %v4107, %v4105
        %vm4109 = vcmp.gt.s32.totalorder %v136, %v2908
        %vm4110 = vcmp.gt.s32.totalorder %v137, %v2908
        %vm4111 = vcmp.gt.s32.totalorder %v136, %v2924
        %vm4112 = vcmp.gt.s32.totalorder %v137, %v2924
        %vm4113 = vcmp.gt.s32.totalorder %v136, %v2940
        %vm4114 = vcmp.gt.s32.totalorder %v137, %v2940
        %vm4115 = vcmp.gt.s32.totalorder %v136, %v2956
        %vm4116 = vcmp.gt.s32.totalorder %v137, %v2956
        %vm4117 = vcmp.gt.s32.totalorder %v136, %v2972
        %vm4118 = vcmp.gt.s32.totalorder %v137, %v2972
        %vm4119 = vcmp.gt.s32.totalorder %v136, %v2988
        %vm4120 = vcmp.gt.s32.totalorder %v137, %v2988
        %vm4121 = vcmp.gt.s32.totalorder %v136, %v3004
        %vm4122 = vcmp.gt.s32.totalorder %v137, %v3004
        %vm4123 = vcmp.gt.s32.totalorder %v136, %v3020
        %vm4124 = vcmp.gt.s32.totalorder %v137, %v3020
        %vm4125 = vcmp.gt.s32.totalorder %v136, %v3036
        %vm4126 = vcmp.gt.s32.totalorder %v137, %v3036
        %vm4127 = vcmp.gt.s32.totalorder %v136, %v3052
        %vm4128 = vcmp.gt.s32.totalorder %v137, %v3052
        %vm4129 = vcmp.gt.s32.totalorder %v136, %v3068
        %vm4130 = vcmp.gt.s32.totalorder %v137, %v3068
        %vm4131 = vcmp.gt.s32.totalorder %v136, %v3084
        %vm4132 = vcmp.gt.s32.totalorder %v137, %v3084
        %vm4133 = vcmp.gt.s32.totalorder %v136, %v3100
        %vm4134 = vcmp.gt.s32.totalorder %v137, %v3100
        %vm4135 = vcmp.gt.s32.totalorder %v136, %v3116
        %vm4136 = vcmp.gt.s32.totalorder %v137, %v3116
        %vm4137 = vcmp.gt.s32.totalorder %v136, %v3132
        %vm4138 = vcmp.gt.s32.totalorder %v137, %v3132
        %vm4139 = vcmp.gt.s32.totalorder %v136, %v3148
        %vm4140 = vcmp.gt.s32.totalorder %v137, %v3148
        %vm4141 = vcmp.gt.s32.totalorder %v136, %v3164
        %vm4142 = vcmp.gt.s32.totalorder %v137, %v3164
        %vm4143 = vcmp.gt.s32.totalorder %v136, %v3180
        %vm4144 = vcmp.gt.s32.totalorder %v137, %v3180
        %vm4145 = vcmp.gt.s32.totalorder %v136, %v3196
        %vm4146 = vcmp.gt.s32.totalorder %v137, %v3196
        %vm4147 = vcmp.gt.s32.totalorder %v136, %v3212
        %vm4148 = vcmp.gt.s32.totalorder %v137, %v3212
        %vm4149 = vcmp.gt.s32.totalorder %v136, %v3228
        %vm4150 = vcmp.gt.s32.totalorder %v137, %v3228
        %vm4151 = vcmp.gt.s32.totalorder %v136, %v3244
        %vm4152 = vcmp.gt.s32.totalorder %v137, %v3244
        %vm4153 = vcmp.gt.s32.totalorder %v136, %v3260
        %vm4154 = vcmp.gt.s32.totalorder %v137, %v3260
        %vm4155 = vcmp.gt.s32.totalorder %v136, %v3276
        %vm4156 = vcmp.gt.s32.totalorder %v137, %v3276
        %vm4157 = vcmp.gt.s32.totalorder %v136, %v3292
        %vm4158 = vcmp.gt.s32.totalorder %v137, %v3292
        %vm4159 = vcmp.gt.s32.totalorder %v136, %v3308
        %vm4160 = vcmp.gt.s32.totalorder %v137, %v3308
        %vm4161 = vcmp.gt.s32.totalorder %v136, %v3324
        %vm4162 = vcmp.gt.s32.totalorder %v137, %v3324
        %vm4163 = vcmp.gt.s32.totalorder %v136, %v3340
        %vm4164 = vcmp.gt.s32.totalorder %v137, %v3340
        %vm4165 = vcmp.gt.s32.totalorder %v136, %v3356
        %vm4166 = vcmp.gt.s32.totalorder %v137, %v3356
        %vm4167 = vcmp.gt.s32.totalorder %v136, %v3372
        %vm4168 = vcmp.gt.s32.totalorder %v137, %v3372
        %vm4169 = vcmp.gt.s32.totalorder %v136, %v3388
        %vm4170 = vcmp.gt.s32.totalorder %v137, %v3388
        %vm4171 = vcmp.gt.s32.totalorder %v136, %v3404
        %vm4172 = vcmp.gt.s32.totalorder %v137, %v3404
        %vm4173 = vcmp.le.s32.totalorder %v136, %v2283
        %vm4174 = vcmp.le.s32.totalorder %v137, %v2283
        %vm4175 = vcmp.le.s32.totalorder %v136, %v2284
        %vm4176 = vcmp.le.s32.totalorder %v137, %v2284
        %vm4177 = vcmp.le.s32.totalorder %v136, %v2285
        %vm4178 = vcmp.le.s32.totalorder %v137, %v2285
        %vm4179 = vcmp.le.s32.totalorder %v136, %v2286
        %vm4180 = vcmp.le.s32.totalorder %v137, %v2286
        %vm4181 = vcmp.le.s32.totalorder %v136, %v2287
        %vm4182 = vcmp.le.s32.totalorder %v137, %v2287
        %vm4183 = vcmp.le.s32.totalorder %v136, %v2288
        %vm4184 = vcmp.le.s32.totalorder %v137, %v2288
        %vm4185 = vcmp.le.s32.totalorder %v136, %v2289
        %vm4186 = vcmp.le.s32.totalorder %v137, %v2289
        %vm4187 = vcmp.le.s32.totalorder %v136, %v2290
        %vm4188 = vcmp.le.s32.totalorder %v137, %v2290
        %vm4189 = vcmp.le.s32.totalorder %v136, %v2291
        %vm4190 = vcmp.le.s32.totalorder %v137, %v2291
        %vm4191 = vcmp.le.s32.totalorder %v136, %v2292
        %vm4192 = vcmp.le.s32.totalorder %v137, %v2292
        %vm4193 = vcmp.le.s32.totalorder %v136, %v2293
        %vm4194 = vcmp.le.s32.totalorder %v137, %v2293
        %vm4195 = vcmp.le.s32.totalorder %v136, %v2294
        %vm4196 = vcmp.le.s32.totalorder %v137, %v2294
        %vm4197 = vcmp.le.s32.totalorder %v136, %v2295
        %vm4198 = vcmp.le.s32.totalorder %v137, %v2295
        %vm4199 = vcmp.le.s32.totalorder %v136, %v2296
        %vm4200 = vcmp.le.s32.totalorder %v137, %v2296
        %vm4201 = vcmp.le.s32.totalorder %v136, %v2297
        %vm4202 = vcmp.le.s32.totalorder %v137, %v2297
        %vm4203 = vcmp.le.s32.totalorder %v136, %v2298
        %vm4204 = vcmp.le.s32.totalorder %v137, %v2298
        %vm4205 = vcmp.le.s32.totalorder %v136, %v2299
        %vm4206 = vcmp.le.s32.totalorder %v137, %v2299
        %vm4207 = vcmp.le.s32.totalorder %v136, %v2300
        %vm4208 = vcmp.le.s32.totalorder %v137, %v2300
        %vm4209 = vcmp.le.s32.totalorder %v136, %v2301
        %vm4210 = vcmp.le.s32.totalorder %v137, %v2301
        %vm4211 = vcmp.le.s32.totalorder %v136, %v2302
        %vm4212 = vcmp.le.s32.totalorder %v137, %v2302
        %vm4213 = vcmp.le.s32.totalorder %v136, %v2303
        %vm4214 = vcmp.le.s32.totalorder %v137, %v2303
        %vm4215 = vcmp.le.s32.totalorder %v136, %v2304
        %vm4216 = vcmp.le.s32.totalorder %v137, %v2304
        %vm4217 = vcmp.le.s32.totalorder %v136, %v2305
        %vm4218 = vcmp.le.s32.totalorder %v137, %v2305
        %vm4219 = vcmp.le.s32.totalorder %v136, %v2306
        %vm4220 = vcmp.le.s32.totalorder %v137, %v2306
        %vm4221 = vcmp.le.s32.totalorder %v136, %v2307
        %vm4222 = vcmp.le.s32.totalorder %v137, %v2307
        %vm4223 = vcmp.le.s32.totalorder %v136, %v2308
        %vm4224 = vcmp.le.s32.totalorder %v137, %v2308
        %vm4225 = vcmp.le.s32.totalorder %v136, %v2309
        %vm4226 = vcmp.le.s32.totalorder %v137, %v2309
        %vm4227 = vcmp.le.s32.totalorder %v136, %v2310
        %vm4228 = vcmp.le.s32.totalorder %v137, %v2310
        %vm4229 = vcmp.le.s32.totalorder %v136, %v2311
        %vm4230 = vcmp.le.s32.totalorder %v137, %v2311
        %vm4231 = vcmp.le.s32.totalorder %v136, %v2312
        %vm4232 = vcmp.le.s32.totalorder %v137, %v2312
        %vm4233 = vcmp.le.s32.totalorder %v136, %v2313
        %vm4234 = vcmp.le.s32.totalorder %v137, %v2313
        %vm4235 = vcmp.le.s32.totalorder %v136, %v2314
        %vm4236 = vcmp.le.s32.totalorder %v137, %v2314
        %vm4237 = vmand %vm4109, %vm4173
        %vm4238 = vmand %vm4110, %vm4174
        %vm4239 = vmand %vm4111, %vm4175
        %vm4240 = vmand %vm4112, %vm4176
        %vm4241 = vmand %vm4113, %vm4177
        %vm4242 = vmand %vm4114, %vm4178
        %vm4243 = vmand %vm4115, %vm4179
        %vm4244 = vmand %vm4116, %vm4180
        %vm4245 = vmand %vm4117, %vm4181
        %vm4246 = vmand %vm4118, %vm4182
        %vm4247 = vmand %vm4119, %vm4183
        %vm4248 = vmand %vm4120, %vm4184
        %vm4249 = vmand %vm4121, %vm4185
        %vm4250 = vmand %vm4122, %vm4186
        %vm4251 = vmand %vm4123, %vm4187
        %vm4252 = vmand %vm4124, %vm4188
        %vm4253 = vmand %vm4125, %vm4189
        %vm4254 = vmand %vm4126, %vm4190
        %vm4255 = vmand %vm4127, %vm4191
        %vm4256 = vmand %vm4128, %vm4192
        %vm4257 = vmand %vm4129, %vm4193
        %vm4258 = vmand %vm4130, %vm4194
        %vm4259 = vmand %vm4131, %vm4195
        %vm4260 = vmand %vm4132, %vm4196
        %vm4261 = vmand %vm4133, %vm4197
        %vm4262 = vmand %vm4134, %vm4198
        %vm4263 = vmand %vm4135, %vm4199
        %vm4264 = vmand %vm4136, %vm4200
        %vm4265 = vmand %vm4137, %vm4201
        %vm4266 = vmand %vm4138, %vm4202
        %vm4267 = vmand %vm4139, %vm4203
        %vm4268 = vmand %vm4140, %vm4204
        %vm4269 = vmand %vm4141, %vm4205
        %vm4270 = vmand %vm4142, %vm4206
        %vm4271 = vmand %vm4143, %vm4207
        %vm4272 = vmand %vm4144, %vm4208
        %vm4273 = vmand %vm4145, %vm4209
        %vm4274 = vmand %vm4146, %vm4210
        %vm4275 = vmand %vm4147, %vm4211
        %vm4276 = vmand %vm4148, %vm4212
        %vm4277 = vmand %vm4149, %vm4213
        %vm4278 = vmand %vm4150, %vm4214
        %vm4279 = vmand %vm4151, %vm4215
        %vm4280 = vmand %vm4152, %vm4216
        %vm4281 = vmand %vm4153, %vm4217
        %vm4282 = vmand %vm4154, %vm4218
        %vm4283 = vmand %vm4155, %vm4219
        %vm4284 = vmand %vm4156, %vm4220
        %vm4285 = vmand %vm4157, %vm4221
        %vm4286 = vmand %vm4158, %vm4222
        %vm4287 = vmand %vm4159, %vm4223
        %vm4288 = vmand %vm4160, %vm4224
        %vm4289 = vmand %vm4161, %vm4225
        %vm4290 = vmand %vm4162, %vm4226
        %vm4291 = vmand %vm4163, %vm4227
        %vm4292 = vmand %vm4164, %vm4228
        %vm4293 = vmand %vm4165, %vm4229
        %vm4294 = vmand %vm4166, %vm4230
        %vm4295 = vmand %vm4167, %vm4231
        %vm4296 = vmand %vm4168, %vm4232
        %vm4297 = vmand %vm4169, %vm4233
        %vm4298 = vmand %vm4170, %vm4234
        %vm4299 = vmand %vm4171, %vm4235
        %vm4300 = vmand %vm4172, %vm4236
        %vm4301 = vcmp.ge.s32.totalorder %v136, %v2283
        %vm4302 = vcmp.ge.s32.totalorder %v137, %v2283
        %vm4303 = vcmp.ge.s32.totalorder %v136, %v2284
        %vm4304 = vcmp.ge.s32.totalorder %v137, %v2284
        %vm4305 = vcmp.ge.s32.totalorder %v136, %v2285
        %vm4306 = vcmp.ge.s32.totalorder %v137, %v2285
        %vm4307 = vcmp.ge.s32.totalorder %v136, %v2286
        %vm4308 = vcmp.ge.s32.totalorder %v137, %v2286
        %vm4309 = vcmp.ge.s32.totalorder %v136, %v2287
        %vm4310 = vcmp.ge.s32.totalorder %v137, %v2287
        %vm4311 = vcmp.ge.s32.totalorder %v136, %v2288
        %vm4312 = vcmp.ge.s32.totalorder %v137, %v2288
        %vm4313 = vcmp.ge.s32.totalorder %v136, %v2289
        %vm4314 = vcmp.ge.s32.totalorder %v137, %v2289
        %vm4315 = vcmp.ge.s32.totalorder %v136, %v2290
        %vm4316 = vcmp.ge.s32.totalorder %v137, %v2290
        %vm4317 = vcmp.ge.s32.totalorder %v136, %v2291
        %vm4318 = vcmp.ge.s32.totalorder %v137, %v2291
        %vm4319 = vcmp.ge.s32.totalorder %v136, %v2292
        %vm4320 = vcmp.ge.s32.totalorder %v137, %v2292
        %vm4321 = vcmp.ge.s32.totalorder %v136, %v2293
        %vm4322 = vcmp.ge.s32.totalorder %v137, %v2293
        %vm4323 = vcmp.ge.s32.totalorder %v136, %v2294
        %vm4324 = vcmp.ge.s32.totalorder %v137, %v2294
        %vm4325 = vcmp.ge.s32.totalorder %v136, %v2295
        %vm4326 = vcmp.ge.s32.totalorder %v137, %v2295
        %vm4327 = vcmp.ge.s32.totalorder %v136, %v2296
        %vm4328 = vcmp.ge.s32.totalorder %v137, %v2296
        %vm4329 = vcmp.ge.s32.totalorder %v136, %v2297
        %vm4330 = vcmp.ge.s32.totalorder %v137, %v2297
        %vm4331 = vcmp.ge.s32.totalorder %v136, %v2298
        %vm4332 = vcmp.ge.s32.totalorder %v137, %v2298
        %vm4333 = vcmp.ge.s32.totalorder %v136, %v2299
        %vm4334 = vcmp.ge.s32.totalorder %v137, %v2299
        %vm4335 = vcmp.ge.s32.totalorder %v136, %v2300
        %vm4336 = vcmp.ge.s32.totalorder %v137, %v2300
        %vm4337 = vcmp.ge.s32.totalorder %v136, %v2301
        %vm4338 = vcmp.ge.s32.totalorder %v137, %v2301
        %vm4339 = vcmp.ge.s32.totalorder %v136, %v2302
        %vm4340 = vcmp.ge.s32.totalorder %v137, %v2302
        %vm4341 = vcmp.ge.s32.totalorder %v136, %v2303
        %vm4342 = vcmp.ge.s32.totalorder %v137, %v2303
        %vm4343 = vcmp.ge.s32.totalorder %v136, %v2304
        %vm4344 = vcmp.ge.s32.totalorder %v137, %v2304
        %vm4345 = vcmp.ge.s32.totalorder %v136, %v2305
        %vm4346 = vcmp.ge.s32.totalorder %v137, %v2305
        %vm4347 = vcmp.ge.s32.totalorder %v136, %v2306
        %vm4348 = vcmp.ge.s32.totalorder %v137, %v2306
        %vm4349 = vcmp.ge.s32.totalorder %v136, %v2307
        %vm4350 = vcmp.ge.s32.totalorder %v137, %v2307
        %vm4351 = vcmp.ge.s32.totalorder %v136, %v2308
        %vm4352 = vcmp.ge.s32.totalorder %v137, %v2308
        %vm4353 = vcmp.ge.s32.totalorder %v136, %v2309
        %vm4354 = vcmp.ge.s32.totalorder %v137, %v2309
        %vm4355 = vcmp.ge.s32.totalorder %v136, %v2310
        %vm4356 = vcmp.ge.s32.totalorder %v137, %v2310
        %vm4357 = vcmp.ge.s32.totalorder %v136, %v2311
        %vm4358 = vcmp.ge.s32.totalorder %v137, %v2311
        %vm4359 = vcmp.ge.s32.totalorder %v136, %v2312
        %vm4360 = vcmp.ge.s32.totalorder %v137, %v2312
        %vm4361 = vcmp.ge.s32.totalorder %v136, %v2313
        %vm4362 = vcmp.ge.s32.totalorder %v137, %v2313
        %vm4363 = vcmp.ge.s32.totalorder %v136, %v2314
        %vm4364 = vcmp.ge.s32.totalorder %v137, %v2314
        %vm4365 = vcmp.lt.s32.totalorder %v136, %v3612
        %vm4366 = vcmp.lt.s32.totalorder %v137, %v3612
        %vm4367 = vcmp.lt.s32.totalorder %v136, %v3628
        %vm4368 = vcmp.lt.s32.totalorder %v137, %v3628
        %vm4369 = vcmp.lt.s32.totalorder %v136, %v3644
        %vm4370 = vcmp.lt.s32.totalorder %v137, %v3644
        %vm4371 = vcmp.lt.s32.totalorder %v136, %v3660
        %vm4372 = vcmp.lt.s32.totalorder %v137, %v3660
        %vm4373 = vcmp.lt.s32.totalorder %v136, %v3676
        %vm4374 = vcmp.lt.s32.totalorder %v137, %v3676
        %vm4375 = vcmp.lt.s32.totalorder %v136, %v3692
        %vm4376 = vcmp.lt.s32.totalorder %v137, %v3692
        %vm4377 = vcmp.lt.s32.totalorder %v136, %v3708
        %vm4378 = vcmp.lt.s32.totalorder %v137, %v3708
        %vm4379 = vcmp.lt.s32.totalorder %v136, %v3724
        %vm4380 = vcmp.lt.s32.totalorder %v137, %v3724
        %vm4381 = vcmp.lt.s32.totalorder %v136, %v3740
        %vm4382 = vcmp.lt.s32.totalorder %v137, %v3740
        %vm4383 = vcmp.lt.s32.totalorder %v136, %v3756
        %vm4384 = vcmp.lt.s32.totalorder %v137, %v3756
        %vm4385 = vcmp.lt.s32.totalorder %v136, %v3772
        %vm4386 = vcmp.lt.s32.totalorder %v137, %v3772
        %vm4387 = vcmp.lt.s32.totalorder %v136, %v3788
        %vm4388 = vcmp.lt.s32.totalorder %v137, %v3788
        %vm4389 = vcmp.lt.s32.totalorder %v136, %v3804
        %vm4390 = vcmp.lt.s32.totalorder %v137, %v3804
        %vm4391 = vcmp.lt.s32.totalorder %v136, %v3820
        %vm4392 = vcmp.lt.s32.totalorder %v137, %v3820
        %vm4393 = vcmp.lt.s32.totalorder %v136, %v3836
        %vm4394 = vcmp.lt.s32.totalorder %v137, %v3836
        %vm4395 = vcmp.lt.s32.totalorder %v136, %v3852
        %vm4396 = vcmp.lt.s32.totalorder %v137, %v3852
        %vm4397 = vcmp.lt.s32.totalorder %v136, %v3868
        %vm4398 = vcmp.lt.s32.totalorder %v137, %v3868
        %vm4399 = vcmp.lt.s32.totalorder %v136, %v3884
        %vm4400 = vcmp.lt.s32.totalorder %v137, %v3884
        %vm4401 = vcmp.lt.s32.totalorder %v136, %v3900
        %vm4402 = vcmp.lt.s32.totalorder %v137, %v3900
        %vm4403 = vcmp.lt.s32.totalorder %v136, %v3916
        %vm4404 = vcmp.lt.s32.totalorder %v137, %v3916
        %vm4405 = vcmp.lt.s32.totalorder %v136, %v3932
        %vm4406 = vcmp.lt.s32.totalorder %v137, %v3932
        %vm4407 = vcmp.lt.s32.totalorder %v136, %v3948
        %vm4408 = vcmp.lt.s32.totalorder %v137, %v3948
        %vm4409 = vcmp.lt.s32.totalorder %v136, %v3964
        %vm4410 = vcmp.lt.s32.totalorder %v137, %v3964
        %vm4411 = vcmp.lt.s32.totalorder %v136, %v3980
        %vm4412 = vcmp.lt.s32.totalorder %v137, %v3980
        %vm4413 = vcmp.lt.s32.totalorder %v136, %v3996
        %vm4414 = vcmp.lt.s32.totalorder %v137, %v3996
        %vm4415 = vcmp.lt.s32.totalorder %v136, %v4012
        %vm4416 = vcmp.lt.s32.totalorder %v137, %v4012
        %vm4417 = vcmp.lt.s32.totalorder %v136, %v4028
        %vm4418 = vcmp.lt.s32.totalorder %v137, %v4028
        %vm4419 = vcmp.lt.s32.totalorder %v136, %v4044
        %vm4420 = vcmp.lt.s32.totalorder %v137, %v4044
        %vm4421 = vcmp.lt.s32.totalorder %v136, %v4060
        %vm4422 = vcmp.lt.s32.totalorder %v137, %v4060
        %vm4423 = vcmp.lt.s32.totalorder %v136, %v4076
        %vm4424 = vcmp.lt.s32.totalorder %v137, %v4076
        %vm4425 = vcmp.lt.s32.totalorder %v136, %v4092
        %vm4426 = vcmp.lt.s32.totalorder %v137, %v4092
        %vm4427 = vcmp.lt.s32.totalorder %v136, %v4108
        %vm4428 = vcmp.lt.s32.totalorder %v137, %v4108
        %vm4429 = vmand %vm4301, %vm4365
        %vm4430 = vmand %vm4302, %vm4366
        %vm4431 = vmand %vm4303, %vm4367
        %vm4432 = vmand %vm4304, %vm4368
        %vm4433 = vmand %vm4305, %vm4369
        %vm4434 = vmand %vm4306, %vm4370
        %vm4435 = vmand %vm4307, %vm4371
        %vm4436 = vmand %vm4308, %vm4372
        %vm4437 = vmand %vm4309, %vm4373
        %vm4438 = vmand %vm4310, %vm4374
        %vm4439 = vmand %vm4311, %vm4375
        %vm4440 = vmand %vm4312, %vm4376
        %vm4441 = vmand %vm4313, %vm4377
        %vm4442 = vmand %vm4314, %vm4378
        %vm4443 = vmand %vm4315, %vm4379
        %vm4444 = vmand %vm4316, %vm4380
        %vm4445 = vmand %vm4317, %vm4381
        %vm4446 = vmand %vm4318, %vm4382
        %vm4447 = vmand %vm4319, %vm4383
        %vm4448 = vmand %vm4320, %vm4384
        %vm4449 = vmand %vm4321, %vm4385
        %vm4450 = vmand %vm4322, %vm4386
        %vm4451 = vmand %vm4323, %vm4387
        %vm4452 = vmand %vm4324, %vm4388
        %vm4453 = vmand %vm4325, %vm4389
        %vm4454 = vmand %vm4326, %vm4390
        %vm4455 = vmand %vm4327, %vm4391
        %vm4456 = vmand %vm4328, %vm4392
        %vm4457 = vmand %vm4329, %vm4393
        %vm4458 = vmand %vm4330, %vm4394
        %vm4459 = vmand %vm4331, %vm4395
        %vm4460 = vmand %vm4332, %vm4396
        %vm4461 = vmand %vm4333, %vm4397
        %vm4462 = vmand %vm4334, %vm4398
        %vm4463 = vmand %vm4335, %vm4399
        %vm4464 = vmand %vm4336, %vm4400
        %vm4465 = vmand %vm4337, %vm4401
        %vm4466 = vmand %vm4338, %vm4402
        %vm4467 = vmand %vm4339, %vm4403
        %vm4468 = vmand %vm4340, %vm4404
        %vm4469 = vmand %vm4341, %vm4405
        %vm4470 = vmand %vm4342, %vm4406
        %vm4471 = vmand %vm4343, %vm4407
        %vm4472 = vmand %vm4344, %vm4408
        %vm4473 = vmand %vm4345, %vm4409
        %vm4474 = vmand %vm4346, %vm4410
        %vm4475 = vmand %vm4347, %vm4411
        %vm4476 = vmand %vm4348, %vm4412
        %vm4477 = vmand %vm4349, %vm4413
        %vm4478 = vmand %vm4350, %vm4414
        %vm4479 = vmand %vm4351, %vm4415
        %vm4480 = vmand %vm4352, %vm4416
        %vm4481 = vmand %vm4353, %vm4417
        %vm4482 = vmand %vm4354, %vm4418
        %vm4483 = vmand %vm4355, %vm4419
        %vm4484 = vmand %vm4356, %vm4420
        %vm4485 = vmand %vm4357, %vm4421
        %vm4486 = vmand %vm4358, %vm4422
        %vm4487 = vmand %vm4359, %vm4423
        %vm4488 = vmand %vm4360, %vm4424
        %vm4489 = vmand %vm4361, %vm4425
        %vm4490 = vmand %vm4362, %vm4426
        %vm4491 = vmand %vm4363, %vm4427
        %vm4492 = vmand %vm4364, %vm4428
        %v4493 = vsel %vm4237, %v2368, 1e+09
        %v4494 = vsel %vm4238, %v2372, 1e+09
        %v4495 = vsel %vm4239, %v2368, 1e+09
        %v4496 = vsel %vm4240, %v2372, 1e+09
        %v4497 = vsel %vm4241, %v2368, 1e+09
        %v4498 = vsel %vm4242, %v2372, 1e+09
        %v4499 = vsel %vm4243, %v2368, 1e+09
        %v4500 = vsel %vm4244, %v2372, 1e+09
        %v4501 = vsel %vm4245, %v2376, 1e+09
        %v4502 = vsel %vm4246, %v2380, 1e+09
        %v4503 = vsel %vm4247, %v2376, 1e+09
        %v4504 = vsel %vm4248, %v2380, 1e+09
        %v4505 = vsel %vm4249, %v2376, 1e+09
        %v4506 = vsel %vm4250, %v2380, 1e+09
        %v4507 = vsel %vm4251, %v2376, 1e+09
        %v4508 = vsel %vm4252, %v2380, 1e+09
        %v4509 = vsel %vm4253, %v2384, 1e+09
        %v4510 = vsel %vm4254, %v2388, 1e+09
        %v4511 = vsel %vm4255, %v2384, 1e+09
        %v4512 = vsel %vm4256, %v2388, 1e+09
        %v4513 = vsel %vm4257, %v2384, 1e+09
        %v4514 = vsel %vm4258, %v2388, 1e+09
        %v4515 = vsel %vm4259, %v2384, 1e+09
        %v4516 = vsel %vm4260, %v2388, 1e+09
        %v4517 = vsel %vm4261, %v2392, 1e+09
        %v4518 = vsel %vm4262, %v2396, 1e+09
        %v4519 = vsel %vm4263, %v2392, 1e+09
        %v4520 = vsel %vm4264, %v2396, 1e+09
        %v4521 = vsel %vm4265, %v2392, 1e+09
        %v4522 = vsel %vm4266, %v2396, 1e+09
        %v4523 = vsel %vm4267, %v2392, 1e+09
        %v4524 = vsel %vm4268, %v2396, 1e+09
        %v4525 = vsel %vm4269, %v2400, 1e+09
        %v4526 = vsel %vm4270, %v2404, 1e+09
        %v4527 = vsel %vm4271, %v2400, 1e+09
        %v4528 = vsel %vm4272, %v2404, 1e+09
        %v4529 = vsel %vm4273, %v2400, 1e+09
        %v4530 = vsel %vm4274, %v2404, 1e+09
        %v4531 = vsel %vm4275, %v2400, 1e+09
        %v4532 = vsel %vm4276, %v2404, 1e+09
        %v4533 = vsel %vm4277, %v2408, 1e+09
        %v4534 = vsel %vm4278, %v2412, 1e+09
        %v4535 = vsel %vm4279, %v2408, 1e+09
        %v4536 = vsel %vm4280, %v2412, 1e+09
        %v4537 = vsel %vm4281, %v2408, 1e+09
        %v4538 = vsel %vm4282, %v2412, 1e+09
        %v4539 = vsel %vm4283, %v2408, 1e+09
        %v4540 = vsel %vm4284, %v2412, 1e+09
        %v4541 = vsel %vm4285, %v2416, 1e+09
        %v4542 = vsel %vm4286, %v2420, 1e+09
        %v4543 = vsel %vm4287, %v2416, 1e+09
        %v4544 = vsel %vm4288, %v2420, 1e+09
        %v4545 = vsel %vm4289, %v2416, 1e+09
        %v4546 = vsel %vm4290, %v2420, 1e+09
        %v4547 = vsel %vm4291, %v2416, 1e+09
        %v4548 = vsel %vm4292, %v2420, 1e+09
        %v4549 = vsel %vm4293, %v2424, 1e+09
        %v4550 = vsel %vm4294, %v2428, 1e+09
        %v4551 = vsel %vm4295, %v2424, 1e+09
        %v4552 = vsel %vm4296, %v2428, 1e+09
        %v4553 = vsel %vm4297, %v2424, 1e+09
        %v4554 = vsel %vm4298, %v2428, 1e+09
        %v4555 = vsel %vm4299, %v2424, 1e+09
        %v4556 = vsel %vm4300, %v2428, 1e+09
        %v4557 = vmin.f32 %v4493, %v4494
        %4558 = vmin.xlane.f32.xlu0 %v4557
        %v4559 = vpop.xlane.xlu0 %4558
        %v4560 = vmin.f32 %v4495, %v4496
        %4561 = vmin.xlane.f32.xlu0 %v4560
        %v4562 = vpop.xlane.xlu0 %4561
        %v4563 = vmin.f32 %v4497, %v4498
        %4564 = vmin.xlane.f32.xlu0 %v4563
        %v4565 = vpop.xlane.xlu0 %4564
        %v4566 = vmin.f32 %v4499, %v4500
        %4567 = vmin.xlane.f32.xlu0 %v4566
        %v4568 = vpop.xlane.xlu0 %4567
        %v4569 = vmin.f32 %v4501, %v4502
        %4570 = vmin.xlane.f32.xlu0 %v4569
        %v4571 = vpop.xlane.xlu0 %4570
        %v4572 = vmin.f32 %v4503, %v4504
        %4573 = vmin.xlane.f32.xlu0 %v4572
        %v4574 = vpop.xlane.xlu0 %4573
        %v4575 = vmin.f32 %v4505, %v4506
        %4576 = vmin.xlane.f32.xlu0 %v4575
        %v4577 = vpop.xlane.xlu0 %4576
        %v4578 = vmin.f32 %v4507, %v4508
        %4579 = vmin.xlane.f32.xlu0 %v4578
        %v4580 = vpop.xlane.xlu0 %4579
        %v4581 = vmin.f32 %v4509, %v4510
        %4582 = vmin.xlane.f32.xlu0 %v4581
        %v4583 = vpop.xlane.xlu0 %4582
        %v4584 = vmin.f32 %v4511, %v4512
        %4585 = vmin.xlane.f32.xlu0 %v4584
        %v4586 = vpop.xlane.xlu0 %4585
        %v4587 = vmin.f32 %v4513, %v4514
        %4588 = vmin.xlane.f32.xlu0 %v4587
        %v4589 = vpop.xlane.xlu0 %4588
        %v4590 = vmin.f32 %v4515, %v4516
        %4591 = vmin.xlane.f32.xlu0 %v4590
        %v4592 = vpop.xlane.xlu0 %4591
        %v4593 = vmin.f32 %v4517, %v4518
        %4594 = vmin.xlane.f32.xlu0 %v4593
        %v4595 = vpop.xlane.xlu0 %4594
        %v4596 = vmin.f32 %v4519, %v4520
        %4597 = vmin.xlane.f32.xlu0 %v4596
        %v4598 = vpop.xlane.xlu0 %4597
        %v4599 = vmin.f32 %v4521, %v4522
        %4600 = vmin.xlane.f32.xlu0 %v4599
        %v4601 = vpop.xlane.xlu0 %4600
        %v4602 = vmin.f32 %v4523, %v4524
        %4603 = vmin.xlane.f32.xlu0 %v4602
        %v4604 = vpop.xlane.xlu0 %4603
        %v4605 = vmin.f32 %v4525, %v4526
        %4606 = vmin.xlane.f32.xlu0 %v4605
        %v4607 = vpop.xlane.xlu0 %4606
        %v4608 = vmin.f32 %v4527, %v4528
        %4609 = vmin.xlane.f32.xlu0 %v4608
        %v4610 = vpop.xlane.xlu0 %4609
        %v4611 = vmin.f32 %v4529, %v4530
        %4612 = vmin.xlane.f32.xlu0 %v4611
        %v4613 = vpop.xlane.xlu0 %4612
        %v4614 = vmin.f32 %v4531, %v4532
        %4615 = vmin.xlane.f32.xlu0 %v4614
        %v4616 = vpop.xlane.xlu0 %4615
        %v4617 = vmin.f32 %v4533, %v4534
        %4618 = vmin.xlane.f32.xlu0 %v4617
        %v4619 = vpop.xlane.xlu0 %4618
        %v4620 = vmin.f32 %v4535, %v4536
        %4621 = vmin.xlane.f32.xlu0 %v4620
        %v4622 = vpop.xlane.xlu0 %4621
        %v4623 = vmin.f32 %v4537, %v4538
        %4624 = vmin.xlane.f32.xlu0 %v4623
        %v4625 = vpop.xlane.xlu0 %4624
        %v4626 = vmin.f32 %v4539, %v4540
        %4627 = vmin.xlane.f32.xlu0 %v4626
        %v4628 = vpop.xlane.xlu0 %4627
        %v4629 = vmin.f32 %v4541, %v4542
        %4630 = vmin.xlane.f32.xlu0 %v4629
        %v4631 = vpop.xlane.xlu0 %4630
        %v4632 = vmin.f32 %v4543, %v4544
        %4633 = vmin.xlane.f32.xlu0 %v4632
        %v4634 = vpop.xlane.xlu0 %4633
        %v4635 = vmin.f32 %v4545, %v4546
        %4636 = vmin.xlane.f32.xlu0 %v4635
        %v4637 = vpop.xlane.xlu0 %4636
        %v4638 = vmin.f32 %v4547, %v4548
        %4639 = vmin.xlane.f32.xlu0 %v4638
        %v4640 = vpop.xlane.xlu0 %4639
        %v4641 = vmin.f32 %v4549, %v4550
        %4642 = vmin.xlane.f32.xlu0 %v4641
        %v4643 = vpop.xlane.xlu0 %4642
        %v4644 = vmin.f32 %v4551, %v4552
        %4645 = vmin.xlane.f32.xlu0 %v4644
        %v4646 = vpop.xlane.xlu0 %4645
        %v4647 = vmin.f32 %v4553, %v4554
        %4648 = vmin.xlane.f32.xlu0 %v4647
        %v4649 = vpop.xlane.xlu0 %4648
        %v4650 = vmin.f32 %v4555, %v4556
        %4651 = vmin.xlane.f32.xlu0 %v4650
        %v4652 = vpop.xlane.xlu0 %4651
        %v4653 = vsel %vm4429, %v2368, 1e+09
        %v4654 = vsel %vm4430, %v2372, 1e+09
        %v4655 = vsel %vm4431, %v2368, 1e+09
        %v4656 = vsel %vm4432, %v2372, 1e+09
        %v4657 = vsel %vm4433, %v2368, 1e+09
        %v4658 = vsel %vm4434, %v2372, 1e+09
        %v4659 = vsel %vm4435, %v2368, 1e+09
        %v4660 = vsel %vm4436, %v2372, 1e+09
        %v4661 = vsel %vm4437, %v2376, 1e+09
        %v4662 = vsel %vm4438, %v2380, 1e+09
        %v4663 = vsel %vm4439, %v2376, 1e+09
        %v4664 = vsel %vm4440, %v2380, 1e+09
        %v4665 = vsel %vm4441, %v2376, 1e+09
        %v4666 = vsel %vm4442, %v2380, 1e+09
        %v4667 = vsel %vm4443, %v2376, 1e+09
        %v4668 = vsel %vm4444, %v2380, 1e+09
        %v4669 = vsel %vm4445, %v2384, 1e+09
        %v4670 = vsel %vm4446, %v2388, 1e+09
        %v4671 = vsel %vm4447, %v2384, 1e+09
        %v4672 = vsel %vm4448, %v2388, 1e+09
        %v4673 = vsel %vm4449, %v2384, 1e+09
        %v4674 = vsel %vm4450, %v2388, 1e+09
        %v4675 = vsel %vm4451, %v2384, 1e+09
        %v4676 = vsel %vm4452, %v2388, 1e+09
        %v4677 = vsel %vm4453, %v2392, 1e+09
        %v4678 = vsel %vm4454, %v2396, 1e+09
        %v4679 = vsel %vm4455, %v2392, 1e+09
        %v4680 = vsel %vm4456, %v2396, 1e+09
        %v4681 = vsel %vm4457, %v2392, 1e+09
        %v4682 = vsel %vm4458, %v2396, 1e+09
        %v4683 = vsel %vm4459, %v2392, 1e+09
        %v4684 = vsel %vm4460, %v2396, 1e+09
        %v4685 = vsel %vm4461, %v2400, 1e+09
        %v4686 = vsel %vm4462, %v2404, 1e+09
        %v4687 = vsel %vm4463, %v2400, 1e+09
        %v4688 = vsel %vm4464, %v2404, 1e+09
        %v4689 = vsel %vm4465, %v2400, 1e+09
        %v4690 = vsel %vm4466, %v2404, 1e+09
        %v4691 = vsel %vm4467, %v2400, 1e+09
        %v4692 = vsel %vm4468, %v2404, 1e+09
        %v4693 = vsel %vm4469, %v2408, 1e+09
        %v4694 = vsel %vm4470, %v2412, 1e+09
        %v4695 = vsel %vm4471, %v2408, 1e+09
        %v4696 = vsel %vm4472, %v2412, 1e+09
        %v4697 = vsel %vm4473, %v2408, 1e+09
        %v4698 = vsel %vm4474, %v2412, 1e+09
        %v4699 = vsel %vm4475, %v2408, 1e+09
        %v4700 = vsel %vm4476, %v2412, 1e+09
        %v4701 = vsel %vm4477, %v2416, 1e+09
        %v4702 = vsel %vm4478, %v2420, 1e+09
        %v4703 = vsel %vm4479, %v2416, 1e+09
        %v4704 = vsel %vm4480, %v2420, 1e+09
        %v4705 = vsel %vm4481, %v2416, 1e+09
        %v4706 = vsel %vm4482, %v2420, 1e+09
        %v4707 = vsel %vm4483, %v2416, 1e+09
        %v4708 = vsel %vm4484, %v2420, 1e+09
        %v4709 = vsel %vm4485, %v2424, 1e+09
        %v4710 = vsel %vm4486, %v2428, 1e+09
        %v4711 = vsel %vm4487, %v2424, 1e+09
        %v4712 = vsel %vm4488, %v2428, 1e+09
        %v4713 = vsel %vm4489, %v2424, 1e+09
        %v4714 = vsel %vm4490, %v2428, 1e+09
        %v4715 = vsel %vm4491, %v2424, 1e+09
        %v4716 = vsel %vm4492, %v2428, 1e+09
        %v4717 = vmin.f32 %v4653, %v4654
        %4718 = vmin.xlane.f32.xlu0 %v4717
        %v4719 = vpop.xlane.xlu0 %4718
        %v4720 = vmin.f32 %v4655, %v4656
        %4721 = vmin.xlane.f32.xlu0 %v4720
        %v4722 = vpop.xlane.xlu0 %4721
        %v4723 = vmin.f32 %v4657, %v4658
        %4724 = vmin.xlane.f32.xlu0 %v4723
        %v4725 = vpop.xlane.xlu0 %4724
        %v4726 = vmin.f32 %v4659, %v4660
        %4727 = vmin.xlane.f32.xlu0 %v4726
        %v4728 = vpop.xlane.xlu0 %4727
        %v4729 = vmin.f32 %v4661, %v4662
        %4730 = vmin.xlane.f32.xlu0 %v4729
        %v4731 = vpop.xlane.xlu0 %4730
        %v4732 = vmin.f32 %v4663, %v4664
        %4733 = vmin.xlane.f32.xlu0 %v4732
        %v4734 = vpop.xlane.xlu0 %4733
        %v4735 = vmin.f32 %v4665, %v4666
        %4736 = vmin.xlane.f32.xlu0 %v4735
        %v4737 = vpop.xlane.xlu0 %4736
        %v4738 = vmin.f32 %v4667, %v4668
        %4739 = vmin.xlane.f32.xlu0 %v4738
        %v4740 = vpop.xlane.xlu0 %4739
        %v4741 = vmin.f32 %v4669, %v4670
        %4742 = vmin.xlane.f32.xlu0 %v4741
        %v4743 = vpop.xlane.xlu0 %4742
        %v4744 = vmin.f32 %v4671, %v4672
        %4745 = vmin.xlane.f32.xlu0 %v4744
        %v4746 = vpop.xlane.xlu0 %4745
        %v4747 = vmin.f32 %v4673, %v4674
        %4748 = vmin.xlane.f32.xlu0 %v4747
        %v4749 = vpop.xlane.xlu0 %4748
        %v4750 = vmin.f32 %v4675, %v4676
        %4751 = vmin.xlane.f32.xlu0 %v4750
        %v4752 = vpop.xlane.xlu0 %4751
        %v4753 = vmin.f32 %v4677, %v4678
        %4754 = vmin.xlane.f32.xlu0 %v4753
        %v4755 = vpop.xlane.xlu0 %4754
        %v4756 = vmin.f32 %v4679, %v4680
        %4757 = vmin.xlane.f32.xlu0 %v4756
        %v4758 = vpop.xlane.xlu0 %4757
        %v4759 = vmin.f32 %v4681, %v4682
        %4760 = vmin.xlane.f32.xlu0 %v4759
        %v4761 = vpop.xlane.xlu0 %4760
        %v4762 = vmin.f32 %v4683, %v4684
        %4763 = vmin.xlane.f32.xlu0 %v4762
        %v4764 = vpop.xlane.xlu0 %4763
        %v4765 = vmin.f32 %v4685, %v4686
        %4766 = vmin.xlane.f32.xlu0 %v4765
        %v4767 = vpop.xlane.xlu0 %4766
        %v4768 = vmin.f32 %v4687, %v4688
        %4769 = vmin.xlane.f32.xlu0 %v4768
        %v4770 = vpop.xlane.xlu0 %4769
        %v4771 = vmin.f32 %v4689, %v4690
        %4772 = vmin.xlane.f32.xlu0 %v4771
        %v4773 = vpop.xlane.xlu0 %4772
        %v4774 = vmin.f32 %v4691, %v4692
        %4775 = vmin.xlane.f32.xlu0 %v4774
        %v4776 = vpop.xlane.xlu0 %4775
        %v4777 = vmin.f32 %v4693, %v4694
        %4778 = vmin.xlane.f32.xlu0 %v4777
        %v4779 = vpop.xlane.xlu0 %4778
        %v4780 = vmin.f32 %v4695, %v4696
        %4781 = vmin.xlane.f32.xlu0 %v4780
        %v4782 = vpop.xlane.xlu0 %4781
        %v4783 = vmin.f32 %v4697, %v4698
        %4784 = vmin.xlane.f32.xlu0 %v4783
        %v4785 = vpop.xlane.xlu0 %4784
        %v4786 = vmin.f32 %v4699, %v4700
        %4787 = vmin.xlane.f32.xlu0 %v4786
        %v4788 = vpop.xlane.xlu0 %4787
        %v4789 = vmin.f32 %v4701, %v4702
        %4790 = vmin.xlane.f32.xlu0 %v4789
        %v4791 = vpop.xlane.xlu0 %4790
        %v4792 = vmin.f32 %v4703, %v4704
        %4793 = vmin.xlane.f32.xlu0 %v4792
        %v4794 = vpop.xlane.xlu0 %4793
        %v4795 = vmin.f32 %v4705, %v4706
        %4796 = vmin.xlane.f32.xlu0 %v4795
        %v4797 = vpop.xlane.xlu0 %4796
        %v4798 = vmin.f32 %v4707, %v4708
        %4799 = vmin.xlane.f32.xlu0 %v4798
        %v4800 = vpop.xlane.xlu0 %4799
        %v4801 = vmin.f32 %v4709, %v4710
        %4802 = vmin.xlane.f32.xlu0 %v4801
        %v4803 = vpop.xlane.xlu0 %4802
        %v4804 = vmin.f32 %v4711, %v4712
        %4805 = vmin.xlane.f32.xlu0 %v4804
        %v4806 = vpop.xlane.xlu0 %4805
        %v4807 = vmin.f32 %v4713, %v4714
        %4808 = vmin.xlane.f32.xlu0 %v4807
        %v4809 = vpop.xlane.xlu0 %4808
        %v4810 = vmin.f32 %v4715, %v4716
        %4811 = vmin.xlane.f32.xlu0 %v4810
        %v4812 = vpop.xlane.xlu0 %4811
        %v4813 = vmax.f32 %v4559, %v4719
        %v4814 = vmax.f32 %v4562, %v4722
        %v4815 = vmax.f32 %v4565, %v4725
        %v4816 = vmax.f32 %v4568, %v4728
        %v4817 = vmax.f32 %v4571, %v4731
        %v4818 = vmax.f32 %v4574, %v4734
        %v4819 = vmax.f32 %v4577, %v4737
        %v4820 = vmax.f32 %v4580, %v4740
        %v4821 = vmax.f32 %v4583, %v4743
        %v4822 = vmax.f32 %v4586, %v4746
        %v4823 = vmax.f32 %v4589, %v4749
        %v4824 = vmax.f32 %v4592, %v4752
        %v4825 = vmax.f32 %v4595, %v4755
        %v4826 = vmax.f32 %v4598, %v4758
        %v4827 = vmax.f32 %v4601, %v4761
        %v4828 = vmax.f32 %v4604, %v4764
        %v4829 = vmax.f32 %v4607, %v4767
        %v4830 = vmax.f32 %v4610, %v4770
        %v4831 = vmax.f32 %v4613, %v4773
        %v4832 = vmax.f32 %v4616, %v4776
        %v4833 = vmax.f32 %v4619, %v4779
        %v4834 = vmax.f32 %v4622, %v4782
        %v4835 = vmax.f32 %v4625, %v4785
        %v4836 = vmax.f32 %v4628, %v4788
        %v4837 = vmax.f32 %v4631, %v4791
        %v4838 = vmax.f32 %v4634, %v4794
        %v4839 = vmax.f32 %v4637, %v4797
        %v4840 = vmax.f32 %v4640, %v4800
        %v4841 = vmax.f32 %v4643, %v4803
        %v4842 = vmax.f32 %v4646, %v4806
        %v4843 = vmax.f32 %v4649, %v4809
        %v4844 = vmax.f32 %v4652, %v4812
        %v4845 = vsub.f32 %v2511, %v4813
        %v4846 = vsub.f32 %v2514, %v4814
        %v4847 = vsub.f32 %v2517, %v4815
        %v4848 = vsub.f32 %v2520, %v4816
        %v4849 = vsub.f32 %v2523, %v4817
        %v4850 = vsub.f32 %v2526, %v4818
        %v4851 = vsub.f32 %v2529, %v4819
        %v4852 = vsub.f32 %v2532, %v4820
        %v4853 = vsub.f32 %v2535, %v4821
        %v4854 = vsub.f32 %v2538, %v4822
        %v4855 = vsub.f32 %v2541, %v4823
        %v4856 = vsub.f32 %v2544, %v4824
        %v4857 = vsub.f32 %v2547, %v4825
        %v4858 = vsub.f32 %v2550, %v4826
        %v4859 = vsub.f32 %v2553, %v4827
        %v4860 = vsub.f32 %v2556, %v4828
        %v4861 = vsub.f32 %v2559, %v4829
        %v4862 = vsub.f32 %v2562, %v4830
        %v4863 = vsub.f32 %v2565, %v4831
        %v4864 = vsub.f32 %v2568, %v4832
        %v4865 = vsub.f32 %v2571, %v4833
        %v4866 = vsub.f32 %v2574, %v4834
        %v4867 = vsub.f32 %v2577, %v4835
        %v4868 = vsub.f32 %v2580, %v4836
        %v4869 = vsub.f32 %v2583, %v4837
        %v4870 = vsub.f32 %v2586, %v4838
        %v4871 = vsub.f32 %v2589, %v4839
        %v4872 = vsub.f32 %v2592, %v4840
        %v4873 = vsub.f32 %v2595, %v4841
        %v4874 = vsub.f32 %v2598, %v4842
        %v4875 = vsub.f32 %v2601, %v4843
        %v4876 = vsub.f32 %v2604, %v4844
        %vm4877 = vcmp.ge.f32.partialorder %v4845, 0.05
        %vm4878 = vcmp.ge.f32.partialorder %v4846, 0.05
        %vm4879 = vcmp.ge.f32.partialorder %v4847, 0.05
        %vm4880 = vcmp.ge.f32.partialorder %v4848, 0.05
        %vm4881 = vcmp.ge.f32.partialorder %v4849, 0.05
        %vm4882 = vcmp.ge.f32.partialorder %v4850, 0.05
        %vm4883 = vcmp.ge.f32.partialorder %v4851, 0.05
        %vm4884 = vcmp.ge.f32.partialorder %v4852, 0.05
        %vm4885 = vcmp.ge.f32.partialorder %v4853, 0.05
        %vm4886 = vcmp.ge.f32.partialorder %v4854, 0.05
        %vm4887 = vcmp.ge.f32.partialorder %v4855, 0.05
        %vm4888 = vcmp.ge.f32.partialorder %v4856, 0.05
        %vm4889 = vcmp.ge.f32.partialorder %v4857, 0.05
        %vm4890 = vcmp.ge.f32.partialorder %v4858, 0.05
        %vm4891 = vcmp.ge.f32.partialorder %v4859, 0.05
        %vm4892 = vcmp.ge.f32.partialorder %v4860, 0.05
        %vm4893 = vcmp.ge.f32.partialorder %v4861, 0.05
        %vm4894 = vcmp.ge.f32.partialorder %v4862, 0.05
        %vm4895 = vcmp.ge.f32.partialorder %v4863, 0.05
        %vm4896 = vcmp.ge.f32.partialorder %v4864, 0.05
        %vm4897 = vcmp.ge.f32.partialorder %v4865, 0.05
        %vm4898 = vcmp.ge.f32.partialorder %v4866, 0.05
        %vm4899 = vcmp.ge.f32.partialorder %v4867, 0.05
        %vm4900 = vcmp.ge.f32.partialorder %v4868, 0.05
        %vm4901 = vcmp.ge.f32.partialorder %v4869, 0.05
        %vm4902 = vcmp.ge.f32.partialorder %v4870, 0.05
        %vm4903 = vcmp.ge.f32.partialorder %v4871, 0.05
        %vm4904 = vcmp.ge.f32.partialorder %v4872, 0.05
        %vm4905 = vcmp.ge.f32.partialorder %v4873, 0.05
        %vm4906 = vcmp.ge.f32.partialorder %v4874, 0.05
        %vm4907 = vcmp.ge.f32.partialorder %v4875, 0.05
        %vm4908 = vcmp.ge.f32.partialorder %v4876, 0.05
        %vm4909 = vmand %vm2605, %vm4877
        %vm4910 = vmand %vm2606, %vm4878
        %vm4911 = vmand %vm2607, %vm4879
        %vm4912 = vmand %vm2608, %vm4880
        %vm4913 = vmand %vm2609, %vm4881
        %vm4914 = vmand %vm2610, %vm4882
        %vm4915 = vmand %vm2611, %vm4883
        %vm4916 = vmand %vm2612, %vm4884
        %vm4917 = vmand %vm2613, %vm4885
        %vm4918 = vmand %vm2614, %vm4886
        %vm4919 = vmand %vm2615, %vm4887
        %vm4920 = vmand %vm2616, %vm4888
        %vm4921 = vmand %vm2617, %vm4889
        %vm4922 = vmand %vm2618, %vm4890
        %vm4923 = vmand %vm2619, %vm4891
        %vm4924 = vmand %vm2620, %vm4892
        %vm4925 = vmand %vm2621, %vm4893
        %vm4926 = vmand %vm2622, %vm4894
        %vm4927 = vmand %vm2623, %vm4895
        %vm4928 = vmand %vm2624, %vm4896
        %vm4929 = vmand %vm2625, %vm4897
        %vm4930 = vmand %vm2626, %vm4898
        %vm4931 = vmand %vm2627, %vm4899
        %vm4932 = vmand %vm2628, %vm4900
        %vm4933 = vmand %vm2629, %vm4901
        %vm4934 = vmand %vm2630, %vm4902
        %vm4935 = vmand %vm2631, %vm4903
        %vm4936 = vmand %vm2632, %vm4904
        %vm4937 = vmand %vm2633, %vm4905
        %vm4938 = vmand %vm2634, %vm4906
        %vm4939 = vmand %vm2635, %vm4907
        %vm4940 = vmand %vm2636, %vm4908
        %v4941 = vsel %vm4909, 1, 0
        %v4942 = vsel %vm4910, 1, 0
        %v4943 = vsel %vm4911, 1, 0
        %v4944 = vsel %vm4912, 1, 0
        %v4945 = vsel %vm4913, 1, 0
        %v4946 = vsel %vm4914, 1, 0
        %v4947 = vsel %vm4915, 1, 0
        %v4948 = vsel %vm4916, 1, 0
        %v4949 = vsel %vm4917, 1, 0
        %v4950 = vsel %vm4918, 1, 0
        %v4951 = vsel %vm4919, 1, 0
        %v4952 = vsel %vm4920, 1, 0
        %v4953 = vsel %vm4921, 1, 0
        %v4954 = vsel %vm4922, 1, 0
        %v4955 = vsel %vm4923, 1, 0
        %v4956 = vsel %vm4924, 1, 0
        %v4957 = vsel %vm4925, 1, 0
        %v4958 = vsel %vm4926, 1, 0
        %v4959 = vsel %vm4927, 1, 0
        %v4960 = vsel %vm4928, 1, 0
        %v4961 = vsel %vm4929, 1, 0
        %v4962 = vsel %vm4930, 1, 0
        %v4963 = vsel %vm4931, 1, 0
        %v4964 = vsel %vm4932, 1, 0
        %v4965 = vsel %vm4933, 1, 0
        %v4966 = vsel %vm4934, 1, 0
        %v4967 = vsel %vm4935, 1, 0
        %v4968 = vsel %vm4936, 1, 0
        %v4969 = vsel %vm4937, 1, 0
        %v4970 = vsel %vm4938, 1, 0
        %v4971 = vsel %vm4939, 1, 0
        %v4972 = vsel %vm4940, 1, 0
        %vm4973 = vcmp.eq.s32.totalorder %v4941, 1
        %vm4974 = vcmp.eq.s32.totalorder %v4942, 1
        %vm4975 = vcmp.eq.s32.totalorder %v4943, 1
        %vm4976 = vcmp.eq.s32.totalorder %v4944, 1
        %vm4977 = vcmp.eq.s32.totalorder %v4945, 1
        %vm4978 = vcmp.eq.s32.totalorder %v4946, 1
        %vm4979 = vcmp.eq.s32.totalorder %v4947, 1
        %vm4980 = vcmp.eq.s32.totalorder %v4948, 1
        %vm4981 = vcmp.eq.s32.totalorder %v4949, 1
        %vm4982 = vcmp.eq.s32.totalorder %v4950, 1
        %vm4983 = vcmp.eq.s32.totalorder %v4951, 1
        %vm4984 = vcmp.eq.s32.totalorder %v4952, 1
        %vm4985 = vcmp.eq.s32.totalorder %v4953, 1
        %vm4986 = vcmp.eq.s32.totalorder %v4954, 1
        %vm4987 = vcmp.eq.s32.totalorder %v4955, 1
        %vm4988 = vcmp.eq.s32.totalorder %v4956, 1
        %vm4989 = vcmp.eq.s32.totalorder %v4957, 1
        %vm4990 = vcmp.eq.s32.totalorder %v4958, 1
        %vm4991 = vcmp.eq.s32.totalorder %v4959, 1
        %vm4992 = vcmp.eq.s32.totalorder %v4960, 1
        %vm4993 = vcmp.eq.s32.totalorder %v4961, 1
        %vm4994 = vcmp.eq.s32.totalorder %v4962, 1
        %vm4995 = vcmp.eq.s32.totalorder %v4963, 1
        %vm4996 = vcmp.eq.s32.totalorder %v4964, 1
        %vm4997 = vcmp.eq.s32.totalorder %v4965, 1
        %vm4998 = vcmp.eq.s32.totalorder %v4966, 1
        %vm4999 = vcmp.eq.s32.totalorder %v4967, 1
        %vm5000 = vcmp.eq.s32.totalorder %v4968, 1
        %vm5001 = vcmp.eq.s32.totalorder %v4969, 1
        %vm5002 = vcmp.eq.s32.totalorder %v4970, 1
        %vm5003 = vcmp.eq.s32.totalorder %v4971, 1
        %vm5004 = vcmp.eq.s32.totalorder %v4972, 1
        %vm5005 = vmand %vm2057, %vm4973
        %vm5006 = vmand %vm2058, %vm4973
        %vm5007 = vmand %vm2059, %vm4974
        %vm5008 = vmand %vm2060, %vm4974
        %vm5009 = vmand %vm2061, %vm4975
        %vm5010 = vmand %vm2062, %vm4975
        %vm5011 = vmand %vm2063, %vm4976
        %vm5012 = vmand %vm2064, %vm4976
        %vm5013 = vmand %vm2065, %vm4977
        %vm5014 = vmand %vm2066, %vm4977
        %vm5015 = vmand %vm2067, %vm4978
        %vm5016 = vmand %vm2068, %vm4978
        %vm5017 = vmand %vm2069, %vm4979
        %vm5018 = vmand %vm2070, %vm4979
        %vm5019 = vmand %vm2071, %vm4980
        %vm5020 = vmand %vm2072, %vm4980
        %vm5021 = vmand %vm2073, %vm4981
        %vm5022 = vmand %vm2074, %vm4981
        %vm5023 = vmand %vm2075, %vm4982
        %vm5024 = vmand %vm2076, %vm4982
        %vm5025 = vmand %vm2077, %vm4983
        %vm5026 = vmand %vm2078, %vm4983
        %vm5027 = vmand %vm2079, %vm4984
        %vm5028 = vmand %vm2080, %vm4984
        %vm5029 = vmand %vm2081, %vm4985
        %vm5030 = vmand %vm2082, %vm4985
        %vm5031 = vmand %vm2083, %vm4986
        %vm5032 = vmand %vm2084, %vm4986
        %vm5033 = vmand %vm2085, %vm4987
        %vm5034 = vmand %vm2086, %vm4987
        %vm5035 = vmand %vm2087, %vm4988
        %vm5036 = vmand %vm2088, %vm4988
        %vm5037 = vmand %vm2089, %vm4989
        %vm5038 = vmand %vm2090, %vm4989
        %vm5039 = vmand %vm2091, %vm4990
        %vm5040 = vmand %vm2092, %vm4990
        %vm5041 = vmand %vm2093, %vm4991
        %vm5042 = vmand %vm2094, %vm4991
        %vm5043 = vmand %vm2095, %vm4992
        %vm5044 = vmand %vm2096, %vm4992
        %vm5045 = vmand %vm2097, %vm4993
        %vm5046 = vmand %vm2098, %vm4993
        %vm5047 = vmand %vm2099, %vm4994
        %vm5048 = vmand %vm2100, %vm4994
        %vm5049 = vmand %vm2101, %vm4995
        %vm5050 = vmand %vm2102, %vm4995
        %vm5051 = vmand %vm2103, %vm4996
        %vm5052 = vmand %vm2104, %vm4996
        %vm5053 = vmand %vm2105, %vm4997
        %vm5054 = vmand %vm2106, %vm4997
        %vm5055 = vmand %vm2107, %vm4998
        %vm5056 = vmand %vm2108, %vm4998
        %vm5057 = vmand %vm2109, %vm4999
        %vm5058 = vmand %vm2110, %vm4999
        %vm5059 = vmand %vm2111, %vm5000
        %vm5060 = vmand %vm2112, %vm5000
        %vm5061 = vmand %vm2113, %vm5001
        %vm5062 = vmand %vm2114, %vm5001
        %vm5063 = vmand %vm2115, %vm5002
        %vm5064 = vmand %vm2116, %vm5002
        %vm5065 = vmand %vm2117, %vm5003
        %vm5066 = vmand %vm2118, %vm5003
        %vm5067 = vmand %vm2119, %vm5004
        %vm5068 = vmand %vm2120, %vm5004
        %v5069 = vsel %vm5005, 1.0, 0.0
        %v5070 = vsel %vm5006, 1.0, 0.0
        %v5071 = vsel %vm5007, 1.0, 0.0
        %v5072 = vsel %vm5008, 1.0, 0.0
        %v5073 = vsel %vm5009, 1.0, 0.0
        %v5074 = vsel %vm5010, 1.0, 0.0
        %v5075 = vsel %vm5011, 1.0, 0.0
        %v5076 = vsel %vm5012, 1.0, 0.0
        %v5077 = vsel %vm5013, 1.0, 0.0
        %v5078 = vsel %vm5014, 1.0, 0.0
        %v5079 = vsel %vm5015, 1.0, 0.0
        %v5080 = vsel %vm5016, 1.0, 0.0
        %v5081 = vsel %vm5017, 1.0, 0.0
        %v5082 = vsel %vm5018, 1.0, 0.0
        %v5083 = vsel %vm5019, 1.0, 0.0
        %v5084 = vsel %vm5020, 1.0, 0.0
        %v5085 = vsel %vm5021, 1.0, 0.0
        %v5086 = vsel %vm5022, 1.0, 0.0
        %v5087 = vsel %vm5023, 1.0, 0.0
        %v5088 = vsel %vm5024, 1.0, 0.0
        %v5089 = vsel %vm5025, 1.0, 0.0
        %v5090 = vsel %vm5026, 1.0, 0.0
        %v5091 = vsel %vm5027, 1.0, 0.0
        %v5092 = vsel %vm5028, 1.0, 0.0
        %v5093 = vsel %vm5029, 1.0, 0.0
        %v5094 = vsel %vm5030, 1.0, 0.0
        %v5095 = vsel %vm5031, 1.0, 0.0
        %v5096 = vsel %vm5032, 1.0, 0.0
        %v5097 = vsel %vm5033, 1.0, 0.0
        %v5098 = vsel %vm5034, 1.0, 0.0
        %v5099 = vsel %vm5035, 1.0, 0.0
        %v5100 = vsel %vm5036, 1.0, 0.0
        %v5101 = vsel %vm5037, 1.0, 0.0
        %v5102 = vsel %vm5038, 1.0, 0.0
        %v5103 = vsel %vm5039, 1.0, 0.0
        %v5104 = vsel %vm5040, 1.0, 0.0
        %v5105 = vsel %vm5041, 1.0, 0.0
        %v5106 = vsel %vm5042, 1.0, 0.0
        %v5107 = vsel %vm5043, 1.0, 0.0
        %v5108 = vsel %vm5044, 1.0, 0.0
        %v5109 = vsel %vm5045, 1.0, 0.0
        %v5110 = vsel %vm5046, 1.0, 0.0
        %v5111 = vsel %vm5047, 1.0, 0.0
        %v5112 = vsel %vm5048, 1.0, 0.0
        %v5113 = vsel %vm5049, 1.0, 0.0
        %v5114 = vsel %vm5050, 1.0, 0.0
        %v5115 = vsel %vm5051, 1.0, 0.0
        %v5116 = vsel %vm5052, 1.0, 0.0
        %v5117 = vsel %vm5053, 1.0, 0.0
        %v5118 = vsel %vm5054, 1.0, 0.0
        %v5119 = vsel %vm5055, 1.0, 0.0
        %v5120 = vsel %vm5056, 1.0, 0.0
        %v5121 = vsel %vm5057, 1.0, 0.0
        %v5122 = vsel %vm5058, 1.0, 0.0
        %v5123 = vsel %vm5059, 1.0, 0.0
        %v5124 = vsel %vm5060, 1.0, 0.0
        %v5125 = vsel %vm5061, 1.0, 0.0
        %v5126 = vsel %vm5062, 1.0, 0.0
        %v5127 = vsel %vm5063, 1.0, 0.0
        %v5128 = vsel %vm5064, 1.0, 0.0
        %v5129 = vsel %vm5065, 1.0, 0.0
        %v5130 = vsel %vm5066, 1.0, 0.0
        %v5131 = vsel %vm5067, 1.0, 0.0
        %v5132 = vsel %vm5068, 1.0, 0.0
        %v5133 = vmax.f32 %v5069, %v5071
        %v5134 = vmax.f32 %v5133, %v5073
        %v5135 = vmax.f32 %v5134, %v5075
        %v5136 = vrot.slane %v5135, 4
        %v5137 = vmax.f32 %v5135, %v5136
        %v5138 = vrot.slane %v5137, 2
        %v5139 = vmax.f32 %v5137, %v5138
        %v5140 = vrot.slane %v5139, 1
        %v5141 = vmax.f32 %v5139, %v5140
        %v5142 = vmax.f32 %v5070, %v5072
        %v5143 = vmax.f32 %v5142, %v5074
        %v5144 = vmax.f32 %v5143, %v5076
        %v5145 = vrot.slane %v5144, 4
        %v5146 = vmax.f32 %v5144, %v5145
        %v5147 = vrot.slane %v5146, 2
        %v5148 = vmax.f32 %v5146, %v5147
        %v5149 = vrot.slane %v5148, 1
        %v5150 = vmax.f32 %v5148, %v5149
        %v5151 = vmax.f32 %v5077, %v5079
        %v5152 = vmax.f32 %v5151, %v5081
        %v5153 = vmax.f32 %v5152, %v5083
        %v5154 = vrot.slane %v5153, 4
        %v5155 = vmax.f32 %v5153, %v5154
        %v5156 = vrot.slane %v5155, 2
        %v5157 = vmax.f32 %v5155, %v5156
        %v5158 = vrot.slane %v5157, 1
        %v5159 = vmax.f32 %v5157, %v5158
        %v5160 = vmax.f32 %v5078, %v5080
        %v5161 = vmax.f32 %v5160, %v5082
        %v5162 = vmax.f32 %v5161, %v5084
        %v5163 = vrot.slane %v5162, 4
        %v5164 = vmax.f32 %v5162, %v5163
        %v5165 = vrot.slane %v5164, 2
        %v5166 = vmax.f32 %v5164, %v5165
        %v5167 = vrot.slane %v5166, 1
        %v5168 = vmax.f32 %v5166, %v5167
        %v5169 = vmax.f32 %v5085, %v5087
        %v5170 = vmax.f32 %v5169, %v5089
        %v5171 = vmax.f32 %v5170, %v5091
        %v5172 = vrot.slane %v5171, 4
        %v5173 = vmax.f32 %v5171, %v5172
        %v5174 = vrot.slane %v5173, 2
        %v5175 = vmax.f32 %v5173, %v5174
        %v5176 = vrot.slane %v5175, 1
        %v5177 = vmax.f32 %v5175, %v5176
        %v5178 = vmax.f32 %v5086, %v5088
        %v5179 = vmax.f32 %v5178, %v5090
        %v5180 = vmax.f32 %v5179, %v5092
        %v5181 = vrot.slane %v5180, 4
        %v5182 = vmax.f32 %v5180, %v5181
        %v5183 = vrot.slane %v5182, 2
        %v5184 = vmax.f32 %v5182, %v5183
        %v5185 = vrot.slane %v5184, 1
        %v5186 = vmax.f32 %v5184, %v5185
        %v5187 = vmax.f32 %v5093, %v5095
        %v5188 = vmax.f32 %v5187, %v5097
        %v5189 = vmax.f32 %v5188, %v5099
        %v5190 = vrot.slane %v5189, 4
        %v5191 = vmax.f32 %v5189, %v5190
        %v5192 = vrot.slane %v5191, 2
        %v5193 = vmax.f32 %v5191, %v5192
        %v5194 = vrot.slane %v5193, 1
        %v5195 = vmax.f32 %v5193, %v5194
        %v5196 = vmax.f32 %v5094, %v5096
        %v5197 = vmax.f32 %v5196, %v5098
        %v5198 = vmax.f32 %v5197, %v5100
        %v5199 = vrot.slane %v5198, 4
        %v5200 = vmax.f32 %v5198, %v5199
        %v5201 = vrot.slane %v5200, 2
        %v5202 = vmax.f32 %v5200, %v5201
        %v5203 = vrot.slane %v5202, 1
        %v5204 = vmax.f32 %v5202, %v5203
        %v5205 = vmax.f32 %v5101, %v5103
        %v5206 = vmax.f32 %v5205, %v5105
        %v5207 = vmax.f32 %v5206, %v5107
        %v5208 = vrot.slane %v5207, 4
        %v5209 = vmax.f32 %v5207, %v5208
        %v5210 = vrot.slane %v5209, 2
        %v5211 = vmax.f32 %v5209, %v5210
        %v5212 = vrot.slane %v5211, 1
        %v5213 = vmax.f32 %v5211, %v5212
        %v5214 = vmax.f32 %v5102, %v5104
        %v5215 = vmax.f32 %v5214, %v5106
        %v5216 = vmax.f32 %v5215, %v5108
        %v5217 = vrot.slane %v5216, 4
        %v5218 = vmax.f32 %v5216, %v5217
        %v5219 = vrot.slane %v5218, 2
        %v5220 = vmax.f32 %v5218, %v5219
        %v5221 = vrot.slane %v5220, 1
        %v5222 = vmax.f32 %v5220, %v5221
        %v5223 = vmax.f32 %v5109, %v5111
        %v5224 = vmax.f32 %v5223, %v5113
        %v5225 = vmax.f32 %v5224, %v5115
        %v5226 = vrot.slane %v5225, 4
        %v5227 = vmax.f32 %v5225, %v5226
        %v5228 = vrot.slane %v5227, 2
        %v5229 = vmax.f32 %v5227, %v5228
        %v5230 = vrot.slane %v5229, 1
        %v5231 = vmax.f32 %v5229, %v5230
        %v5232 = vmax.f32 %v5110, %v5112
        %v5233 = vmax.f32 %v5232, %v5114
        %v5234 = vmax.f32 %v5233, %v5116
        %v5235 = vrot.slane %v5234, 4
        %v5236 = vmax.f32 %v5234, %v5235
        %v5237 = vrot.slane %v5236, 2
        %v5238 = vmax.f32 %v5236, %v5237
        %v5239 = vrot.slane %v5238, 1
        %v5240 = vmax.f32 %v5238, %v5239
        %v5241 = vmax.f32 %v5117, %v5119
        %v5242 = vmax.f32 %v5241, %v5121
        %v5243 = vmax.f32 %v5242, %v5123
        %v5244 = vrot.slane %v5243, 4
        %v5245 = vmax.f32 %v5243, %v5244
        %v5246 = vrot.slane %v5245, 2
        %v5247 = vmax.f32 %v5245, %v5246
        %v5248 = vrot.slane %v5247, 1
        %v5249 = vmax.f32 %v5247, %v5248
        %v5250 = vmax.f32 %v5118, %v5120
        %v5251 = vmax.f32 %v5250, %v5122
        %v5252 = vmax.f32 %v5251, %v5124
        %v5253 = vrot.slane %v5252, 4
        %v5254 = vmax.f32 %v5252, %v5253
        %v5255 = vrot.slane %v5254, 2
        %v5256 = vmax.f32 %v5254, %v5255
        %v5257 = vrot.slane %v5256, 1
        %v5258 = vmax.f32 %v5256, %v5257
        %v5259 = vmax.f32 %v5125, %v5127
        %v5260 = vmax.f32 %v5259, %v5129
        %v5261 = vmax.f32 %v5260, %v5131
        %v5262 = vrot.slane %v5261, 4
        %v5263 = vmax.f32 %v5261, %v5262
        %v5264 = vrot.slane %v5263, 2
        %v5265 = vmax.f32 %v5263, %v5264
        %v5266 = vrot.slane %v5265, 1
        %v5267 = vmax.f32 %v5265, %v5266
        %v5268 = vmax.f32 %v5126, %v5128
        %v5269 = vmax.f32 %v5268, %v5130
        %v5270 = vmax.f32 %v5269, %v5132
        %v5271 = vrot.slane %v5270, 4
        %v5272 = vmax.f32 %v5270, %v5271
        %v5273 = vrot.slane %v5272, 2
        %v5274 = vmax.f32 %v5272, %v5273
        %v5275 = vrot.slane %v5274, 1
        %v5276 = vmax.f32 %v5274, %v5275
        %vm5293 = vcmask 1041409
        %v5294 = vsel %vm5293, %v5159, %v5141
        %vm5295 = vcmask 1042434
        %v5296 = vsel %vm5295, %v5177, %v5294
        %vm5297 = vcmask 1043459
        %v5298 = vsel %vm5297, %v5195, %v5296
        %vm5299 = vcmask 1044484
        %v5300 = vsel %vm5299, %v5213, %v5298
        %vm5301 = vcmask 1045509
        %v5302 = vsel %vm5301, %v5231, %v5300
        %vm5303 = vcmask 1046534
        %v5304 = vsel %vm5303, %v5249, %v5302
        %vm5305 = vcmask 1047559
        %v5306 = vsel %vm5305, %v5267, %v5304
        %v5307 = vsel %vm5293, %v5168, %v5150
        %v5308 = vsel %vm5295, %v5186, %v5307
        %v5309 = vsel %vm5297, %v5204, %v5308
        %v5310 = vsel %vm5299, %v5222, %v5309
        %v5311 = vsel %vm5301, %v5240, %v5310
        %v5312 = vsel %vm5303, %v5258, %v5311
        %v5313 = vsel %vm5305, %v5276, %v5312
        %5316 = vst [vmem:[%s132] sm:$0xff] %v5306
        %5317 = vst [vmem:[%s132 + $0x8] sm:$0xff] %v5313
        %s5318 = sand.u32 %s52, 1
        %s5319 = scalar_lea.sflag [#allocation4], %s5318
        %s5320 = sand.u32 %s52, 1
        %s5321 = smul.addr %s5320, 16
        %s5322 = scalar_lea.vmem [#allocation5], %s5321
        // Predicated region
        $region29: #{tpu_custom_call.1} parent=23 // pred_check
          %p5323 = pneg %p62
        $region30: #{tpu_custom_call.1} parent=23 // pred_check_branch
          %5325 = sbr.rel (%p5323) target = $region32
        $region31: #{tpu_custom_call.1} parent=23 // pred_region
          %s5327 = ssub.s32 256, 256
          %5328 = vsyncadd %s5319, %s5327
          %s5329 = smul.addr %s18, 2
          %s5330 = smul.addr %s5329, 128
          %s5331 = scalar_lea.hbm %s1, %s5330
          %s5333 = sshll.u32 %s5322, 4
          %s5334 = int_to_ptr.vmem [resolvable:$true] %s5333
          %5336 = dma.vmem_to_hbm [thread:$0]  %s5334, 256, %s5331, %s5319
        $region32: #{tpu_custom_call.1} parent=23 // pred_fallthru
          _
      $region24: #{tpu_custom_call.1} parent=5 // pred_fallthru
        _
      %p5337 = scmp.le.s32.totalorder 2, %s13
      // Predicated region
      $region33: #{tpu_custom_call.1} parent=5 // pred_check
        %p5338 = pneg %p5337
      $region34: #{tpu_custom_call.1} parent=5 // pred_check_branch
        %5340 = sbr.rel (%p5338) target = $region36
      $region35: #{tpu_custom_call.1} parent=5 // pred_region
        %s5341 = ssub.s32 %s13, 2
        // Predicated region
        $region37: #{tpu_custom_call.1} parent=35 // pred_check
          %p5342 = pneg %p68
        $region38: #{tpu_custom_call.1} parent=35 // pred_check_branch
          %5344 = sbr.rel (%p5342) target = $region40
        $region39: #{tpu_custom_call.1} parent=35 // pred_region
          %s5345 = sand.u32 %s53, 1
          %s5346 = scalar_lea.sflag [#allocation4], %s5345
          %s5347 = sand.u32 %s53, 1
          %s5348 = smul.addr %s5347, 16
          %s5349 = scalar_lea.vmem [#allocation5], %s5348
          %5350 = dma.done %s5346, 256
        $region40: #{tpu_custom_call.1} parent=35 // pred_fallthru
          _
      $region36: #{tpu_custom_call.1} parent=5 // pred_fallthru
        _
    $region6: #{tpu_custom_call.1} parent=1 // loop_footer
      %s17 = sadd.s32 1, %s13
    $region7: #{tpu_custom_call.1} parent=1 // loop_footer_branch
      %12 = sbr.rel target = $region3
    $region8: #{tpu_custom_call.1} parent=1 // loop_exit
      _
    %5351 = vsyncpa [#allocation3], 1
    %s5352 = scalar_lea.sflag [#allocation3], 1
    %5353 = vsyncpa %s5352, 1
    %5354 = vsyncpa [#allocation4], 1
    %s5355 = scalar_lea.sflag [#allocation4], 1
    %5356 = vsyncpa %s5355, 1

</llo_original>
